<compile_context>
chip_gen: v6e
topology: v6e:2x2x1
jax: 0.10.0
libtpu: 0.0.40
codegen_flags: <defaults>
</compile_context>

<pallas_src>
import jax
import jax.numpy as jnp
from jax.experimental import pallas as pl
from jax.experimental.pallas import tpu as pltpu

# ---------------- model dimensions (from the PyTorch module) ----------------
H = W = 28
K = 17
OH = OW = H - K + 1            # 12
C_OUT = 57
FLAT = C_OUT * OH * OW         # 8208
HID = 99
HID_PAD = 128                  # lane-dense padded hidden dim (pad cols are zero)
NCLS = 10

KW_ROW = K * W                 # 476  (one height-expanded row group)
NF = OW * C_OUT                # 684  (conv outputs produced per output row)
IMG = H * W                    # 784


# ------------------------------ Pallas kernel -------------------------------

def fused_kernel(x_ref, m_ref, bc_ref, w2r_ref, b2_ref, w3_ref, b3_ref,
                 o_ref, lhs_ref):
    """conv(17x17,57) -> tanh -> Linear(8208,99) -> Linear(99,10) -> log_softmax.

    x_ref  : (BT, 784)        bf16  raw flattened image tile
    m_ref  : (476, 684)       bf16  width-unrolled conv weights (resident)
    bc_ref : (1, 684)         f32   conv bias tiled over ow
    w2r_ref: (OH, 684, 128)   bf16  W2 permuted to (oh, ow, c) order, HID padded
    b2_ref : (1, 128)         f32
    w3_ref : (128, 10)        f32
    b3_ref : (1, 10)          f32
    o_ref  : (BT, 10)         f32   log-probabilities
    lhs_ref: (OH*BT, 476)     bf16  VMEM scratch: height-expanded conv LHS
    """
    bt = o_ref.shape[0]

    # ---- in-kernel height expansion (12 static, contiguous flat-image slices)
    # lhs[oh*bt + b, kh*28 + w] = img[b, oh + kh, w]
    for oh in range(OH):
        lhs_ref[oh * bt:(oh + 1) * bt, :] = x_ref[:, oh * W: oh * W + KW_ROW]

    # ---- conv for ALL 12 output rows as one MXU matmul (shared RHS) ----
    pre = jnp.dot(lhs_ref[...], m_ref[...],
                  preferred_element_type=jnp.float32)            # (12*BT, 684)
    a = jnp.tanh((pre + bc_ref[...]).astype(jnp.bfloat16))       # bf16 tanh

    # ---- Linear(8208, 99): NHWC->NCHW transpose folded into w2r blocks ----
    h = jnp.zeros((bt, HID_PAD), jnp.float32) + b2_ref[...]
    for oh in range(OH):                                         # static unroll
        h = h + jnp.dot(a[oh * bt:(oh + 1) * bt, :], w2r_ref[oh],
                        preferred_element_type=jnp.float32)      # (BT, 128)

    # ---- Linear(99, 10) + LogSoftmax (f32) ----
    y = jnp.dot(h, w3_ref[...], preferred_element_type=jnp.float32) + b3_ref[...]
    mx = jnp.max(y, axis=-1, keepdims=True)
    z = y - mx
    lse = jnp.log(jnp.sum(jnp.exp(z), axis=-1, keepdims=True))
    o_ref[...] = z - lse


# ------------------------------ JAX wrapper --------------------------------

def _round_up(x, m):
    return (x + m - 1) // m * m


def _conv_weight_matrix(wc):
    # wc (57,1,17,17) -> M (476, 684): M[kh*28 + w, ow*57 + c] = wc[c,0,kh,w-ow]
    wck = wc.reshape(C_OUT, K, K)
    kw = jnp.arange(W)[None, :] - jnp.arange(OW)[:, None]         # (12, 28)
    valid = (kw >= 0) & (kw < K)
    g = wck[:, :, jnp.clip(kw, 0, K - 1)]                         # (57, 17, 12, 28)
    g = jnp.where(valid[None, None], g, 0.0)
    return g.transpose(1, 3, 2, 0).reshape(KW_ROW, NF)            # (476, 684)


def _permute_w2(w2):
    # w2 (99, 8208) over NCHW flatten -> (OH, 684, 128) blocks in (oh, ow, c)
    # order; hidden dim zero-padded 99 -> 128 (lane-dense accumulator).
    w2_nchw = w2.reshape(HID, C_OUT, OH, OW)                      # [j, c, oh, ow]
    w2r = w2_nchw.transpose(2, 3, 1, 0).reshape(OH, NF, HID)
    return jnp.pad(w2r, ((0, 0), (0, 0), (0, HID_PAD - HID)))


def conv2d_then_linear_48(x, params):
    """x: (B, 784) float32 (or anything reshapable to (B,1,28,28))."""
    wc, bc, w2, b2, w3, b3 = params
    B = x.shape[0]
    x_flat = x.reshape(B, IMG).astype(jnp.bfloat16)

    # ---- batch tiling: >=2 grid steps once B > 16 (megacore), cap BT=256 ----
    b_al = _round_up(B, 16)                    # 16 = bf16 sublane packing
    if b_al <= 16:
        BT = b_al
    else:
        BT = min(256, _round_up((b_al + 1) // 2, 16))
    B_pad = _round_up(B, BT)
    if B_pad != B:
        x_flat = jnp.pad(x_flat, ((0, B_pad - B), (0, 0)))

    # ---- weight prep (B-independent; VMEM-resident across the grid) ----
    m = _conv_weight_matrix(wc).astype(jnp.bfloat16)              # (476, 684)
    bc_t = jnp.tile(bc, OW).reshape(1, NF).astype(jnp.float32)    # (1, 684)
    w2r = _permute_w2(w2).astype(jnp.bfloat16)                    # (12, 684, 128)
    b2_r = jnp.pad(b2, (0, HID_PAD - HID)).reshape(1, HID_PAD).astype(jnp.float32)
    w3_t = jnp.pad(w3.T, ((0, HID_PAD - HID), (0, 0))).astype(jnp.float32)  # (128, 10)
    b3_r = b3.reshape(1, NCLS).astype(jnp.float32)

    grid = (B_pad // BT,)

    flops = 2 * B_pad * (OH * KW_ROW * NF + OH * NF * HID_PAD + HID_PAD * NCLS)
    bytes_accessed = (x_flat.size * 2 + m.size * 2 + w2r.size * 2
                      + (bc_t.size + b2_r.size + w3_t.size + b3_r.size) * 4
                      + B_pad * NCLS * 4)
    cost = pl.CostEstimate(flops=flops,
                           transcendentals=B_pad * (OH * NF + NCLS),
                           bytes_accessed=bytes_accessed)

    out = pl.pallas_call(
        fused_kernel,
        out_shape=jax.ShapeDtypeStruct((B_pad, NCLS), jnp.float32),
        grid=grid,
        in_specs=[
            pl.BlockSpec((BT, IMG), lambda i: (i, 0)),            # raw image (batch-tiled)
            pl.BlockSpec((KW_ROW, NF), lambda i: (0, 0)),         # conv weight (resident)
            pl.BlockSpec((1, NF), lambda i: (0, 0)),              # conv bias
            pl.BlockSpec((OH, NF, HID_PAD), lambda i: (0, 0, 0)), # permuted W2 (resident)
            pl.BlockSpec((1, HID_PAD), lambda i: (0, 0)),         # b2
            pl.BlockSpec((HID_PAD, NCLS), lambda i: (0, 0)),      # W3^T
            pl.BlockSpec((1, NCLS), lambda i: (0, 0)),            # b3
        ],
        out_specs=pl.BlockSpec((BT, NCLS), lambda i: (i, 0)),
        scratch_shapes=[pltpu.VMEM((OH * BT, KW_ROW), jnp.bfloat16)],
        compiler_params=pltpu.CompilerParams(
            dimension_semantics=("parallel",),
            vmem_limit_bytes=48 * 1024 * 1024),
        cost_estimate=cost,
    )(x_flat, m, bc_t, w2r, b2_r, w3_t, b3_r)

    return out[:B]


# ------------------------- pure-JAX reference (f32) -------------------------

def reference_forward(x, params):
    wc, bc, w2, b2, w3, b3 = params
    B = x.shape[0]
    xi = x.reshape(B, 1, H, W).astype(jnp.float32)
    conv = jax.lax.conv_general_dilated(
        xi, wc, window_strides=(1, 1), padding="VALID",
        dimension_numbers=("NCHW", "OIHW", "NCHW"))
    conv = jnp.tanh(conv + bc.reshape(1, C_OUT, 1, 1))
    feat = conv.reshape(B, FLAT)
    h = feat @ w2.T + b2
    y = h @ w3.T + b3
    return jax.nn.log_softmax(y, axis=1)


def init_params(key):
    k = jax.random.split(key, 6)
    # PyTorch-like uniform(-1/sqrt(fan_in), 1/sqrt(fan_in)) init, deterministic.
    def u(key, shape, fan_in):
        bound = 1.0 / jnp.sqrt(fan_in)
        return jax.random.uniform(key, shape, jnp.float32, -bound, bound)

    wc = u(k[0], (C_OUT, 1, K, K), K * K)        # Conv2d weight
    bc = u(k[1], (C_OUT,), K * K)                # Conv2d bias
    w2 = u(k[2], (HID, FLAT), FLAT)              # Linear(8208, 99) weight
    b2 = u(k[3], (HID,), FLAT)
    w3 = u(k[4], (NCLS, HID), HID)               # Linear(99, 10) weight
    b3 = u(k[5], (NCLS,), HID)
    return (wc, bc, w2, b2, w3, b3)


if __name__ == "__main__":
    key = jax.random.PRNGKey(0)
    pkey, xkey = jax.random.split(key)
    params = init_params(pkey)

    B = 2
    x = jax.random.normal(xkey, (B, H * W), jnp.float32)

    out = jax.jit(conv2d_then_linear_48)(x, params)
    out = jax.block_until_ready(out)

    assert out.shape == (B, NCLS)
    # log-softmax rows must sum (in prob space) to ~1
    assert jnp.allclose(jnp.sum(jnp.exp(out), axis=1), 1.0, atol=1e-4)
    # loose check vs f32 reference (bf16 MXU inputs / bf16 tanh -> ~1e-2 level)
    ref = reference_forward(x, params)
    max_err = float(jnp.max(jnp.abs(out - ref)))
    assert max_err < 0.1, f"max abs diff vs reference: {max_err}"
    print("KERNEL_OK")
</pallas_src>

<mosaic_0001>
module attributes {stable_mosaic.version = 11 : i64} {
  func.func @fused_kernel(%arg0: i32, %arg1: memref<16x784xbf16, #tpu.memory_space<vmem>>, %arg2: memref<476x684xbf16, #tpu.memory_space<vmem>>, %arg3: memref<1x684xf32, #tpu.memory_space<vmem>>, %arg4: memref<12x684x128xbf16, #tpu.memory_space<vmem>>, %arg5: memref<1x128xf32, #tpu.memory_space<vmem>>, %arg6: memref<128x10xf32, #tpu.memory_space<vmem>>, %arg7: memref<1x10xf32, #tpu.memory_space<vmem>>, %arg8: memref<16x10xf32, #tpu.memory_space<vmem>>, %arg9: memref<192x476xbf16, #tpu.memory_space<vmem>>) attributes {dimension_semantics = [#tpu.dimension_semantics<parallel>], iteration_bounds = array<i64: 1>, scalar_prefetch = 0 : i64, scratch_operands = 1 : i64, tpu.core_type = #tpu.core_type<tc>, window_params = [{transform_indices = @transform_0, window_bounds = array<i64: 16, 784>}, {pipeline_mode = #tpu.pipeline_mode<synchronous>, transform_indices = @transform_1, window_bounds = array<i64: 476, 684>}, {pipeline_mode = #tpu.pipeline_mode<synchronous>, transform_indices = @transform_2, window_bounds = array<i64: 1, 684>}, {pipeline_mode = #tpu.pipeline_mode<synchronous>, transform_indices = @transform_3, window_bounds = array<i64: 12, 684, 128>}, {pipeline_mode = #tpu.pipeline_mode<synchronous>, transform_indices = @transform_4, window_bounds = array<i64: 1, 128>}, {pipeline_mode = #tpu.pipeline_mode<synchronous>, transform_indices = @transform_5, window_bounds = array<i64: 128, 10>}, {pipeline_mode = #tpu.pipeline_mode<synchronous>, transform_indices = @transform_6, window_bounds = array<i64: 1, 10>}, {transform_indices = @transform_7, window_bounds = array<i64: 16, 10>}]} {
    %c0 = arith.constant 0 : index
    %c0_0 = arith.constant 0 : index
    %0 = vector.load %arg1[%c0, %c0_0] : memref<16x784xbf16, #tpu.memory_space<vmem>>, vector<16x476xbf16>
    %c0_1 = arith.constant 0 : index
    %c0_2 = arith.constant 0 : index
    %1 = vector.load %arg9[%c0_1, %c0_2] : memref<192x476xbf16, #tpu.memory_space<vmem>>, vector<16x476xbf16>
    tpu.vector_store %arg9[%c0_1, %c0_2], %0 {strides = array<i32>} : memref<192x476xbf16, #tpu.memory_space<vmem>>, vector<16x476xbf16>,
    %c0_3 = arith.constant 0 : index
    %c28 = arith.constant 28 : index
    %2 = vector.load %arg1[%c0_3, %c28] : memref<16x784xbf16, #tpu.memory_space<vmem>>, vector<16x476xbf16>
    %c16 = arith.constant 16 : index
    %c0_4 = arith.constant 0 : index
    %3 = vector.load %arg9[%c16, %c0_4] : memref<192x476xbf16, #tpu.memory_space<vmem>>, vector<16x476xbf16>
    tpu.vector_store %arg9[%c16, %c0_4], %2 {strides = array<i32>} : memref<192x476xbf16, #tpu.memory_space<vmem>>, vector<16x476xbf16>,
    %c0_5 = arith.constant 0 : index
    %c56 = arith.constant 56 : index
    %4 = vector.load %arg1[%c0_5, %c56] : memref<16x784xbf16, #tpu.memory_space<vmem>>, vector<16x476xbf16>
    %c32 = arith.constant 32 : index
    %c0_6 = arith.constant 0 : index
    %5 = vector.load %arg9[%c32, %c0_6] : memref<192x476xbf16, #tpu.memory_space<vmem>>, vector<16x476xbf16>
    tpu.vector_store %arg9[%c32, %c0_6], %4 {strides = array<i32>} : memref<192x476xbf16, #tpu.memory_space<vmem>>, vector<16x476xbf16>,
    %c0_7 = arith.constant 0 : index
    %c84 = arith.constant 84 : index
    %6 = vector.load %arg1[%c0_7, %c84] : memref<16x784xbf16, #tpu.memory_space<vmem>>, vector<16x476xbf16>
    %c48 = arith.constant 48 : index
    %c0_8 = arith.constant 0 : index
    %7 = vector.load %arg9[%c48, %c0_8] : memref<192x476xbf16, #tpu.memory_space<vmem>>, vector<16x476xbf16>
    tpu.vector_store %arg9[%c48, %c0_8], %6 {strides = array<i32>} : memref<192x476xbf16, #tpu.memory_space<vmem>>, vector<16x476xbf16>,
    %c0_9 = arith.constant 0 : index
    %c112 = arith.constant 112 : index
    %8 = vector.load %arg1[%c0_9, %c112] : memref<16x784xbf16, #tpu.memory_space<vmem>>, vector<16x476xbf16>
    %c64 = arith.constant 64 : index
    %c0_10 = arith.constant 0 : index
    %9 = vector.load %arg9[%c64, %c0_10] : memref<192x476xbf16, #tpu.memory_space<vmem>>, vector<16x476xbf16>
    tpu.vector_store %arg9[%c64, %c0_10], %8 {strides = array<i32>} : memref<192x476xbf16, #tpu.memory_space<vmem>>, vector<16x476xbf16>,
    %c0_11 = arith.constant 0 : index
    %c140 = arith.constant 140 : index
    %10 = vector.load %arg1[%c0_11, %c140] : memref<16x784xbf16, #tpu.memory_space<vmem>>, vector<16x476xbf16>
    %c80 = arith.constant 80 : index
    %c0_12 = arith.constant 0 : index
    %11 = vector.load %arg9[%c80, %c0_12] : memref<192x476xbf16, #tpu.memory_space<vmem>>, vector<16x476xbf16>
    tpu.vector_store %arg9[%c80, %c0_12], %10 {strides = array<i32>} : memref<192x476xbf16, #tpu.memory_space<vmem>>, vector<16x476xbf16>,
    %c0_13 = arith.constant 0 : index
    %c168 = arith.constant 168 : index
    %12 = vector.load %arg1[%c0_13, %c168] : memref<16x784xbf16, #tpu.memory_space<vmem>>, vector<16x476xbf16>
    %c96 = arith.constant 96 : index
    %c0_14 = arith.constant 0 : index
    %13 = vector.load %arg9[%c96, %c0_14] : memref<192x476xbf16, #tpu.memory_space<vmem>>, vector<16x476xbf16>
    tpu.vector_store %arg9[%c96, %c0_14], %12 {strides = array<i32>} : memref<192x476xbf16, #tpu.memory_space<vmem>>, vector<16x476xbf16>,
    %c0_15 = arith.constant 0 : index
    %c196 = arith.constant 196 : index
    %14 = vector.load %arg1[%c0_15, %c196] : memref<16x784xbf16, #tpu.memory_space<vmem>>, vector<16x476xbf16>
    %c112_16 = arith.constant 112 : index
    %c0_17 = arith.constant 0 : index
    %15 = vector.load %arg9[%c112_16, %c0_17] : memref<192x476xbf16, #tpu.memory_space<vmem>>, vector<16x476xbf16>
    tpu.vector_store %arg9[%c112_16, %c0_17], %14 {strides = array<i32>} : memref<192x476xbf16, #tpu.memory_space<vmem>>, vector<16x476xbf16>,
    %c0_18 = arith.constant 0 : index
    %c224 = arith.constant 224 : index
    %16 = vector.load %arg1[%c0_18, %c224] : memref<16x784xbf16, #tpu.memory_space<vmem>>, vector<16x476xbf16>
    %c128 = arith.constant 128 : index
    %c0_19 = arith.constant 0 : index
    %17 = vector.load %arg9[%c128, %c0_19] : memref<192x476xbf16, #tpu.memory_space<vmem>>, vector<16x476xbf16>
    tpu.vector_store %arg9[%c128, %c0_19], %16 {strides = array<i32>} : memref<192x476xbf16, #tpu.memory_space<vmem>>, vector<16x476xbf16>,
    %c0_20 = arith.constant 0 : index
    %c252 = arith.constant 252 : index
    %18 = vector.load %arg1[%c0_20, %c252] : memref<16x784xbf16, #tpu.memory_space<vmem>>, vector<16x476xbf16>
    %c144 = arith.constant 144 : index
    %c0_21 = arith.constant 0 : index
    %19 = vector.load %arg9[%c144, %c0_21] : memref<192x476xbf16, #tpu.memory_space<vmem>>, vector<16x476xbf16>
    tpu.vector_store %arg9[%c144, %c0_21], %18 {strides = array<i32>} : memref<192x476xbf16, #tpu.memory_space<vmem>>, vector<16x476xbf16>,
    %c0_22 = arith.constant 0 : index
    %c280 = arith.constant 280 : index
    %20 = vector.load %arg1[%c0_22, %c280] : memref<16x784xbf16, #tpu.memory_space<vmem>>, vector<16x476xbf16>
    %c160 = arith.constant 160 : index
    %c0_23 = arith.constant 0 : index
    %21 = vector.load %arg9[%c160, %c0_23] : memref<192x476xbf16, #tpu.memory_space<vmem>>, vector<16x476xbf16>
    tpu.vector_store %arg9[%c160, %c0_23], %20 {strides = array<i32>} : memref<192x476xbf16, #tpu.memory_space<vmem>>, vector<16x476xbf16>,
    %c0_24 = arith.constant 0 : index
    %c308 = arith.constant 308 : index
    %22 = vector.load %arg1[%c0_24, %c308] : memref<16x784xbf16, #tpu.memory_space<vmem>>, vector<16x476xbf16>
    %c176 = arith.constant 176 : index
    %c0_25 = arith.constant 0 : index
    %23 = vector.load %arg9[%c176, %c0_25] : memref<192x476xbf16, #tpu.memory_space<vmem>>, vector<16x476xbf16>
    tpu.vector_store %arg9[%c176, %c0_25], %22 {strides = array<i32>} : memref<192x476xbf16, #tpu.memory_space<vmem>>, vector<16x476xbf16>,
    %c0_26 = arith.constant 0 : index
    %c0_27 = arith.constant 0 : index
    %24 = vector.load %arg9[%c0_26, %c0_27] : memref<192x476xbf16, #tpu.memory_space<vmem>>, vector<192x476xbf16>
    %c0_28 = arith.constant 0 : index
    %c0_29 = arith.constant 0 : index
    %25 = vector.load %arg2[%c0_28, %c0_29] : memref<476x684xbf16, #tpu.memory_space<vmem>>, vector<476x684xbf16>
    %cst = arith.constant dense<0.000000e+00> : vector<192x684xf32>
    %26 = tpu.matmul %24, %25, %cst {dimension_numbers = #tpu.dot_dimension_numbers<[1], [0], [0], [1], [0, 0, 1, 1], [], []>} : vector<192x476xbf16>, vector<476x684xbf16>, vector<192x684xf32> -> vector<192x684xf32>
    %c0_30 = arith.constant 0 : index
    %c0_31 = arith.constant 0 : index
    %27 = vector.load %arg3[%c0_30, %c0_31] : memref<1x684xf32, #tpu.memory_space<vmem>>, vector<1x684xf32>
    %28 = vector.broadcast %27 : vector<1x684xf32> to vector<192x684xf32>
    %29 = arith.addf %26, %28 : vector<192x684xf32>
    %30 = arith.truncf %29 : vector<192x684xf32> to vector<192x684xbf16>
    %31 = math.tanh %30 : vector<192x684xbf16>
    %cst_32 = arith.constant 0.000000e+00 : f32
    %32 = vector.broadcast %cst_32 : f32 to vector<16x128xf32>
    %c0_33 = arith.constant 0 : index
    %c0_34 = arith.constant 0 : index
    %33 = vector.load %arg5[%c0_33, %c0_34] : memref<1x128xf32, #tpu.memory_space<vmem>>, vector<1x128xf32>
    %34 = vector.broadcast %33 : vector<1x128xf32> to vector<16x128xf32>
    %35 = arith.addf %32, %34 : vector<16x128xf32>
    %36 = vector.extract_strided_slice %31 {offsets = [0, 0], sizes = [16, 684], strides = [1, 1]} : vector<192x684xbf16> to vector<16x684xbf16>
    %c0_35 = arith.constant 0 : index
    %c0_36 = arith.constant 0 : index
    %c0_37 = arith.constant 0 : index
    %37 = vector.load %arg4[%c0_35, %c0_36, %c0_37] : memref<12x684x128xbf16, #tpu.memory_space<vmem>>, vector<1x684x128xbf16>
    %38 = vector.shape_cast %37 : vector<1x684x128xbf16> to vector<684x128xbf16>
    %cst_38 = arith.constant dense<0.000000e+00> : vector<16x128xf32>
    %39 = tpu.matmul %36, %38, %cst_38 {dimension_numbers = #tpu.dot_dimension_numbers<[1], [0], [0], [1], [0, 0, 1, 1], [], []>} : vector<16x684xbf16>, vector<684x128xbf16>, vector<16x128xf32> -> vector<16x128xf32>
    %40 = arith.addf %35, %39 : vector<16x128xf32>
    %41 = vector.extract_strided_slice %31 {offsets = [16, 0], sizes = [16, 684], strides = [1, 1]} : vector<192x684xbf16> to vector<16x684xbf16>
    %c1 = arith.constant 1 : index
    %c0_39 = arith.constant 0 : index
    %c0_40 = arith.constant 0 : index
    %42 = vector.load %arg4[%c1, %c0_39, %c0_40] : memref<12x684x128xbf16, #tpu.memory_space<vmem>>, vector<1x684x128xbf16>
    %43 = vector.shape_cast %42 : vector<1x684x128xbf16> to vector<684x128xbf16>
    %cst_41 = arith.constant dense<0.000000e+00> : vector<16x128xf32>
    %44 = tpu.matmul %41, %43, %cst_41 {dimension_numbers = #tpu.dot_dimension_numbers<[1], [0], [0], [1], [0, 0, 1, 1], [], []>} : vector<16x684xbf16>, vector<684x128xbf16>, vector<16x128xf32> -> vector<16x128xf32>
    %45 = arith.addf %40, %44 : vector<16x128xf32>
    %46 = vector.extract_strided_slice %31 {offsets = [32, 0], sizes = [16, 684], strides = [1, 1]} : vector<192x684xbf16> to vector<16x684xbf16>
    %c2 = arith.constant 2 : index
    %c0_42 = arith.constant 0 : index
    %c0_43 = arith.constant 0 : index
    %47 = vector.load %arg4[%c2, %c0_42, %c0_43] : memref<12x684x128xbf16, #tpu.memory_space<vmem>>, vector<1x684x128xbf16>
    %48 = vector.shape_cast %47 : vector<1x684x128xbf16> to vector<684x128xbf16>
    %cst_44 = arith.constant dense<0.000000e+00> : vector<16x128xf32>
    %49 = tpu.matmul %46, %48, %cst_44 {dimension_numbers = #tpu.dot_dimension_numbers<[1], [0], [0], [1], [0, 0, 1, 1], [], []>} : vector<16x684xbf16>, vector<684x128xbf16>, vector<16x128xf32> -> vector<16x128xf32>
    %50 = arith.addf %45, %49 : vector<16x128xf32>
    %51 = vector.extract_strided_slice %31 {offsets = [48, 0], sizes = [16, 684], strides = [1, 1]} : vector<192x684xbf16> to vector<16x684xbf16>
    %c3 = arith.constant 3 : index
    %c0_45 = arith.constant 0 : index
    %c0_46 = arith.constant 0 : index
    %52 = vector.load %arg4[%c3, %c0_45, %c0_46] : memref<12x684x128xbf16, #tpu.memory_space<vmem>>, vector<1x684x128xbf16>
    %53 = vector.shape_cast %52 : vector<1x684x128xbf16> to vector<684x128xbf16>
    %cst_47 = arith.constant dense<0.000000e+00> : vector<16x128xf32>
    %54 = tpu.matmul %51, %53, %cst_47 {dimension_numbers = #tpu.dot_dimension_numbers<[1], [0], [0], [1], [0, 0, 1, 1], [], []>} : vector<16x684xbf16>, vector<684x128xbf16>, vector<16x128xf32> -> vector<16x128xf32>
    %55 = arith.addf %50, %54 : vector<16x128xf32>
    %56 = vector.extract_strided_slice %31 {offsets = [64, 0], sizes = [16, 684], strides = [1, 1]} : vector<192x684xbf16> to vector<16x684xbf16>
    %c4 = arith.constant 4 : index
    %c0_48 = arith.constant 0 : index
    %c0_49 = arith.constant 0 : index
    %57 = vector.load %arg4[%c4, %c0_48, %c0_49] : memref<12x684x128xbf16, #tpu.memory_space<vmem>>, vector<1x684x128xbf16>
    %58 = vector.shape_cast %57 : vector<1x684x128xbf16> to vector<684x128xbf16>
    %cst_50 = arith.constant dense<0.000000e+00> : vector<16x128xf32>
    %59 = tpu.matmul %56, %58, %cst_50 {dimension_numbers = #tpu.dot_dimension_numbers<[1], [0], [0], [1], [0, 0, 1, 1], [], []>} : vector<16x684xbf16>, vector<684x128xbf16>, vector<16x128xf32> -> vector<16x128xf32>
    %60 = arith.addf %55, %59 : vector<16x128xf32>
    %61 = vector.extract_strided_slice %31 {offsets = [80, 0], sizes = [16, 684], strides = [1, 1]} : vector<192x684xbf16> to vector<16x684xbf16>
    %c5 = arith.constant 5 : index
    %c0_51 = arith.constant 0 : index
    %c0_52 = arith.constant 0 : index
    %62 = vector.load %arg4[%c5, %c0_51, %c0_52] : memref<12x684x128xbf16, #tpu.memory_space<vmem>>, vector<1x684x128xbf16>
    %63 = vector.shape_cast %62 : vector<1x684x128xbf16> to vector<684x128xbf16>
    %cst_53 = arith.constant dense<0.000000e+00> : vector<16x128xf32>
    %64 = tpu.matmul %61, %63, %cst_53 {dimension_numbers = #tpu.dot_dimension_numbers<[1], [0], [0], [1], [0, 0, 1, 1], [], []>} : vector<16x684xbf16>, vector<684x128xbf16>, vector<16x128xf32> -> vector<16x128xf32>
    %65 = arith.addf %60, %64 : vector<16x128xf32>
    %66 = vector.extract_strided_slice %31 {offsets = [96, 0], sizes = [16, 684], strides = [1, 1]} : vector<192x684xbf16> to vector<16x684xbf16>
    %c6 = arith.constant 6 : index
    %c0_54 = arith.constant 0 : index
    %c0_55 = arith.constant 0 : index
    %67 = vector.load %arg4[%c6, %c0_54, %c0_55] : memref<12x684x128xbf16, #tpu.memory_space<vmem>>, vector<1x684x128xbf16>
    %68 = vector.shape_cast %67 : vector<1x684x128xbf16> to vector<684x128xbf16>
    %cst_56 = arith.constant dense<0.000000e+00> : vector<16x128xf32>
    %69 = tpu.matmul %66, %68, %cst_56 {dimension_numbers = #tpu.dot_dimension_numbers<[1], [0], [0], [1], [0, 0, 1, 1], [], []>} : vector<16x684xbf16>, vector<684x128xbf16>, vector<16x128xf32> -> vector<16x128xf32>
    %70 = arith.addf %65, %69 : vector<16x128xf32>
    %71 = vector.extract_strided_slice %31 {offsets = [112, 0], sizes = [16, 684], strides = [1, 1]} : vector<192x684xbf16> to vector<16x684xbf16>
    %c7 = arith.constant 7 : index
    %c0_57 = arith.constant 0 : index
    %c0_58 = arith.constant 0 : index
    %72 = vector.load %arg4[%c7, %c0_57, %c0_58] : memref<12x684x128xbf16, #tpu.memory_space<vmem>>, vector<1x684x128xbf16>
    %73 = vector.shape_cast %72 : vector<1x684x128xbf16> to vector<684x128xbf16>
    %cst_59 = arith.constant dense<0.000000e+00> : vector<16x128xf32>
    %74 = tpu.matmul %71, %73, %cst_59 {dimension_numbers = #tpu.dot_dimension_numbers<[1], [0], [0], [1], [0, 0, 1, 1], [], []>} : vector<16x684xbf16>, vector<684x128xbf16>, vector<16x128xf32> -> vector<16x128xf32>
    %75 = arith.addf %70, %74 : vector<16x128xf32>
    %76 = vector.extract_strided_slice %31 {offsets = [128, 0], sizes = [16, 684], strides = [1, 1]} : vector<192x684xbf16> to vector<16x684xbf16>
    %c8 = arith.constant 8 : index
    %c0_60 = arith.constant 0 : index
    %c0_61 = arith.constant 0 : index
    %77 = vector.load %arg4[%c8, %c0_60, %c0_61] : memref<12x684x128xbf16, #tpu.memory_space<vmem>>, vector<1x684x128xbf16>
    %78 = vector.shape_cast %77 : vector<1x684x128xbf16> to vector<684x128xbf16>
    %cst_62 = arith.constant dense<0.000000e+00> : vector<16x128xf32>
    %79 = tpu.matmul %76, %78, %cst_62 {dimension_numbers = #tpu.dot_dimension_numbers<[1], [0], [0], [1], [0, 0, 1, 1], [], []>} : vector<16x684xbf16>, vector<684x128xbf16>, vector<16x128xf32> -> vector<16x128xf32>
    %80 = arith.addf %75, %79 : vector<16x128xf32>
    %81 = vector.extract_strided_slice %31 {offsets = [144, 0], sizes = [16, 684], strides = [1, 1]} : vector<192x684xbf16> to vector<16x684xbf16>
    %c9 = arith.constant 9 : index
    %c0_63 = arith.constant 0 : index
    %c0_64 = arith.constant 0 : index
    %82 = vector.load %arg4[%c9, %c0_63, %c0_64] : memref<12x684x128xbf16, #tpu.memory_space<vmem>>, vector<1x684x128xbf16>
    %83 = vector.shape_cast %82 : vector<1x684x128xbf16> to vector<684x128xbf16>
    %cst_65 = arith.constant dense<0.000000e+00> : vector<16x128xf32>
    %84 = tpu.matmul %81, %83, %cst_65 {dimension_numbers = #tpu.dot_dimension_numbers<[1], [0], [0], [1], [0, 0, 1, 1], [], []>} : vector<16x684xbf16>, vector<684x128xbf16>, vector<16x128xf32> -> vector<16x128xf32>
    %85 = arith.addf %80, %84 : vector<16x128xf32>
    %86 = vector.extract_strided_slice %31 {offsets = [160, 0], sizes = [16, 684], strides = [1, 1]} : vector<192x684xbf16> to vector<16x684xbf16>
    %c10 = arith.constant 10 : index
    %c0_66 = arith.constant 0 : index
    %c0_67 = arith.constant 0 : index
    %87 = vector.load %arg4[%c10, %c0_66, %c0_67] : memref<12x684x128xbf16, #tpu.memory_space<vmem>>, vector<1x684x128xbf16>
    %88 = vector.shape_cast %87 : vector<1x684x128xbf16> to vector<684x128xbf16>
    %cst_68 = arith.constant dense<0.000000e+00> : vector<16x128xf32>
    %89 = tpu.matmul %86, %88, %cst_68 {dimension_numbers = #tpu.dot_dimension_numbers<[1], [0], [0], [1], [0, 0, 1, 1], [], []>} : vector<16x684xbf16>, vector<684x128xbf16>, vector<16x128xf32> -> vector<16x128xf32>
    %90 = arith.addf %85, %89 : vector<16x128xf32>
    %91 = vector.extract_strided_slice %31 {offsets = [176, 0], sizes = [16, 684], strides = [1, 1]} : vector<192x684xbf16> to vector<16x684xbf16>
    %c11 = arith.constant 11 : index
    %c0_69 = arith.constant 0 : index
    %c0_70 = arith.constant 0 : index
    %92 = vector.load %arg4[%c11, %c0_69, %c0_70] : memref<12x684x128xbf16, #tpu.memory_space<vmem>>, vector<1x684x128xbf16>
    %93 = vector.shape_cast %92 : vector<1x684x128xbf16> to vector<684x128xbf16>
    %cst_71 = arith.constant dense<0.000000e+00> : vector<16x128xf32>
    %94 = tpu.matmul %91, %93, %cst_71 {dimension_numbers = #tpu.dot_dimension_numbers<[1], [0], [0], [1], [0, 0, 1, 1], [], []>} : vector<16x684xbf16>, vector<684x128xbf16>, vector<16x128xf32> -> vector<16x128xf32>
    %95 = arith.addf %90, %94 : vector<16x128xf32>
    %c0_72 = arith.constant 0 : index
    %c0_73 = arith.constant 0 : index
    %96 = vector.load %arg6[%c0_72, %c0_73] : memref<128x10xf32, #tpu.memory_space<vmem>>, vector<128x10xf32>
    %cst_74 = arith.constant dense<0.000000e+00> : vector<16x10xf32>
    %97 = tpu.matmul %95, %96, %cst_74 {dimension_numbers = #tpu.dot_dimension_numbers<[1], [0], [0], [1], [0, 0, 1, 1], [], []>} : vector<16x128xf32>, vector<128x10xf32>, vector<16x10xf32> -> vector<16x10xf32>
    %c0_75 = arith.constant 0 : index
    %c0_76 = arith.constant 0 : index
    %98 = vector.load %arg7[%c0_75, %c0_76] : memref<1x10xf32, #tpu.memory_space<vmem>>, vector<1x10xf32>
    %99 = vector.broadcast %98 : vector<1x10xf32> to vector<16x10xf32>
    %100 = arith.addf %97, %99 : vector<16x10xf32>
    %cst_77 = arith.constant dense<0xFF800000> : vector<16xf32>
    %101 = vector.multi_reduction <maximumf>, %100, %cst_77 [1] : vector<16x10xf32> to vector<16xf32>
    %102 = vector.shape_cast %101 : vector<16xf32> to vector<16x1xf32>
    %103 = vector.broadcast %102 : vector<16x1xf32> to vector<16x10xf32>
    %104 = arith.subf %100, %103 : vector<16x10xf32>
    %105 = math.exp %104 : vector<16x10xf32>
    %cst_78 = arith.constant dense<0.000000e+00> : vector<16xf32>
    %106 = vector.multi_reduction <add>, %105, %cst_78 [1] : vector<16x10xf32> to vector<16xf32>
    %107 = vector.shape_cast %106 : vector<16xf32> to vector<16x1xf32>
    %108 = math.log %107 : vector<16x1xf32>
    %109 = vector.broadcast %108 : vector<16x1xf32> to vector<16x10xf32>
    %110 = arith.subf %104, %109 : vector<16x10xf32>
    %c0_79 = arith.constant 0 : index
    %c0_80 = arith.constant 0 : index
    %111 = vector.load %arg8[%c0_79, %c0_80] : memref<16x10xf32, #tpu.memory_space<vmem>>, vector<16x10xf32>
    tpu.vector_store %arg8[%c0_79, %c0_80], %110 {strides = array<i32>} : memref<16x10xf32, #tpu.memory_space<vmem>>, vector<16x10xf32>,
    return
  }
  func.func @transform_0(%arg0: i32) -> (i32, i32) {
    %c0_i32 = arith.constant 0 : i32
    %c0_i32_0 = arith.constant 0 : i32
    return %arg0, %c0_i32 : i32, i32
  }
  func.func @transform_1(%arg0: i32) -> (i32, i32) {
    %c0_i32 = arith.constant 0 : i32
    %c0_i32_0 = arith.constant 0 : i32
    %c0_i32_1 = arith.constant 0 : i32
    return %c0_i32, %c0_i32_0 : i32, i32
  }
  func.func @transform_2(%arg0: i32) -> (i32, i32) {
    %c0_i32 = arith.constant 0 : i32
    %c0_i32_0 = arith.constant 0 : i32
    %c0_i32_1 = arith.constant 0 : i32
    return %c0_i32, %c0_i32_0 : i32, i32
  }
  func.func @transform_3(%arg0: i32) -> (i32, i32, i32) {
    %c0_i32 = arith.constant 0 : i32
    %c0_i32_0 = arith.constant 0 : i32
    %c0_i32_1 = arith.constant 0 : i32
    %c0_i32_2 = arith.constant 0 : i32
    return %c0_i32, %c0_i32_0, %c0_i32_1 : i32, i32, i32
  }
  func.func @transform_4(%arg0: i32) -> (i32, i32) {
    %c0_i32 = arith.constant 0 : i32
    %c0_i32_0 = arith.constant 0 : i32
    %c0_i32_1 = arith.constant 0 : i32
    return %c0_i32, %c0_i32_0 : i32, i32
  }
  func.func @transform_5(%arg0: i32) -> (i32, i32) {
    %c0_i32 = arith.constant 0 : i32
    %c0_i32_0 = arith.constant 0 : i32
    %c0_i32_1 = arith.constant 0 : i32
    return %c0_i32, %c0_i32_0 : i32, i32
  }
  func.func @transform_6(%arg0: i32) -> (i32, i32) {
    %c0_i32 = arith.constant 0 : i32
    %c0_i32_0 = arith.constant 0 : i32
    %c0_i32_1 = arith.constant 0 : i32
    return %c0_i32, %c0_i32_0 : i32, i32
  }
  func.func @transform_7(%arg0: i32) -> (i32, i32) {
    %c0_i32 = arith.constant 0 : i32
    %c0_i32_0 = arith.constant 0 : i32
    return %arg0, %c0_i32 : i32, i32
  }
}

</mosaic_0001>

<llo_original>
// kernel: tile.8
$region0: #{tile.8}
  #allocation0 [shape = 's32[1]{0}', space=sflag, size = 0x4, scoped, tag = 'scoped memory for tile.8']
  %s0 = inlined_call_operand.vmem [shape: f32[57], index: 0, kind: input, shape index: {}]
  %s1 = inlined_call_operand.vmem [shape: f32[12,57], index: 1, kind: output, shape index: {}]
  // Predicated region
  $region2: #{tile.8} parent=0 // pred_check
    _
  $region3: #{tile.8} parent=0 // pred_check_branch
    %3 = sbr.rel (0) target = $region5
  $region4: #{tile.8} parent=0 // pred_region
    _
  $region5: #{tile.8} parent=0 // pred_fallthru
    _
  %v4 = vld [vmem:[%s0] ss:$0 sm:$0xff]
  %5 = vst [vmem:[%s1] sm:$0xff] %v4
  %s6 = scalar_lea.vmem %s1, 8
  %7 = vst [vmem:[%s6] sm:$0xff] %v4

// kernel: tile.9
$region0: #{tile.9}
  %s0 = inlined_call_operand.vmem [shape: f32[12,57], index: 0, kind: input, shape index: {}]
  %s1 = inlined_call_operand.vmem [shape: f32[1,684], index: 1, kind: output, shape index: {}]
  $region1: #{tile.9} parent=0
    #allocation0 [shape = 'u8[24576]{0}', space=vmem, size = 0x6000, scoped, tag = 'scoped mem for output reshape']
    %v2 = vld [vmem:[%s0] sm:$0x1]
    %vm3 = vcmask 465920
    %4 = vst.msk [vmem:[#allocation0] sm:$0x1] %vm3, %v2
    %s5 = scalar_lea.vmem %s0, 11
    %v6 = vld [vmem:[%s5] sm:$0x1]
    %s7 = scalar_lea.vmem %s0, 11
    %v8 = vld [vmem:[%s7] sm:$0x1]
    %vm9 = vcmask 105472
    %v10 = vsel %vm9, %v8, %v6
    %11 = vrot.lane.b32.xlu0 %v10, 115
    %v12 = vpop.permute.xlu0 %11
    %vm13 = vcmask 359424
    %s14 = scalar_lea.vmem [#allocation0], 40
    %15 = vst.msk [vmem:[%s14] sm:$0x1] %vm13, %v12
    %vm16 = vcmask 1048472
    %s17 = scalar_lea.vmem [#allocation0], 32
    %18 = vst.msk [vmem:[%s17] sm:$0x1] %vm16, %v12
    %s19 = scalar_lea.vmem %s0, 2
    %v20 = vld [vmem:[%s19] sm:$0x1]
    %s21 = scalar_lea.vmem %s0, 2
    %v22 = vld [vmem:[%s21] sm:$0x1]
    %vm23 = vcmask 113664
    %v24 = vsel %vm23, %v22, %v20
    %25 = vrot.lane.b32.xlu0 %v24, 114
    %v26 = vpop.permute.xlu0 %25
    %vm27 = vcmask 351232
    %s28 = scalar_lea.vmem [#allocation0], 8
    %29 = vst.msk [vmem:[%s28] sm:$0x1] %vm27, %v26
    %vm30 = vcmask 1048464
    %31 = vst.msk [vmem:[#allocation0] sm:$0x1] %vm30, %v26
    %s32 = scalar_lea.vmem %s0, 4
    %v33 = vld [vmem:[%s32] sm:$0x1]
    %s34 = scalar_lea.vmem %s0, 4
    %v35 = vld [vmem:[%s34] sm:$0x1]
    %vm36 = vcmask 228352
    %v37 = vsel %vm36, %v35, %v33
    %38 = vrot.lane.b32.xlu0 %v37, 100
    %v39 = vpop.permute.xlu0 %38
    %vm40 = vcmask 236544
    %s41 = scalar_lea.vmem [#allocation0], 16
    %42 = vst.msk [vmem:[%s41] sm:$0x1] %vm40, %v39
    %vm43 = vcmask 1048352
    %s44 = scalar_lea.vmem [#allocation0], 8
    %45 = vst.msk [vmem:[%s44] sm:$0x1] %vm43, %v39
    %s46 = scalar_lea.vmem %s0, 6
    %v47 = vld [vmem:[%s46] sm:$0x1]
    %s48 = scalar_lea.vmem %s0, 6
    %v49 = vld [vmem:[%s48] sm:$0x1]
    %vm50 = vcmask 343040
    %v51 = vsel %vm50, %v49, %v47
    %52 = vrot.lane.b32.xlu0 %v51, 86
    %v53 = vpop.permute.xlu0 %52
    %vm54 = vcmask 121856
    %s55 = scalar_lea.vmem [#allocation0], 24
    %56 = vst.msk [vmem:[%s55] sm:$0x1] %vm54, %v53
    %vm57 = vcmask 1048240
    %s58 = scalar_lea.vmem [#allocation0], 16
    %59 = vst.msk [vmem:[%s58] sm:$0x1] %vm57, %v53
    %s60 = scalar_lea.vmem %s0, 8
    %v61 = vld [vmem:[%s60] sm:$0x1]
    %s62 = scalar_lea.vmem %s0, 8
    %v63 = vld [vmem:[%s62] sm:$0x1]
    %vm64 = vcmask 457728
    %v65 = vsel %vm64, %v63, %v61
    %66 = vrot.lane.b32.xlu0 %v65, 72
    %v67 = vpop.permute.xlu0 %66
    %vm68 = vcmask 7168
    %s69 = scalar_lea.vmem [#allocation0], 32
    %70 = vst.msk [vmem:[%s69] sm:$0x1] %vm68, %v67
    %vm71 = vcmask 1048128
    %s72 = scalar_lea.vmem [#allocation0], 24
    %73 = vst.msk [vmem:[%s72] sm:$0x1] %vm71, %v67
    %s74 = scalar_lea.vmem %s0, 10
    %v75 = vld [vmem:[%s74] sm:$0x1]
    %76 = vrot.lane.b32.xlu0 %v75, 58
    %v77 = vpop.permute.xlu0 %76
    %vm78 = vcmask 941520
    %s79 = scalar_lea.vmem [#allocation0], 32
    %80 = vst.msk [vmem:[%s79] sm:$0x1] %vm78, %v77
    %s81 = scalar_lea.vmem %s0, 1
    %v82 = vld [vmem:[%s81] sm:$0x1]
    %83 = vrot.lane.b32.xlu0 %v82, 57
    %v84 = vpop.permute.xlu0 %83
    %vm85 = vcmask 933320
    %86 = vst.msk [vmem:[#allocation0] sm:$0x1] %vm85, %v84
    %s87 = scalar_lea.vmem %s0, 3
    %v88 = vld [vmem:[%s87] sm:$0x1]
    %89 = vrot.lane.b32.xlu0 %v88, 43
    %v90 = vpop.permute.xlu0 %89
    %vm91 = vcmask 818520
    %s92 = scalar_lea.vmem [#allocation0], 8
    %93 = vst.msk [vmem:[%s92] sm:$0x1] %vm91, %v90
    %s94 = scalar_lea.vmem %s0, 5
    %v95 = vld [vmem:[%s94] sm:$0x1]
    %96 = vrot.lane.b32.xlu0 %v95, 29
    %v97 = vpop.permute.xlu0 %96
    %vm98 = vcmask 703720
    %s99 = scalar_lea.vmem [#allocation0], 16
    %100 = vst.msk [vmem:[%s99] sm:$0x1] %vm98, %v97
    %s101 = scalar_lea.vmem %s0, 7
    %v102 = vld [vmem:[%s101] sm:$0x1]
    %103 = vrot.lane.b32.xlu0 %v102, 15
    %v104 = vpop.permute.xlu0 %103
    %vm105 = vcmask 588920
    %s106 = scalar_lea.vmem [#allocation0], 24
    %107 = vst.msk [vmem:[%s106] sm:$0x1] %vm105, %v104
    %s108 = scalar_lea.vmem %s0, 9
    %v109 = vld [vmem:[%s108] sm:$0x1]
    %110 = vrot.lane.b32.xlu0 %v109, 1
    %v111 = vpop.permute.xlu0 %110
    %vm112 = vcmask 474120
    %s113 = scalar_lea.vmem [#allocation0], 32
    %114 = vst.msk [vmem:[%s113] sm:$0x1] %vm112, %v111
    %s116 = sshll.u32 1, 1
    %s117 = ssub.s32 %s116, 1
    %v119 = vld [vmem:[#allocation0] sm:%s117]
    %s120 = sshll.u32 1, 1
    %s121 = ssub.s32 %s120, 1
    %122 = vst [vmem:[%s1] sm:%s121] %v119
    %s123 = scalar_lea.vmem [#allocation0], 8
    %v124 = vld [vmem:[%s123] sm:%s117]
    %s125 = sshll.u32 1, 1
    %s126 = ssub.s32 %s125, 1
    %s127 = scalar_lea.vmem %s1, 1
    %128 = vst [vmem:[%s127] sm:%s126] %v124
    %s129 = scalar_lea.vmem [#allocation0], 16
    %v130 = vld [vmem:[%s129] sm:%s117]
    %s131 = sshll.u32 1, 1
    %s132 = ssub.s32 %s131, 1
    %s133 = smul.addr 1, 2
    %s134 = scalar_lea.vmem %s1, %s133
    %135 = vst [vmem:[%s134] sm:%s132] %v130
    %s136 = scalar_lea.vmem [#allocation0], 24
    %v137 = vld [vmem:[%s136] sm:%s117]
    %s138 = sshll.u32 1, 1
    %s139 = ssub.s32 %s138, 1
    %s140 = smul.addr 1, 3
    %s141 = scalar_lea.vmem %s1, %s140
    %142 = vst [vmem:[%s141] sm:%s139] %v137
    %s143 = scalar_lea.vmem [#allocation0], 32
    %v144 = vld [vmem:[%s143] sm:%s117]
    %s145 = sshll.u32 1, 1
    %s146 = ssub.s32 %s145, 1
    %s147 = smul.addr 1, 4
    %s148 = scalar_lea.vmem %s1, %s147
    %149 = vst [vmem:[%s148] sm:%s146] %v144
    %s150 = scalar_lea.vmem [#allocation0], 40
    %v151 = vld [vmem:[%s150] sm:%s117]
    %s152 = sshll.u32 1, 1
    %s153 = ssub.s32 %s152, 1
    %s154 = smul.addr 1, 5
    %s155 = scalar_lea.vmem %s1, %s154
    %156 = vst [vmem:[%s155] sm:%s153] %v151

// kernel: conv2d_then_linear_48.1
$region0: #{conv2d_then_linear_48.1}
  #allocation0 [shape = 'u32[]', space=smem, size = 0x4, offset = 0x4, fixed_abs, tag = 'smem constant byte address 0x4 - core index']
  #allocation1 [shape = 'u32[144,128]{1,0:T(1,128)}', space=vmem, size = 0x12000, scoped, tag = 'internal scratch']
  #allocation2 [shape = 'bf16[192,476]{1,0:T(8,128)(2,1)}', space=vmem, size = 0x30000, scoped, tag = 'scratch operand']
  %s0 = inlined_call_operand.vmem [shape: bf16[16,784], index: 0, kind: input, shape index: {}]
  %s1 = inlined_call_operand.vmem [shape: bf16[476,684], index: 1, kind: input, shape index: {}]
  %s2 = inlined_call_operand.vmem [shape: f32[1,684], index: 2, kind: input, shape index: {}]
  %s3 = inlined_call_operand.vmem [shape: bf16[12,684,128], index: 3, kind: input, shape index: {}]
  %s4 = inlined_call_operand.vmem [shape: f32[1,128], index: 4, kind: input, shape index: {}]
  %s5 = inlined_call_operand.vmem [shape: f32[128,10], index: 5, kind: input, shape index: {}]
  %s6 = inlined_call_operand.vmem [shape: f32[1,10], index: 6, kind: input, shape index: {}]
  %s7 = inlined_call_operand.vmem [shape: f32[16,10], index: 7, kind: output, shape index: {}]
  %s8 = sld [smem:[#allocation0]]
  $region38: #{conv2d_then_linear_48.1} parent=0
    _
  %s10 = ssub.s32 1, %s8
  %s11 = scalar_select 0, %s10, %s8
  // Predicated region
  $region2: #{conv2d_then_linear_48.1} parent=0 // pred_check
    _
  $region3: #{conv2d_then_linear_48.1} parent=0 // pred_check_branch
    %13 = sbr.rel (0) target = $region5
  $region4: #{conv2d_then_linear_48.1} parent=0 // pred_region
    _
  $region5: #{conv2d_then_linear_48.1} parent=0 // pred_fallthru
    _
  // Predicated region
  $region6: #{conv2d_then_linear_48.1} parent=0 // pred_check
    _
  $region7: #{conv2d_then_linear_48.1} parent=0 // pred_check_branch
    %15 = sbr.rel (0) target = $region9
  $region8: #{conv2d_then_linear_48.1} parent=0 // pred_region
    _
  $region9: #{conv2d_then_linear_48.1} parent=0 // pred_fallthru
    _
  // Predicated region
  $region10: #{conv2d_then_linear_48.1} parent=0 // pred_check
    _
  $region11: #{conv2d_then_linear_48.1} parent=0 // pred_check_branch
    %17 = sbr.rel (0) target = $region13
  $region12: #{conv2d_then_linear_48.1} parent=0 // pred_region
    _
  $region13: #{conv2d_then_linear_48.1} parent=0 // pred_fallthru
    _
  // Predicated region
  $region14: #{conv2d_then_linear_48.1} parent=0 // pred_check
    _
  $region15: #{conv2d_then_linear_48.1} parent=0 // pred_check_branch
    %19 = sbr.rel (0) target = $region17
  $region16: #{conv2d_then_linear_48.1} parent=0 // pred_region
    _
  $region17: #{conv2d_then_linear_48.1} parent=0 // pred_fallthru
    _
  // Predicated region
  $region18: #{conv2d_then_linear_48.1} parent=0 // pred_check
    _
  $region19: #{conv2d_then_linear_48.1} parent=0 // pred_check_branch
    %21 = sbr.rel (0) target = $region21
  $region20: #{conv2d_then_linear_48.1} parent=0 // pred_region
    _
  $region21: #{conv2d_then_linear_48.1} parent=0 // pred_fallthru
    _
  // Predicated region
  $region22: #{conv2d_then_linear_48.1} parent=0 // pred_check
    _
  $region23: #{conv2d_then_linear_48.1} parent=0 // pred_check_branch
    %23 = sbr.rel (0) target = $region25
  $region24: #{conv2d_then_linear_48.1} parent=0 // pred_region
    _
  $region25: #{conv2d_then_linear_48.1} parent=0 // pred_fallthru
    _
  // Predicated region
  $region26: #{conv2d_then_linear_48.1} parent=0 // pred_check
    _
  $region27: #{conv2d_then_linear_48.1} parent=0 // pred_check_branch
    %25 = sbr.rel (0) target = $region29
  $region28: #{conv2d_then_linear_48.1} parent=0 // pred_region
    _
  $region29: #{conv2d_then_linear_48.1} parent=0 // pred_fallthru
    _
  %v27 = vld [vmem:[%s0] sm:$0xff]
  %v28 = vld [vmem:[%s0 + $0x8] sm:$0xff]
  %v29 = vld [vmem:[%s0 + $0x1c] sm:$0xff]
  %v30 = vld [vmem:[%s0 + $0x24] sm:$0xff]
  %31 = vst [vmem:[#allocation2] sm:$0xff] %v27
  %vm32 = vcmask 1043456
  %vm33 = vcmask 752644
  %vm34 = vmor %vm33, %vm32
  %35 = vst.msk [vmem:[#allocation2 + $0x8] sm:$0xff] %vm34, %v28
  %36 = vst [vmem:[#allocation2 + $0x10] sm:$0xff] %v29
  %37 = vst.msk [vmem:[#allocation2 + $0x18] sm:$0xff] %vm34, %v30
  %v38 = vld [vmem:[%s0] sm:$0xff]
  %v39 = vld [vmem:[%s0 + $0x8] sm:$0xff]
  %v40 = vld [vmem:[%s0 + $0x1c] sm:$0xff]
  %v41 = vld [vmem:[%s0 + $0x24] sm:$0xff]
  %46 = vrot.lane.b32.xlu0 %v38, 100
  %v47 = vpop.permute.xlu0 %46
  %48 = vrot.lane.b32.xlu0 %v39, 100
  %v49 = vpop.permute.xlu0 %48
  %50 = vrot.lane.b32.xlu0 %v40, 100
  %v51 = vpop.permute.xlu0 %50
  %52 = vrot.lane.b32.xlu0 %v41, 100
  %v53 = vpop.permute.xlu0 %52
  %v54 = vrot.slane %v47, 4
  %v55 = vrot.slane %v49, 4
  %v56 = vrot.slane %v51, 4
  %v57 = vrot.slane %v53, 4
  %vm58 = vcmask 1043456
  %v59 = vsel %vm58, %v54, %v55
  %vm60 = vcmask 818176
  %v61 = vsel %vm60, %v47, %v59
  %v62 = vsel %vm60, %v49, %v55
  %v63 = vsel %vm58, %v56, %v57
  %v64 = vsel %vm60, %v51, %v63
  %v65 = vsel %vm60, %v53, %v57
  %70 = vst [vmem:[#allocation2 + $0x20] sm:$0xff] %v61
  %71 = vst.msk [vmem:[#allocation2 + $0x28] sm:$0xff] %vm34, %v62
  %72 = vst [vmem:[#allocation2 + $0x30] sm:$0xff] %v64
  %73 = vst.msk [vmem:[#allocation2 + $0x38] sm:$0xff] %vm34, %v65
  %v74 = vld [vmem:[%s0] sm:$0xff]
  %v75 = vld [vmem:[%s0 + $0x8] sm:$0xff]
  %v76 = vld [vmem:[%s0 + $0x10] sm:$0xf]
  %v77 = vld [vmem:[%s0 + $0x1c] sm:$0xff]
  %v78 = vld [vmem:[%s0 + $0x24] sm:$0xff]
  %v79 = vld [vmem:[%s0 + $0x2c] sm:$0xf]
  %86 = vrot.lane.b32.xlu0 %v74, 72
  %v87 = vpop.permute.xlu0 %86
  %88 = vrot.lane.b32.xlu0 %v75, 72
  %v89 = vpop.permute.xlu0 %88
  %90 = vrot.lane.b32.xlu0 %v76, 72
  %v91 = vpop.permute.xlu0 %90
  %92 = vrot.lane.b32.xlu0 %v77, 72
  %v93 = vpop.permute.xlu0 %92
  %94 = vrot.lane.b32.xlu0 %v78, 72
  %v95 = vpop.permute.xlu0 %94
  %96 = vrot.lane.b32.xlu0 %v79, 72
  %v97 = vpop.permute.xlu0 %96
  %v98 = vrot.slane %v87, 4
  %v99 = vrot.slane %v89, 4
  %v100 = vrot.slane %v91, 4
  %v101 = vrot.slane %v93, 4
  %v102 = vrot.slane %v95, 4
  %v103 = vrot.slane %v97, 4
  %v104 = vsel %vm58, %v98, %v99
  %vm105 = vcmask 588800
  %v106 = vsel %vm105, %v87, %v104
  %v107 = vsel %vm58, %v99, %v100
  %v108 = vsel %vm105, %v89, %v107
  %v109 = vsel %vm58, %v101, %v102
  %v110 = vsel %vm105, %v93, %v109
  %v111 = vsel %vm58, %v102, %v103
  %v112 = vsel %vm105, %v95, %v111
  %117 = vst [vmem:[#allocation2 + $0x40] sm:$0xff] %v106
  %118 = vst.msk [vmem:[#allocation2 + $0x48] sm:$0xff] %vm34, %v108
  %119 = vst [vmem:[#allocation2 + $0x50] sm:$0xff] %v110
  %120 = vst.msk [vmem:[#allocation2 + $0x58] sm:$0xff] %vm34, %v112
  %v121 = vld [vmem:[%s0] sm:$0xff]
  %v122 = vld [vmem:[%s0 + $0x8] sm:$0xff]
  %v123 = vld [vmem:[%s0 + $0x10] sm:$0xf]
  %v124 = vld [vmem:[%s0 + $0x1c] sm:$0xff]
  %v125 = vld [vmem:[%s0 + $0x24] sm:$0xff]
  %v126 = vld [vmem:[%s0 + $0x2c] sm:$0xf]
  %133 = vrot.lane.b32.xlu0 %v121, 44
  %v134 = vpop.permute.xlu0 %133
  %135 = vrot.lane.b32.xlu0 %v122, 44
  %v136 = vpop.permute.xlu0 %135
  %137 = vrot.lane.b32.xlu0 %v123, 44
  %v138 = vpop.permute.xlu0 %137
  %139 = vrot.lane.b32.xlu0 %v124, 44
  %v140 = vpop.permute.xlu0 %139
  %141 = vrot.lane.b32.xlu0 %v125, 44
  %v142 = vpop.permute.xlu0 %141
  %143 = vrot.lane.b32.xlu0 %v126, 44
  %v144 = vpop.permute.xlu0 %143
  %v145 = vrot.slane %v134, 4
  %v146 = vrot.slane %v136, 4
  %v147 = vrot.slane %v138, 4
  %v148 = vrot.slane %v140, 4
  %v149 = vrot.slane %v142, 4
  %v150 = vrot.slane %v144, 4
  %v151 = vsel %vm58, %v145, %v146
  %vm152 = vcmask 359424
  %v153 = vsel %vm152, %v134, %v151
  %v154 = vsel %vm58, %v146, %v147
  %v155 = vsel %vm152, %v136, %v154
  %v156 = vsel %vm58, %v148, %v149
  %v157 = vsel %vm152, %v140, %v156
  %v158 = vsel %vm58, %v149, %v150
  %v159 = vsel %vm152, %v142, %v158
  %164 = vst [vmem:[#allocation2 + $0x60] sm:$0xff] %v153
  %165 = vst.msk [vmem:[#allocation2 + $0x68] sm:$0xff] %vm34, %v155
  %166 = vst [vmem:[#allocation2 + $0x70] sm:$0xff] %v157
  %167 = vst.msk [vmem:[#allocation2 + $0x78] sm:$0xff] %vm34, %v159
  %v168 = vld [vmem:[%s0] sm:$0xff]
  %v169 = vld [vmem:[%s0 + $0x8] sm:$0xff]
  %v170 = vld [vmem:[%s0 + $0x10] sm:$0xf]
  %v171 = vld [vmem:[%s0 + $0x1c] sm:$0xff]
  %v172 = vld [vmem:[%s0 + $0x24] sm:$0xff]
  %v173 = vld [vmem:[%s0 + $0x2c] sm:$0xf]
  %180 = vrot.lane.b32.xlu0 %v168, 16
  %v181 = vpop.permute.xlu0 %180
  %182 = vrot.lane.b32.xlu0 %v169, 16
  %v183 = vpop.permute.xlu0 %182
  %184 = vrot.lane.b32.xlu0 %v170, 16
  %v185 = vpop.permute.xlu0 %184
  %186 = vrot.lane.b32.xlu0 %v171, 16
  %v187 = vpop.permute.xlu0 %186
  %188 = vrot.lane.b32.xlu0 %v172, 16
  %v189 = vpop.permute.xlu0 %188
  %190 = vrot.lane.b32.xlu0 %v173, 16
  %v191 = vpop.permute.xlu0 %190
  %v192 = vrot.slane %v181, 4
  %v193 = vrot.slane %v183, 4
  %v194 = vrot.slane %v185, 4
  %v195 = vrot.slane %v187, 4
  %v196 = vrot.slane %v189, 4
  %v197 = vrot.slane %v191, 4
  %v198 = vsel %vm58, %v192, %v193
  %vm199 = vcmask 130048
  %v200 = vsel %vm199, %v181, %v198
  %v201 = vsel %vm58, %v193, %v194
  %v202 = vsel %vm199, %v183, %v201
  %v203 = vsel %vm58, %v195, %v196
  %v204 = vsel %vm199, %v187, %v203
  %v205 = vsel %vm58, %v196, %v197
  %v206 = vsel %vm199, %v189, %v205
  %211 = vst [vmem:[#allocation2 + $0x80] sm:$0xff] %v200
  %212 = vst.msk [vmem:[#allocation2 + $0x88] sm:$0xff] %vm34, %v202
  %213 = vst [vmem:[#allocation2 + $0x90] sm:$0xff] %v204
  %214 = vst.msk [vmem:[#allocation2 + $0x98] sm:$0xff] %vm34, %v206
  %v215 = vld [vmem:[%s0 + $0x4] sm:$0xff]
  %v216 = vld [vmem:[%s0 + $0xc] sm:$0xff]
  %v217 = vld [vmem:[%s0 + $0x20] sm:$0xff]
  %v218 = vld [vmem:[%s0 + $0x28] sm:$0xff]
  %223 = vrot.lane.b32.xlu0 %v215, 116
  %v224 = vpop.permute.xlu0 %223
  %225 = vrot.lane.b32.xlu0 %v216, 116
  %v226 = vpop.permute.xlu0 %225
  %227 = vrot.lane.b32.xlu0 %v217, 116
  %v228 = vpop.permute.xlu0 %227
  %229 = vrot.lane.b32.xlu0 %v218, 116
  %v230 = vpop.permute.xlu0 %229
  %v231 = vrot.slane %v224, 4
  %v232 = vrot.slane %v226, 4
  %v233 = vrot.slane %v228, 4
  %v234 = vrot.slane %v230, 4
  %v235 = vsel %vm58, %v231, %v232
  %vm236 = vcmask 949248
  %v237 = vsel %vm236, %v224, %v235
  %v238 = vsel %vm236, %v226, %v232
  %v239 = vsel %vm58, %v233, %v234
  %v240 = vsel %vm236, %v228, %v239
  %v241 = vsel %vm236, %v230, %v234
  %246 = vst [vmem:[#allocation2 + $0xa0] sm:$0xff] %v237
  %247 = vst.msk [vmem:[#allocation2 + $0xa8] sm:$0xff] %vm34, %v238
  %248 = vst [vmem:[#allocation2 + $0xb0] sm:$0xff] %v240
  %249 = vst.msk [vmem:[#allocation2 + $0xb8] sm:$0xff] %vm34, %v241
  %v250 = vld [vmem:[%s0 + $0x4] sm:$0xff]
  %v251 = vld [vmem:[%s0 + $0xc] sm:$0xff]
  %v252 = vld [vmem:[%s0 + $0x14] sm:$0xf]
  %v253 = vld [vmem:[%s0 + $0x20] sm:$0xff]
  %v254 = vld [vmem:[%s0 + $0x28] sm:$0xff]
  %v255 = vld [vmem:[%s0 + $0x30] sm:$0xf]
  %262 = vrot.lane.b32.xlu0 %v250, 88
  %v263 = vpop.permute.xlu0 %262
  %264 = vrot.lane.b32.xlu0 %v251, 88
  %v265 = vpop.permute.xlu0 %264
  %266 = vrot.lane.b32.xlu0 %v252, 88
  %v267 = vpop.permute.xlu0 %266
  %268 = vrot.lane.b32.xlu0 %v253, 88
  %v269 = vpop.permute.xlu0 %268
  %270 = vrot.lane.b32.xlu0 %v254, 88
  %v271 = vpop.permute.xlu0 %270
  %272 = vrot.lane.b32.xlu0 %v255, 88
  %v273 = vpop.permute.xlu0 %272
  %v274 = vrot.slane %v263, 4
  %v275 = vrot.slane %v265, 4
  %v276 = vrot.slane %v267, 4
  %v277 = vrot.slane %v269, 4
  %v278 = vrot.slane %v271, 4
  %v279 = vrot.slane %v273, 4
  %v280 = vsel %vm58, %v274, %v275
  %vm281 = vcmask 719872
  %v282 = vsel %vm281, %v263, %v280
  %v283 = vsel %vm58, %v275, %v276
  %v284 = vsel %vm281, %v265, %v283
  %v285 = vsel %vm58, %v277, %v278
  %v286 = vsel %vm281, %v269, %v285
  %v287 = vsel %vm58, %v278, %v279
  %v288 = vsel %vm281, %v271, %v287
  %293 = vst [vmem:[#allocation2 + $0xc0] sm:$0xff] %v282
  %294 = vst.msk [vmem:[#allocation2 + $0xc8] sm:$0xff] %vm34, %v284
  %295 = vst [vmem:[#allocation2 + $0xd0] sm:$0xff] %v286
  %296 = vst.msk [vmem:[#allocation2 + $0xd8] sm:$0xff] %vm34, %v288
  %v297 = vld [vmem:[%s0 + $0x4] sm:$0xff]
  %v298 = vld [vmem:[%s0 + $0xc] sm:$0xff]
  %v299 = vld [vmem:[%s0 + $0x14] sm:$0xf]
  %v300 = vld [vmem:[%s0 + $0x20] sm:$0xff]
  %v301 = vld [vmem:[%s0 + $0x28] sm:$0xff]
  %v302 = vld [vmem:[%s0 + $0x30] sm:$0xf]
  %309 = vrot.lane.b32.xlu0 %v297, 60
  %v310 = vpop.permute.xlu0 %309
  %311 = vrot.lane.b32.xlu0 %v298, 60
  %v312 = vpop.permute.xlu0 %311
  %313 = vrot.lane.b32.xlu0 %v299, 60
  %v314 = vpop.permute.xlu0 %313
  %315 = vrot.lane.b32.xlu0 %v300, 60
  %v316 = vpop.permute.xlu0 %315
  %317 = vrot.lane.b32.xlu0 %v301, 60
  %v318 = vpop.permute.xlu0 %317
  %319 = vrot.lane.b32.xlu0 %v302, 60
  %v320 = vpop.permute.xlu0 %319
  %v321 = vrot.slane %v310, 4
  %v322 = vrot.slane %v312, 4
  %v323 = vrot.slane %v314, 4
  %v324 = vrot.slane %v316, 4
  %v325 = vrot.slane %v318, 4
  %v326 = vrot.slane %v320, 4
  %v327 = vsel %vm58, %v321, %v322
  %vm328 = vcmask 490496
  %v329 = vsel %vm328, %v310, %v327
  %v330 = vsel %vm58, %v322, %v323
  %v331 = vsel %vm328, %v312, %v330
  %v332 = vsel %vm58, %v324, %v325
  %v333 = vsel %vm328, %v316, %v332
  %v334 = vsel %vm58, %v325, %v326
  %v335 = vsel %vm328, %v318, %v334
  %340 = vst [vmem:[#allocation2 + $0xe0] sm:$0xff] %v329
  %341 = vst.msk [vmem:[#allocation2 + $0xe8] sm:$0xff] %vm34, %v331
  %342 = vst [vmem:[#allocation2 + $0xf0] sm:$0xff] %v333
  %343 = vst.msk [vmem:[#allocation2 + $0xf8] sm:$0xff] %vm34, %v335
  %v344 = vld [vmem:[%s0 + $0x4] sm:$0xff]
  %v345 = vld [vmem:[%s0 + $0xc] sm:$0xff]
  %v346 = vld [vmem:[%s0 + $0x14] sm:$0xf]
  %v347 = vld [vmem:[%s0 + $0x20] sm:$0xff]
  %v348 = vld [vmem:[%s0 + $0x28] sm:$0xff]
  %v349 = vld [vmem:[%s0 + $0x30] sm:$0xf]
  %356 = vrot.lane.b32.xlu0 %v344, 32
  %v357 = vpop.permute.xlu0 %356
  %358 = vrot.lane.b32.xlu0 %v345, 32
  %v359 = vpop.permute.xlu0 %358
  %360 = vrot.lane.b32.xlu0 %v346, 32
  %v361 = vpop.permute.xlu0 %360
  %362 = vrot.lane.b32.xlu0 %v347, 32
  %v363 = vpop.permute.xlu0 %362
  %364 = vrot.lane.b32.xlu0 %v348, 32
  %v365 = vpop.permute.xlu0 %364
  %366 = vrot.lane.b32.xlu0 %v349, 32
  %v367 = vpop.permute.xlu0 %366
  %v368 = vrot.slane %v357, 4
  %v369 = vrot.slane %v359, 4
  %v370 = vrot.slane %v361, 4
  %v371 = vrot.slane %v363, 4
  %v372 = vrot.slane %v365, 4
  %v373 = vrot.slane %v367, 4
  %v374 = vsel %vm58, %v368, %v369
  %vm375 = vcmask 261120
  %v376 = vsel %vm375, %v357, %v374
  %v377 = vsel %vm58, %v369, %v370
  %v378 = vsel %vm375, %v359, %v377
  %v379 = vsel %vm58, %v371, %v372
  %v380 = vsel %vm375, %v363, %v379
  %v381 = vsel %vm58, %v372, %v373
  %v382 = vsel %vm375, %v365, %v381
  %387 = vst [vmem:[#allocation2 + $0x100] sm:$0xff] %v376
  %388 = vst.msk [vmem:[#allocation2 + $0x108] sm:$0xff] %vm34, %v378
  %389 = vst [vmem:[#allocation2 + $0x110] sm:$0xff] %v380
  %390 = vst.msk [vmem:[#allocation2 + $0x118] sm:$0xff] %vm34, %v382
  %v391 = vld [vmem:[%s0 + $0x4] sm:$0xff]
  %v392 = vld [vmem:[%s0 + $0xc] sm:$0xff]
  %v393 = vld [vmem:[%s0 + $0x14] sm:$0xf]
  %v394 = vld [vmem:[%s0 + $0x20] sm:$0xff]
  %v395 = vld [vmem:[%s0 + $0x28] sm:$0xff]
  %v396 = vld [vmem:[%s0 + $0x30] sm:$0xf]
  %403 = vrot.lane.b32.xlu0 %v391, 4
  %v404 = vpop.permute.xlu0 %403
  %405 = vrot.lane.b32.xlu0 %v392, 4
  %v406 = vpop.permute.xlu0 %405
  %407 = vrot.lane.b32.xlu0 %v393, 4
  %v408 = vpop.permute.xlu0 %407
  %409 = vrot.lane.b32.xlu0 %v394, 4
  %v410 = vpop.permute.xlu0 %409
  %411 = vrot.lane.b32.xlu0 %v395, 4
  %v412 = vpop.permute.xlu0 %411
  %413 = vrot.lane.b32.xlu0 %v396, 4
  %v414 = vpop.permute.xlu0 %413
  %v415 = vrot.slane %v404, 4
  %v416 = vrot.slane %v406, 4
  %v417 = vrot.slane %v408, 4
  %v418 = vrot.slane %v410, 4
  %v419 = vrot.slane %v412, 4
  %v420 = vrot.slane %v414, 4
  %v421 = vsel %vm58, %v415, %v416
  %vm422 = vcmask 31744
  %v423 = vsel %vm422, %v404, %v421
  %v424 = vsel %vm58, %v416, %v417
  %v425 = vsel %vm422, %v406, %v424
  %v426 = vsel %vm58, %v418, %v419
  %v427 = vsel %vm422, %v410, %v426
  %v428 = vsel %vm58, %v419, %v420
  %v429 = vsel %vm422, %v412, %v428
  %434 = vst [vmem:[#allocation2 + $0x120] sm:$0xff] %v423
  %435 = vst.msk [vmem:[#allocation2 + $0x128] sm:$0xff] %vm34, %v425
  %436 = vst [vmem:[#allocation2 + $0x130] sm:$0xff] %v427
  %437 = vst.msk [vmem:[#allocation2 + $0x138] sm:$0xff] %vm34, %v429
  %v438 = vld [vmem:[%s0 + $0x8] sm:$0xff]
  %v439 = vld [vmem:[%s0 + $0x10] sm:$0xff]
  %v440 = vld [vmem:[%s0 + $0x24] sm:$0xff]
  %v441 = vld [vmem:[%s0 + $0x2c] sm:$0xff]
  %446 = vrot.lane.b32.xlu0 %v438, 104
  %v447 = vpop.permute.xlu0 %446
  %448 = vrot.lane.b32.xlu0 %v439, 104
  %v449 = vpop.permute.xlu0 %448
  %450 = vrot.lane.b32.xlu0 %v440, 104
  %v451 = vpop.permute.xlu0 %450
  %452 = vrot.lane.b32.xlu0 %v441, 104
  %v453 = vpop.permute.xlu0 %452
  %v454 = vrot.slane %v447, 4
  %v455 = vrot.slane %v449, 4
  %v456 = vrot.slane %v451, 4
  %v457 = vrot.slane %v453, 4
  %v458 = vsel %vm58, %v454, %v455
  %vm459 = vcmask 850944
  %v460 = vsel %vm459, %v447, %v458
  %v461 = vsel %vm459, %v449, %v455
  %v462 = vsel %vm58, %v456, %v457
  %v463 = vsel %vm459, %v451, %v462
  %v464 = vsel %vm459, %v453, %v457
  %469 = vst [vmem:[#allocation2 + $0x140] sm:$0xff] %v460
  %470 = vst.msk [vmem:[#allocation2 + $0x148] sm:$0xff] %vm34, %v461
  %471 = vst [vmem:[#allocation2 + $0x150] sm:$0xff] %v463
  %472 = vst.msk [vmem:[#allocation2 + $0x158] sm:$0xff] %vm34, %v464
  %v473 = vld [vmem:[%s0 + $0x8] sm:$0xff]
  %v474 = vld [vmem:[%s0 + $0x10] sm:$0xff]
  %v475 = vld [vmem:[%s0 + $0x18] sm:$0xf]
  %v476 = vld [vmem:[%s0 + $0x24] sm:$0xff]
  %v477 = vld [vmem:[%s0 + $0x2c] sm:$0xff]
  %v478 = vld [vmem:[%s0 + $0x34] sm:$0xf]
  %485 = vrot.lane.b32.xlu0 %v473, 76
  %v486 = vpop.permute.xlu0 %485
  %487 = vrot.lane.b32.xlu0 %v474, 76
  %v488 = vpop.permute.xlu0 %487
  %489 = vrot.lane.b32.xlu0 %v475, 76
  %v490 = vpop.permute.xlu0 %489
  %491 = vrot.lane.b32.xlu0 %v476, 76
  %v492 = vpop.permute.xlu0 %491
  %493 = vrot.lane.b32.xlu0 %v477, 76
  %v494 = vpop.permute.xlu0 %493
  %495 = vrot.lane.b32.xlu0 %v478, 76
  %v496 = vpop.permute.xlu0 %495
  %v497 = vrot.slane %v486, 4
  %v498 = vrot.slane %v488, 4
  %v499 = vrot.slane %v490, 4
  %v500 = vrot.slane %v492, 4
  %v501 = vrot.slane %v494, 4
  %v502 = vrot.slane %v496, 4
  %v503 = vsel %vm58, %v497, %v498
  %vm504 = vcmask 621568
  %v505 = vsel %vm504, %v486, %v503
  %v506 = vsel %vm58, %v498, %v499
  %v507 = vsel %vm504, %v488, %v506
  %v508 = vsel %vm58, %v500, %v501
  %v509 = vsel %vm504, %v492, %v508
  %v510 = vsel %vm58, %v501, %v502
  %v511 = vsel %vm504, %v494, %v510
  %516 = vst [vmem:[#allocation2 + $0x160] sm:$0xff] %v505
  %517 = vst.msk [vmem:[#allocation2 + $0x168] sm:$0xff] %vm34, %v507
  %518 = vst [vmem:[#allocation2 + $0x170] sm:$0xff] %v509
  %519 = vst.msk [vmem:[#allocation2 + $0x178] sm:$0xff] %vm34, %v511
  %v520 = vld [vmem:[#allocation2] sm:$0xff]
  %v521 = vld [vmem:[#allocation2 + $0x8] sm:$0xff]
  %v522 = vld [vmem:[#allocation2 + $0x10] sm:$0xff]
  %v523 = vld [vmem:[#allocation2 + $0x18] sm:$0xff]
  %v524 = vld [vmem:[#allocation2 + $0x20] sm:$0xff]
  %v525 = vld [vmem:[#allocation2 + $0x28] sm:$0xff]
  %v526 = vld [vmem:[#allocation2 + $0x30] sm:$0xff]
  %v527 = vld [vmem:[#allocation2 + $0x38] sm:$0xff]
  %v528 = vld [vmem:[#allocation2 + $0x40] sm:$0xff]
  %v529 = vld [vmem:[#allocation2 + $0x48] sm:$0xff]
  %v530 = vld [vmem:[#allocation2 + $0x50] sm:$0xff]
  %v531 = vld [vmem:[#allocation2 + $0x58] sm:$0xff]
  %v532 = vld [vmem:[#allocation2 + $0x60] sm:$0xff]
  %v533 = vld [vmem:[#allocation2 + $0x68] sm:$0xff]
  %v534 = vld [vmem:[#allocation2 + $0x70] sm:$0xff]
  %v535 = vld [vmem:[#allocation2 + $0x78] sm:$0xff]
  %v536 = vld [vmem:[#allocation2 + $0x80] sm:$0xff]
  %v537 = vld [vmem:[#allocation2 + $0x88] sm:$0xff]
  %v538 = vld [vmem:[#allocation2 + $0x90] sm:$0xff]
  %v539 = vld [vmem:[#allocation2 + $0x98] sm:$0xff]
  %v540 = vld [vmem:[#allocation2 + $0xa0] sm:$0xff]
  %v541 = vld [vmem:[#allocation2 + $0xa8] sm:$0xff]
  %v542 = vld [vmem:[#allocation2 + $0xb0] sm:$0xff]
  %v543 = vld [vmem:[#allocation2 + $0xb8] sm:$0xff]
  %v544 = vld [vmem:[#allocation2 + $0xc0] sm:$0xff]
  %v545 = vld [vmem:[#allocation2 + $0xc8] sm:$0xff]
  %v546 = vld [vmem:[#allocation2 + $0xd0] sm:$0xff]
  %v547 = vld [vmem:[#allocation2 + $0xd8] sm:$0xff]
  %v548 = vld [vmem:[#allocation2 + $0xe0] sm:$0xff]
  %v549 = vld [vmem:[#allocation2 + $0xe8] sm:$0xff]
  %v550 = vld [vmem:[#allocation2 + $0xf0] sm:$0xff]
  %v551 = vld [vmem:[#allocation2 + $0xf8] sm:$0xff]
  %v552 = vld [vmem:[#allocation2 + $0x100] sm:$0xff]
  %v553 = vld [vmem:[#allocation2 + $0x108] sm:$0xff]
  %v554 = vld [vmem:[#allocation2 + $0x110] sm:$0xff]
  %v555 = vld [vmem:[#allocation2 + $0x118] sm:$0xff]
  %v556 = vld [vmem:[#allocation2 + $0x120] sm:$0xff]
  %v557 = vld [vmem:[#allocation2 + $0x128] sm:$0xff]
  %v558 = vld [vmem:[#allocation2 + $0x130] sm:$0xff]
  %v559 = vld [vmem:[#allocation2 + $0x138] sm:$0xff]
  %v560 = vld [vmem:[#allocation2 + $0x140] sm:$0xff]
  %v561 = vld [vmem:[#allocation2 + $0x148] sm:$0xff]
  %v562 = vld [vmem:[#allocation2 + $0x150] sm:$0xff]
  %v563 = vld [vmem:[#allocation2 + $0x158] sm:$0xff]
  %v564 = vld [vmem:[#allocation2 + $0x160] sm:$0xff]
  %v565 = vld [vmem:[#allocation2 + $0x168] sm:$0xff]
  %v566 = vld [vmem:[#allocation2 + $0x170] sm:$0xff]
  %v567 = vld [vmem:[#allocation2 + $0x178] sm:$0xff]
  %v568 = vld [vmem:[%s1] sm:$0xff]
  %v569 = vld [vmem:[%s1 + $0x8] sm:$0xff]
  %v570 = vld [vmem:[%s1 + $0x10] sm:$0xff]
  %v571 = vld [vmem:[%s1 + $0x18] sm:$0xff]
  %v572 = vld [vmem:[%s1 + $0x20] sm:$0xff]
  %v573 = vld [vmem:[%s1 + $0x28] sm:$0xff]
  %v574 = vld [vmem:[%s1 + $0x30] sm:$0xff]
  %v575 = vld [vmem:[%s1 + $0x38] sm:$0xff]
  %v576 = vld [vmem:[%s1 + $0x40] sm:$0xff]
  %v577 = vld [vmem:[%s1 + $0x48] sm:$0xff]
  %v578 = vld [vmem:[%s1 + $0x50] sm:$0xff]
  %v579 = vld [vmem:[%s1 + $0x58] sm:$0xff]
  %v580 = vld [vmem:[%s1 + $0x60] sm:$0xff]
  %v581 = vld [vmem:[%s1 + $0x68] sm:$0xff]
  %v582 = vld [vmem:[%s1 + $0x70] sm:$0xff]
  %v583 = vld [vmem:[%s1 + $0x78] sm:$0xff]
  %v584 = vld [vmem:[%s1 + $0x80] sm:$0xff]
  %v585 = vld [vmem:[%s1 + $0x88] sm:$0xff]
  %v586 = vld [vmem:[%s1 + $0x90] sm:$0xff]
  %v587 = vld [vmem:[%s1 + $0x98] sm:$0xff]
  %v588 = vld [vmem:[%s1 + $0xa0] sm:$0xff]
  %v589 = vld [vmem:[%s1 + $0xa8] sm:$0xff]
  %v590 = vld [vmem:[%s1 + $0xb0] sm:$0xff]
  %v591 = vld [vmem:[%s1 + $0xb8] sm:$0xff]
  %v592 = vld [vmem:[%s1 + $0xc0] sm:$0xff]
  %v593 = vld [vmem:[%s1 + $0xc8] sm:$0xff]
  %v594 = vld [vmem:[%s1 + $0xd0] sm:$0xff]
  %v595 = vld [vmem:[%s1 + $0xd8] sm:$0xff]
  %v596 = vld [vmem:[%s1 + $0xe0] sm:$0xff]
  %v597 = vld [vmem:[%s1 + $0xe8] sm:$0xff]
  %v598 = vld [vmem:[%s1 + $0xf0] sm:$0xff]
  %v599 = vld [vmem:[%s1 + $0xf8] sm:$0xff]
  %v600 = vld [vmem:[%s1 + $0x100] sm:$0xff]
  %v601 = vld [vmem:[%s1 + $0x108] sm:$0xff]
  %v602 = vld [vmem:[%s1 + $0x110] sm:$0xff]
  %v603 = vld [vmem:[%s1 + $0x118] sm:$0xff]
  %v604 = vld [vmem:[%s1 + $0x120] sm:$0xff]
  %v605 = vld [vmem:[%s1 + $0x128] sm:$0xff]
  %v606 = vld [vmem:[%s1 + $0x130] sm:$0xff]
  %v607 = vld [vmem:[%s1 + $0x138] sm:$0xff]
  %v608 = vld [vmem:[%s1 + $0x140] sm:$0xff]
  %v609 = vld [vmem:[%s1 + $0x148] sm:$0xff]
  %v610 = vld [vmem:[%s1 + $0x150] sm:$0xff]
  %v611 = vld [vmem:[%s1 + $0x158] sm:$0xff]
  %v612 = vld [vmem:[%s1 + $0x160] sm:$0xff]
  %v613 = vld [vmem:[%s1 + $0x168] sm:$0xff]
  %v614 = vld [vmem:[%s1 + $0x170] sm:$0xff]
  %v615 = vld [vmem:[%s1 + $0x178] sm:$0xff]
  %v616 = vld [vmem:[%s1 + $0x180] sm:$0xff]
  %v617 = vld [vmem:[%s1 + $0x188] sm:$0xff]
  %v618 = vld [vmem:[%s1 + $0x190] sm:$0xff]
  %v619 = vld [vmem:[%s1 + $0x198] sm:$0xff]
  %v620 = vld [vmem:[%s1 + $0x1a0] sm:$0xff]
  %v621 = vld [vmem:[%s1 + $0x1a8] sm:$0xff]
  %v622 = vld [vmem:[%s1 + $0x1b0] sm:$0xff]
  %v623 = vld [vmem:[%s1 + $0x1b8] sm:$0xff]
  %v624 = vld [vmem:[%s1 + $0x1c0] sm:$0xff]
  %v625 = vld [vmem:[%s1 + $0x1c8] sm:$0xff]
  %v626 = vld [vmem:[%s1 + $0x1d0] sm:$0xff]
  %v627 = vld [vmem:[%s1 + $0x1d8] sm:$0xff]
  %v628 = vld [vmem:[%s1 + $0x1e0] sm:$0xff]
  %v629 = vld [vmem:[%s1 + $0x1e8] sm:$0xff]
  %v630 = vld [vmem:[%s1 + $0x1f0] sm:$0xff]
  %v631 = vld [vmem:[%s1 + $0x1f8] sm:$0xff]
  %v632 = vld [vmem:[%s1 + $0x200] sm:$0xff]
  %v633 = vld [vmem:[%s1 + $0x208] sm:$0xff]
  %v634 = vld [vmem:[%s1 + $0x210] sm:$0xff]
  %v635 = vld [vmem:[%s1 + $0x218] sm:$0xff]
  %v636 = vld [vmem:[%s1 + $0x220] sm:$0xff]
  %v637 = vld [vmem:[%s1 + $0x228] sm:$0xff]
  %v638 = vld [vmem:[%s1 + $0x230] sm:$0xff]
  %v639 = vld [vmem:[%s1 + $0x238] sm:$0xff]
  %v640 = vld [vmem:[%s1 + $0x240] sm:$0xff]
  %v641 = vld [vmem:[%s1 + $0x248] sm:$0xff]
  %v642 = vld [vmem:[%s1 + $0x250] sm:$0xff]
  %v643 = vld [vmem:[%s1 + $0x258] sm:$0xff]
  %v644 = vld [vmem:[%s1 + $0x260] sm:$0xff]
  %v645 = vld [vmem:[%s1 + $0x268] sm:$0xff]
  %v646 = vld [vmem:[%s1 + $0x270] sm:$0xff]
  %v647 = vld [vmem:[%s1 + $0x278] sm:$0xff]
  %v648 = vld [vmem:[%s1 + $0x280] sm:$0xff]
  %v649 = vld [vmem:[%s1 + $0x288] sm:$0xff]
  %v650 = vld [vmem:[%s1 + $0x290] sm:$0xff]
  %v651 = vld [vmem:[%s1 + $0x298] sm:$0xff]
  %v652 = vld [vmem:[%s1 + $0x2a0] sm:$0xff]
  %v653 = vld [vmem:[%s1 + $0x2a8] sm:$0xff]
  %v654 = vld [vmem:[%s1 + $0x2b0] sm:$0xff]
  %v655 = vld [vmem:[%s1 + $0x2b8] sm:$0xff]
  %v656 = vld [vmem:[%s1 + $0x2c0] sm:$0xff]
  %v657 = vld [vmem:[%s1 + $0x2c8] sm:$0xff]
  %v658 = vld [vmem:[%s1 + $0x2d0] sm:$0xff]
  %v659 = vld [vmem:[%s1 + $0x2d8] sm:$0xff]
  %v660 = vld [vmem:[%s1 + $0x2e0] sm:$0xff]
  %v661 = vld [vmem:[%s1 + $0x2e8] sm:$0xff]
  %v662 = vld [vmem:[%s1 + $0x2f0] sm:$0xff]
  %v663 = vld [vmem:[%s1 + $0x2f8] sm:$0xff]
  %v664 = vld [vmem:[%s1 + $0x300] sm:$0xff]
  %v665 = vld [vmem:[%s1 + $0x308] sm:$0xff]
  %v666 = vld [vmem:[%s1 + $0x310] sm:$0xff]
  %v667 = vld [vmem:[%s1 + $0x318] sm:$0xff]
  %v668 = vld [vmem:[%s1 + $0x320] sm:$0xff]
  %v669 = vld [vmem:[%s1 + $0x328] sm:$0xff]
  %v670 = vld [vmem:[%s1 + $0x330] sm:$0xff]
  %v671 = vld [vmem:[%s1 + $0x338] sm:$0xff]
  %v672 = vld [vmem:[%s1 + $0x340] sm:$0xff]
  %v673 = vld [vmem:[%s1 + $0x348] sm:$0xff]
  %v674 = vld [vmem:[%s1 + $0x350] sm:$0xff]
  %v675 = vld [vmem:[%s1 + $0x358] sm:$0xff]
  %v676 = vld [vmem:[%s1 + $0x360] sm:$0xff]
  %v677 = vld [vmem:[%s1 + $0x368] sm:$0xff]
  %v678 = vld [vmem:[%s1 + $0x370] sm:$0xff]
  %v679 = vld [vmem:[%s1 + $0x378] sm:$0xff]
  %v680 = vld [vmem:[%s1 + $0x380] sm:$0xff]
  %v681 = vld [vmem:[%s1 + $0x388] sm:$0xff]
  %v682 = vld [vmem:[%s1 + $0x390] sm:$0xff]
  %v683 = vld [vmem:[%s1 + $0x398] sm:$0xff]
  %v684 = vld [vmem:[%s1 + $0x3a0] sm:$0xff]
  %v685 = vld [vmem:[%s1 + $0x3a8] sm:$0xff]
  %v686 = vld [vmem:[%s1 + $0x3b0] sm:$0xff]
  %v687 = vld [vmem:[%s1 + $0x3b8] sm:$0xff]
  %v688 = vld [vmem:[%s1 + $0x3c0] sm:$0xff]
  %v689 = vld [vmem:[%s1 + $0x3c8] sm:$0xff]
  %v690 = vld [vmem:[%s1 + $0x3d0] sm:$0xff]
  %v691 = vld [vmem:[%s1 + $0x3d8] sm:$0xff]
  %v692 = vld [vmem:[%s1 + $0x3e0] sm:$0xff]
  %v693 = vld [vmem:[%s1 + $0x3e8] sm:$0xff]
  %v694 = vld [vmem:[%s1 + $0x3f0] sm:$0xff]
  %v695 = vld [vmem:[%s1 + $0x3f8] sm:$0xff]
  %v696 = vld [vmem:[%s1 + $0x400] sm:$0xff]
  %v697 = vld [vmem:[%s1 + $0x408] sm:$0xff]
  %v698 = vld [vmem:[%s1 + $0x410] sm:$0xff]
  %v699 = vld [vmem:[%s1 + $0x418] sm:$0xff]
  %v700 = vld [vmem:[%s1 + $0x420] sm:$0xff]
  %v701 = vld [vmem:[%s1 + $0x428] sm:$0xff]
  %v702 = vld [vmem:[%s1 + $0x430] sm:$0xff]
  %v703 = vld [vmem:[%s1 + $0x438] sm:$0xff]
  %v704 = vld [vmem:[%s1 + $0x440] sm:$0xff]
  %v705 = vld [vmem:[%s1 + $0x448] sm:$0xff]
  %v706 = vld [vmem:[%s1 + $0x450] sm:$0xff]
  %v707 = vld [vmem:[%s1 + $0x458] sm:$0xff]
  %v708 = vld [vmem:[%s1 + $0x460] sm:$0xff]
  %v709 = vld [vmem:[%s1 + $0x468] sm:$0xff]
  %v710 = vld [vmem:[%s1 + $0x470] sm:$0xff]
  %v711 = vld [vmem:[%s1 + $0x478] sm:$0xff]
  %v712 = vld [vmem:[%s1 + $0x480] sm:$0xff]
  %v713 = vld [vmem:[%s1 + $0x488] sm:$0xff]
  %v714 = vld [vmem:[%s1 + $0x490] sm:$0xff]
  %v715 = vld [vmem:[%s1 + $0x498] sm:$0xff]
  %v716 = vld [vmem:[%s1 + $0x4a0] sm:$0xff]
  %v717 = vld [vmem:[%s1 + $0x4a8] sm:$0xff]
  %v718 = vld [vmem:[%s1 + $0x4b0] sm:$0xff]
  %v719 = vld [vmem:[%s1 + $0x4b8] sm:$0xff]
  %v720 = vld [vmem:[%s1 + $0x4c0] sm:$0xff]
  %v721 = vld [vmem:[%s1 + $0x4c8] sm:$0xff]
  %v722 = vld [vmem:[%s1 + $0x4d0] sm:$0xff]
  %v723 = vld [vmem:[%s1 + $0x4d8] sm:$0xff]
  %v724 = vld [vmem:[%s1 + $0x4e0] sm:$0xff]
  %v725 = vld [vmem:[%s1 + $0x4e8] sm:$0xff]
  %v726 = vld [vmem:[%s1 + $0x4f0] sm:$0xff]
  %v727 = vld [vmem:[%s1 + $0x4f8] sm:$0xff]
  %v728 = vld [vmem:[%s1 + $0x500] sm:$0xff]
  %v729 = vld [vmem:[%s1 + $0x508] sm:$0xff]
  %v730 = vld [vmem:[%s1 + $0x510] sm:$0xff]
  %v731 = vld [vmem:[%s1 + $0x518] sm:$0xff]
  %v732 = vld [vmem:[%s1 + $0x520] sm:$0xff]
  %v733 = vld [vmem:[%s1 + $0x528] sm:$0xff]
  %v734 = vld [vmem:[%s1 + $0x530] sm:$0xff]
  %v735 = vld [vmem:[%s1 + $0x538] sm:$0xff]
  %v736 = vld [vmem:[%s1 + $0x540] sm:$0xff]
  %v737 = vld [vmem:[%s1 + $0x548] sm:$0xff]
  %v738 = vld [vmem:[%s1 + $0x550] sm:$0xff]
  %v739 = vld [vmem:[%s1 + $0x558] sm:$0xff]
  %v740 = vld [vmem:[%s1 + $0x560] sm:$0xff]
  %v741 = vld [vmem:[%s1 + $0x568] sm:$0xff]
  %v742 = vld [vmem:[%s1 + $0x570] sm:$0xff]
  %v743 = vld [vmem:[%s1 + $0x578] sm:$0xff]
  %v744 = vld [vmem:[%s1 + $0x580] sm:$0xff]
  %v745 = vld [vmem:[%s1 + $0x588] sm:$0x33]
  %v746 = vld [vmem:[%s1 + $0x590] sm:$0x33]
  %v747 = vld [vmem:[%s1 + $0x598] sm:$0x33]
  %v748 = vld [vmem:[%s2] sm:$0x3f]
  %v750 = vlaneseq
  %v751 = vshrl.u32 %v750, 7
  %v752 = vsub.s32 0, %v751
  %v753 = vrot.slane %v748, %v752
  %v754 = vlaneseq
  %v755 = vshrl.u32 %v754, 7
  %v756 = vsub.s32 1, %v755
  %v757 = vrot.slane %v748, %v756
  %v758 = vlaneseq
  %v759 = vshrl.u32 %v758, 7
  %v760 = vsub.s32 2, %v759
  %v761 = vrot.slane %v748, %v760
  %v762 = vlaneseq
  %v763 = vshrl.u32 %v762, 7
  %v764 = vsub.s32 3, %v763
  %v765 = vrot.slane %v748, %v764
  %v766 = vlaneseq
  %v767 = vshrl.u32 %v766, 7
  %v768 = vsub.s32 4, %v767
  %v769 = vrot.slane %v748, %v768
  %v770 = vlaneseq
  %v771 = vshrl.u32 %v770, 7
  %v772 = vsub.s32 5, %v771
  %v773 = vrot.slane %v748, %v772
  %v828 = vunpack.c.l.b16 %v520
  %v829 = vunpack.c.h.b16 %v520
  %v830 = vunpack.c.l.b16 %v521
  %v831 = vunpack.c.h.b16 %v521
  %v832 = vunpack.c.l.b16 %v522
  %v833 = vunpack.c.h.b16 %v522
  %v834 = vunpack.c.l.b16 %v523
  %v835 = vunpack.c.h.b16 %v523
  %v836 = vunpack.c.l.b16 %v524
  %v837 = vunpack.c.h.b16 %v524
  %v838 = vunpack.c.l.b16 %v525
  %v839 = vunpack.c.h.b16 %v525
  %v840 = vunpack.c.l.b16 %v526
  %v841 = vunpack.c.h.b16 %v526
  %v842 = vunpack.c.l.b16 %v527
  %v843 = vunpack.c.h.b16 %v527
  %v844 = vunpack.c.l.b16 %v528
  %v845 = vunpack.c.h.b16 %v528
  %v846 = vunpack.c.l.b16 %v529
  %v847 = vunpack.c.h.b16 %v529
  %v848 = vunpack.c.l.b16 %v530
  %v849 = vunpack.c.h.b16 %v530
  %v850 = vunpack.c.l.b16 %v531
  %v851 = vunpack.c.h.b16 %v531
  %v852 = vunpack.c.l.b16 %v532
  %v853 = vunpack.c.h.b16 %v532
  %v854 = vunpack.c.l.b16 %v533
  %v855 = vunpack.c.h.b16 %v533
  %v856 = vunpack.c.l.b16 %v534
  %v857 = vunpack.c.h.b16 %v534
  %v858 = vunpack.c.l.b16 %v535
  %v859 = vunpack.c.h.b16 %v535
  %v860 = vunpack.c.l.b16 %v536
  %v861 = vunpack.c.h.b16 %v536
  %v862 = vunpack.c.l.b16 %v537
  %v863 = vunpack.c.h.b16 %v537
  %v864 = vunpack.c.l.b16 %v538
  %v865 = vunpack.c.h.b16 %v538
  %v866 = vunpack.c.l.b16 %v539
  %v867 = vunpack.c.h.b16 %v539
  %v868 = vunpack.c.l.b16 %v540
  %v869 = vunpack.c.h.b16 %v540
  %v870 = vunpack.c.l.b16 %v541
  %v871 = vunpack.c.h.b16 %v541
  %v872 = vunpack.c.l.b16 %v542
  %v873 = vunpack.c.h.b16 %v542
  %v874 = vunpack.c.l.b16 %v543
  %v875 = vunpack.c.h.b16 %v543
  %v876 = vunpack.c.l.b16 %v544
  %v877 = vunpack.c.h.b16 %v544
  %v878 = vunpack.c.l.b16 %v545
  %v879 = vunpack.c.h.b16 %v545
  %v880 = vunpack.c.l.b16 %v546
  %v881 = vunpack.c.h.b16 %v546
  %v882 = vunpack.c.l.b16 %v547
  %v883 = vunpack.c.h.b16 %v547
  %v884 = vunpack.c.l.b16 %v548
  %v885 = vunpack.c.h.b16 %v548
  %v886 = vunpack.c.l.b16 %v549
  %v887 = vunpack.c.h.b16 %v549
  %v888 = vunpack.c.l.b16 %v550
  %v889 = vunpack.c.h.b16 %v550
  %v890 = vunpack.c.l.b16 %v551
  %v891 = vunpack.c.h.b16 %v551
  %v892 = vunpack.c.l.b16 %v552
  %v893 = vunpack.c.h.b16 %v552
  %v894 = vunpack.c.l.b16 %v553
  %v895 = vunpack.c.h.b16 %v553
  %v896 = vunpack.c.l.b16 %v554
  %v897 = vunpack.c.h.b16 %v554
  %v898 = vunpack.c.l.b16 %v555
  %v899 = vunpack.c.h.b16 %v555
  %v900 = vunpack.c.l.b16 %v556
  %v901 = vunpack.c.h.b16 %v556
  %v902 = vunpack.c.l.b16 %v557
  %v903 = vunpack.c.h.b16 %v557
  %v904 = vunpack.c.l.b16 %v558
  %v905 = vunpack.c.h.b16 %v558
  %v906 = vunpack.c.l.b16 %v559
  %v907 = vunpack.c.h.b16 %v559
  %v908 = vunpack.c.l.b16 %v560
  %v909 = vunpack.c.h.b16 %v560
  %v910 = vunpack.c.l.b16 %v561
  %v911 = vunpack.c.h.b16 %v561
  %v912 = vunpack.c.l.b16 %v562
  %v913 = vunpack.c.h.b16 %v562
  %v914 = vunpack.c.l.b16 %v563
  %v915 = vunpack.c.h.b16 %v563
  %v916 = vunpack.c.l.b16 %v564
  %v917 = vunpack.c.h.b16 %v564
  %v918 = vunpack.c.l.b16 %v565
  %v919 = vunpack.c.h.b16 %v565
  %v920 = vunpack.c.l.b16 %v566
  %v921 = vunpack.c.h.b16 %v566
  %v922 = vunpack.c.l.b16 %v567
  %v923 = vunpack.c.h.b16 %v567
  %v924 = vpack.c.b16 %v832, %v828
  %v925 = vpack.c.b16 %v833, %v829
  %v926 = vpack.c.b16 %v834, %v830
  %v927 = vpack.c.b16 %v835, %v831
  %v928 = vpack.c.b16 %v840, %v836
  %v929 = vpack.c.b16 %v841, %v837
  %v930 = vpack.c.b16 %v842, %v838
  %v931 = vpack.c.b16 %v843, %v839
  %v932 = vpack.c.b16 %v848, %v844
  %v933 = vpack.c.b16 %v849, %v845
  %v934 = vpack.c.b16 %v850, %v846
  %v935 = vpack.c.b16 %v851, %v847
  %v936 = vpack.c.b16 %v856, %v852
  %v937 = vpack.c.b16 %v857, %v853
  %v938 = vpack.c.b16 %v858, %v854
  %v939 = vpack.c.b16 %v859, %v855
  %v940 = vpack.c.b16 %v864, %v860
  %v941 = vpack.c.b16 %v865, %v861
  %v942 = vpack.c.b16 %v866, %v862
  %v943 = vpack.c.b16 %v867, %v863
  %v944 = vpack.c.b16 %v872, %v868
  %v945 = vpack.c.b16 %v873, %v869
  %v946 = vpack.c.b16 %v874, %v870
  %v947 = vpack.c.b16 %v875, %v871
  %v948 = vpack.c.b16 %v880, %v876
  %v949 = vpack.c.b16 %v881, %v877
  %v950 = vpack.c.b16 %v882, %v878
  %v951 = vpack.c.b16 %v883, %v879
  %v952 = vpack.c.b16 %v888, %v884
  %v953 = vpack.c.b16 %v889, %v885
  %v954 = vpack.c.b16 %v890, %v886
  %v955 = vpack.c.b16 %v891, %v887
  %v956 = vpack.c.b16 %v896, %v892
  %v957 = vpack.c.b16 %v897, %v893
  %v958 = vpack.c.b16 %v898, %v894
  %v959 = vpack.c.b16 %v899, %v895
  %v960 = vpack.c.b16 %v904, %v900
  %v961 = vpack.c.b16 %v905, %v901
  %v962 = vpack.c.b16 %v906, %v902
  %v963 = vpack.c.b16 %v907, %v903
  %v964 = vpack.c.b16 %v912, %v908
  %v965 = vpack.c.b16 %v913, %v909
  %v966 = vpack.c.b16 %v914, %v910
  %v967 = vpack.c.b16 %v915, %v911
  %v968 = vpack.c.b16 %v920, %v916
  %v969 = vpack.c.b16 %v921, %v917
  %v970 = vpack.c.b16 %v922, %v918
  %v971 = vpack.c.b16 %v923, %v919
  %v1188 = vunpack.c.l.b16 %v568
  %v1189 = vunpack.c.h.b16 %v568
  %v1190 = vunpack.c.l.b16 %v569
  %v1191 = vunpack.c.h.b16 %v569
  %v1192 = vunpack.c.l.b16 %v570
  %v1193 = vunpack.c.h.b16 %v570
  %v1194 = vunpack.c.l.b16 %v571
  %v1195 = vunpack.c.h.b16 %v571
  %v1196 = vunpack.c.l.b16 %v572
  %v1197 = vunpack.c.h.b16 %v572
  %v1198 = vunpack.c.l.b16 %v573
  %v1199 = vunpack.c.h.b16 %v573
  %v1200 = vunpack.c.l.b16 %v574
  %v1201 = vunpack.c.h.b16 %v574
  %v1202 = vunpack.c.l.b16 %v575
  %v1203 = vunpack.c.h.b16 %v575
  %v1204 = vunpack.c.l.b16 %v576
  %v1205 = vunpack.c.h.b16 %v576
  %v1206 = vunpack.c.l.b16 %v577
  %v1207 = vunpack.c.h.b16 %v577
  %v1208 = vunpack.c.l.b16 %v578
  %v1209 = vunpack.c.h.b16 %v578
  %v1210 = vunpack.c.l.b16 %v579
  %v1211 = vunpack.c.h.b16 %v579
  %v1212 = vunpack.c.l.b16 %v580
  %v1213 = vunpack.c.h.b16 %v580
  %v1214 = vunpack.c.l.b16 %v581
  %v1215 = vunpack.c.h.b16 %v581
  %v1216 = vunpack.c.l.b16 %v582
  %v1217 = vunpack.c.h.b16 %v582
  %v1218 = vunpack.c.l.b16 %v583
  %v1219 = vunpack.c.h.b16 %v583
  %v1220 = vunpack.c.l.b16 %v584
  %v1221 = vunpack.c.h.b16 %v584
  %v1222 = vunpack.c.l.b16 %v585
  %v1223 = vunpack.c.h.b16 %v585
  %v1224 = vunpack.c.l.b16 %v586
  %v1225 = vunpack.c.h.b16 %v586
  %v1226 = vunpack.c.l.b16 %v587
  %v1227 = vunpack.c.h.b16 %v587
  %v1228 = vunpack.c.l.b16 %v588
  %v1229 = vunpack.c.h.b16 %v588
  %v1230 = vunpack.c.l.b16 %v589
  %v1231 = vunpack.c.h.b16 %v589
  %v1232 = vunpack.c.l.b16 %v590
  %v1233 = vunpack.c.h.b16 %v590
  %v1234 = vunpack.c.l.b16 %v591
  %v1235 = vunpack.c.h.b16 %v591
  %v1236 = vunpack.c.l.b16 %v592
  %v1237 = vunpack.c.h.b16 %v592
  %v1238 = vunpack.c.l.b16 %v593
  %v1239 = vunpack.c.h.b16 %v593
  %v1240 = vunpack.c.l.b16 %v594
  %v1241 = vunpack.c.h.b16 %v594
  %v1242 = vunpack.c.l.b16 %v595
  %v1243 = vunpack.c.h.b16 %v595
  %v1244 = vunpack.c.l.b16 %v596
  %v1245 = vunpack.c.h.b16 %v596
  %v1246 = vunpack.c.l.b16 %v597
  %v1247 = vunpack.c.h.b16 %v597
  %v1248 = vunpack.c.l.b16 %v598
  %v1249 = vunpack.c.h.b16 %v598
  %v1250 = vunpack.c.l.b16 %v599
  %v1251 = vunpack.c.h.b16 %v599
  %v1252 = vunpack.c.l.b16 %v600
  %v1253 = vunpack.c.h.b16 %v600
  %v1254 = vunpack.c.l.b16 %v601
  %v1255 = vunpack.c.h.b16 %v601
  %v1256 = vunpack.c.l.b16 %v602
  %v1257 = vunpack.c.h.b16 %v602
  %v1258 = vunpack.c.l.b16 %v603
  %v1259 = vunpack.c.h.b16 %v603
  %v1260 = vunpack.c.l.b16 %v604
  %v1261 = vunpack.c.h.b16 %v604
  %v1262 = vunpack.c.l.b16 %v605
  %v1263 = vunpack.c.h.b16 %v605
  %v1264 = vunpack.c.l.b16 %v606
  %v1265 = vunpack.c.h.b16 %v606
  %v1266 = vunpack.c.l.b16 %v607
  %v1267 = vunpack.c.h.b16 %v607
  %v1268 = vunpack.c.l.b16 %v608
  %v1269 = vunpack.c.h.b16 %v608
  %v1270 = vunpack.c.l.b16 %v609
  %v1271 = vunpack.c.h.b16 %v609
  %v1272 = vunpack.c.l.b16 %v610
  %v1273 = vunpack.c.h.b16 %v610
  %v1274 = vunpack.c.l.b16 %v611
  %v1275 = vunpack.c.h.b16 %v611
  %v1276 = vunpack.c.l.b16 %v612
  %v1277 = vunpack.c.h.b16 %v612
  %v1278 = vunpack.c.l.b16 %v613
  %v1279 = vunpack.c.h.b16 %v613
  %v1280 = vunpack.c.l.b16 %v614
  %v1281 = vunpack.c.h.b16 %v614
  %v1282 = vunpack.c.l.b16 %v615
  %v1283 = vunpack.c.h.b16 %v615
  %v1284 = vunpack.c.l.b16 %v616
  %v1285 = vunpack.c.h.b16 %v616
  %v1286 = vunpack.c.l.b16 %v617
  %v1287 = vunpack.c.h.b16 %v617
  %v1288 = vunpack.c.l.b16 %v618
  %v1289 = vunpack.c.h.b16 %v618
  %v1290 = vunpack.c.l.b16 %v619
  %v1291 = vunpack.c.h.b16 %v619
  %v1292 = vunpack.c.l.b16 %v620
  %v1293 = vunpack.c.h.b16 %v620
  %v1294 = vunpack.c.l.b16 %v621
  %v1295 = vunpack.c.h.b16 %v621
  %v1296 = vunpack.c.l.b16 %v622
  %v1297 = vunpack.c.h.b16 %v622
  %v1298 = vunpack.c.l.b16 %v623
  %v1299 = vunpack.c.h.b16 %v623
  %v1300 = vunpack.c.l.b16 %v624
  %v1301 = vunpack.c.h.b16 %v624
  %v1302 = vunpack.c.l.b16 %v625
  %v1303 = vunpack.c.h.b16 %v625
  %v1304 = vunpack.c.l.b16 %v626
  %v1305 = vunpack.c.h.b16 %v626
  %v1306 = vunpack.c.l.b16 %v627
  %v1307 = vunpack.c.h.b16 %v627
  %v1308 = vunpack.c.l.b16 %v628
  %v1309 = vunpack.c.h.b16 %v628
  %v1310 = vunpack.c.l.b16 %v629
  %v1311 = vunpack.c.h.b16 %v629
  %v1312 = vunpack.c.l.b16 %v630
  %v1313 = vunpack.c.h.b16 %v630
  %v1314 = vunpack.c.l.b16 %v631
  %v1315 = vunpack.c.h.b16 %v631
  %v1316 = vunpack.c.l.b16 %v632
  %v1317 = vunpack.c.h.b16 %v632
  %v1318 = vunpack.c.l.b16 %v633
  %v1319 = vunpack.c.h.b16 %v633
  %v1320 = vunpack.c.l.b16 %v634
  %v1321 = vunpack.c.h.b16 %v634
  %v1322 = vunpack.c.l.b16 %v635
  %v1323 = vunpack.c.h.b16 %v635
  %v1324 = vunpack.c.l.b16 %v636
  %v1325 = vunpack.c.h.b16 %v636
  %v1326 = vunpack.c.l.b16 %v637
  %v1327 = vunpack.c.h.b16 %v637
  %v1328 = vunpack.c.l.b16 %v638
  %v1329 = vunpack.c.h.b16 %v638
  %v1330 = vunpack.c.l.b16 %v639
  %v1331 = vunpack.c.h.b16 %v639
  %v1332 = vunpack.c.l.b16 %v640
  %v1333 = vunpack.c.h.b16 %v640
  %v1334 = vunpack.c.l.b16 %v641
  %v1335 = vunpack.c.h.b16 %v641
  %v1336 = vunpack.c.l.b16 %v642
  %v1337 = vunpack.c.h.b16 %v642
  %v1338 = vunpack.c.l.b16 %v643
  %v1339 = vunpack.c.h.b16 %v643
  %v1340 = vunpack.c.l.b16 %v644
  %v1341 = vunpack.c.h.b16 %v644
  %v1342 = vunpack.c.l.b16 %v645
  %v1343 = vunpack.c.h.b16 %v645
  %v1344 = vunpack.c.l.b16 %v646
  %v1345 = vunpack.c.h.b16 %v646
  %v1346 = vunpack.c.l.b16 %v647
  %v1347 = vunpack.c.h.b16 %v647
  %v1348 = vunpack.c.l.b16 %v648
  %v1349 = vunpack.c.h.b16 %v648
  %v1350 = vunpack.c.l.b16 %v649
  %v1351 = vunpack.c.h.b16 %v649
  %v1352 = vunpack.c.l.b16 %v650
  %v1353 = vunpack.c.h.b16 %v650
  %v1354 = vunpack.c.l.b16 %v651
  %v1355 = vunpack.c.h.b16 %v651
  %v1356 = vunpack.c.l.b16 %v652
  %v1357 = vunpack.c.h.b16 %v652
  %v1358 = vunpack.c.l.b16 %v653
  %v1359 = vunpack.c.h.b16 %v653
  %v1360 = vunpack.c.l.b16 %v654
  %v1361 = vunpack.c.h.b16 %v654
  %v1362 = vunpack.c.l.b16 %v655
  %v1363 = vunpack.c.h.b16 %v655
  %v1364 = vunpack.c.l.b16 %v656
  %v1365 = vunpack.c.h.b16 %v656
  %v1366 = vunpack.c.l.b16 %v657
  %v1367 = vunpack.c.h.b16 %v657
  %v1368 = vunpack.c.l.b16 %v658
  %v1369 = vunpack.c.h.b16 %v658
  %v1370 = vunpack.c.l.b16 %v659
  %v1371 = vunpack.c.h.b16 %v659
  %v1372 = vunpack.c.l.b16 %v660
  %v1373 = vunpack.c.h.b16 %v660
  %v1374 = vunpack.c.l.b16 %v661
  %v1375 = vunpack.c.h.b16 %v661
  %v1376 = vunpack.c.l.b16 %v662
  %v1377 = vunpack.c.h.b16 %v662
  %v1378 = vunpack.c.l.b16 %v663
  %v1379 = vunpack.c.h.b16 %v663
  %v1380 = vunpack.c.l.b16 %v664
  %v1381 = vunpack.c.h.b16 %v664
  %v1382 = vunpack.c.l.b16 %v665
  %v1383 = vunpack.c.h.b16 %v665
  %v1384 = vunpack.c.l.b16 %v666
  %v1385 = vunpack.c.h.b16 %v666
  %v1386 = vunpack.c.l.b16 %v667
  %v1387 = vunpack.c.h.b16 %v667
  %v1388 = vunpack.c.l.b16 %v668
  %v1389 = vunpack.c.h.b16 %v668
  %v1390 = vunpack.c.l.b16 %v669
  %v1391 = vunpack.c.h.b16 %v669
  %v1392 = vunpack.c.l.b16 %v670
  %v1393 = vunpack.c.h.b16 %v670
  %v1394 = vunpack.c.l.b16 %v671
  %v1395 = vunpack.c.h.b16 %v671
  %v1396 = vunpack.c.l.b16 %v672
  %v1397 = vunpack.c.h.b16 %v672
  %v1398 = vunpack.c.l.b16 %v673
  %v1399 = vunpack.c.h.b16 %v673
  %v1400 = vunpack.c.l.b16 %v674
  %v1401 = vunpack.c.h.b16 %v674
  %v1402 = vunpack.c.l.b16 %v675
  %v1403 = vunpack.c.h.b16 %v675
  %v1404 = vunpack.c.l.b16 %v676
  %v1405 = vunpack.c.h.b16 %v676
  %v1406 = vunpack.c.l.b16 %v677
  %v1407 = vunpack.c.h.b16 %v677
  %v1408 = vunpack.c.l.b16 %v678
  %v1409 = vunpack.c.h.b16 %v678
  %v1410 = vunpack.c.l.b16 %v679
  %v1411 = vunpack.c.h.b16 %v679
  %v1412 = vunpack.c.l.b16 %v680
  %v1413 = vunpack.c.h.b16 %v680
  %v1414 = vunpack.c.l.b16 %v681
  %v1415 = vunpack.c.h.b16 %v681
  %v1416 = vunpack.c.l.b16 %v682
  %v1417 = vunpack.c.h.b16 %v682
  %v1418 = vunpack.c.l.b16 %v683
  %v1419 = vunpack.c.h.b16 %v683
  %v1420 = vunpack.c.l.b16 %v684
  %v1421 = vunpack.c.h.b16 %v684
  %v1422 = vunpack.c.l.b16 %v685
  %v1423 = vunpack.c.h.b16 %v685
  %v1424 = vunpack.c.l.b16 %v686
  %v1425 = vunpack.c.h.b16 %v686
  %v1426 = vunpack.c.l.b16 %v687
  %v1427 = vunpack.c.h.b16 %v687
  %v1428 = vunpack.c.l.b16 %v688
  %v1429 = vunpack.c.h.b16 %v688
  %v1430 = vunpack.c.l.b16 %v689
  %v1431 = vunpack.c.h.b16 %v689
  %v1432 = vunpack.c.l.b16 %v690
  %v1433 = vunpack.c.h.b16 %v690
  %v1434 = vunpack.c.l.b16 %v691
  %v1435 = vunpack.c.h.b16 %v691
  %v1436 = vunpack.c.l.b16 %v692
  %v1437 = vunpack.c.h.b16 %v692
  %v1438 = vunpack.c.l.b16 %v693
  %v1439 = vunpack.c.h.b16 %v693
  %v1440 = vunpack.c.l.b16 %v694
  %v1441 = vunpack.c.h.b16 %v694
  %v1442 = vunpack.c.l.b16 %v695
  %v1443 = vunpack.c.h.b16 %v695
  %v1444 = vunpack.c.l.b16 %v696
  %v1445 = vunpack.c.h.b16 %v696
  %v1446 = vunpack.c.l.b16 %v697
  %v1447 = vunpack.c.h.b16 %v697
  %v1448 = vunpack.c.l.b16 %v698
  %v1449 = vunpack.c.h.b16 %v698
  %v1450 = vunpack.c.l.b16 %v699
  %v1451 = vunpack.c.h.b16 %v699
  %v1452 = vunpack.c.l.b16 %v700
  %v1453 = vunpack.c.h.b16 %v700
  %v1454 = vunpack.c.l.b16 %v701
  %v1455 = vunpack.c.h.b16 %v701
  %v1456 = vunpack.c.l.b16 %v702
  %v1457 = vunpack.c.h.b16 %v702
  %v1458 = vunpack.c.l.b16 %v703
  %v1459 = vunpack.c.h.b16 %v703
  %v1460 = vunpack.c.l.b16 %v704
  %v1461 = vunpack.c.h.b16 %v704
  %v1462 = vunpack.c.l.b16 %v705
  %v1463 = vunpack.c.h.b16 %v705
  %v1464 = vunpack.c.l.b16 %v706
  %v1465 = vunpack.c.h.b16 %v706
  %v1466 = vunpack.c.l.b16 %v707
  %v1467 = vunpack.c.h.b16 %v707
  %v1468 = vunpack.c.l.b16 %v708
  %v1469 = vunpack.c.h.b16 %v708
  %v1470 = vunpack.c.l.b16 %v709
  %v1471 = vunpack.c.h.b16 %v709
  %v1472 = vunpack.c.l.b16 %v710
  %v1473 = vunpack.c.h.b16 %v710
  %v1474 = vunpack.c.l.b16 %v711
  %v1475 = vunpack.c.h.b16 %v711
  %v1476 = vunpack.c.l.b16 %v712
  %v1477 = vunpack.c.h.b16 %v712
  %v1478 = vunpack.c.l.b16 %v713
  %v1479 = vunpack.c.h.b16 %v713
  %v1480 = vunpack.c.l.b16 %v714
  %v1481 = vunpack.c.h.b16 %v714
  %v1482 = vunpack.c.l.b16 %v715
  %v1483 = vunpack.c.h.b16 %v715
  %v1484 = vunpack.c.l.b16 %v716
  %v1485 = vunpack.c.h.b16 %v716
  %v1486 = vunpack.c.l.b16 %v717
  %v1487 = vunpack.c.h.b16 %v717
  %v1488 = vunpack.c.l.b16 %v718
  %v1489 = vunpack.c.h.b16 %v718
  %v1490 = vunpack.c.l.b16 %v719
  %v1491 = vunpack.c.h.b16 %v719
  %v1492 = vunpack.c.l.b16 %v720
  %v1493 = vunpack.c.h.b16 %v720
  %v1494 = vunpack.c.l.b16 %v721
  %v1495 = vunpack.c.h.b16 %v721
  %v1496 = vunpack.c.l.b16 %v722
  %v1497 = vunpack.c.h.b16 %v722
  %v1498 = vunpack.c.l.b16 %v723
  %v1499 = vunpack.c.h.b16 %v723
  %v1500 = vunpack.c.l.b16 %v724
  %v1501 = vunpack.c.h.b16 %v724
  %v1502 = vunpack.c.l.b16 %v725
  %v1503 = vunpack.c.h.b16 %v725
  %v1504 = vunpack.c.l.b16 %v726
  %v1505 = vunpack.c.h.b16 %v726
  %v1506 = vunpack.c.l.b16 %v727
  %v1507 = vunpack.c.h.b16 %v727
  %v1508 = vunpack.c.l.b16 %v728
  %v1509 = vunpack.c.h.b16 %v728
  %v1510 = vunpack.c.l.b16 %v729
  %v1511 = vunpack.c.h.b16 %v729
  %v1512 = vunpack.c.l.b16 %v730
  %v1513 = vunpack.c.h.b16 %v730
  %v1514 = vunpack.c.l.b16 %v731
  %v1515 = vunpack.c.h.b16 %v731
  %v1516 = vunpack.c.l.b16 %v732
  %v1517 = vunpack.c.h.b16 %v732
  %v1518 = vunpack.c.l.b16 %v733
  %v1519 = vunpack.c.h.b16 %v733
  %v1520 = vunpack.c.l.b16 %v734
  %v1521 = vunpack.c.h.b16 %v734
  %v1522 = vunpack.c.l.b16 %v735
  %v1523 = vunpack.c.h.b16 %v735
  %v1524 = vunpack.c.l.b16 %v736
  %v1525 = vunpack.c.h.b16 %v736
  %v1526 = vunpack.c.l.b16 %v737
  %v1527 = vunpack.c.h.b16 %v737
  %v1528 = vunpack.c.l.b16 %v738
  %v1529 = vunpack.c.h.b16 %v738
  %v1530 = vunpack.c.l.b16 %v739
  %v1531 = vunpack.c.h.b16 %v739
  %v1532 = vunpack.c.l.b16 %v740
  %v1533 = vunpack.c.h.b16 %v740
  %v1534 = vunpack.c.l.b16 %v741
  %v1535 = vunpack.c.h.b16 %v741
  %v1536 = vunpack.c.l.b16 %v742
  %v1537 = vunpack.c.h.b16 %v742
  %v1538 = vunpack.c.l.b16 %v743
  %v1539 = vunpack.c.h.b16 %v743
  %v1540 = vunpack.c.l.b16 %v744
  %v1541 = vunpack.c.h.b16 %v744
  %v1542 = vunpack.c.l.b16 %v745
  %v1543 = vunpack.c.h.b16 %v745
  %v1544 = vunpack.c.l.b16 %v746
  %v1545 = vunpack.c.h.b16 %v746
  %v1546 = vunpack.c.l.b16 %v747
  %v1547 = vunpack.c.h.b16 %v747
  %v1548 = vpack.c.b16 %v1194, %v1188
  %v1549 = vpack.c.b16 %v1195, %v1189
  %v1550 = vpack.c.b16 %v1196, %v1190
  %v1551 = vpack.c.b16 %v1197, %v1191
  %v1552 = vpack.c.b16 %v1198, %v1192
  %v1553 = vpack.c.b16 %v1199, %v1193
  %v1554 = vpack.c.b16 %v1206, %v1200
  %v1555 = vpack.c.b16 %v1207, %v1201
  %v1556 = vpack.c.b16 %v1208, %v1202
  %v1557 = vpack.c.b16 %v1209, %v1203
  %v1558 = vpack.c.b16 %v1210, %v1204
  %v1559 = vpack.c.b16 %v1211, %v1205
  %v1560 = vpack.c.b16 %v1218, %v1212
  %v1561 = vpack.c.b16 %v1219, %v1213
  %v1562 = vpack.c.b16 %v1220, %v1214
  %v1563 = vpack.c.b16 %v1221, %v1215
  %v1564 = vpack.c.b16 %v1222, %v1216
  %v1565 = vpack.c.b16 %v1223, %v1217
  %v1566 = vpack.c.b16 %v1230, %v1224
  %v1567 = vpack.c.b16 %v1231, %v1225
  %v1568 = vpack.c.b16 %v1232, %v1226
  %v1569 = vpack.c.b16 %v1233, %v1227
  %v1570 = vpack.c.b16 %v1234, %v1228
  %v1571 = vpack.c.b16 %v1235, %v1229
  %v1572 = vpack.c.b16 %v1242, %v1236
  %v1573 = vpack.c.b16 %v1243, %v1237
  %v1574 = vpack.c.b16 %v1244, %v1238
  %v1575 = vpack.c.b16 %v1245, %v1239
  %v1576 = vpack.c.b16 %v1246, %v1240
  %v1577 = vpack.c.b16 %v1247, %v1241
  %v1578 = vpack.c.b16 %v1254, %v1248
  %v1579 = vpack.c.b16 %v1255, %v1249
  %v1580 = vpack.c.b16 %v1256, %v1250
  %v1581 = vpack.c.b16 %v1257, %v1251
  %v1582 = vpack.c.b16 %v1258, %v1252
  %v1583 = vpack.c.b16 %v1259, %v1253
  %v1584 = vpack.c.b16 %v1266, %v1260
  %v1585 = vpack.c.b16 %v1267, %v1261
  %v1586 = vpack.c.b16 %v1268, %v1262
  %v1587 = vpack.c.b16 %v1269, %v1263
  %v1588 = vpack.c.b16 %v1270, %v1264
  %v1589 = vpack.c.b16 %v1271, %v1265
  %v1590 = vpack.c.b16 %v1278, %v1272
  %v1591 = vpack.c.b16 %v1279, %v1273
  %v1592 = vpack.c.b16 %v1280, %v1274
  %v1593 = vpack.c.b16 %v1281, %v1275
  %v1594 = vpack.c.b16 %v1282, %v1276
  %v1595 = vpack.c.b16 %v1283, %v1277
  %v1596 = vpack.c.b16 %v1290, %v1284
  %v1597 = vpack.c.b16 %v1291, %v1285
  %v1598 = vpack.c.b16 %v1292, %v1286
  %v1599 = vpack.c.b16 %v1293, %v1287
  %v1600 = vpack.c.b16 %v1294, %v1288
  %v1601 = vpack.c.b16 %v1295, %v1289
  %v1602 = vpack.c.b16 %v1302, %v1296
  %v1603 = vpack.c.b16 %v1303, %v1297
  %v1604 = vpack.c.b16 %v1304, %v1298
  %v1605 = vpack.c.b16 %v1305, %v1299
  %v1606 = vpack.c.b16 %v1306, %v1300
  %v1607 = vpack.c.b16 %v1307, %v1301
  %v1608 = vpack.c.b16 %v1314, %v1308
  %v1609 = vpack.c.b16 %v1315, %v1309
  %v1610 = vpack.c.b16 %v1316, %v1310
  %v1611 = vpack.c.b16 %v1317, %v1311
  %v1612 = vpack.c.b16 %v1318, %v1312
  %v1613 = vpack.c.b16 %v1319, %v1313
  %v1614 = vpack.c.b16 %v1326, %v1320
  %v1615 = vpack.c.b16 %v1327, %v1321
  %v1616 = vpack.c.b16 %v1328, %v1322
  %v1617 = vpack.c.b16 %v1329, %v1323
  %v1618 = vpack.c.b16 %v1330, %v1324
  %v1619 = vpack.c.b16 %v1331, %v1325
  %v1620 = vpack.c.b16 %v1338, %v1332
  %v1621 = vpack.c.b16 %v1339, %v1333
  %v1622 = vpack.c.b16 %v1340, %v1334
  %v1623 = vpack.c.b16 %v1341, %v1335
  %v1624 = vpack.c.b16 %v1342, %v1336
  %v1625 = vpack.c.b16 %v1343, %v1337
  %v1626 = vpack.c.b16 %v1350, %v1344
  %v1627 = vpack.c.b16 %v1351, %v1345
  %v1628 = vpack.c.b16 %v1352, %v1346
  %v1629 = vpack.c.b16 %v1353, %v1347
  %v1630 = vpack.c.b16 %v1354, %v1348
  %v1631 = vpack.c.b16 %v1355, %v1349
  %v1632 = vpack.c.b16 %v1362, %v1356
  %v1633 = vpack.c.b16 %v1363, %v1357
  %v1634 = vpack.c.b16 %v1364, %v1358
  %v1635 = vpack.c.b16 %v1365, %v1359
  %v1636 = vpack.c.b16 %v1366, %v1360
  %v1637 = vpack.c.b16 %v1367, %v1361
  %v1638 = vpack.c.b16 %v1374, %v1368
  %v1639 = vpack.c.b16 %v1375, %v1369
  %v1640 = vpack.c.b16 %v1376, %v1370
  %v1641 = vpack.c.b16 %v1377, %v1371
  %v1642 = vpack.c.b16 %v1378, %v1372
  %v1643 = vpack.c.b16 %v1379, %v1373
  %v1644 = vpack.c.b16 %v1386, %v1380
  %v1645 = vpack.c.b16 %v1387, %v1381
  %v1646 = vpack.c.b16 %v1388, %v1382
  %v1647 = vpack.c.b16 %v1389, %v1383
  %v1648 = vpack.c.b16 %v1390, %v1384
  %v1649 = vpack.c.b16 %v1391, %v1385
  %v1650 = vpack.c.b16 %v1398, %v1392
  %v1651 = vpack.c.b16 %v1399, %v1393
  %v1652 = vpack.c.b16 %v1400, %v1394
  %v1653 = vpack.c.b16 %v1401, %v1395
  %v1654 = vpack.c.b16 %v1402, %v1396
  %v1655 = vpack.c.b16 %v1403, %v1397
  %v1656 = vpack.c.b16 %v1410, %v1404
  %v1657 = vpack.c.b16 %v1411, %v1405
  %v1658 = vpack.c.b16 %v1412, %v1406
  %v1659 = vpack.c.b16 %v1413, %v1407
  %v1660 = vpack.c.b16 %v1414, %v1408
  %v1661 = vpack.c.b16 %v1415, %v1409
  %v1662 = vpack.c.b16 %v1422, %v1416
  %v1663 = vpack.c.b16 %v1423, %v1417
  %v1664 = vpack.c.b16 %v1424, %v1418
  %v1665 = vpack.c.b16 %v1425, %v1419
  %v1666 = vpack.c.b16 %v1426, %v1420
  %v1667 = vpack.c.b16 %v1427, %v1421
  %v1668 = vpack.c.b16 %v1434, %v1428
  %v1669 = vpack.c.b16 %v1435, %v1429
  %v1670 = vpack.c.b16 %v1436, %v1430
  %v1671 = vpack.c.b16 %v1437, %v1431
  %v1672 = vpack.c.b16 %v1438, %v1432
  %v1673 = vpack.c.b16 %v1439, %v1433
  %v1674 = vpack.c.b16 %v1446, %v1440
  %v1675 = vpack.c.b16 %v1447, %v1441
  %v1676 = vpack.c.b16 %v1448, %v1442
  %v1677 = vpack.c.b16 %v1449, %v1443
  %v1678 = vpack.c.b16 %v1450, %v1444
  %v1679 = vpack.c.b16 %v1451, %v1445
  %v1680 = vpack.c.b16 %v1458, %v1452
  %v1681 = vpack.c.b16 %v1459, %v1453
  %v1682 = vpack.c.b16 %v1460, %v1454
  %v1683 = vpack.c.b16 %v1461, %v1455
  %v1684 = vpack.c.b16 %v1462, %v1456
  %v1685 = vpack.c.b16 %v1463, %v1457
  %v1686 = vpack.c.b16 %v1470, %v1464
  %v1687 = vpack.c.b16 %v1471, %v1465
  %v1688 = vpack.c.b16 %v1472, %v1466
  %v1689 = vpack.c.b16 %v1473, %v1467
  %v1690 = vpack.c.b16 %v1474, %v1468
  %v1691 = vpack.c.b16 %v1475, %v1469
  %v1692 = vpack.c.b16 %v1482, %v1476
  %v1693 = vpack.c.b16 %v1483, %v1477
  %v1694 = vpack.c.b16 %v1484, %v1478
  %v1695 = vpack.c.b16 %v1485, %v1479
  %v1696 = vpack.c.b16 %v1486, %v1480
  %v1697 = vpack.c.b16 %v1487, %v1481
  %v1698 = vpack.c.b16 %v1494, %v1488
  %v1699 = vpack.c.b16 %v1495, %v1489
  %v1700 = vpack.c.b16 %v1496, %v1490
  %v1701 = vpack.c.b16 %v1497, %v1491
  %v1702 = vpack.c.b16 %v1498, %v1492
  %v1703 = vpack.c.b16 %v1499, %v1493
  %v1704 = vpack.c.b16 %v1506, %v1500
  %v1705 = vpack.c.b16 %v1507, %v1501
  %v1706 = vpack.c.b16 %v1508, %v1502
  %v1707 = vpack.c.b16 %v1509, %v1503
  %v1708 = vpack.c.b16 %v1510, %v1504
  %v1709 = vpack.c.b16 %v1511, %v1505
  %v1710 = vpack.c.b16 %v1518, %v1512
  %v1711 = vpack.c.b16 %v1519, %v1513
  %v1712 = vpack.c.b16 %v1520, %v1514
  %v1713 = vpack.c.b16 %v1521, %v1515
  %v1714 = vpack.c.b16 %v1522, %v1516
  %v1715 = vpack.c.b16 %v1523, %v1517
  %v1716 = vpack.c.b16 %v1530, %v1524
  %v1717 = vpack.c.b16 %v1531, %v1525
  %v1718 = vpack.c.b16 %v1532, %v1526
  %v1719 = vpack.c.b16 %v1533, %v1527
  %v1720 = vpack.c.b16 %v1534, %v1528
  %v1721 = vpack.c.b16 %v1535, %v1529
  %v1722 = vpack.c.b16 %v1542, %v1536
  %v1723 = vpack.c.b16 %v1543, %v1537
  %v1724 = vpack.c.b16 %v1544, %v1538
  %v1725 = vpack.c.b16 %v1545, %v1539
  %v1726 = vpack.c.b16 %v1546, %v1540
  %v1727 = vpack.c.b16 %v1547, %v1541
  %vm1902 = vcmask 752640
  %v1904 = vsel %vm1902, %v927, 0
  %v1907 = vsel %vm1902, %v931, 0
  %v1910 = vsel %vm1902, %v935, 0
  %v1913 = vsel %vm1902, %v939, 0
  %v1916 = vsel %vm1902, %v943, 0
  %v1919 = vsel %vm1902, %v947, 0
  %v1922 = vsel %vm1902, %v951, 0
  %v1925 = vsel %vm1902, %v955, 0
  %v1928 = vsel %vm1902, %v959, 0
  %v1931 = vsel %vm1902, %v963, 0
  %v1934 = vsel %vm1902, %v967, 0
  %v1937 = vsel %vm1902, %v971, 0
  %vm1939 = vcmask 1045504
  %v1941 = vsel %vm1939, %v1722, 0
  %v1944 = vsel %vm1939, %v1723, 0
  %v1947 = vsel %vm1939, %v1724, 0
  %v1950 = vsel %vm1939, %v1725, 0
  %v1953 = vsel %vm1939, %v1726, 0
  %v1956 = vsel %vm1939, %v1727, 0
  %1958 = vmatprep.subr.bf16.mxu0 %v1591
  %1959 = vmatpush1.bf16.msra.mxu0 %v1590
  %1960 = vmatprep.subr.bf16.mxu0 %v1585
  %1961 = vmatpush1.bf16.msra.mxu0 %v1584
  %1962 = vmatprep.subr.bf16.mxu0 %v1579
  %1963 = vmatpush1.bf16.msra.mxu0 %v1578
  %1964 = vmatprep.subr.bf16.mxu0 %v1573
  %1965 = vmatpush1.bf16.msra.mxu0 %v1572
  %1966 = vmatprep.subr.bf16.mxu0 %v1567
  %1967 = vmatpush1.bf16.msra.mxu0 %v1566
  %1968 = vmatprep.subr.bf16.mxu0 %v1561
  %1969 = vmatpush1.bf16.msra.mxu0 %v1560
  %1970 = vmatprep.subr.bf16.mxu0 %v1555
  %1971 = vmatpush1.bf16.msra.mxu0 %v1554
  %1972 = vmatprep.subr.bf16.mxu0 %v1549
  %1973 = vmatpush1.bf16.msra.mxu0 %v1548
  %1974 = vmatprep.subr.bf16.mxu0 %v1639
  %1975 = vmatpush2.bf16.msra.mxu0 %v1638
  %1976 = vmatprep.subr.bf16.mxu0 %v1633
  %1977 = vmatpush2.bf16.msra.mxu0 %v1632
  %1978 = vmatprep.subr.bf16.mxu0 %v1627
  %1979 = vmatpush2.bf16.msra.mxu0 %v1626
  %1980 = vmatprep.subr.bf16.mxu0 %v1621
  %1981 = vmatpush2.bf16.msra.mxu0 %v1620
  %1982 = vmatprep.subr.bf16.mxu0 %v1615
  %1983 = vmatpush2.bf16.msra.mxu0 %v1614
  %1984 = vmatprep.subr.bf16.mxu0 %v1609
  %1985 = vmatpush2.bf16.msra.mxu0 %v1608
  %1986 = vmatprep.subr.bf16.mxu0 %v1603
  %1987 = vmatpush2.bf16.msra.mxu0 %v1602
  %1988 = vmatprep.subr.bf16.mxu0 %v1597
  %1989 = vmatpush2.bf16.msra.mxu0 %v1596
  %1990 = vmatprep.mubr.bf16.mxu0 %v925
  %1991 = vmatmul.mubr.bf16.gmra.mxu0 %v924
  %v1992 = vpop.f32.mrf.mxu0
  %v1993 = vadd.f32 %v753, %v1992
  %v1994 = vpop.f32.mrf.mxu0
  %v1995 = vadd.f32 %v757, %v1994
  %v1996 = vpop.f32.mrf.mxu0
  %v1997 = vadd.f32 %v753, %v1996
  %v1998 = vpop.f32.mrf.mxu0
  %v1999 = vadd.f32 %v757, %v1998
  %2000 = vmatprep.mubr.bf16.mxu0 %v929
  %2001 = vmatmul.mubr.bf16.gmra.mxu0 %v928
  %v2002 = vpop.f32.mrf.mxu0
  %v2003 = vadd.f32 %v753, %v2002
  %v2004 = vpop.f32.mrf.mxu0
  %v2005 = vadd.f32 %v757, %v2004
  %v2006 = vpop.f32.mrf.mxu0
  %v2007 = vadd.f32 %v753, %v2006
  %v2008 = vpop.f32.mrf.mxu0
  %v2009 = vadd.f32 %v757, %v2008
  %2010 = vmatprep.mubr.bf16.mxu0 %v933
  %2011 = vmatmul.mubr.bf16.gmra.mxu0 %v932
  %v2012 = vpop.f32.mrf.mxu0
  %v2013 = vadd.f32 %v753, %v2012
  %v2014 = vpop.f32.mrf.mxu0
  %v2015 = vadd.f32 %v757, %v2014
  %v2016 = vpop.f32.mrf.mxu0
  %v2017 = vadd.f32 %v753, %v2016
  %v2018 = vpop.f32.mrf.mxu0
  %v2019 = vadd.f32 %v757, %v2018
  %2020 = vmatprep.mubr.bf16.mxu0 %v937
  %2021 = vmatmul.mubr.bf16.gmra.mxu0 %v936
  %v2022 = vpop.f32.mrf.mxu0
  %v2023 = vadd.f32 %v753, %v2022
  %v2024 = vpop.f32.mrf.mxu0
  %v2025 = vadd.f32 %v757, %v2024
  %v2026 = vpop.f32.mrf.mxu0
  %v2027 = vadd.f32 %v753, %v2026
  %v2028 = vpop.f32.mrf.mxu0
  %v2029 = vadd.f32 %v757, %v2028
  %2030 = vmatprep.mubr.bf16.mxu0 %v941
  %2031 = vmatmul.mubr.bf16.gmra.mxu0 %v940
  %v2032 = vpop.f32.mrf.mxu0
  %v2033 = vadd.f32 %v753, %v2032
  %v2034 = vpop.f32.mrf.mxu0
  %v2035 = vadd.f32 %v757, %v2034
  %v2036 = vpop.f32.mrf.mxu0
  %v2037 = vadd.f32 %v753, %v2036
  %v2038 = vpop.f32.mrf.mxu0
  %v2039 = vadd.f32 %v757, %v2038
  %2040 = vmatprep.mubr.bf16.mxu0 %v945
  %2041 = vmatmul.mubr.bf16.gmra.mxu0 %v944
  %v2042 = vpop.f32.mrf.mxu0
  %v2043 = vadd.f32 %v753, %v2042
  %v2044 = vpop.f32.mrf.mxu0
  %v2045 = vadd.f32 %v757, %v2044
  %v2046 = vpop.f32.mrf.mxu0
  %v2047 = vadd.f32 %v753, %v2046
  %v2048 = vpop.f32.mrf.mxu0
  %v2049 = vadd.f32 %v757, %v2048
  %2050 = vmatprep.mubr.bf16.mxu0 %v949
  %2051 = vmatmul.mubr.bf16.gmra.mxu0 %v948
  %v2052 = vpop.f32.mrf.mxu0
  %v2053 = vadd.f32 %v753, %v2052
  %v2054 = vpop.f32.mrf.mxu0
  %v2055 = vadd.f32 %v757, %v2054
  %v2056 = vpop.f32.mrf.mxu0
  %v2057 = vadd.f32 %v753, %v2056
  %v2058 = vpop.f32.mrf.mxu0
  %v2059 = vadd.f32 %v757, %v2058
  %2060 = vmatprep.mubr.bf16.mxu0 %v953
  %2061 = vmatmul.mubr.bf16.gmra.mxu0 %v952
  %v2062 = vpop.f32.mrf.mxu0
  %v2063 = vadd.f32 %v753, %v2062
  %v2064 = vpop.f32.mrf.mxu0
  %v2065 = vadd.f32 %v757, %v2064
  %v2066 = vpop.f32.mrf.mxu0
  %v2067 = vadd.f32 %v753, %v2066
  %v2068 = vpop.f32.mrf.mxu0
  %v2069 = vadd.f32 %v757, %v2068
  %2070 = vmatprep.mubr.bf16.mxu0 %v957
  %2071 = vmatmul.mubr.bf16.gmra.mxu0 %v956
  %v2072 = vpop.f32.mrf.mxu0
  %v2073 = vadd.f32 %v753, %v2072
  %v2074 = vpop.f32.mrf.mxu0
  %v2075 = vadd.f32 %v757, %v2074
  %v2076 = vpop.f32.mrf.mxu0
  %v2077 = vadd.f32 %v753, %v2076
  %v2078 = vpop.f32.mrf.mxu0
  %v2079 = vadd.f32 %v757, %v2078
  %2080 = vmatprep.mubr.bf16.mxu0 %v961
  %2081 = vmatmul.mubr.bf16.gmra.mxu0 %v960
  %v2082 = vpop.f32.mrf.mxu0
  %v2083 = vadd.f32 %v753, %v2082
  %v2084 = vpop.f32.mrf.mxu0
  %v2085 = vadd.f32 %v757, %v2084
  %v2086 = vpop.f32.mrf.mxu0
  %v2087 = vadd.f32 %v753, %v2086
  %v2088 = vpop.f32.mrf.mxu0
  %v2089 = vadd.f32 %v757, %v2088
  %2090 = vmatprep.mubr.bf16.mxu0 %v965
  %2091 = vmatmul.mubr.bf16.gmra.mxu0 %v964
  %v2092 = vpop.f32.mrf.mxu0
  %v2093 = vadd.f32 %v753, %v2092
  %v2094 = vpop.f32.mrf.mxu0
  %v2095 = vadd.f32 %v757, %v2094
  %v2096 = vpop.f32.mrf.mxu0
  %v2097 = vadd.f32 %v753, %v2096
  %v2098 = vpop.f32.mrf.mxu0
  %v2099 = vadd.f32 %v757, %v2098
  %2100 = vmatprep.mubr.bf16.mxu0 %v969
  %2101 = vmatmul.mubr.bf16.gmra.mxu0 %v968
  %v2102 = vpop.f32.mrf.mxu0
  %v2103 = vadd.f32 %v753, %v2102
  %v2104 = vpop.f32.mrf.mxu0
  %v2105 = vadd.f32 %v757, %v2104
  %v2106 = vpop.f32.mrf.mxu0
  %v2107 = vadd.f32 %v753, %v2106
  %v2108 = vpop.f32.mrf.mxu0
  %v2109 = vadd.f32 %v757, %v2108
  %2110 = vdwg.mxu0
  %2111 = vmatprep.subr.bf16.mxu0 %v1687
  %2112 = vmatpush1.bf16.msra.mxu0 %v1686
  %2113 = vmatprep.subr.bf16.mxu0 %v1681
  %2114 = vmatpush1.bf16.msra.mxu0 %v1680
  %2115 = vmatprep.subr.bf16.mxu0 %v1675
  %2116 = vmatpush1.bf16.msra.mxu0 %v1674
  %2117 = vmatprep.subr.bf16.mxu0 %v1669
  %2118 = vmatpush1.bf16.msra.mxu0 %v1668
  %2119 = vmatprep.subr.bf16.mxu0 %v1663
  %2120 = vmatpush1.bf16.msra.mxu0 %v1662
  %2121 = vmatprep.subr.bf16.mxu0 %v1657
  %2122 = vmatpush1.bf16.msra.mxu0 %v1656
  %2123 = vmatprep.subr.bf16.mxu0 %v1651
  %2124 = vmatpush1.bf16.msra.mxu0 %v1650
  %2125 = vmatprep.subr.bf16.mxu0 %v1645
  %2126 = vmatpush1.bf16.msra.mxu0 %v1644
  %2127 = vmatprep.subr.bf16.mxu0 0
  %2128 = vmatpush2.bf16.msra.mxu0 0
  %2129 = vmatprep.subr.bf16.mxu0 0
  %2130 = vmatpush2.bf16.msra.mxu0 0
  %2131 = vmatprep.subr.bf16.mxu0 %v1944
  %2132 = vmatpush2.bf16.msra.mxu0 %v1941
  %2133 = vmatprep.subr.bf16.mxu0 %v1717
  %2134 = vmatpush2.bf16.msra.mxu0 %v1716
  %2135 = vmatprep.subr.bf16.mxu0 %v1711
  %2136 = vmatpush2.bf16.msra.mxu0 %v1710
  %2137 = vmatprep.subr.bf16.mxu0 %v1705
  %2138 = vmatpush2.bf16.msra.mxu0 %v1704
  %2139 = vmatprep.subr.bf16.mxu0 %v1699
  %2140 = vmatpush2.bf16.msra.mxu0 %v1698
  %2141 = vmatprep.subr.bf16.mxu0 %v1693
  %2142 = vmatpush2.bf16.msra.mxu0 %v1692
  %2143 = vmatprep.mubr.bf16.mxu0 %v1904
  %2144 = vmatmul.mubr.bf16.gmra.mxu0 %v926
  %v2145 = vpop.f32.mrf.mxu0
  %v2146 = vadd.f32 %v1993, %v2145
  %v2147 = vpop.f32.mrf.mxu0
  %v2148 = vadd.f32 %v1995, %v2147
  %v2149 = vpop.f32.mrf.mxu0
  %v2150 = vadd.f32 %v1997, %v2149
  %v2151 = vpop.f32.mrf.mxu0
  %v2152 = vadd.f32 %v1999, %v2151
  %2153 = vmatprep.mubr.bf16.mxu0 %v1907
  %2154 = vmatmul.mubr.bf16.gmra.mxu0 %v930
  %v2155 = vpop.f32.mrf.mxu0
  %v2156 = vadd.f32 %v2003, %v2155
  %v2157 = vpop.f32.mrf.mxu0
  %v2158 = vadd.f32 %v2005, %v2157
  %v2159 = vpop.f32.mrf.mxu0
  %v2160 = vadd.f32 %v2007, %v2159
  %v2161 = vpop.f32.mrf.mxu0
  %v2162 = vadd.f32 %v2009, %v2161
  %2163 = vmatprep.mubr.bf16.mxu0 %v1910
  %2164 = vmatmul.mubr.bf16.gmra.mxu0 %v934
  %v2165 = vpop.f32.mrf.mxu0
  %v2166 = vadd.f32 %v2013, %v2165
  %v2167 = vpop.f32.mrf.mxu0
  %v2168 = vadd.f32 %v2015, %v2167
  %v2169 = vpop.f32.mrf.mxu0
  %v2170 = vadd.f32 %v2017, %v2169
  %v2171 = vpop.f32.mrf.mxu0
  %v2172 = vadd.f32 %v2019, %v2171
  %2173 = vmatprep.mubr.bf16.mxu0 %v1913
  %2174 = vmatmul.mubr.bf16.gmra.mxu0 %v938
  %v2175 = vpop.f32.mrf.mxu0
  %v2176 = vadd.f32 %v2023, %v2175
  %v2177 = vpop.f32.mrf.mxu0
  %v2178 = vadd.f32 %v2025, %v2177
  %v2179 = vpop.f32.mrf.mxu0
  %v2180 = vadd.f32 %v2027, %v2179
  %v2181 = vpop.f32.mrf.mxu0
  %v2182 = vadd.f32 %v2029, %v2181
  %2183 = vmatprep.mubr.bf16.mxu0 %v1916
  %2184 = vmatmul.mubr.bf16.gmra.mxu0 %v942
  %v2185 = vpop.f32.mrf.mxu0
  %v2186 = vadd.f32 %v2033, %v2185
  %v2187 = vpop.f32.mrf.mxu0
  %v2188 = vadd.f32 %v2035, %v2187
  %v2189 = vpop.f32.mrf.mxu0
  %v2190 = vadd.f32 %v2037, %v2189
  %v2191 = vpop.f32.mrf.mxu0
  %v2192 = vadd.f32 %v2039, %v2191
  %2193 = vmatprep.mubr.bf16.mxu0 %v1919
  %2194 = vmatmul.mubr.bf16.gmra.mxu0 %v946
  %v2195 = vpop.f32.mrf.mxu0
  %v2196 = vadd.f32 %v2043, %v2195
  %v2197 = vpop.f32.mrf.mxu0
  %v2198 = vadd.f32 %v2045, %v2197
  %v2199 = vpop.f32.mrf.mxu0
  %v2200 = vadd.f32 %v2047, %v2199
  %v2201 = vpop.f32.mrf.mxu0
  %v2202 = vadd.f32 %v2049, %v2201
  %2203 = vmatprep.mubr.bf16.mxu0 %v1922
  %2204 = vmatmul.mubr.bf16.gmra.mxu0 %v950
  %v2205 = vpop.f32.mrf.mxu0
  %v2206 = vadd.f32 %v2053, %v2205
  %v2207 = vpop.f32.mrf.mxu0
  %v2208 = vadd.f32 %v2055, %v2207
  %v2209 = vpop.f32.mrf.mxu0
  %v2210 = vadd.f32 %v2057, %v2209
  %v2211 = vpop.f32.mrf.mxu0
  %v2212 = vadd.f32 %v2059, %v2211
  %2213 = vmatprep.mubr.bf16.mxu0 %v1925
  %2214 = vmatmul.mubr.bf16.gmra.mxu0 %v954
  %v2215 = vpop.f32.mrf.mxu0
  %v2216 = vadd.f32 %v2063, %v2215
  %v2217 = vpop.f32.mrf.mxu0
  %v2218 = vadd.f32 %v2065, %v2217
  %v2219 = vpop.f32.mrf.mxu0
  %v2220 = vadd.f32 %v2067, %v2219
  %v2221 = vpop.f32.mrf.mxu0
  %v2222 = vadd.f32 %v2069, %v2221
  %2223 = vmatprep.mubr.bf16.mxu0 %v1928
  %2224 = vmatmul.mubr.bf16.gmra.mxu0 %v958
  %v2225 = vpop.f32.mrf.mxu0
  %v2226 = vadd.f32 %v2073, %v2225
  %v2227 = vpop.f32.mrf.mxu0
  %v2228 = vadd.f32 %v2075, %v2227
  %v2229 = vpop.f32.mrf.mxu0
  %v2230 = vadd.f32 %v2077, %v2229
  %v2231 = vpop.f32.mrf.mxu0
  %v2232 = vadd.f32 %v2079, %v2231
  %2233 = vmatprep.mubr.bf16.mxu0 %v1931
  %2234 = vmatmul.mubr.bf16.gmra.mxu0 %v962
  %v2235 = vpop.f32.mrf.mxu0
  %v2236 = vadd.f32 %v2083, %v2235
  %v2237 = vpop.f32.mrf.mxu0
  %v2238 = vadd.f32 %v2085, %v2237
  %v2239 = vpop.f32.mrf.mxu0
  %v2240 = vadd.f32 %v2087, %v2239
  %v2241 = vpop.f32.mrf.mxu0
  %v2242 = vadd.f32 %v2089, %v2241
  %2243 = vmatprep.mubr.bf16.mxu0 %v1934
  %2244 = vmatmul.mubr.bf16.gmra.mxu0 %v966
  %v2245 = vpop.f32.mrf.mxu0
  %v2246 = vadd.f32 %v2093, %v2245
  %v2247 = vpop.f32.mrf.mxu0
  %v2248 = vadd.f32 %v2095, %v2247
  %v2249 = vpop.f32.mrf.mxu0
  %v2250 = vadd.f32 %v2097, %v2249
  %v2251 = vpop.f32.mrf.mxu0
  %v2252 = vadd.f32 %v2099, %v2251
  %2253 = vmatprep.mubr.bf16.mxu0 %v1937
  %2254 = vmatmul.mubr.bf16.gmra.mxu0 %v970
  %v2255 = vpop.f32.mrf.mxu0
  %v2256 = vadd.f32 %v2103, %v2255
  %v2257 = vpop.f32.mrf.mxu0
  %v2258 = vadd.f32 %v2105, %v2257
  %v2259 = vpop.f32.mrf.mxu0
  %v2260 = vadd.f32 %v2107, %v2259
  %v2261 = vpop.f32.mrf.mxu0
  %v2262 = vadd.f32 %v2109, %v2261
  %2263 = vdwg.mxu0
  %2264 = vmatprep.subr.bf16.mxu0 %v1593
  %2265 = vmatpush1.bf16.msra.mxu0 %v1592
  %2266 = vmatprep.subr.bf16.mxu0 %v1587
  %2267 = vmatpush1.bf16.msra.mxu0 %v1586
  %2268 = vmatprep.subr.bf16.mxu0 %v1581
  %2269 = vmatpush1.bf16.msra.mxu0 %v1580
  %2270 = vmatprep.subr.bf16.mxu0 %v1575
  %2271 = vmatpush1.bf16.msra.mxu0 %v1574
  %2272 = vmatprep.subr.bf16.mxu0 %v1569
  %2273 = vmatpush1.bf16.msra.mxu0 %v1568
  %2274 = vmatprep.subr.bf16.mxu0 %v1563
  %2275 = vmatpush1.bf16.msra.mxu0 %v1562
  %2276 = vmatprep.subr.bf16.mxu0 %v1557
  %2277 = vmatpush1.bf16.msra.mxu0 %v1556
  %2278 = vmatprep.subr.bf16.mxu0 %v1551
  %2279 = vmatpush1.bf16.msra.mxu0 %v1550
  %2280 = vmatprep.subr.bf16.mxu0 %v1641
  %2281 = vmatpush2.bf16.msra.mxu0 %v1640
  %2282 = vmatprep.subr.bf16.mxu0 %v1635
  %2283 = vmatpush2.bf16.msra.mxu0 %v1634
  %2284 = vmatprep.subr.bf16.mxu0 %v1629
  %2285 = vmatpush2.bf16.msra.mxu0 %v1628
  %2286 = vmatprep.subr.bf16.mxu0 %v1623
  %2287 = vmatpush2.bf16.msra.mxu0 %v1622
  %2288 = vmatprep.subr.bf16.mxu0 %v1617
  %2289 = vmatpush2.bf16.msra.mxu0 %v1616
  %2290 = vmatprep.subr.bf16.mxu0 %v1611
  %2291 = vmatpush2.bf16.msra.mxu0 %v1610
  %2292 = vmatprep.subr.bf16.mxu0 %v1605
  %2293 = vmatpush2.bf16.msra.mxu0 %v1604
  %2294 = vmatprep.subr.bf16.mxu0 %v1599
  %2295 = vmatpush2.bf16.msra.mxu0 %v1598
  %2296 = vmatprep.mubr.bf16.mxu0 %v925
  %2297 = vmatmul.mubr.bf16.gmra.mxu0 %v924
  %v2298 = vpop.f32.mrf.mxu0
  %v2299 = vadd.f32 %v761, %v2298
  %v2300 = vpop.f32.mrf.mxu0
  %v2301 = vadd.f32 %v765, %v2300
  %v2302 = vpop.f32.mrf.mxu0
  %v2303 = vadd.f32 %v761, %v2302
  %v2304 = vpop.f32.mrf.mxu0
  %v2305 = vadd.f32 %v765, %v2304
  %2306 = vmatprep.mubr.bf16.mxu0 %v929
  %2307 = vmatmul.mubr.bf16.gmra.mxu0 %v928
  %v2308 = vpop.f32.mrf.mxu0
  %v2309 = vadd.f32 %v761, %v2308
  %v2310 = vpop.f32.mrf.mxu0
  %v2311 = vadd.f32 %v765, %v2310
  %v2312 = vpop.f32.mrf.mxu0
  %v2313 = vadd.f32 %v761, %v2312
  %v2314 = vpop.f32.mrf.mxu0
  %v2315 = vadd.f32 %v765, %v2314
  %2316 = vmatprep.mubr.bf16.mxu0 %v933
  %2317 = vmatmul.mubr.bf16.gmra.mxu0 %v932
  %v2318 = vpop.f32.mrf.mxu0
  %v2319 = vadd.f32 %v761, %v2318
  %v2320 = vpop.f32.mrf.mxu0
  %v2321 = vadd.f32 %v765, %v2320
  %v2322 = vpop.f32.mrf.mxu0
  %v2323 = vadd.f32 %v761, %v2322
  %v2324 = vpop.f32.mrf.mxu0
  %v2325 = vadd.f32 %v765, %v2324
  %2326 = vmatprep.mubr.bf16.mxu0 %v937
  %2327 = vmatmul.mubr.bf16.gmra.mxu0 %v936
  %v2328 = vpop.f32.mrf.mxu0
  %v2329 = vadd.f32 %v761, %v2328
  %v2330 = vpop.f32.mrf.mxu0
  %v2331 = vadd.f32 %v765, %v2330
  %v2332 = vpop.f32.mrf.mxu0
  %v2333 = vadd.f32 %v761, %v2332
  %v2334 = vpop.f32.mrf.mxu0
  %v2335 = vadd.f32 %v765, %v2334
  %2336 = vmatprep.mubr.bf16.mxu0 %v941
  %2337 = vmatmul.mubr.bf16.gmra.mxu0 %v940
  %v2338 = vpop.f32.mrf.mxu0
  %v2339 = vadd.f32 %v761, %v2338
  %v2340 = vpop.f32.mrf.mxu0
  %v2341 = vadd.f32 %v765, %v2340
  %v2342 = vpop.f32.mrf.mxu0
  %v2343 = vadd.f32 %v761, %v2342
  %v2344 = vpop.f32.mrf.mxu0
  %v2345 = vadd.f32 %v765, %v2344
  %2346 = vmatprep.mubr.bf16.mxu0 %v945
  %2347 = vmatmul.mubr.bf16.gmra.mxu0 %v944
  %v2348 = vpop.f32.mrf.mxu0
  %v2349 = vadd.f32 %v761, %v2348
  %v2350 = vpop.f32.mrf.mxu0
  %v2351 = vadd.f32 %v765, %v2350
  %v2352 = vpop.f32.mrf.mxu0
  %v2353 = vadd.f32 %v761, %v2352
  %v2354 = vpop.f32.mrf.mxu0
  %v2355 = vadd.f32 %v765, %v2354
  %2356 = vmatprep.mubr.bf16.mxu0 %v949
  %2357 = vmatmul.mubr.bf16.gmra.mxu0 %v948
  %v2358 = vpop.f32.mrf.mxu0
  %v2359 = vadd.f32 %v761, %v2358
  %v2360 = vpop.f32.mrf.mxu0
  %v2361 = vadd.f32 %v765, %v2360
  %v2362 = vpop.f32.mrf.mxu0
  %v2363 = vadd.f32 %v761, %v2362
  %v2364 = vpop.f32.mrf.mxu0
  %v2365 = vadd.f32 %v765, %v2364
  %2366 = vmatprep.mubr.bf16.mxu0 %v953
  %2367 = vmatmul.mubr.bf16.gmra.mxu0 %v952
  %v2368 = vpop.f32.mrf.mxu0
  %v2369 = vadd.f32 %v761, %v2368
  %v2370 = vpop.f32.mrf.mxu0
  %v2371 = vadd.f32 %v765, %v2370
  %v2372 = vpop.f32.mrf.mxu0
  %v2373 = vadd.f32 %v761, %v2372
  %v2374 = vpop.f32.mrf.mxu0
  %v2375 = vadd.f32 %v765, %v2374
  %2376 = vmatprep.mubr.bf16.mxu0 %v957
  %2377 = vmatmul.mubr.bf16.gmra.mxu0 %v956
  %v2378 = vpop.f32.mrf.mxu0
  %v2379 = vadd.f32 %v761, %v2378
  %v2380 = vpop.f32.mrf.mxu0
  %v2381 = vadd.f32 %v765, %v2380
  %v2382 = vpop.f32.mrf.mxu0
  %v2383 = vadd.f32 %v761, %v2382
  %v2384 = vpop.f32.mrf.mxu0
  %v2385 = vadd.f32 %v765, %v2384
  %2386 = vmatprep.mubr.bf16.mxu0 %v961
  %2387 = vmatmul.mubr.bf16.gmra.mxu0 %v960
  %v2388 = vpop.f32.mrf.mxu0
  %v2389 = vadd.f32 %v761, %v2388
  %v2390 = vpop.f32.mrf.mxu0
  %v2391 = vadd.f32 %v765, %v2390
  %v2392 = vpop.f32.mrf.mxu0
  %v2393 = vadd.f32 %v761, %v2392
  %v2394 = vpop.f32.mrf.mxu0
  %v2395 = vadd.f32 %v765, %v2394
  %2396 = vmatprep.mubr.bf16.mxu0 %v965
  %2397 = vmatmul.mubr.bf16.gmra.mxu0 %v964
  %v2398 = vpop.f32.mrf.mxu0
  %v2399 = vadd.f32 %v761, %v2398
  %v2400 = vpop.f32.mrf.mxu0
  %v2401 = vadd.f32 %v765, %v2400
  %v2402 = vpop.f32.mrf.mxu0
  %v2403 = vadd.f32 %v761, %v2402
  %v2404 = vpop.f32.mrf.mxu0
  %v2405 = vadd.f32 %v765, %v2404
  %2406 = vmatprep.mubr.bf16.mxu0 %v969
  %2407 = vmatmul.mubr.bf16.gmra.mxu0 %v968
  %v2408 = vpop.f32.mrf.mxu0
  %v2409 = vadd.f32 %v761, %v2408
  %v2410 = vpop.f32.mrf.mxu0
  %v2411 = vadd.f32 %v765, %v2410
  %v2412 = vpop.f32.mrf.mxu0
  %v2413 = vadd.f32 %v761, %v2412
  %v2414 = vpop.f32.mrf.mxu0
  %v2415 = vadd.f32 %v765, %v2414
  %2416 = vdwg.mxu0
  %2417 = vmatprep.subr.bf16.mxu0 %v1689
  %2418 = vmatpush1.bf16.msra.mxu0 %v1688
  %2419 = vmatprep.subr.bf16.mxu0 %v1683
  %2420 = vmatpush1.bf16.msra.mxu0 %v1682
  %2421 = vmatprep.subr.bf16.mxu0 %v1677
  %2422 = vmatpush1.bf16.msra.mxu0 %v1676
  %2423 = vmatprep.subr.bf16.mxu0 %v1671
  %2424 = vmatpush1.bf16.msra.mxu0 %v1670
  %2425 = vmatprep.subr.bf16.mxu0 %v1665
  %2426 = vmatpush1.bf16.msra.mxu0 %v1664
  %2427 = vmatprep.subr.bf16.mxu0 %v1659
  %2428 = vmatpush1.bf16.msra.mxu0 %v1658
  %2429 = vmatprep.subr.bf16.mxu0 %v1653
  %2430 = vmatpush1.bf16.msra.mxu0 %v1652
  %2431 = vmatprep.subr.bf16.mxu0 %v1647
  %2432 = vmatpush1.bf16.msra.mxu0 %v1646
  %2433 = vmatprep.subr.bf16.mxu0 0
  %2434 = vmatpush2.bf16.msra.mxu0 0
  %2435 = vmatprep.subr.bf16.mxu0 0
  %2436 = vmatpush2.bf16.msra.mxu0 0
  %2437 = vmatprep.subr.bf16.mxu0 %v1950
  %2438 = vmatpush2.bf16.msra.mxu0 %v1947
  %2439 = vmatprep.subr.bf16.mxu0 %v1719
  %2440 = vmatpush2.bf16.msra.mxu0 %v1718
  %2441 = vmatprep.subr.bf16.mxu0 %v1713
  %2442 = vmatpush2.bf16.msra.mxu0 %v1712
  %2443 = vmatprep.subr.bf16.mxu0 %v1707
  %2444 = vmatpush2.bf16.msra.mxu0 %v1706
  %2445 = vmatprep.subr.bf16.mxu0 %v1701
  %2446 = vmatpush2.bf16.msra.mxu0 %v1700
  %2447 = vmatprep.subr.bf16.mxu0 %v1695
  %2448 = vmatpush2.bf16.msra.mxu0 %v1694
  %2449 = vmatprep.mubr.bf16.mxu0 %v1904
  %2450 = vmatmul.mubr.bf16.gmra.mxu0 %v926
  %v2451 = vpop.f32.mrf.mxu0
  %v2452 = vadd.f32 %v2299, %v2451
  %v2453 = vpop.f32.mrf.mxu0
  %v2454 = vadd.f32 %v2301, %v2453
  %v2455 = vpop.f32.mrf.mxu0
  %v2456 = vadd.f32 %v2303, %v2455
  %v2457 = vpop.f32.mrf.mxu0
  %v2458 = vadd.f32 %v2305, %v2457
  %2459 = vmatprep.mubr.bf16.mxu0 %v1907
  %2460 = vmatmul.mubr.bf16.gmra.mxu0 %v930
  %v2461 = vpop.f32.mrf.mxu0
  %v2462 = vadd.f32 %v2309, %v2461
  %v2463 = vpop.f32.mrf.mxu0
  %v2464 = vadd.f32 %v2311, %v2463
  %v2465 = vpop.f32.mrf.mxu0
  %v2466 = vadd.f32 %v2313, %v2465
  %v2467 = vpop.f32.mrf.mxu0
  %v2468 = vadd.f32 %v2315, %v2467
  %2469 = vmatprep.mubr.bf16.mxu0 %v1910
  %2470 = vmatmul.mubr.bf16.gmra.mxu0 %v934
  %v2471 = vpop.f32.mrf.mxu0
  %v2472 = vadd.f32 %v2319, %v2471
  %v2473 = vpop.f32.mrf.mxu0
  %v2474 = vadd.f32 %v2321, %v2473
  %v2475 = vpop.f32.mrf.mxu0
  %v2476 = vadd.f32 %v2323, %v2475
  %v2477 = vpop.f32.mrf.mxu0
  %v2478 = vadd.f32 %v2325, %v2477
  %2479 = vmatprep.mubr.bf16.mxu0 %v1913
  %2480 = vmatmul.mubr.bf16.gmra.mxu0 %v938
  %v2481 = vpop.f32.mrf.mxu0
  %v2482 = vadd.f32 %v2329, %v2481
  %v2483 = vpop.f32.mrf.mxu0
  %v2484 = vadd.f32 %v2331, %v2483
  %v2485 = vpop.f32.mrf.mxu0
  %v2486 = vadd.f32 %v2333, %v2485
  %v2487 = vpop.f32.mrf.mxu0
  %v2488 = vadd.f32 %v2335, %v2487
  %2489 = vmatprep.mubr.bf16.mxu0 %v1916
  %2490 = vmatmul.mubr.bf16.gmra.mxu0 %v942
  %v2491 = vpop.f32.mrf.mxu0
  %v2492 = vadd.f32 %v2339, %v2491
  %v2493 = vpop.f32.mrf.mxu0
  %v2494 = vadd.f32 %v2341, %v2493
  %v2495 = vpop.f32.mrf.mxu0
  %v2496 = vadd.f32 %v2343, %v2495
  %v2497 = vpop.f32.mrf.mxu0
  %v2498 = vadd.f32 %v2345, %v2497
  %2499 = vmatprep.mubr.bf16.mxu0 %v1919
  %2500 = vmatmul.mubr.bf16.gmra.mxu0 %v946
  %v2501 = vpop.f32.mrf.mxu0
  %v2502 = vadd.f32 %v2349, %v2501
  %v2503 = vpop.f32.mrf.mxu0
  %v2504 = vadd.f32 %v2351, %v2503
  %v2505 = vpop.f32.mrf.mxu0
  %v2506 = vadd.f32 %v2353, %v2505
  %v2507 = vpop.f32.mrf.mxu0
  %v2508 = vadd.f32 %v2355, %v2507
  %2509 = vmatprep.mubr.bf16.mxu0 %v1922
  %2510 = vmatmul.mubr.bf16.gmra.mxu0 %v950
  %v2511 = vpop.f32.mrf.mxu0
  %v2512 = vadd.f32 %v2359, %v2511
  %v2513 = vpop.f32.mrf.mxu0
  %v2514 = vadd.f32 %v2361, %v2513
  %v2515 = vpop.f32.mrf.mxu0
  %v2516 = vadd.f32 %v2363, %v2515
  %v2517 = vpop.f32.mrf.mxu0
  %v2518 = vadd.f32 %v2365, %v2517
  %2519 = vmatprep.mubr.bf16.mxu0 %v1925
  %2520 = vmatmul.mubr.bf16.gmra.mxu0 %v954
  %v2521 = vpop.f32.mrf.mxu0
  %v2522 = vadd.f32 %v2369, %v2521
  %v2523 = vpop.f32.mrf.mxu0
  %v2524 = vadd.f32 %v2371, %v2523
  %v2525 = vpop.f32.mrf.mxu0
  %v2526 = vadd.f32 %v2373, %v2525
  %v2527 = vpop.f32.mrf.mxu0
  %v2528 = vadd.f32 %v2375, %v2527
  %2529 = vmatprep.mubr.bf16.mxu0 %v1928
  %2530 = vmatmul.mubr.bf16.gmra.mxu0 %v958
  %v2531 = vpop.f32.mrf.mxu0
  %v2532 = vadd.f32 %v2379, %v2531
  %v2533 = vpop.f32.mrf.mxu0
  %v2534 = vadd.f32 %v2381, %v2533
  %v2535 = vpop.f32.mrf.mxu0
  %v2536 = vadd.f32 %v2383, %v2535
  %v2537 = vpop.f32.mrf.mxu0
  %v2538 = vadd.f32 %v2385, %v2537
  %2539 = vmatprep.mubr.bf16.mxu0 %v1931
  %2540 = vmatmul.mubr.bf16.gmra.mxu0 %v962
  %v2541 = vpop.f32.mrf.mxu0
  %v2542 = vadd.f32 %v2389, %v2541
  %v2543 = vpop.f32.mrf.mxu0
  %v2544 = vadd.f32 %v2391, %v2543
  %v2545 = vpop.f32.mrf.mxu0
  %v2546 = vadd.f32 %v2393, %v2545
  %v2547 = vpop.f32.mrf.mxu0
  %v2548 = vadd.f32 %v2395, %v2547
  %2549 = vmatprep.mubr.bf16.mxu0 %v1934
  %2550 = vmatmul.mubr.bf16.gmra.mxu0 %v966
  %v2551 = vpop.f32.mrf.mxu0
  %v2552 = vadd.f32 %v2399, %v2551
  %v2553 = vpop.f32.mrf.mxu0
  %v2554 = vadd.f32 %v2401, %v2553
  %v2555 = vpop.f32.mrf.mxu0
  %v2556 = vadd.f32 %v2403, %v2555
  %v2557 = vpop.f32.mrf.mxu0
  %v2558 = vadd.f32 %v2405, %v2557
  %2559 = vmatprep.mubr.bf16.mxu0 %v1937
  %2560 = vmatmul.mubr.bf16.gmra.mxu0 %v970
  %v2561 = vpop.f32.mrf.mxu0
  %v2562 = vadd.f32 %v2409, %v2561
  %v2563 = vpop.f32.mrf.mxu0
  %v2564 = vadd.f32 %v2411, %v2563
  %v2565 = vpop.f32.mrf.mxu0
  %v2566 = vadd.f32 %v2413, %v2565
  %v2567 = vpop.f32.mrf.mxu0
  %v2568 = vadd.f32 %v2415, %v2567
  %2569 = vdwg.mxu0
  %2570 = vmatprep.subr.bf16.mxu0 %v1595
  %2571 = vmatpush1.bf16.msra.mxu0 %v1594
  %2572 = vmatprep.subr.bf16.mxu0 %v1589
  %2573 = vmatpush1.bf16.msra.mxu0 %v1588
  %2574 = vmatprep.subr.bf16.mxu0 %v1583
  %2575 = vmatpush1.bf16.msra.mxu0 %v1582
  %2576 = vmatprep.subr.bf16.mxu0 %v1577
  %2577 = vmatpush1.bf16.msra.mxu0 %v1576
  %2578 = vmatprep.subr.bf16.mxu0 %v1571
  %2579 = vmatpush1.bf16.msra.mxu0 %v1570
  %2580 = vmatprep.subr.bf16.mxu0 %v1565
  %2581 = vmatpush1.bf16.msra.mxu0 %v1564
  %2582 = vmatprep.subr.bf16.mxu0 %v1559
  %2583 = vmatpush1.bf16.msra.mxu0 %v1558
  %2584 = vmatprep.subr.bf16.mxu0 %v1553
  %2585 = vmatpush1.bf16.msra.mxu0 %v1552
  %2586 = vmatprep.subr.bf16.mxu0 %v1643
  %2587 = vmatpush2.bf16.msra.mxu0 %v1642
  %2588 = vmatprep.subr.bf16.mxu0 %v1637
  %2589 = vmatpush2.bf16.msra.mxu0 %v1636
  %2590 = vmatprep.subr.bf16.mxu0 %v1631
  %2591 = vmatpush2.bf16.msra.mxu0 %v1630
  %2592 = vmatprep.subr.bf16.mxu0 %v1625
  %2593 = vmatpush2.bf16.msra.mxu0 %v1624
  %2594 = vmatprep.subr.bf16.mxu0 %v1619
  %2595 = vmatpush2.bf16.msra.mxu0 %v1618
  %2596 = vmatprep.subr.bf16.mxu0 %v1613
  %2597 = vmatpush2.bf16.msra.mxu0 %v1612
  %2598 = vmatprep.subr.bf16.mxu0 %v1607
  %2599 = vmatpush2.bf16.msra.mxu0 %v1606
  %2600 = vmatprep.subr.bf16.mxu0 %v1601
  %2601 = vmatpush2.bf16.msra.mxu0 %v1600
  %2602 = vmatprep.mubr.bf16.mxu0 %v925
  %2603 = vmatmul.mubr.bf16.gmra.mxu0 %v924
  %v2604 = vpop.f32.mrf.mxu0
  %v2605 = vadd.f32 %v769, %v2604
  %v2606 = vpop.f32.mrf.mxu0
  %v2607 = vadd.f32 %v773, %v2606
  %v2608 = vpop.f32.mrf.mxu0
  %v2609 = vadd.f32 %v769, %v2608
  %v2610 = vpop.f32.mrf.mxu0
  %v2611 = vadd.f32 %v773, %v2610
  %2612 = vmatprep.mubr.bf16.mxu0 %v929
  %2613 = vmatmul.mubr.bf16.gmra.mxu0 %v928
  %v2614 = vpop.f32.mrf.mxu0
  %v2615 = vadd.f32 %v769, %v2614
  %v2616 = vpop.f32.mrf.mxu0
  %v2617 = vadd.f32 %v773, %v2616
  %v2618 = vpop.f32.mrf.mxu0
  %v2619 = vadd.f32 %v769, %v2618
  %v2620 = vpop.f32.mrf.mxu0
  %v2621 = vadd.f32 %v773, %v2620
  %2622 = vmatprep.mubr.bf16.mxu0 %v933
  %2623 = vmatmul.mubr.bf16.gmra.mxu0 %v932
  %v2624 = vpop.f32.mrf.mxu0
  %v2625 = vadd.f32 %v769, %v2624
  %v2626 = vpop.f32.mrf.mxu0
  %v2627 = vadd.f32 %v773, %v2626
  %v2628 = vpop.f32.mrf.mxu0
  %v2629 = vadd.f32 %v769, %v2628
  %v2630 = vpop.f32.mrf.mxu0
  %v2631 = vadd.f32 %v773, %v2630
  %2632 = vmatprep.mubr.bf16.mxu0 %v937
  %2633 = vmatmul.mubr.bf16.gmra.mxu0 %v936
  %v2634 = vpop.f32.mrf.mxu0
  %v2635 = vadd.f32 %v769, %v2634
  %v2636 = vpop.f32.mrf.mxu0
  %v2637 = vadd.f32 %v773, %v2636
  %v2638 = vpop.f32.mrf.mxu0
  %v2639 = vadd.f32 %v769, %v2638
  %v2640 = vpop.f32.mrf.mxu0
  %v2641 = vadd.f32 %v773, %v2640
  %2642 = vmatprep.mubr.bf16.mxu0 %v941
  %2643 = vmatmul.mubr.bf16.gmra.mxu0 %v940
  %v2644 = vpop.f32.mrf.mxu0
  %v2645 = vadd.f32 %v769, %v2644
  %v2646 = vpop.f32.mrf.mxu0
  %v2647 = vadd.f32 %v773, %v2646
  %v2648 = vpop.f32.mrf.mxu0
  %v2649 = vadd.f32 %v769, %v2648
  %v2650 = vpop.f32.mrf.mxu0
  %v2651 = vadd.f32 %v773, %v2650
  %2652 = vmatprep.mubr.bf16.mxu0 %v945
  %2653 = vmatmul.mubr.bf16.gmra.mxu0 %v944
  %v2654 = vpop.f32.mrf.mxu0
  %v2655 = vadd.f32 %v769, %v2654
  %v2656 = vpop.f32.mrf.mxu0
  %v2657 = vadd.f32 %v773, %v2656
  %v2658 = vpop.f32.mrf.mxu0
  %v2659 = vadd.f32 %v769, %v2658
  %v2660 = vpop.f32.mrf.mxu0
  %v2661 = vadd.f32 %v773, %v2660
  %2662 = vmatprep.mubr.bf16.mxu0 %v949
  %2663 = vmatmul.mubr.bf16.gmra.mxu0 %v948
  %v2664 = vpop.f32.mrf.mxu0
  %v2665 = vadd.f32 %v769, %v2664
  %v2666 = vpop.f32.mrf.mxu0
  %v2667 = vadd.f32 %v773, %v2666
  %v2668 = vpop.f32.mrf.mxu0
  %v2669 = vadd.f32 %v769, %v2668
  %v2670 = vpop.f32.mrf.mxu0
  %v2671 = vadd.f32 %v773, %v2670
  %2672 = vmatprep.mubr.bf16.mxu0 %v953
  %2673 = vmatmul.mubr.bf16.gmra.mxu0 %v952
  %v2674 = vpop.f32.mrf.mxu0
  %v2675 = vadd.f32 %v769, %v2674
  %v2676 = vpop.f32.mrf.mxu0
  %v2677 = vadd.f32 %v773, %v2676
  %v2678 = vpop.f32.mrf.mxu0
  %v2679 = vadd.f32 %v769, %v2678
  %v2680 = vpop.f32.mrf.mxu0
  %v2681 = vadd.f32 %v773, %v2680
  %2682 = vmatprep.mubr.bf16.mxu0 %v957
  %2683 = vmatmul.mubr.bf16.gmra.mxu0 %v956
  %v2684 = vpop.f32.mrf.mxu0
  %v2685 = vadd.f32 %v769, %v2684
  %v2686 = vpop.f32.mrf.mxu0
  %v2687 = vadd.f32 %v773, %v2686
  %v2688 = vpop.f32.mrf.mxu0
  %v2689 = vadd.f32 %v769, %v2688
  %v2690 = vpop.f32.mrf.mxu0
  %v2691 = vadd.f32 %v773, %v2690
  %2692 = vmatprep.mubr.bf16.mxu0 %v961
  %2693 = vmatmul.mubr.bf16.gmra.mxu0 %v960
  %v2694 = vpop.f32.mrf.mxu0
  %v2695 = vadd.f32 %v769, %v2694
  %v2696 = vpop.f32.mrf.mxu0
  %v2697 = vadd.f32 %v773, %v2696
  %v2698 = vpop.f32.mrf.mxu0
  %v2699 = vadd.f32 %v769, %v2698
  %v2700 = vpop.f32.mrf.mxu0
  %v2701 = vadd.f32 %v773, %v2700
  %2702 = vmatprep.mubr.bf16.mxu0 %v965
  %2703 = vmatmul.mubr.bf16.gmra.mxu0 %v964
  %v2704 = vpop.f32.mrf.mxu0
  %v2705 = vadd.f32 %v769, %v2704
  %v2706 = vpop.f32.mrf.mxu0
  %v2707 = vadd.f32 %v773, %v2706
  %v2708 = vpop.f32.mrf.mxu0
  %v2709 = vadd.f32 %v769, %v2708
  %v2710 = vpop.f32.mrf.mxu0
  %v2711 = vadd.f32 %v773, %v2710
  %2712 = vmatprep.mubr.bf16.mxu0 %v969
  %2713 = vmatmul.mubr.bf16.gmra.mxu0 %v968
  %v2714 = vpop.f32.mrf.mxu0
  %v2715 = vadd.f32 %v769, %v2714
  %v2716 = vpop.f32.mrf.mxu0
  %v2717 = vadd.f32 %v773, %v2716
  %v2718 = vpop.f32.mrf.mxu0
  %v2719 = vadd.f32 %v769, %v2718
  %v2720 = vpop.f32.mrf.mxu0
  %v2721 = vadd.f32 %v773, %v2720
  %2722 = vdwg.mxu0
  %2723 = vmatprep.subr.bf16.mxu0 %v1691
  %2724 = vmatpush1.bf16.msra.mxu0 %v1690
  %2725 = vmatprep.subr.bf16.mxu0 %v1685
  %2726 = vmatpush1.bf16.msra.mxu0 %v1684
  %2727 = vmatprep.subr.bf16.mxu0 %v1679
  %2728 = vmatpush1.bf16.msra.mxu0 %v1678
  %2729 = vmatprep.subr.bf16.mxu0 %v1673
  %2730 = vmatpush1.bf16.msra.mxu0 %v1672
  %2731 = vmatprep.subr.bf16.mxu0 %v1667
  %2732 = vmatpush1.bf16.msra.mxu0 %v1666
  %2733 = vmatprep.subr.bf16.mxu0 %v1661
  %2734 = vmatpush1.bf16.msra.mxu0 %v1660
  %2735 = vmatprep.subr.bf16.mxu0 %v1655
  %2736 = vmatpush1.bf16.msra.mxu0 %v1654
  %2737 = vmatprep.subr.bf16.mxu0 %v1649
  %2738 = vmatpush1.bf16.msra.mxu0 %v1648
  %2739 = vmatprep.subr.bf16.mxu0 0
  %2740 = vmatpush2.bf16.msra.mxu0 0
  %2741 = vmatprep.subr.bf16.mxu0 0
  %2742 = vmatpush2.bf16.msra.mxu0 0
  %2743 = vmatprep.subr.bf16.mxu0 %v1956
  %2744 = vmatpush2.bf16.msra.mxu0 %v1953
  %2745 = vmatprep.subr.bf16.mxu0 %v1721
  %2746 = vmatpush2.bf16.msra.mxu0 %v1720
  %2747 = vmatprep.subr.bf16.mxu0 %v1715
  %2748 = vmatpush2.bf16.msra.mxu0 %v1714
  %2749 = vmatprep.subr.bf16.mxu0 %v1709
  %2750 = vmatpush2.bf16.msra.mxu0 %v1708
  %2751 = vmatprep.subr.bf16.mxu0 %v1703
  %2752 = vmatpush2.bf16.msra.mxu0 %v1702
  %2753 = vmatprep.subr.bf16.mxu0 %v1697
  %2754 = vmatpush2.bf16.msra.mxu0 %v1696
  %2755 = vmatprep.mubr.bf16.mxu0 %v1904
  %2756 = vmatmul.mubr.bf16.gmra.mxu0 %v926
  %v2757 = vpop.f32.mrf.mxu0
  %v2758 = vadd.f32 %v2605, %v2757
  %v2759 = vpop.f32.mrf.mxu0
  %v2760 = vadd.f32 %v2607, %v2759
  %v2761 = vpop.f32.mrf.mxu0
  %v2762 = vadd.f32 %v2609, %v2761
  %v2763 = vpop.f32.mrf.mxu0
  %v2764 = vadd.f32 %v2611, %v2763
  %2765 = vmatprep.mubr.bf16.mxu0 %v1907
  %2766 = vmatmul.mubr.bf16.gmra.mxu0 %v930
  %v2767 = vpop.f32.mrf.mxu0
  %v2768 = vadd.f32 %v2615, %v2767
  %v2769 = vpop.f32.mrf.mxu0
  %v2770 = vadd.f32 %v2617, %v2769
  %v2771 = vpop.f32.mrf.mxu0
  %v2772 = vadd.f32 %v2619, %v2771
  %v2773 = vpop.f32.mrf.mxu0
  %v2774 = vadd.f32 %v2621, %v2773
  %2775 = vmatprep.mubr.bf16.mxu0 %v1910
  %2776 = vmatmul.mubr.bf16.gmra.mxu0 %v934
  %v2777 = vpop.f32.mrf.mxu0
  %v2778 = vadd.f32 %v2625, %v2777
  %v2779 = vpop.f32.mrf.mxu0
  %v2780 = vadd.f32 %v2627, %v2779
  %v2781 = vpop.f32.mrf.mxu0
  %v2782 = vadd.f32 %v2629, %v2781
  %v2783 = vpop.f32.mrf.mxu0
  %v2784 = vadd.f32 %v2631, %v2783
  %2785 = vmatprep.mubr.bf16.mxu0 %v1913
  %2786 = vmatmul.mubr.bf16.gmra.mxu0 %v938
  %v2787 = vpop.f32.mrf.mxu0
  %v2788 = vadd.f32 %v2635, %v2787
  %v2789 = vpop.f32.mrf.mxu0
  %v2790 = vadd.f32 %v2637, %v2789
  %v2791 = vpop.f32.mrf.mxu0
  %v2792 = vadd.f32 %v2639, %v2791
  %v2793 = vpop.f32.mrf.mxu0
  %v2794 = vadd.f32 %v2641, %v2793
  %2795 = vmatprep.mubr.bf16.mxu0 %v1916
  %2796 = vmatmul.mubr.bf16.gmra.mxu0 %v942
  %v2797 = vpop.f32.mrf.mxu0
  %v2798 = vadd.f32 %v2645, %v2797
  %v2799 = vpop.f32.mrf.mxu0
  %v2800 = vadd.f32 %v2647, %v2799
  %v2801 = vpop.f32.mrf.mxu0
  %v2802 = vadd.f32 %v2649, %v2801
  %v2803 = vpop.f32.mrf.mxu0
  %v2804 = vadd.f32 %v2651, %v2803
  %2805 = vmatprep.mubr.bf16.mxu0 %v1919
  %2806 = vmatmul.mubr.bf16.gmra.mxu0 %v946
  %v2807 = vpop.f32.mrf.mxu0
  %v2808 = vadd.f32 %v2655, %v2807
  %v2809 = vpop.f32.mrf.mxu0
  %v2810 = vadd.f32 %v2657, %v2809
  %v2811 = vpop.f32.mrf.mxu0
  %v2812 = vadd.f32 %v2659, %v2811
  %v2813 = vpop.f32.mrf.mxu0
  %v2814 = vadd.f32 %v2661, %v2813
  %2815 = vmatprep.mubr.bf16.mxu0 %v1922
  %2816 = vmatmul.mubr.bf16.gmra.mxu0 %v950
  %v2817 = vpop.f32.mrf.mxu0
  %v2818 = vadd.f32 %v2665, %v2817
  %v2819 = vpop.f32.mrf.mxu0
  %v2820 = vadd.f32 %v2667, %v2819
  %v2821 = vpop.f32.mrf.mxu0
  %v2822 = vadd.f32 %v2669, %v2821
  %v2823 = vpop.f32.mrf.mxu0
  %v2824 = vadd.f32 %v2671, %v2823
  %2825 = vmatprep.mubr.bf16.mxu0 %v1925
  %2826 = vmatmul.mubr.bf16.gmra.mxu0 %v954
  %v2827 = vpop.f32.mrf.mxu0
  %v2828 = vadd.f32 %v2675, %v2827
  %v2829 = vpop.f32.mrf.mxu0
  %v2830 = vadd.f32 %v2677, %v2829
  %v2831 = vpop.f32.mrf.mxu0
  %v2832 = vadd.f32 %v2679, %v2831
  %v2833 = vpop.f32.mrf.mxu0
  %v2834 = vadd.f32 %v2681, %v2833
  %2835 = vmatprep.mubr.bf16.mxu0 %v1928
  %2836 = vmatmul.mubr.bf16.gmra.mxu0 %v958
  %v2837 = vpop.f32.mrf.mxu0
  %v2838 = vadd.f32 %v2685, %v2837
  %v2839 = vpop.f32.mrf.mxu0
  %v2840 = vadd.f32 %v2687, %v2839
  %v2841 = vpop.f32.mrf.mxu0
  %v2842 = vadd.f32 %v2689, %v2841
  %v2843 = vpop.f32.mrf.mxu0
  %v2844 = vadd.f32 %v2691, %v2843
  %2845 = vmatprep.mubr.bf16.mxu0 %v1931
  %2846 = vmatmul.mubr.bf16.gmra.mxu0 %v962
  %v2847 = vpop.f32.mrf.mxu0
  %v2848 = vadd.f32 %v2695, %v2847
  %v2849 = vpop.f32.mrf.mxu0
  %v2850 = vadd.f32 %v2697, %v2849
  %v2851 = vpop.f32.mrf.mxu0
  %v2852 = vadd.f32 %v2699, %v2851
  %v2853 = vpop.f32.mrf.mxu0
  %v2854 = vadd.f32 %v2701, %v2853
  %2855 = vmatprep.mubr.bf16.mxu0 %v1934
  %2856 = vmatmul.mubr.bf16.gmra.mxu0 %v966
  %v2857 = vpop.f32.mrf.mxu0
  %v2858 = vadd.f32 %v2705, %v2857
  %v2859 = vpop.f32.mrf.mxu0
  %v2860 = vadd.f32 %v2707, %v2859
  %v2861 = vpop.f32.mrf.mxu0
  %v2862 = vadd.f32 %v2709, %v2861
  %v2863 = vpop.f32.mrf.mxu0
  %v2864 = vadd.f32 %v2711, %v2863
  %2865 = vmatprep.mubr.bf16.mxu0 %v1937
  %2866 = vmatmul.mubr.bf16.gmra.mxu0 %v970
  %v2867 = vpop.f32.mrf.mxu0
  %v2868 = vadd.f32 %v2715, %v2867
  %v2869 = vpop.f32.mrf.mxu0
  %v2870 = vadd.f32 %v2717, %v2869
  %v2871 = vpop.f32.mrf.mxu0
  %v2872 = vadd.f32 %v2719, %v2871
  %v2873 = vpop.f32.mrf.mxu0
  %v2874 = vadd.f32 %v2721, %v2873
  %2875 = vdwg.mxu0
  %v2876 = vpack.c.bf16 %v2150, %v2146
  %v2877 = vpack.c.bf16 %v2152, %v2148
  %v2878 = vpack.c.bf16 %v2456, %v2452
  %v2879 = vpack.c.bf16 %v2458, %v2454
  %v2880 = vpack.c.bf16 %v2762, %v2758
  %v2881 = vpack.c.bf16 %v2764, %v2760
  %v2882 = vpack.c.bf16 %v2160, %v2156
  %v2883 = vpack.c.bf16 %v2162, %v2158
  %v2884 = vpack.c.bf16 %v2466, %v2462
  %v2885 = vpack.c.bf16 %v2468, %v2464
  %v2886 = vpack.c.bf16 %v2772, %v2768
  %v2887 = vpack.c.bf16 %v2774, %v2770
  %v2888 = vpack.c.bf16 %v2170, %v2166
  %v2889 = vpack.c.bf16 %v2172, %v2168
  %v2890 = vpack.c.bf16 %v2476, %v2472
  %v2891 = vpack.c.bf16 %v2478, %v2474
  %v2892 = vpack.c.bf16 %v2782, %v2778
  %v2893 = vpack.c.bf16 %v2784, %v2780
  %v2894 = vpack.c.bf16 %v2180, %v2176
  %v2895 = vpack.c.bf16 %v2182, %v2178
  %v2896 = vpack.c.bf16 %v2486, %v2482
  %v2897 = vpack.c.bf16 %v2488, %v2484
  %v2898 = vpack.c.bf16 %v2792, %v2788
  %v2899 = vpack.c.bf16 %v2794, %v2790
  %v2900 = vpack.c.bf16 %v2190, %v2186
  %v2901 = vpack.c.bf16 %v2192, %v2188
  %v2902 = vpack.c.bf16 %v2496, %v2492
  %v2903 = vpack.c.bf16 %v2498, %v2494
  %v2904 = vpack.c.bf16 %v2802, %v2798
  %v2905 = vpack.c.bf16 %v2804, %v2800
  %v2906 = vpack.c.bf16 %v2200, %v2196
  %v2907 = vpack.c.bf16 %v2202, %v2198
  %v2908 = vpack.c.bf16 %v2506, %v2502
  %v2909 = vpack.c.bf16 %v2508, %v2504
  %v2910 = vpack.c.bf16 %v2812, %v2808
  %v2911 = vpack.c.bf16 %v2814, %v2810
  %v2912 = vpack.c.bf16 %v2210, %v2206
  %v2913 = vpack.c.bf16 %v2212, %v2208
  %v2914 = vpack.c.bf16 %v2516, %v2512
  %v2915 = vpack.c.bf16 %v2518, %v2514
  %v2916 = vpack.c.bf16 %v2822, %v2818
  %v2917 = vpack.c.bf16 %v2824, %v2820
  %v2918 = vpack.c.bf16 %v2220, %v2216
  %v2919 = vpack.c.bf16 %v2222, %v2218
  %v2920 = vpack.c.bf16 %v2526, %v2522
  %v2921 = vpack.c.bf16 %v2528, %v2524
  %v2922 = vpack.c.bf16 %v2832, %v2828
  %v2923 = vpack.c.bf16 %v2834, %v2830
  %v2924 = vpack.c.bf16 %v2230, %v2226
  %v2925 = vpack.c.bf16 %v2232, %v2228
  %v2926 = vpack.c.bf16 %v2536, %v2532
  %v2927 = vpack.c.bf16 %v2538, %v2534
  %v2928 = vpack.c.bf16 %v2842, %v2838
  %v2929 = vpack.c.bf16 %v2844, %v2840
  %v2930 = vpack.c.bf16 %v2240, %v2236
  %v2931 = vpack.c.bf16 %v2242, %v2238
  %v2932 = vpack.c.bf16 %v2546, %v2542
  %v2933 = vpack.c.bf16 %v2548, %v2544
  %v2934 = vpack.c.bf16 %v2852, %v2848
  %v2935 = vpack.c.bf16 %v2854, %v2850
  %v2936 = vpack.c.bf16 %v2250, %v2246
  %v2937 = vpack.c.bf16 %v2252, %v2248
  %v2938 = vpack.c.bf16 %v2556, %v2552
  %v2939 = vpack.c.bf16 %v2558, %v2554
  %v2940 = vpack.c.bf16 %v2862, %v2858
  %v2941 = vpack.c.bf16 %v2864, %v2860
  %v2942 = vpack.c.bf16 %v2260, %v2256
  %v2943 = vpack.c.bf16 %v2262, %v2258
  %v2944 = vpack.c.bf16 %v2566, %v2562
  %v2945 = vpack.c.bf16 %v2568, %v2564
  %v2946 = vpack.c.bf16 %v2872, %v2868
  %v2947 = vpack.c.bf16 %v2874, %v2870
  %v2948 = vtanh.bf16.pop %v2876
  %v2949 = vtanh.bf16.pop %v2877
  %v2950 = vtanh.bf16.pop %v2878
  %v2951 = vtanh.bf16.pop %v2879
  %v2952 = vtanh.bf16.pop %v2880
  %v2953 = vtanh.bf16.pop %v2881
  %v2954 = vtanh.bf16.pop %v2882
  %v2955 = vtanh.bf16.pop %v2883
  %v2956 = vtanh.bf16.pop %v2884
  %v2957 = vtanh.bf16.pop %v2885
  %v2958 = vtanh.bf16.pop %v2886
  %v2959 = vtanh.bf16.pop %v2887
  %v2960 = vtanh.bf16.pop %v2888
  %v2961 = vtanh.bf16.pop %v2889
  %v2962 = vtanh.bf16.pop %v2890
  %v2963 = vtanh.bf16.pop %v2891
  %v2964 = vtanh.bf16.pop %v2892
  %v2965 = vtanh.bf16.pop %v2893
  %v2966 = vtanh.bf16.pop %v2894
  %v2967 = vtanh.bf16.pop %v2895
  %v2968 = vtanh.bf16.pop %v2896
  %v2969 = vtanh.bf16.pop %v2897
  %v2970 = vtanh.bf16.pop %v2898
  %v2971 = vtanh.bf16.pop %v2899
  %v2972 = vtanh.bf16.pop %v2900
  %v2973 = vtanh.bf16.pop %v2901
  %v2974 = vtanh.bf16.pop %v2902
  %v2975 = vtanh.bf16.pop %v2903
  %v2976 = vtanh.bf16.pop %v2904
  %v2977 = vtanh.bf16.pop %v2905
  %v2978 = vtanh.bf16.pop %v2906
  %v2979 = vtanh.bf16.pop %v2907
  %v2980 = vtanh.bf16.pop %v2908
  %v2981 = vtanh.bf16.pop %v2909
  %v2982 = vtanh.bf16.pop %v2910
  %v2983 = vtanh.bf16.pop %v2911
  %v2984 = vtanh.bf16.pop %v2912
  %v2985 = vtanh.bf16.pop %v2913
  %v2986 = vtanh.bf16.pop %v2914
  %v2987 = vtanh.bf16.pop %v2915
  %v2988 = vtanh.bf16.pop %v2916
  %v2989 = vtanh.bf16.pop %v2917
  %v2990 = vtanh.bf16.pop %v2918
  %v2991 = vtanh.bf16.pop %v2919
  %v2992 = vtanh.bf16.pop %v2920
  %v2993 = vtanh.bf16.pop %v2921
  %v2994 = vtanh.bf16.pop %v2922
  %v2995 = vtanh.bf16.pop %v2923
  %v2996 = vtanh.bf16.pop %v2924
  %v2997 = vtanh.bf16.pop %v2925
  %v2998 = vtanh.bf16.pop %v2926
  %v2999 = vtanh.bf16.pop %v2927
  %v3000 = vtanh.bf16.pop %v2928
  %v3001 = vtanh.bf16.pop %v2929
  %v3002 = vtanh.bf16.pop %v2930
  %v3003 = vtanh.bf16.pop %v2931
  %v3004 = vtanh.bf16.pop %v2932
  %v3005 = vtanh.bf16.pop %v2933
  %v3006 = vtanh.bf16.pop %v2934
  %v3007 = vtanh.bf16.pop %v2935
  %v3008 = vtanh.bf16.pop %v2936
  %v3009 = vtanh.bf16.pop %v2937
  %v3010 = vtanh.bf16.pop %v2938
  %v3011 = vtanh.bf16.pop %v2939
  %v3012 = vtanh.bf16.pop %v2940
  %v3013 = vtanh.bf16.pop %v2941
  %v3014 = vtanh.bf16.pop %v2942
  %v3015 = vtanh.bf16.pop %v2943
  %v3016 = vtanh.bf16.pop %v2944
  %v3017 = vtanh.bf16.pop %v2945
  %v3018 = vtanh.bf16.pop %v2946
  %v3019 = vtanh.bf16.pop %v2947
  %v3020 = vld [vmem:[%s4] sm:$0x1]
  %v3022 = vlaneseq
  %v3023 = vshrl.u32 %v3022, 7
  %v3024 = vsub.s32 0, %v3023
  %v3025 = vrot.slane %v3020, %v3024
  %v3027 = vadd.f32 %v3025, 0.0
  %v3028 = vld [vmem:[%s3] sm:$0xf]
  %v3029 = vld [vmem:[%s3 + $0x4] sm:$0xf]
  %v3030 = vld [vmem:[%s3 + $0x8] sm:$0xf]
  %v3031 = vld [vmem:[%s3 + $0xc] sm:$0xf]
  %v3032 = vld [vmem:[%s3 + $0x10] sm:$0xf]
  %v3033 = vld [vmem:[%s3 + $0x14] sm:$0xf]
  %v3034 = vld [vmem:[%s3 + $0x18] sm:$0xf]
  %v3035 = vld [vmem:[%s3 + $0x1c] sm:$0xf]
  %v3036 = vld [vmem:[%s3 + $0x20] sm:$0xf]
  %v3037 = vld [vmem:[%s3 + $0x24] sm:$0xf]
  %v3038 = vld [vmem:[%s3 + $0x28] sm:$0xf]
  %v3039 = vld [vmem:[%s3 + $0x2c] sm:$0xf]
  %v3040 = vld [vmem:[%s3 + $0x30] sm:$0xf]
  %v3041 = vld [vmem:[%s3 + $0x34] sm:$0xf]
  %v3042 = vld [vmem:[%s3 + $0x38] sm:$0xf]
  %v3043 = vld [vmem:[%s3 + $0x3c] sm:$0xf]
  %v3044 = vld [vmem:[%s3 + $0x40] sm:$0xf]
  %v3045 = vld [vmem:[%s3 + $0x44] sm:$0xf]
  %v3046 = vld [vmem:[%s3 + $0x48] sm:$0xf]
  %v3047 = vld [vmem:[%s3 + $0x4c] sm:$0xf]
  %v3048 = vld [vmem:[%s3 + $0x50] sm:$0xf]
  %v3049 = vld [vmem:[%s3 + $0x54] sm:$0xf]
  %v3050 = vld [vmem:[%s3 + $0x58] sm:$0xf]
  %v3051 = vld [vmem:[%s3 + $0x5c] sm:$0xf]
  %v3052 = vld [vmem:[%s3 + $0x60] sm:$0xf]
  %v3053 = vld [vmem:[%s3 + $0x64] sm:$0xf]
  %v3054 = vld [vmem:[%s3 + $0x68] sm:$0xf]
  %v3055 = vld [vmem:[%s3 + $0x6c] sm:$0xf]
  %v3056 = vld [vmem:[%s3 + $0x70] sm:$0xf]
  %v3057 = vld [vmem:[%s3 + $0x74] sm:$0xf]
  %v3058 = vld [vmem:[%s3 + $0x78] sm:$0xf]
  %v3059 = vld [vmem:[%s3 + $0x7c] sm:$0xf]
  %v3060 = vld [vmem:[%s3 + $0x80] sm:$0xf]
  %v3061 = vld [vmem:[%s3 + $0x84] sm:$0xf]
  %v3062 = vld [vmem:[%s3 + $0x88] sm:$0xf]
  %v3063 = vld [vmem:[%s3 + $0x8c] sm:$0xf]
  %v3064 = vld [vmem:[%s3 + $0x90] sm:$0xf]
  %v3065 = vld [vmem:[%s3 + $0x94] sm:$0xf]
  %v3066 = vld [vmem:[%s3 + $0x98] sm:$0xf]
  %v3067 = vld [vmem:[%s3 + $0x9c] sm:$0xf]
  %v3068 = vld [vmem:[%s3 + $0xa0] sm:$0xf]
  %v3069 = vld [vmem:[%s3 + $0xa4] sm:$0xf]
  %v3070 = vld [vmem:[%s3 + $0xa8] sm:$0xf]
  %v3071 = vld [vmem:[%s3 + $0xac] sm:$0xf]
  %v3072 = vld [vmem:[%s3 + $0xb0] sm:$0xf]
  %v3073 = vld [vmem:[%s3 + $0xb4] sm:$0xf]
  %v3074 = vld [vmem:[%s3 + $0xb8] sm:$0xf]
  %v3075 = vld [vmem:[%s3 + $0xbc] sm:$0xf]
  %v3076 = vld [vmem:[%s3 + $0xc0] sm:$0xf]
  %v3077 = vld [vmem:[%s3 + $0xc4] sm:$0xf]
  %v3078 = vld [vmem:[%s3 + $0xc8] sm:$0xf]
  %v3079 = vld [vmem:[%s3 + $0xcc] sm:$0xf]
  %v3080 = vld [vmem:[%s3 + $0xd0] sm:$0xf]
  %v3081 = vld [vmem:[%s3 + $0xd4] sm:$0xf]
  %v3082 = vld [vmem:[%s3 + $0xd8] sm:$0xf]
  %v3083 = vld [vmem:[%s3 + $0xdc] sm:$0xf]
  %v3084 = vld [vmem:[%s3 + $0xe0] sm:$0xf]
  %v3085 = vld [vmem:[%s3 + $0xe4] sm:$0xf]
  %v3086 = vld [vmem:[%s3 + $0xe8] sm:$0xf]
  %v3087 = vld [vmem:[%s3 + $0xec] sm:$0xf]
  %v3088 = vld [vmem:[%s3 + $0xf0] sm:$0xf]
  %v3089 = vld [vmem:[%s3 + $0xf4] sm:$0xf]
  %v3090 = vld [vmem:[%s3 + $0xf8] sm:$0xf]
  %v3091 = vld [vmem:[%s3 + $0xfc] sm:$0xf]
  %v3092 = vld [vmem:[%s3 + $0x100] sm:$0xf]
  %v3093 = vld [vmem:[%s3 + $0x104] sm:$0xf]
  %v3094 = vld [vmem:[%s3 + $0x108] sm:$0xf]
  %v3095 = vld [vmem:[%s3 + $0x10c] sm:$0xf]
  %v3096 = vld [vmem:[%s3 + $0x110] sm:$0xf]
  %v3097 = vld [vmem:[%s3 + $0x114] sm:$0xf]
  %v3098 = vld [vmem:[%s3 + $0x118] sm:$0xf]
  %v3099 = vld [vmem:[%s3 + $0x11c] sm:$0xf]
  %v3100 = vld [vmem:[%s3 + $0x120] sm:$0xf]
  %v3101 = vld [vmem:[%s3 + $0x124] sm:$0xf]
  %v3102 = vld [vmem:[%s3 + $0x128] sm:$0xf]
  %v3103 = vld [vmem:[%s3 + $0x12c] sm:$0xf]
  %v3104 = vld [vmem:[%s3 + $0x130] sm:$0xf]
  %v3105 = vld [vmem:[%s3 + $0x134] sm:$0xf]
  %v3106 = vld [vmem:[%s3 + $0x138] sm:$0xf]
  %v3107 = vld [vmem:[%s3 + $0x13c] sm:$0xf]
  %v3108 = vld [vmem:[%s3 + $0x140] sm:$0xf]
  %v3109 = vld [vmem:[%s3 + $0x144] sm:$0xf]
  %v3110 = vld [vmem:[%s3 + $0x148] sm:$0xf]
  %v3111 = vld [vmem:[%s3 + $0x14c] sm:$0xf]
  %v3112 = vld [vmem:[%s3 + $0x150] sm:$0xf]
  %v3113 = vld [vmem:[%s3 + $0x154] sm:$0x3]
  %v3200 = vunpack.c.l.b16 %v3028
  %v3201 = vunpack.c.l.b16 %v3029
  %v3202 = vunpack.c.l.b16 %v3030
  %v3203 = vunpack.c.l.b16 %v3031
  %v3204 = vunpack.c.l.b16 %v3032
  %v3205 = vunpack.c.l.b16 %v3033
  %v3206 = vunpack.c.l.b16 %v3034
  %v3207 = vunpack.c.l.b16 %v3035
  %v3208 = vunpack.c.l.b16 %v3036
  %v3209 = vunpack.c.l.b16 %v3037
  %v3210 = vunpack.c.l.b16 %v3038
  %v3211 = vunpack.c.l.b16 %v3039
  %v3212 = vunpack.c.l.b16 %v3040
  %v3213 = vunpack.c.l.b16 %v3041
  %v3214 = vunpack.c.l.b16 %v3042
  %v3215 = vunpack.c.l.b16 %v3043
  %v3216 = vunpack.c.l.b16 %v3044
  %v3217 = vunpack.c.l.b16 %v3045
  %v3218 = vunpack.c.l.b16 %v3046
  %v3219 = vunpack.c.l.b16 %v3047
  %v3220 = vunpack.c.l.b16 %v3048
  %v3221 = vunpack.c.l.b16 %v3049
  %v3222 = vunpack.c.l.b16 %v3050
  %v3223 = vunpack.c.l.b16 %v3051
  %v3224 = vunpack.c.l.b16 %v3052
  %v3225 = vunpack.c.l.b16 %v3053
  %v3226 = vunpack.c.l.b16 %v3054
  %v3227 = vunpack.c.l.b16 %v3055
  %v3228 = vunpack.c.l.b16 %v3056
  %v3229 = vunpack.c.l.b16 %v3057
  %v3230 = vunpack.c.l.b16 %v3058
  %v3231 = vunpack.c.l.b16 %v3059
  %v3232 = vunpack.c.l.b16 %v3060
  %v3233 = vunpack.c.l.b16 %v3061
  %v3234 = vunpack.c.l.b16 %v3062
  %v3235 = vunpack.c.l.b16 %v3063
  %v3236 = vunpack.c.l.b16 %v3064
  %v3237 = vunpack.c.l.b16 %v3065
  %v3238 = vunpack.c.l.b16 %v3066
  %v3239 = vunpack.c.l.b16 %v3067
  %v3240 = vunpack.c.l.b16 %v3068
  %v3241 = vunpack.c.l.b16 %v3069
  %v3242 = vunpack.c.l.b16 %v3070
  %v3243 = vunpack.c.l.b16 %v3071
  %v3244 = vunpack.c.l.b16 %v3072
  %v3245 = vunpack.c.l.b16 %v3073
  %v3246 = vunpack.c.l.b16 %v3074
  %v3247 = vunpack.c.l.b16 %v3075
  %v3248 = vunpack.c.l.b16 %v3076
  %v3249 = vunpack.c.l.b16 %v3077
  %v3250 = vunpack.c.l.b16 %v3078
  %v3251 = vunpack.c.l.b16 %v3079
  %v3252 = vunpack.c.l.b16 %v3080
  %v3253 = vunpack.c.l.b16 %v3081
  %v3254 = vunpack.c.l.b16 %v3082
  %v3255 = vunpack.c.l.b16 %v3083
  %v3256 = vunpack.c.l.b16 %v3084
  %v3257 = vunpack.c.l.b16 %v3085
  %v3258 = vunpack.c.l.b16 %v3086
  %v3259 = vunpack.c.l.b16 %v3087
  %v3260 = vunpack.c.l.b16 %v3088
  %v3261 = vunpack.c.l.b16 %v3089
  %v3262 = vunpack.c.l.b16 %v3090
  %v3263 = vunpack.c.l.b16 %v3091
  %v3264 = vunpack.c.l.b16 %v3092
  %v3265 = vunpack.c.l.b16 %v3093
  %v3266 = vunpack.c.l.b16 %v3094
  %v3267 = vunpack.c.l.b16 %v3095
  %v3268 = vunpack.c.l.b16 %v3096
  %v3269 = vunpack.c.l.b16 %v3097
  %v3270 = vunpack.c.l.b16 %v3098
  %v3271 = vunpack.c.l.b16 %v3099
  %v3272 = vunpack.c.l.b16 %v3100
  %v3273 = vunpack.c.l.b16 %v3101
  %v3274 = vunpack.c.l.b16 %v3102
  %v3275 = vunpack.c.l.b16 %v3103
  %v3276 = vunpack.c.l.b16 %v3104
  %v3277 = vunpack.c.l.b16 %v3105
  %v3278 = vunpack.c.l.b16 %v3106
  %v3279 = vunpack.c.l.b16 %v3107
  %v3280 = vunpack.c.l.b16 %v3108
  %v3281 = vunpack.c.l.b16 %v3109
  %v3282 = vunpack.c.l.b16 %v3110
  %v3283 = vunpack.c.l.b16 %v3111
  %v3284 = vunpack.c.l.b16 %v3112
  %v3285 = vunpack.c.l.b16 %v3113
  %v3286 = vpack.c.b16 %v3201, %v3200
  %v3287 = vpack.c.b16 %v3203, %v3202
  %v3288 = vpack.c.b16 %v3205, %v3204
  %v3289 = vpack.c.b16 %v3207, %v3206
  %v3290 = vpack.c.b16 %v3209, %v3208
  %v3291 = vpack.c.b16 %v3211, %v3210
  %v3292 = vpack.c.b16 %v3213, %v3212
  %v3293 = vpack.c.b16 %v3215, %v3214
  %v3294 = vpack.c.b16 %v3217, %v3216
  %v3295 = vpack.c.b16 %v3219, %v3218
  %v3296 = vpack.c.b16 %v3221, %v3220
  %v3297 = vpack.c.b16 %v3223, %v3222
  %v3298 = vpack.c.b16 %v3225, %v3224
  %v3299 = vpack.c.b16 %v3227, %v3226
  %v3300 = vpack.c.b16 %v3229, %v3228
  %v3301 = vpack.c.b16 %v3231, %v3230
  %v3302 = vpack.c.b16 %v3233, %v3232
  %v3303 = vpack.c.b16 %v3235, %v3234
  %v3304 = vpack.c.b16 %v3237, %v3236
  %v3305 = vpack.c.b16 %v3239, %v3238
  %v3306 = vpack.c.b16 %v3241, %v3240
  %v3307 = vpack.c.b16 %v3243, %v3242
  %v3308 = vpack.c.b16 %v3245, %v3244
  %v3309 = vpack.c.b16 %v3247, %v3246
  %v3310 = vpack.c.b16 %v3249, %v3248
  %v3311 = vpack.c.b16 %v3251, %v3250
  %v3312 = vpack.c.b16 %v3253, %v3252
  %v3313 = vpack.c.b16 %v3255, %v3254
  %v3314 = vpack.c.b16 %v3257, %v3256
  %v3315 = vpack.c.b16 %v3259, %v3258
  %v3316 = vpack.c.b16 %v3261, %v3260
  %v3317 = vpack.c.b16 %v3263, %v3262
  %v3318 = vpack.c.b16 %v3265, %v3264
  %v3319 = vpack.c.b16 %v3267, %v3266
  %v3320 = vpack.c.b16 %v3269, %v3268
  %v3321 = vpack.c.b16 %v3271, %v3270
  %v3322 = vpack.c.b16 %v3273, %v3272
  %v3323 = vpack.c.b16 %v3275, %v3274
  %v3324 = vpack.c.b16 %v3277, %v3276
  %v3325 = vpack.c.b16 %v3279, %v3278
  %v3326 = vpack.c.b16 %v3281, %v3280
  %v3327 = vpack.c.b16 %v3283, %v3282
  %v3328 = vpack.c.b16 %v3285, %v3284
  %vm3371 = vcmask 359424
  %v3373 = vsel %vm3371, %v2953, 0
  %v3376 = vsel %vm1939, %v3328, 0
  %3378 = vmatprep.subr.bf16.mxu0 0
  %3379 = vmatpush1.bf16.msra.mxu0 %v3293
  %3380 = vmatprep.subr.bf16.mxu0 0
  %3381 = vmatpush1.bf16.msra.mxu0 %v3292
  %3382 = vmatprep.subr.bf16.mxu0 0
  %3383 = vmatpush1.bf16.msra.mxu0 %v3291
  %3384 = vmatprep.subr.bf16.mxu0 0
  %3385 = vmatpush1.bf16.msra.mxu0 %v3290
  %3386 = vmatprep.subr.bf16.mxu0 0
  %3387 = vmatpush1.bf16.msra.mxu0 %v3289
  %3388 = vmatprep.subr.bf16.mxu0 0
  %3389 = vmatpush1.bf16.msra.mxu0 %v3288
  %3390 = vmatprep.subr.bf16.mxu0 0
  %3391 = vmatpush1.bf16.msra.mxu0 %v3287
  %3392 = vmatprep.subr.bf16.mxu0 0
  %3393 = vmatpush1.bf16.msra.mxu0 %v3286
  %3394 = vmatprep.subr.bf16.mxu0 0
  %3395 = vmatpush2.bf16.msra.mxu0 %v3301
  %3396 = vmatprep.subr.bf16.mxu0 0
  %3397 = vmatpush2.bf16.msra.mxu0 %v3300
  %3398 = vmatprep.subr.bf16.mxu0 0
  %3399 = vmatpush2.bf16.msra.mxu0 %v3299
  %3400 = vmatprep.subr.bf16.mxu0 0
  %3401 = vmatpush2.bf16.msra.mxu0 %v3298
  %3402 = vmatprep.subr.bf16.mxu0 0
  %3403 = vmatpush2.bf16.msra.mxu0 %v3297
  %3404 = vmatprep.subr.bf16.mxu0 0
  %3405 = vmatpush2.bf16.msra.mxu0 %v3296
  %3406 = vmatprep.subr.bf16.mxu0 0
  %3407 = vmatpush2.bf16.msra.mxu0 %v3295
  %3408 = vmatprep.subr.bf16.mxu0 0
  %3409 = vmatpush2.bf16.msra.mxu0 %v3294
  %3410 = vmatprep.mubr.bf16.mxu0 %v2949
  %3411 = vmatmul.mubr.bf16.gmra.mxu0 %v2948
  %v3412 = vpop.f32.mrf.mxu0
  %v3413 = vadd.f32 0.0, %v3412
  %v3414 = vpop.f32.mrf.mxu0
  %v3415 = vpop.f32.mrf.mxu0
  %v3416 = vadd.f32 0.0, %v3415
  %v3417 = vpop.f32.mrf.mxu0
  %3418 = vdwg.mxu0
  %3419 = vmatprep.subr.bf16.mxu0 0
  %3420 = vmatpush1.bf16.msra.mxu0 %v3309
  %3421 = vmatprep.subr.bf16.mxu0 0
  %3422 = vmatpush1.bf16.msra.mxu0 %v3308
  %3423 = vmatprep.subr.bf16.mxu0 0
  %3424 = vmatpush1.bf16.msra.mxu0 %v3307
  %3425 = vmatprep.subr.bf16.mxu0 0
  %3426 = vmatpush1.bf16.msra.mxu0 %v3306
  %3427 = vmatprep.subr.bf16.mxu0 0
  %3428 = vmatpush1.bf16.msra.mxu0 %v3305
  %3429 = vmatprep.subr.bf16.mxu0 0
  %3430 = vmatpush1.bf16.msra.mxu0 %v3304
  %3431 = vmatprep.subr.bf16.mxu0 0
  %3432 = vmatpush1.bf16.msra.mxu0 %v3303
  %3433 = vmatprep.subr.bf16.mxu0 0
  %3434 = vmatpush1.bf16.msra.mxu0 %v3302
  %3435 = vmatprep.subr.bf16.mxu0 0
  %3436 = vmatpush2.bf16.msra.mxu0 %v3317
  %3437 = vmatprep.subr.bf16.mxu0 0
  %3438 = vmatpush2.bf16.msra.mxu0 %v3316
  %3439 = vmatprep.subr.bf16.mxu0 0
  %3440 = vmatpush2.bf16.msra.mxu0 %v3315
  %3441 = vmatprep.subr.bf16.mxu0 0
  %3442 = vmatpush2.bf16.msra.mxu0 %v3314
  %3443 = vmatprep.subr.bf16.mxu0 0
  %3444 = vmatpush2.bf16.msra.mxu0 %v3313
  %3445 = vmatprep.subr.bf16.mxu0 0
  %3446 = vmatpush2.bf16.msra.mxu0 %v3312
  %3447 = vmatprep.subr.bf16.mxu0 0
  %3448 = vmatpush2.bf16.msra.mxu0 %v3311
  %3449 = vmatprep.subr.bf16.mxu0 0
  %3450 = vmatpush2.bf16.msra.mxu0 %v3310
  %3451 = vmatprep.mubr.bf16.mxu0 %v2951
  %3452 = vmatmul.mubr.bf16.gmra.mxu0 %v2950
  %v3453 = vpop.f32.mrf.mxu0
  %v3454 = vadd.f32 %v3413, %v3453
  %v3455 = vpop.f32.mrf.mxu0
  %v3456 = vpop.f32.mrf.mxu0
  %v3457 = vadd.f32 %v3416, %v3456
  %v3458 = vpop.f32.mrf.mxu0
  %3459 = vdwg.mxu0
  %3460 = vmatprep.subr.bf16.mxu0 0
  %3461 = vmatpush1.bf16.msra.mxu0 %v3325
  %3462 = vmatprep.subr.bf16.mxu0 0
  %3463 = vmatpush1.bf16.msra.mxu0 %v3324
  %3464 = vmatprep.subr.bf16.mxu0 0
  %3465 = vmatpush1.bf16.msra.mxu0 %v3323
  %3466 = vmatprep.subr.bf16.mxu0 0
  %3467 = vmatpush1.bf16.msra.mxu0 %v3322
  %3468 = vmatprep.subr.bf16.mxu0 0
  %3469 = vmatpush1.bf16.msra.mxu0 %v3321
  %3470 = vmatprep.subr.bf16.mxu0 0
  %3471 = vmatpush1.bf16.msra.mxu0 %v3320
  %3472 = vmatprep.subr.bf16.mxu0 0
  %3473 = vmatpush1.bf16.msra.mxu0 %v3319
  %3474 = vmatprep.subr.bf16.mxu0 0
  %3475 = vmatpush1.bf16.msra.mxu0 %v3318
  %3476 = vmatprep.subr.bf16.mxu0 0
  %3477 = vmatpush2.bf16.msra.mxu0 0
  %3478 = vmatprep.subr.bf16.mxu0 0
  %3479 = vmatpush2.bf16.msra.mxu0 0
  %3480 = vmatprep.subr.bf16.mxu0 0
  %3481 = vmatpush2.bf16.msra.mxu0 0
  %3482 = vmatprep.subr.bf16.mxu0 0
  %3483 = vmatpush2.bf16.msra.mxu0 0
  %3484 = vmatprep.subr.bf16.mxu0 0
  %3485 = vmatpush2.bf16.msra.mxu0 0
  %3486 = vmatprep.subr.bf16.mxu0 0
  %3487 = vmatpush2.bf16.msra.mxu0 %v3376
  %3488 = vmatprep.subr.bf16.mxu0 0
  %3489 = vmatpush2.bf16.msra.mxu0 %v3327
  %3490 = vmatprep.subr.bf16.mxu0 0
  %3491 = vmatpush2.bf16.msra.mxu0 %v3326
  %3492 = vmatprep.mubr.bf16.mxu0 %v3373
  %3493 = vmatmul.mubr.bf16.gmra.mxu0 %v2952
  %v3494 = vpop.f32.mrf.mxu0
  %v3495 = vadd.f32 %v3454, %v3494
  %v3496 = vpop.f32.mrf.mxu0
  %v3497 = vpop.f32.mrf.mxu0
  %v3498 = vadd.f32 %v3457, %v3497
  %v3499 = vpop.f32.mrf.mxu0
  %3500 = vdwg.mxu0
  %v3501 = vadd.f32 %v3027, %v3495
  %v3502 = vadd.f32 %v3027, %v3498
  %s3503 = scalar_lea.vmem %s3, 344
  %v3504 = vld [vmem:[%s3503] sm:$0xf]
  %v3505 = vld [vmem:[%s3503 + $0x4] sm:$0xf]
  %v3506 = vld [vmem:[%s3503 + $0x8] sm:$0xf]
  %v3507 = vld [vmem:[%s3503 + $0xc] sm:$0xf]
  %v3508 = vld [vmem:[%s3503 + $0x10] sm:$0xf]
  %v3509 = vld [vmem:[%s3503 + $0x14] sm:$0xf]
  %v3510 = vld [vmem:[%s3503 + $0x18] sm:$0xf]
  %v3511 = vld [vmem:[%s3503 + $0x1c] sm:$0xf]
  %v3512 = vld [vmem:[%s3503 + $0x20] sm:$0xf]
  %v3513 = vld [vmem:[%s3503 + $0x24] sm:$0xf]
  %v3514 = vld [vmem:[%s3503 + $0x28] sm:$0xf]
  %v3515 = vld [vmem:[%s3503 + $0x2c] sm:$0xf]
  %v3516 = vld [vmem:[%s3503 + $0x30] sm:$0xf]
  %v3517 = vld [vmem:[%s3503 + $0x34] sm:$0xf]
  %v3518 = vld [vmem:[%s3503 + $0x38] sm:$0xf]
  %v3519 = vld [vmem:[%s3503 + $0x3c] sm:$0xf]
  %v3520 = vld [vmem:[%s3503 + $0x40] sm:$0xf]
  %v3521 = vld [vmem:[%s3503 + $0x44] sm:$0xf]
  %v3522 = vld [vmem:[%s3503 + $0x48] sm:$0xf]
  %v3523 = vld [vmem:[%s3503 + $0x4c] sm:$0xf]
  %v3524 = vld [vmem:[%s3503 + $0x50] sm:$0xf]
  %v3525 = vld [vmem:[%s3503 + $0x54] sm:$0xf]
  %v3526 = vld [vmem:[%s3503 + $0x58] sm:$0xf]
  %v3527 = vld [vmem:[%s3503 + $0x5c] sm:$0xf]
  %v3528 = vld [vmem:[%s3503 + $0x60] sm:$0xf]
  %v3529 = vld [vmem:[%s3503 + $0x64] sm:$0xf]
  %v3530 = vld [vmem:[%s3503 + $0x68] sm:$0xf]
  %v3531 = vld [vmem:[%s3503 + $0x6c] sm:$0xf]
  %v3532 = vld [vmem:[%s3503 + $0x70] sm:$0xf]
  %v3533 = vld [vmem:[%s3503 + $0x74] sm:$0xf]
  %v3534 = vld [vmem:[%s3503 + $0x78] sm:$0xf]
  %v3535 = vld [vmem:[%s3503 + $0x7c] sm:$0xf]
  %v3536 = vld [vmem:[%s3503 + $0x80] sm:$0xf]
  %v3537 = vld [vmem:[%s3503 + $0x84] sm:$0xf]
  %v3538 = vld [vmem:[%s3503 + $0x88] sm:$0xf]
  %v3539 = vld [vmem:[%s3503 + $0x8c] sm:$0xf]
  %v3540 = vld [vmem:[%s3503 + $0x90] sm:$0xf]
  %v3541 = vld [vmem:[%s3503 + $0x94] sm:$0xf]
  %v3542 = vld [vmem:[%s3503 + $0x98] sm:$0xf]
  %v3543 = vld [vmem:[%s3503 + $0x9c] sm:$0xf]
  %v3544 = vld [vmem:[%s3503 + $0xa0] sm:$0xf]
  %v3545 = vld [vmem:[%s3503 + $0xa4] sm:$0xf]
  %v3546 = vld [vmem:[%s3503 + $0xa8] sm:$0xf]
  %v3547 = vld [vmem:[%s3503 + $0xac] sm:$0xf]
  %v3548 = vld [vmem:[%s3503 + $0xb0] sm:$0xf]
  %v3549 = vld [vmem:[%s3503 + $0xb4] sm:$0xf]
  %v3550 = vld [vmem:[%s3503 + $0xb8] sm:$0xf]
  %v3551 = vld [vmem:[%s3503 + $0xbc] sm:$0xf]
  %v3552 = vld [vmem:[%s3503 + $0xc0] sm:$0xf]
  %v3553 = vld [vmem:[%s3503 + $0xc4] sm:$0xf]
  %v3554 = vld [vmem:[%s3503 + $0xc8] sm:$0xf]
  %v3555 = vld [vmem:[%s3503 + $0xcc] sm:$0xf]
  %v3556 = vld [vmem:[%s3503 + $0xd0] sm:$0xf]
  %v3557 = vld [vmem:[%s3503 + $0xd4] sm:$0xf]
  %v3558 = vld [vmem:[%s3503 + $0xd8] sm:$0xf]
  %v3559 = vld [vmem:[%s3503 + $0xdc] sm:$0xf]
  %v3560 = vld [vmem:[%s3503 + $0xe0] sm:$0xf]
  %v3561 = vld [vmem:[%s3503 + $0xe4] sm:$0xf]
  %v3562 = vld [vmem:[%s3503 + $0xe8] sm:$0xf]
  %v3563 = vld [vmem:[%s3503 + $0xec] sm:$0xf]
  %v3564 = vld [vmem:[%s3503 + $0xf0] sm:$0xf]
  %v3565 = vld [vmem:[%s3503 + $0xf4] sm:$0xf]
  %v3566 = vld [vmem:[%s3503 + $0xf8] sm:$0xf]
  %v3567 = vld [vmem:[%s3503 + $0xfc] sm:$0xf]
  %v3568 = vld [vmem:[%s3503 + $0x100] sm:$0xf]
  %v3569 = vld [vmem:[%s3503 + $0x104] sm:$0xf]
  %v3570 = vld [vmem:[%s3503 + $0x108] sm:$0xf]
  %v3571 = vld [vmem:[%s3503 + $0x10c] sm:$0xf]
  %v3572 = vld [vmem:[%s3503 + $0x110] sm:$0xf]
  %v3573 = vld [vmem:[%s3503 + $0x114] sm:$0xf]
  %v3574 = vld [vmem:[%s3503 + $0x118] sm:$0xf]
  %v3575 = vld [vmem:[%s3503 + $0x11c] sm:$0xf]
  %v3576 = vld [vmem:[%s3503 + $0x120] sm:$0xf]
  %v3577 = vld [vmem:[%s3503 + $0x124] sm:$0xf]
  %v3578 = vld [vmem:[%s3503 + $0x128] sm:$0xf]
  %v3579 = vld [vmem:[%s3503 + $0x12c] sm:$0xf]
  %v3580 = vld [vmem:[%s3503 + $0x130] sm:$0xf]
  %v3581 = vld [vmem:[%s3503 + $0x134] sm:$0xf]
  %v3582 = vld [vmem:[%s3503 + $0x138] sm:$0xf]
  %v3583 = vld [vmem:[%s3503 + $0x13c] sm:$0xf]
  %v3584 = vld [vmem:[%s3503 + $0x140] sm:$0xf]
  %v3585 = vld [vmem:[%s3503 + $0x144] sm:$0xf]
  %v3586 = vld [vmem:[%s3503 + $0x148] sm:$0xf]
  %v3587 = vld [vmem:[%s3503 + $0x14c] sm:$0xf]
  %v3588 = vld [vmem:[%s3503 + $0x150] sm:$0xf]
  %v3589 = vld [vmem:[%s3503 + $0x154] sm:$0x3]
  %v3676 = vunpack.c.l.b16 %v3504
  %v3677 = vunpack.c.l.b16 %v3505
  %v3678 = vunpack.c.l.b16 %v3506
  %v3679 = vunpack.c.l.b16 %v3507
  %v3680 = vunpack.c.l.b16 %v3508
  %v3681 = vunpack.c.l.b16 %v3509
  %v3682 = vunpack.c.l.b16 %v3510
  %v3683 = vunpack.c.l.b16 %v3511
  %v3684 = vunpack.c.l.b16 %v3512
  %v3685 = vunpack.c.l.b16 %v3513
  %v3686 = vunpack.c.l.b16 %v3514
  %v3687 = vunpack.c.l.b16 %v3515
  %v3688 = vunpack.c.l.b16 %v3516
  %v3689 = vunpack.c.l.b16 %v3517
  %v3690 = vunpack.c.l.b16 %v3518
  %v3691 = vunpack.c.l.b16 %v3519
  %v3692 = vunpack.c.l.b16 %v3520
  %v3693 = vunpack.c.l.b16 %v3521
  %v3694 = vunpack.c.l.b16 %v3522
  %v3695 = vunpack.c.l.b16 %v3523
  %v3696 = vunpack.c.l.b16 %v3524
  %v3697 = vunpack.c.l.b16 %v3525
  %v3698 = vunpack.c.l.b16 %v3526
  %v3699 = vunpack.c.l.b16 %v3527
  %v3700 = vunpack.c.l.b16 %v3528
  %v3701 = vunpack.c.l.b16 %v3529
  %v3702 = vunpack.c.l.b16 %v3530
  %v3703 = vunpack.c.l.b16 %v3531
  %v3704 = vunpack.c.l.b16 %v3532
  %v3705 = vunpack.c.l.b16 %v3533
  %v3706 = vunpack.c.l.b16 %v3534
  %v3707 = vunpack.c.l.b16 %v3535
  %v3708 = vunpack.c.l.b16 %v3536
  %v3709 = vunpack.c.l.b16 %v3537
  %v3710 = vunpack.c.l.b16 %v3538
  %v3711 = vunpack.c.l.b16 %v3539
  %v3712 = vunpack.c.l.b16 %v3540
  %v3713 = vunpack.c.l.b16 %v3541
  %v3714 = vunpack.c.l.b16 %v3542
  %v3715 = vunpack.c.l.b16 %v3543
  %v3716 = vunpack.c.l.b16 %v3544
  %v3717 = vunpack.c.l.b16 %v3545
  %v3718 = vunpack.c.l.b16 %v3546
  %v3719 = vunpack.c.l.b16 %v3547
  %v3720 = vunpack.c.l.b16 %v3548
  %v3721 = vunpack.c.l.b16 %v3549
  %v3722 = vunpack.c.l.b16 %v3550
  %v3723 = vunpack.c.l.b16 %v3551
  %v3724 = vunpack.c.l.b16 %v3552
  %v3725 = vunpack.c.l.b16 %v3553
  %v3726 = vunpack.c.l.b16 %v3554
  %v3727 = vunpack.c.l.b16 %v3555
  %v3728 = vunpack.c.l.b16 %v3556
  %v3729 = vunpack.c.l.b16 %v3557
  %v3730 = vunpack.c.l.b16 %v3558
  %v3731 = vunpack.c.l.b16 %v3559
  %v3732 = vunpack.c.l.b16 %v3560
  %v3733 = vunpack.c.l.b16 %v3561
  %v3734 = vunpack.c.l.b16 %v3562
  %v3735 = vunpack.c.l.b16 %v3563
  %v3736 = vunpack.c.l.b16 %v3564
  %v3737 = vunpack.c.l.b16 %v3565
  %v3738 = vunpack.c.l.b16 %v3566
  %v3739 = vunpack.c.l.b16 %v3567
  %v3740 = vunpack.c.l.b16 %v3568
  %v3741 = vunpack.c.l.b16 %v3569
  %v3742 = vunpack.c.l.b16 %v3570
  %v3743 = vunpack.c.l.b16 %v3571
  %v3744 = vunpack.c.l.b16 %v3572
  %v3745 = vunpack.c.l.b16 %v3573
  %v3746 = vunpack.c.l.b16 %v3574
  %v3747 = vunpack.c.l.b16 %v3575
  %v3748 = vunpack.c.l.b16 %v3576
  %v3749 = vunpack.c.l.b16 %v3577
  %v3750 = vunpack.c.l.b16 %v3578
  %v3751 = vunpack.c.l.b16 %v3579
  %v3752 = vunpack.c.l.b16 %v3580
  %v3753 = vunpack.c.l.b16 %v3581
  %v3754 = vunpack.c.l.b16 %v3582
  %v3755 = vunpack.c.l.b16 %v3583
  %v3756 = vunpack.c.l.b16 %v3584
  %v3757 = vunpack.c.l.b16 %v3585
  %v3758 = vunpack.c.l.b16 %v3586
  %v3759 = vunpack.c.l.b16 %v3587
  %v3760 = vunpack.c.l.b16 %v3588
  %v3761 = vunpack.c.l.b16 %v3589
  %v3762 = vpack.c.b16 %v3677, %v3676
  %v3763 = vpack.c.b16 %v3679, %v3678
  %v3764 = vpack.c.b16 %v3681, %v3680
  %v3765 = vpack.c.b16 %v3683, %v3682
  %v3766 = vpack.c.b16 %v3685, %v3684
  %v3767 = vpack.c.b16 %v3687, %v3686
  %v3768 = vpack.c.b16 %v3689, %v3688
  %v3769 = vpack.c.b16 %v3691, %v3690
  %v3770 = vpack.c.b16 %v3693, %v3692
  %v3771 = vpack.c.b16 %v3695, %v3694
  %v3772 = vpack.c.b16 %v3697, %v3696
  %v3773 = vpack.c.b16 %v3699, %v3698
  %v3774 = vpack.c.b16 %v3701, %v3700
  %v3775 = vpack.c.b16 %v3703, %v3702
  %v3776 = vpack.c.b16 %v3705, %v3704
  %v3777 = vpack.c.b16 %v3707, %v3706
  %v3778 = vpack.c.b16 %v3709, %v3708
  %v3779 = vpack.c.b16 %v3711, %v3710
  %v3780 = vpack.c.b16 %v3713, %v3712
  %v3781 = vpack.c.b16 %v3715, %v3714
  %v3782 = vpack.c.b16 %v3717, %v3716
  %v3783 = vpack.c.b16 %v3719, %v3718
  %v3784 = vpack.c.b16 %v3721, %v3720
  %v3785 = vpack.c.b16 %v3723, %v3722
  %v3786 = vpack.c.b16 %v3725, %v3724
  %v3787 = vpack.c.b16 %v3727, %v3726
  %v3788 = vpack.c.b16 %v3729, %v3728
  %v3789 = vpack.c.b16 %v3731, %v3730
  %v3790 = vpack.c.b16 %v3733, %v3732
  %v3791 = vpack.c.b16 %v3735, %v3734
  %v3792 = vpack.c.b16 %v3737, %v3736
  %v3793 = vpack.c.b16 %v3739, %v3738
  %v3794 = vpack.c.b16 %v3741, %v3740
  %v3795 = vpack.c.b16 %v3743, %v3742
  %v3796 = vpack.c.b16 %v3745, %v3744
  %v3797 = vpack.c.b16 %v3747, %v3746
  %v3798 = vpack.c.b16 %v3749, %v3748
  %v3799 = vpack.c.b16 %v3751, %v3750
  %v3800 = vpack.c.b16 %v3753, %v3752
  %v3801 = vpack.c.b16 %v3755, %v3754
  %v3802 = vpack.c.b16 %v3757, %v3756
  %v3803 = vpack.c.b16 %v3759, %v3758
  %v3804 = vpack.c.b16 %v3761, %v3760
  %v3848 = vsel %vm3371, %v2959, 0
  %v3851 = vsel %vm1939, %v3804, 0
  %3853 = vmatprep.subr.bf16.mxu0 0
  %3854 = vmatpush1.bf16.msra.mxu0 %v3769
  %3855 = vmatprep.subr.bf16.mxu0 0
  %3856 = vmatpush1.bf16.msra.mxu0 %v3768
  %3857 = vmatprep.subr.bf16.mxu0 0
  %3858 = vmatpush1.bf16.msra.mxu0 %v3767
  %3859 = vmatprep.subr.bf16.mxu0 0
  %3860 = vmatpush1.bf16.msra.mxu0 %v3766
  %3861 = vmatprep.subr.bf16.mxu0 0
  %3862 = vmatpush1.bf16.msra.mxu0 %v3765
  %3863 = vmatprep.subr.bf16.mxu0 0
  %3864 = vmatpush1.bf16.msra.mxu0 %v3764
  %3865 = vmatprep.subr.bf16.mxu0 0
  %3866 = vmatpush1.bf16.msra.mxu0 %v3763
  %3867 = vmatprep.subr.bf16.mxu0 0
  %3868 = vmatpush1.bf16.msra.mxu0 %v3762
  %3869 = vmatprep.subr.bf16.mxu0 0
  %3870 = vmatpush2.bf16.msra.mxu0 %v3777
  %3871 = vmatprep.subr.bf16.mxu0 0
  %3872 = vmatpush2.bf16.msra.mxu0 %v3776
  %3873 = vmatprep.subr.bf16.mxu0 0
  %3874 = vmatpush2.bf16.msra.mxu0 %v3775
  %3875 = vmatprep.subr.bf16.mxu0 0
  %3876 = vmatpush2.bf16.msra.mxu0 %v3774
  %3877 = vmatprep.subr.bf16.mxu0 0
  %3878 = vmatpush2.bf16.msra.mxu0 %v3773
  %3879 = vmatprep.subr.bf16.mxu0 0
  %3880 = vmatpush2.bf16.msra.mxu0 %v3772
  %3881 = vmatprep.subr.bf16.mxu0 0
  %3882 = vmatpush2.bf16.msra.mxu0 %v3771
  %3883 = vmatprep.subr.bf16.mxu0 0
  %3884 = vmatpush2.bf16.msra.mxu0 %v3770
  %3885 = vmatprep.mubr.bf16.mxu0 %v2955
  %3886 = vmatmul.mubr.bf16.gmra.mxu0 %v2954
  %v3887 = vpop.f32.mrf.mxu0
  %v3888 = vadd.f32 0.0, %v3887
  %v3889 = vpop.f32.mrf.mxu0
  %v3890 = vpop.f32.mrf.mxu0
  %v3891 = vadd.f32 0.0, %v3890
  %v3892 = vpop.f32.mrf.mxu0
  %3893 = vdwg.mxu0
  %3894 = vmatprep.subr.bf16.mxu0 0
  %3895 = vmatpush1.bf16.msra.mxu0 %v3785
  %3896 = vmatprep.subr.bf16.mxu0 0
  %3897 = vmatpush1.bf16.msra.mxu0 %v3784
  %3898 = vmatprep.subr.bf16.mxu0 0
  %3899 = vmatpush1.bf16.msra.mxu0 %v3783
  %3900 = vmatprep.subr.bf16.mxu0 0
  %3901 = vmatpush1.bf16.msra.mxu0 %v3782
  %3902 = vmatprep.subr.bf16.mxu0 0
  %3903 = vmatpush1.bf16.msra.mxu0 %v3781
  %3904 = vmatprep.subr.bf16.mxu0 0
  %3905 = vmatpush1.bf16.msra.mxu0 %v3780
  %3906 = vmatprep.subr.bf16.mxu0 0
  %3907 = vmatpush1.bf16.msra.mxu0 %v3779
  %3908 = vmatprep.subr.bf16.mxu0 0
  %3909 = vmatpush1.bf16.msra.mxu0 %v3778
  %3910 = vmatprep.subr.bf16.mxu0 0
  %3911 = vmatpush2.bf16.msra.mxu0 %v3793
  %3912 = vmatprep.subr.bf16.mxu0 0
  %3913 = vmatpush2.bf16.msra.mxu0 %v3792
  %3914 = vmatprep.subr.bf16.mxu0 0
  %3915 = vmatpush2.bf16.msra.mxu0 %v3791
  %3916 = vmatprep.subr.bf16.mxu0 0
  %3917 = vmatpush2.bf16.msra.mxu0 %v3790
  %3918 = vmatprep.subr.bf16.mxu0 0
  %3919 = vmatpush2.bf16.msra.mxu0 %v3789
  %3920 = vmatprep.subr.bf16.mxu0 0
  %3921 = vmatpush2.bf16.msra.mxu0 %v3788
  %3922 = vmatprep.subr.bf16.mxu0 0
  %3923 = vmatpush2.bf16.msra.mxu0 %v3787
  %3924 = vmatprep.subr.bf16.mxu0 0
  %3925 = vmatpush2.bf16.msra.mxu0 %v3786
  %3926 = vmatprep.mubr.bf16.mxu0 %v2957
  %3927 = vmatmul.mubr.bf16.gmra.mxu0 %v2956
  %v3928 = vpop.f32.mrf.mxu0
  %v3929 = vadd.f32 %v3888, %v3928
  %v3930 = vpop.f32.mrf.mxu0
  %v3931 = vpop.f32.mrf.mxu0
  %v3932 = vadd.f32 %v3891, %v3931
  %v3933 = vpop.f32.mrf.mxu0
  %3934 = vdwg.mxu0
  %3935 = vmatprep.subr.bf16.mxu0 0
  %3936 = vmatpush1.bf16.msra.mxu0 %v3801
  %3937 = vmatprep.subr.bf16.mxu0 0
  %3938 = vmatpush1.bf16.msra.mxu0 %v3800
  %3939 = vmatprep.subr.bf16.mxu0 0
  %3940 = vmatpush1.bf16.msra.mxu0 %v3799
  %3941 = vmatprep.subr.bf16.mxu0 0
  %3942 = vmatpush1.bf16.msra.mxu0 %v3798
  %3943 = vmatprep.subr.bf16.mxu0 0
  %3944 = vmatpush1.bf16.msra.mxu0 %v3797
  %3945 = vmatprep.subr.bf16.mxu0 0
  %3946 = vmatpush1.bf16.msra.mxu0 %v3796
  %3947 = vmatprep.subr.bf16.mxu0 0
  %3948 = vmatpush1.bf16.msra.mxu0 %v3795
  %3949 = vmatprep.subr.bf16.mxu0 0
  %3950 = vmatpush1.bf16.msra.mxu0 %v3794
  %3951 = vmatprep.subr.bf16.mxu0 0
  %3952 = vmatpush2.bf16.msra.mxu0 0
  %3953 = vmatprep.subr.bf16.mxu0 0
  %3954 = vmatpush2.bf16.msra.mxu0 0
  %3955 = vmatprep.subr.bf16.mxu0 0
  %3956 = vmatpush2.bf16.msra.mxu0 0
  %3957 = vmatprep.subr.bf16.mxu0 0
  %3958 = vmatpush2.bf16.msra.mxu0 0
  %3959 = vmatprep.subr.bf16.mxu0 0
  %3960 = vmatpush2.bf16.msra.mxu0 0
  %3961 = vmatprep.subr.bf16.mxu0 0
  %3962 = vmatpush2.bf16.msra.mxu0 %v3851
  %3963 = vmatprep.subr.bf16.mxu0 0
  %3964 = vmatpush2.bf16.msra.mxu0 %v3803
  %3965 = vmatprep.subr.bf16.mxu0 0
  %3966 = vmatpush2.bf16.msra.mxu0 %v3802
  %3967 = vmatprep.mubr.bf16.mxu0 %v3848
  %3968 = vmatmul.mubr.bf16.gmra.mxu0 %v2958
  %v3969 = vpop.f32.mrf.mxu0
  %v3970 = vadd.f32 %v3929, %v3969
  %v3971 = vpop.f32.mrf.mxu0
  %v3972 = vpop.f32.mrf.mxu0
  %v3973 = vadd.f32 %v3932, %v3972
  %v3974 = vpop.f32.mrf.mxu0
  %3975 = vdwg.mxu0
  %v3976 = vadd.f32 %v3501, %v3970
  %v3977 = vadd.f32 %v3502, %v3973
  %s3978 = scalar_lea.vmem %s3, 688
  %v3979 = vld [vmem:[%s3978] sm:$0xf]
  %v3980 = vld [vmem:[%s3978 + $0x4] sm:$0xf]
  %v3981 = vld [vmem:[%s3978 + $0x8] sm:$0xf]
  %v3982 = vld [vmem:[%s3978 + $0xc] sm:$0xf]
  %v3983 = vld [vmem:[%s3978 + $0x10] sm:$0xf]
  %v3984 = vld [vmem:[%s3978 + $0x14] sm:$0xf]
  %v3985 = vld [vmem:[%s3978 + $0x18] sm:$0xf]
  %v3986 = vld [vmem:[%s3978 + $0x1c] sm:$0xf]
  %v3987 = vld [vmem:[%s3978 + $0x20] sm:$0xf]
  %v3988 = vld [vmem:[%s3978 + $0x24] sm:$0xf]
  %v3989 = vld [vmem:[%s3978 + $0x28] sm:$0xf]
  %v3990 = vld [vmem:[%s3978 + $0x2c] sm:$0xf]
  %v3991 = vld [vmem:[%s3978 + $0x30] sm:$0xf]
  %v3992 = vld [vmem:[%s3978 + $0x34] sm:$0xf]
  %v3993 = vld [vmem:[%s3978 + $0x38] sm:$0xf]
  %v3994 = vld [vmem:[%s3978 + $0x3c] sm:$0xf]
  %v3995 = vld [vmem:[%s3978 + $0x40] sm:$0xf]
  %v3996 = vld [vmem:[%s3978 + $0x44] sm:$0xf]
  %v3997 = vld [vmem:[%s3978 + $0x48] sm:$0xf]
  %v3998 = vld [vmem:[%s3978 + $0x4c] sm:$0xf]
  %v3999 = vld [vmem:[%s3978 + $0x50] sm:$0xf]
  %v4000 = vld [vmem:[%s3978 + $0x54] sm:$0xf]
  %v4001 = vld [vmem:[%s3978 + $0x58] sm:$0xf]
  %v4002 = vld [vmem:[%s3978 + $0x5c] sm:$0xf]
  %v4003 = vld [vmem:[%s3978 + $0x60] sm:$0xf]
  %v4004 = vld [vmem:[%s3978 + $0x64] sm:$0xf]
  %v4005 = vld [vmem:[%s3978 + $0x68] sm:$0xf]
  %v4006 = vld [vmem:[%s3978 + $0x6c] sm:$0xf]
  %v4007 = vld [vmem:[%s3978 + $0x70] sm:$0xf]
  %v4008 = vld [vmem:[%s3978 + $0x74] sm:$0xf]
  %v4009 = vld [vmem:[%s3978 + $0x78] sm:$0xf]
  %v4010 = vld [vmem:[%s3978 + $0x7c] sm:$0xf]
  %v4011 = vld [vmem:[%s3978 + $0x80] sm:$0xf]
  %v4012 = vld [vmem:[%s3978 + $0x84] sm:$0xf]
  %v4013 = vld [vmem:[%s3978 + $0x88] sm:$0xf]
  %v4014 = vld [vmem:[%s3978 + $0x8c] sm:$0xf]
  %v4015 = vld [vmem:[%s3978 + $0x90] sm:$0xf]
  %v4016 = vld [vmem:[%s3978 + $0x94] sm:$0xf]
  %v4017 = vld [vmem:[%s3978 + $0x98] sm:$0xf]
  %v4018 = vld [vmem:[%s3978 + $0x9c] sm:$0xf]
  %v4019 = vld [vmem:[%s3978 + $0xa0] sm:$0xf]
  %v4020 = vld [vmem:[%s3978 + $0xa4] sm:$0xf]
  %v4021 = vld [vmem:[%s3978 + $0xa8] sm:$0xf]
  %v4022 = vld [vmem:[%s3978 + $0xac] sm:$0xf]
  %v4023 = vld [vmem:[%s3978 + $0xb0] sm:$0xf]
  %v4024 = vld [vmem:[%s3978 + $0xb4] sm:$0xf]
  %v4025 = vld [vmem:[%s3978 + $0xb8] sm:$0xf]
  %v4026 = vld [vmem:[%s3978 + $0xbc] sm:$0xf]
  %v4027 = vld [vmem:[%s3978 + $0xc0] sm:$0xf]
  %v4028 = vld [vmem:[%s3978 + $0xc4] sm:$0xf]
  %v4029 = vld [vmem:[%s3978 + $0xc8] sm:$0xf]
  %v4030 = vld [vmem:[%s3978 + $0xcc] sm:$0xf]
  %v4031 = vld [vmem:[%s3978 + $0xd0] sm:$0xf]
  %v4032 = vld [vmem:[%s3978 + $0xd4] sm:$0xf]
  %v4033 = vld [vmem:[%s3978 + $0xd8] sm:$0xf]
  %v4034 = vld [vmem:[%s3978 + $0xdc] sm:$0xf]
  %v4035 = vld [vmem:[%s3978 + $0xe0] sm:$0xf]
  %v4036 = vld [vmem:[%s3978 + $0xe4] sm:$0xf]
  %v4037 = vld [vmem:[%s3978 + $0xe8] sm:$0xf]
  %v4038 = vld [vmem:[%s3978 + $0xec] sm:$0xf]
  %v4039 = vld [vmem:[%s3978 + $0xf0] sm:$0xf]
  %v4040 = vld [vmem:[%s3978 + $0xf4] sm:$0xf]
  %v4041 = vld [vmem:[%s3978 + $0xf8] sm:$0xf]
  %v4042 = vld [vmem:[%s3978 + $0xfc] sm:$0xf]
  %v4043 = vld [vmem:[%s3978 + $0x100] sm:$0xf]
  %v4044 = vld [vmem:[%s3978 + $0x104] sm:$0xf]
  %v4045 = vld [vmem:[%s3978 + $0x108] sm:$0xf]
  %v4046 = vld [vmem:[%s3978 + $0x10c] sm:$0xf]
  %v4047 = vld [vmem:[%s3978 + $0x110] sm:$0xf]
  %v4048 = vld [vmem:[%s3978 + $0x114] sm:$0xf]
  %v4049 = vld [vmem:[%s3978 + $0x118] sm:$0xf]
  %v4050 = vld [vmem:[%s3978 + $0x11c] sm:$0xf]
  %v4051 = vld [vmem:[%s3978 + $0x120] sm:$0xf]
  %v4052 = vld [vmem:[%s3978 + $0x124] sm:$0xf]
  %v4053 = vld [vmem:[%s3978 + $0x128] sm:$0xf]
  %v4054 = vld [vmem:[%s3978 + $0x12c] sm:$0xf]
  %v4055 = vld [vmem:[%s3978 + $0x130] sm:$0xf]
  %v4056 = vld [vmem:[%s3978 + $0x134] sm:$0xf]
  %v4057 = vld [vmem:[%s3978 + $0x138] sm:$0xf]
  %v4058 = vld [vmem:[%s3978 + $0x13c] sm:$0xf]
  %v4059 = vld [vmem:[%s3978 + $0x140] sm:$0xf]
  %v4060 = vld [vmem:[%s3978 + $0x144] sm:$0xf]
  %v4061 = vld [vmem:[%s3978 + $0x148] sm:$0xf]
  %v4062 = vld [vmem:[%s3978 + $0x14c] sm:$0xf]
  %v4063 = vld [vmem:[%s3978 + $0x150] sm:$0xf]
  %v4064 = vld [vmem:[%s3978 + $0x154] sm:$0x3]
  %v4151 = vunpack.c.l.b16 %v3979
  %v4152 = vunpack.c.l.b16 %v3980
  %v4153 = vunpack.c.l.b16 %v3981
  %v4154 = vunpack.c.l.b16 %v3982
  %v4155 = vunpack.c.l.b16 %v3983
  %v4156 = vunpack.c.l.b16 %v3984
  %v4157 = vunpack.c.l.b16 %v3985
  %v4158 = vunpack.c.l.b16 %v3986
  %v4159 = vunpack.c.l.b16 %v3987
  %v4160 = vunpack.c.l.b16 %v3988
  %v4161 = vunpack.c.l.b16 %v3989
  %v4162 = vunpack.c.l.b16 %v3990
  %v4163 = vunpack.c.l.b16 %v3991
  %v4164 = vunpack.c.l.b16 %v3992
  %v4165 = vunpack.c.l.b16 %v3993
  %v4166 = vunpack.c.l.b16 %v3994
  %v4167 = vunpack.c.l.b16 %v3995
  %v4168 = vunpack.c.l.b16 %v3996
  %v4169 = vunpack.c.l.b16 %v3997
  %v4170 = vunpack.c.l.b16 %v3998
  %v4171 = vunpack.c.l.b16 %v3999
  %v4172 = vunpack.c.l.b16 %v4000
  %v4173 = vunpack.c.l.b16 %v4001
  %v4174 = vunpack.c.l.b16 %v4002
  %v4175 = vunpack.c.l.b16 %v4003
  %v4176 = vunpack.c.l.b16 %v4004
  %v4177 = vunpack.c.l.b16 %v4005
  %v4178 = vunpack.c.l.b16 %v4006
  %v4179 = vunpack.c.l.b16 %v4007
  %v4180 = vunpack.c.l.b16 %v4008
  %v4181 = vunpack.c.l.b16 %v4009
  %v4182 = vunpack.c.l.b16 %v4010
  %v4183 = vunpack.c.l.b16 %v4011
  %v4184 = vunpack.c.l.b16 %v4012
  %v4185 = vunpack.c.l.b16 %v4013
  %v4186 = vunpack.c.l.b16 %v4014
  %v4187 = vunpack.c.l.b16 %v4015
  %v4188 = vunpack.c.l.b16 %v4016
  %v4189 = vunpack.c.l.b16 %v4017
  %v4190 = vunpack.c.l.b16 %v4018
  %v4191 = vunpack.c.l.b16 %v4019
  %v4192 = vunpack.c.l.b16 %v4020
  %v4193 = vunpack.c.l.b16 %v4021
  %v4194 = vunpack.c.l.b16 %v4022
  %v4195 = vunpack.c.l.b16 %v4023
  %v4196 = vunpack.c.l.b16 %v4024
  %v4197 = vunpack.c.l.b16 %v4025
  %v4198 = vunpack.c.l.b16 %v4026
  %v4199 = vunpack.c.l.b16 %v4027
  %v4200 = vunpack.c.l.b16 %v4028
  %v4201 = vunpack.c.l.b16 %v4029
  %v4202 = vunpack.c.l.b16 %v4030
  %v4203 = vunpack.c.l.b16 %v4031
  %v4204 = vunpack.c.l.b16 %v4032
  %v4205 = vunpack.c.l.b16 %v4033
  %v4206 = vunpack.c.l.b16 %v4034
  %v4207 = vunpack.c.l.b16 %v4035
  %v4208 = vunpack.c.l.b16 %v4036
  %v4209 = vunpack.c.l.b16 %v4037
  %v4210 = vunpack.c.l.b16 %v4038
  %v4211 = vunpack.c.l.b16 %v4039
  %v4212 = vunpack.c.l.b16 %v4040
  %v4213 = vunpack.c.l.b16 %v4041
  %v4214 = vunpack.c.l.b16 %v4042
  %v4215 = vunpack.c.l.b16 %v4043
  %v4216 = vunpack.c.l.b16 %v4044
  %v4217 = vunpack.c.l.b16 %v4045
  %v4218 = vunpack.c.l.b16 %v4046
  %v4219 = vunpack.c.l.b16 %v4047
  %v4220 = vunpack.c.l.b16 %v4048
  %v4221 = vunpack.c.l.b16 %v4049
  %v4222 = vunpack.c.l.b16 %v4050
  %v4223 = vunpack.c.l.b16 %v4051
  %v4224 = vunpack.c.l.b16 %v4052
  %v4225 = vunpack.c.l.b16 %v4053
  %v4226 = vunpack.c.l.b16 %v4054
  %v4227 = vunpack.c.l.b16 %v4055
  %v4228 = vunpack.c.l.b16 %v4056
  %v4229 = vunpack.c.l.b16 %v4057
  %v4230 = vunpack.c.l.b16 %v4058
  %v4231 = vunpack.c.l.b16 %v4059
  %v4232 = vunpack.c.l.b16 %v4060
  %v4233 = vunpack.c.l.b16 %v4061
  %v4234 = vunpack.c.l.b16 %v4062
  %v4235 = vunpack.c.l.b16 %v4063
  %v4236 = vunpack.c.l.b16 %v4064
  %v4237 = vpack.c.b16 %v4152, %v4151
  %v4238 = vpack.c.b16 %v4154, %v4153
  %v4239 = vpack.c.b16 %v4156, %v4155
  %v4240 = vpack.c.b16 %v4158, %v4157
  %v4241 = vpack.c.b16 %v4160, %v4159
  %v4242 = vpack.c.b16 %v4162, %v4161
  %v4243 = vpack.c.b16 %v4164, %v4163
  %v4244 = vpack.c.b16 %v4166, %v4165
  %v4245 = vpack.c.b16 %v4168, %v4167
  %v4246 = vpack.c.b16 %v4170, %v4169
  %v4247 = vpack.c.b16 %v4172, %v4171
  %v4248 = vpack.c.b16 %v4174, %v4173
  %v4249 = vpack.c.b16 %v4176, %v4175
  %v4250 = vpack.c.b16 %v4178, %v4177
  %v4251 = vpack.c.b16 %v4180, %v4179
  %v4252 = vpack.c.b16 %v4182, %v4181
  %v4253 = vpack.c.b16 %v4184, %v4183
  %v4254 = vpack.c.b16 %v4186, %v4185
  %v4255 = vpack.c.b16 %v4188, %v4187
  %v4256 = vpack.c.b16 %v4190, %v4189
  %v4257 = vpack.c.b16 %v4192, %v4191
  %v4258 = vpack.c.b16 %v4194, %v4193
  %v4259 = vpack.c.b16 %v4196, %v4195
  %v4260 = vpack.c.b16 %v4198, %v4197
  %v4261 = vpack.c.b16 %v4200, %v4199
  %v4262 = vpack.c.b16 %v4202, %v4201
  %v4263 = vpack.c.b16 %v4204, %v4203
  %v4264 = vpack.c.b16 %v4206, %v4205
  %v4265 = vpack.c.b16 %v4208, %v4207
  %v4266 = vpack.c.b16 %v4210, %v4209
  %v4267 = vpack.c.b16 %v4212, %v4211
  %v4268 = vpack.c.b16 %v4214, %v4213
  %v4269 = vpack.c.b16 %v4216, %v4215
  %v4270 = vpack.c.b16 %v4218, %v4217
  %v4271 = vpack.c.b16 %v4220, %v4219
  %v4272 = vpack.c.b16 %v4222, %v4221
  %v4273 = vpack.c.b16 %v4224, %v4223
  %v4274 = vpack.c.b16 %v4226, %v4225
  %v4275 = vpack.c.b16 %v4228, %v4227
  %v4276 = vpack.c.b16 %v4230, %v4229
  %v4277 = vpack.c.b16 %v4232, %v4231
  %v4278 = vpack.c.b16 %v4234, %v4233
  %v4279 = vpack.c.b16 %v4236, %v4235
  %v4323 = vsel %vm3371, %v2965, 0
  %v4326 = vsel %vm1939, %v4279, 0
  %4328 = vmatprep.subr.bf16.mxu0 0
  %4329 = vmatpush1.bf16.msra.mxu0 %v4244
  %4330 = vmatprep.subr.bf16.mxu0 0
  %4331 = vmatpush1.bf16.msra.mxu0 %v4243
  %4332 = vmatprep.subr.bf16.mxu0 0
  %4333 = vmatpush1.bf16.msra.mxu0 %v4242
  %4334 = vmatprep.subr.bf16.mxu0 0
  %4335 = vmatpush1.bf16.msra.mxu0 %v4241
  %4336 = vmatprep.subr.bf16.mxu0 0
  %4337 = vmatpush1.bf16.msra.mxu0 %v4240
  %4338 = vmatprep.subr.bf16.mxu0 0
  %4339 = vmatpush1.bf16.msra.mxu0 %v4239
  %4340 = vmatprep.subr.bf16.mxu0 0
  %4341 = vmatpush1.bf16.msra.mxu0 %v4238
  %4342 = vmatprep.subr.bf16.mxu0 0
  %4343 = vmatpush1.bf16.msra.mxu0 %v4237
  %4344 = vmatprep.subr.bf16.mxu0 0
  %4345 = vmatpush2.bf16.msra.mxu0 %v4252
  %4346 = vmatprep.subr.bf16.mxu0 0
  %4347 = vmatpush2.bf16.msra.mxu0 %v4251
  %4348 = vmatprep.subr.bf16.mxu0 0
  %4349 = vmatpush2.bf16.msra.mxu0 %v4250
  %4350 = vmatprep.subr.bf16.mxu0 0
  %4351 = vmatpush2.bf16.msra.mxu0 %v4249
  %4352 = vmatprep.subr.bf16.mxu0 0
  %4353 = vmatpush2.bf16.msra.mxu0 %v4248
  %4354 = vmatprep.subr.bf16.mxu0 0
  %4355 = vmatpush2.bf16.msra.mxu0 %v4247
  %4356 = vmatprep.subr.bf16.mxu0 0
  %4357 = vmatpush2.bf16.msra.mxu0 %v4246
  %4358 = vmatprep.subr.bf16.mxu0 0
  %4359 = vmatpush2.bf16.msra.mxu0 %v4245
  %4360 = vmatprep.mubr.bf16.mxu0 %v2961
  %4361 = vmatmul.mubr.bf16.gmra.mxu0 %v2960
  %v4362 = vpop.f32.mrf.mxu0
  %v4363 = vadd.f32 0.0, %v4362
  %v4364 = vpop.f32.mrf.mxu0
  %v4365 = vpop.f32.mrf.mxu0
  %v4366 = vadd.f32 0.0, %v4365
  %v4367 = vpop.f32.mrf.mxu0
  %4368 = vdwg.mxu0
  %4369 = vmatprep.subr.bf16.mxu0 0
  %4370 = vmatpush1.bf16.msra.mxu0 %v4260
  %4371 = vmatprep.subr.bf16.mxu0 0
  %4372 = vmatpush1.bf16.msra.mxu0 %v4259
  %4373 = vmatprep.subr.bf16.mxu0 0
  %4374 = vmatpush1.bf16.msra.mxu0 %v4258
  %4375 = vmatprep.subr.bf16.mxu0 0
  %4376 = vmatpush1.bf16.msra.mxu0 %v4257
  %4377 = vmatprep.subr.bf16.mxu0 0
  %4378 = vmatpush1.bf16.msra.mxu0 %v4256
  %4379 = vmatprep.subr.bf16.mxu0 0
  %4380 = vmatpush1.bf16.msra.mxu0 %v4255
  %4381 = vmatprep.subr.bf16.mxu0 0
  %4382 = vmatpush1.bf16.msra.mxu0 %v4254
  %4383 = vmatprep.subr.bf16.mxu0 0
  %4384 = vmatpush1.bf16.msra.mxu0 %v4253
  %4385 = vmatprep.subr.bf16.mxu0 0
  %4386 = vmatpush2.bf16.msra.mxu0 %v4268
  %4387 = vmatprep.subr.bf16.mxu0 0
  %4388 = vmatpush2.bf16.msra.mxu0 %v4267
  %4389 = vmatprep.subr.bf16.mxu0 0
  %4390 = vmatpush2.bf16.msra.mxu0 %v4266
  %4391 = vmatprep.subr.bf16.mxu0 0
  %4392 = vmatpush2.bf16.msra.mxu0 %v4265
  %4393 = vmatprep.subr.bf16.mxu0 0
  %4394 = vmatpush2.bf16.msra.mxu0 %v4264
  %4395 = vmatprep.subr.bf16.mxu0 0
  %4396 = vmatpush2.bf16.msra.mxu0 %v4263
  %4397 = vmatprep.subr.bf16.mxu0 0
  %4398 = vmatpush2.bf16.msra.mxu0 %v4262
  %4399 = vmatprep.subr.bf16.mxu0 0
  %4400 = vmatpush2.bf16.msra.mxu0 %v4261
  %4401 = vmatprep.mubr.bf16.mxu0 %v2963
  %4402 = vmatmul.mubr.bf16.gmra.mxu0 %v2962
  %v4403 = vpop.f32.mrf.mxu0
  %v4404 = vadd.f32 %v4363, %v4403
  %v4405 = vpop.f32.mrf.mxu0
  %v4406 = vpop.f32.mrf.mxu0
  %v4407 = vadd.f32 %v4366, %v4406
  %v4408 = vpop.f32.mrf.mxu0
  %4409 = vdwg.mxu0
  %4410 = vmatprep.subr.bf16.mxu0 0
  %4411 = vmatpush1.bf16.msra.mxu0 %v4276
  %4412 = vmatprep.subr.bf16.mxu0 0
  %4413 = vmatpush1.bf16.msra.mxu0 %v4275
  %4414 = vmatprep.subr.bf16.mxu0 0
  %4415 = vmatpush1.bf16.msra.mxu0 %v4274
  %4416 = vmatprep.subr.bf16.mxu0 0
  %4417 = vmatpush1.bf16.msra.mxu0 %v4273
  %4418 = vmatprep.subr.bf16.mxu0 0
  %4419 = vmatpush1.bf16.msra.mxu0 %v4272
  %4420 = vmatprep.subr.bf16.mxu0 0
  %4421 = vmatpush1.bf16.msra.mxu0 %v4271
  %4422 = vmatprep.subr.bf16.mxu0 0
  %4423 = vmatpush1.bf16.msra.mxu0 %v4270
  %4424 = vmatprep.subr.bf16.mxu0 0
  %4425 = vmatpush1.bf16.msra.mxu0 %v4269
  %4426 = vmatprep.subr.bf16.mxu0 0
  %4427 = vmatpush2.bf16.msra.mxu0 0
  %4428 = vmatprep.subr.bf16.mxu0 0
  %4429 = vmatpush2.bf16.msra.mxu0 0
  %4430 = vmatprep.subr.bf16.mxu0 0
  %4431 = vmatpush2.bf16.msra.mxu0 0
  %4432 = vmatprep.subr.bf16.mxu0 0
  %4433 = vmatpush2.bf16.msra.mxu0 0
  %4434 = vmatprep.subr.bf16.mxu0 0
  %4435 = vmatpush2.bf16.msra.mxu0 0
  %4436 = vmatprep.subr.bf16.mxu0 0
  %4437 = vmatpush2.bf16.msra.mxu0 %v4326
  %4438 = vmatprep.subr.bf16.mxu0 0
  %4439 = vmatpush2.bf16.msra.mxu0 %v4278
  %4440 = vmatprep.subr.bf16.mxu0 0
  %4441 = vmatpush2.bf16.msra.mxu0 %v4277
  %4442 = vmatprep.mubr.bf16.mxu0 %v4323
  %4443 = vmatmul.mubr.bf16.gmra.mxu0 %v2964
  %v4444 = vpop.f32.mrf.mxu0
  %v4445 = vadd.f32 %v4404, %v4444
  %v4446 = vpop.f32.mrf.mxu0
  %v4447 = vpop.f32.mrf.mxu0
  %v4448 = vadd.f32 %v4407, %v4447
  %v4449 = vpop.f32.mrf.mxu0
  %4450 = vdwg.mxu0
  %v4451 = vadd.f32 %v3976, %v4445
  %v4452 = vadd.f32 %v3977, %v4448
  %s4453 = scalar_lea.vmem %s3, 1032
  %v4454 = vld [vmem:[%s4453] sm:$0xf]
  %v4455 = vld [vmem:[%s4453 + $0x4] sm:$0xf]
  %v4456 = vld [vmem:[%s4453 + $0x8] sm:$0xf]
  %v4457 = vld [vmem:[%s4453 + $0xc] sm:$0xf]
  %v4458 = vld [vmem:[%s4453 + $0x10] sm:$0xf]
  %v4459 = vld [vmem:[%s4453 + $0x14] sm:$0xf]
  %v4460 = vld [vmem:[%s4453 + $0x18] sm:$0xf]
  %v4461 = vld [vmem:[%s4453 + $0x1c] sm:$0xf]
  %v4462 = vld [vmem:[%s4453 + $0x20] sm:$0xf]
  %v4463 = vld [vmem:[%s4453 + $0x24] sm:$0xf]
  %v4464 = vld [vmem:[%s4453 + $0x28] sm:$0xf]
  %v4465 = vld [vmem:[%s4453 + $0x2c] sm:$0xf]
  %v4466 = vld [vmem:[%s4453 + $0x30] sm:$0xf]
  %v4467 = vld [vmem:[%s4453 + $0x34] sm:$0xf]
  %v4468 = vld [vmem:[%s4453 + $0x38] sm:$0xf]
  %v4469 = vld [vmem:[%s4453 + $0x3c] sm:$0xf]
  %v4470 = vld [vmem:[%s4453 + $0x40] sm:$0xf]
  %v4471 = vld [vmem:[%s4453 + $0x44] sm:$0xf]
  %v4472 = vld [vmem:[%s4453 + $0x48] sm:$0xf]
  %v4473 = vld [vmem:[%s4453 + $0x4c] sm:$0xf]
  %v4474 = vld [vmem:[%s4453 + $0x50] sm:$0xf]
  %v4475 = vld [vmem:[%s4453 + $0x54] sm:$0xf]
  %v4476 = vld [vmem:[%s4453 + $0x58] sm:$0xf]
  %v4477 = vld [vmem:[%s4453 + $0x5c] sm:$0xf]
  %v4478 = vld [vmem:[%s4453 + $0x60] sm:$0xf]
  %v4479 = vld [vmem:[%s4453 + $0x64] sm:$0xf]
  %v4480 = vld [vmem:[%s4453 + $0x68] sm:$0xf]
  %v4481 = vld [vmem:[%s4453 + $0x6c] sm:$0xf]
  %v4482 = vld [vmem:[%s4453 + $0x70] sm:$0xf]
  %v4483 = vld [vmem:[%s4453 + $0x74] sm:$0xf]
  %v4484 = vld [vmem:[%s4453 + $0x78] sm:$0xf]
  %v4485 = vld [vmem:[%s4453 + $0x7c] sm:$0xf]
  %v4486 = vld [vmem:[%s4453 + $0x80] sm:$0xf]
  %v4487 = vld [vmem:[%s4453 + $0x84] sm:$0xf]
  %v4488 = vld [vmem:[%s4453 + $0x88] sm:$0xf]
  %v4489 = vld [vmem:[%s4453 + $0x8c] sm:$0xf]
  %v4490 = vld [vmem:[%s4453 + $0x90] sm:$0xf]
  %v4491 = vld [vmem:[%s4453 + $0x94] sm:$0xf]
  %v4492 = vld [vmem:[%s4453 + $0x98] sm:$0xf]
  %v4493 = vld [vmem:[%s4453 + $0x9c] sm:$0xf]
  %v4494 = vld [vmem:[%s4453 + $0xa0] sm:$0xf]
  %v4495 = vld [vmem:[%s4453 + $0xa4] sm:$0xf]
  %v4496 = vld [vmem:[%s4453 + $0xa8] sm:$0xf]
  %v4497 = vld [vmem:[%s4453 + $0xac] sm:$0xf]
  %v4498 = vld [vmem:[%s4453 + $0xb0] sm:$0xf]
  %v4499 = vld [vmem:[%s4453 + $0xb4] sm:$0xf]
  %v4500 = vld [vmem:[%s4453 + $0xb8] sm:$0xf]
  %v4501 = vld [vmem:[%s4453 + $0xbc] sm:$0xf]
  %v4502 = vld [vmem:[%s4453 + $0xc0] sm:$0xf]
  %v4503 = vld [vmem:[%s4453 + $0xc4] sm:$0xf]
  %v4504 = vld [vmem:[%s4453 + $0xc8] sm:$0xf]
  %v4505 = vld [vmem:[%s4453 + $0xcc] sm:$0xf]
  %v4506 = vld [vmem:[%s4453 + $0xd0] sm:$0xf]
  %v4507 = vld [vmem:[%s4453 + $0xd4] sm:$0xf]
  %v4508 = vld [vmem:[%s4453 + $0xd8] sm:$0xf]
  %v4509 = vld [vmem:[%s4453 + $0xdc] sm:$0xf]
  %v4510 = vld [vmem:[%s4453 + $0xe0] sm:$0xf]
  %v4511 = vld [vmem:[%s4453 + $0xe4] sm:$0xf]
  %v4512 = vld [vmem:[%s4453 + $0xe8] sm:$0xf]
  %v4513 = vld [vmem:[%s4453 + $0xec] sm:$0xf]
  %v4514 = vld [vmem:[%s4453 + $0xf0] sm:$0xf]
  %v4515 = vld [vmem:[%s4453 + $0xf4] sm:$0xf]
  %v4516 = vld [vmem:[%s4453 + $0xf8] sm:$0xf]
  %v4517 = vld [vmem:[%s4453 + $0xfc] sm:$0xf]
  %v4518 = vld [vmem:[%s4453 + $0x100] sm:$0xf]
  %v4519 = vld [vmem:[%s4453 + $0x104] sm:$0xf]
  %v4520 = vld [vmem:[%s4453 + $0x108] sm:$0xf]
  %v4521 = vld [vmem:[%s4453 + $0x10c] sm:$0xf]
  %v4522 = vld [vmem:[%s4453 + $0x110] sm:$0xf]
  %v4523 = vld [vmem:[%s4453 + $0x114] sm:$0xf]
  %v4524 = vld [vmem:[%s4453 + $0x118] sm:$0xf]
  %v4525 = vld [vmem:[%s4453 + $0x11c] sm:$0xf]
  %v4526 = vld [vmem:[%s4453 + $0x120] sm:$0xf]
  %v4527 = vld [vmem:[%s4453 + $0x124] sm:$0xf]
  %v4528 = vld [vmem:[%s4453 + $0x128] sm:$0xf]
  %v4529 = vld [vmem:[%s4453 + $0x12c] sm:$0xf]
  %v4530 = vld [vmem:[%s4453 + $0x130] sm:$0xf]
  %v4531 = vld [vmem:[%s4453 + $0x134] sm:$0xf]
  %v4532 = vld [vmem:[%s4453 + $0x138] sm:$0xf]
  %v4533 = vld [vmem:[%s4453 + $0x13c] sm:$0xf]
  %v4534 = vld [vmem:[%s4453 + $0x140] sm:$0xf]
  %v4535 = vld [vmem:[%s4453 + $0x144] sm:$0xf]
  %v4536 = vld [vmem:[%s4453 + $0x148] sm:$0xf]
  %v4537 = vld [vmem:[%s4453 + $0x14c] sm:$0xf]
  %v4538 = vld [vmem:[%s4453 + $0x150] sm:$0xf]
  %v4539 = vld [vmem:[%s4453 + $0x154] sm:$0x3]
  %v4626 = vunpack.c.l.b16 %v4454
  %v4627 = vunpack.c.l.b16 %v4455
  %v4628 = vunpack.c.l.b16 %v4456
  %v4629 = vunpack.c.l.b16 %v4457
  %v4630 = vunpack.c.l.b16 %v4458
  %v4631 = vunpack.c.l.b16 %v4459
  %v4632 = vunpack.c.l.b16 %v4460
  %v4633 = vunpack.c.l.b16 %v4461
  %v4634 = vunpack.c.l.b16 %v4462
  %v4635 = vunpack.c.l.b16 %v4463
  %v4636 = vunpack.c.l.b16 %v4464
  %v4637 = vunpack.c.l.b16 %v4465
  %v4638 = vunpack.c.l.b16 %v4466
  %v4639 = vunpack.c.l.b16 %v4467
  %v4640 = vunpack.c.l.b16 %v4468
  %v4641 = vunpack.c.l.b16 %v4469
  %v4642 = vunpack.c.l.b16 %v4470
  %v4643 = vunpack.c.l.b16 %v4471
  %v4644 = vunpack.c.l.b16 %v4472
  %v4645 = vunpack.c.l.b16 %v4473
  %v4646 = vunpack.c.l.b16 %v4474
  %v4647 = vunpack.c.l.b16 %v4475
  %v4648 = vunpack.c.l.b16 %v4476
  %v4649 = vunpack.c.l.b16 %v4477
  %v4650 = vunpack.c.l.b16 %v4478
  %v4651 = vunpack.c.l.b16 %v4479
  %v4652 = vunpack.c.l.b16 %v4480
  %v4653 = vunpack.c.l.b16 %v4481
  %v4654 = vunpack.c.l.b16 %v4482
  %v4655 = vunpack.c.l.b16 %v4483
  %v4656 = vunpack.c.l.b16 %v4484
  %v4657 = vunpack.c.l.b16 %v4485
  %v4658 = vunpack.c.l.b16 %v4486
  %v4659 = vunpack.c.l.b16 %v4487
  %v4660 = vunpack.c.l.b16 %v4488
  %v4661 = vunpack.c.l.b16 %v4489
  %v4662 = vunpack.c.l.b16 %v4490
  %v4663 = vunpack.c.l.b16 %v4491
  %v4664 = vunpack.c.l.b16 %v4492
  %v4665 = vunpack.c.l.b16 %v4493
  %v4666 = vunpack.c.l.b16 %v4494
  %v4667 = vunpack.c.l.b16 %v4495
  %v4668 = vunpack.c.l.b16 %v4496
  %v4669 = vunpack.c.l.b16 %v4497
  %v4670 = vunpack.c.l.b16 %v4498
  %v4671 = vunpack.c.l.b16 %v4499
  %v4672 = vunpack.c.l.b16 %v4500
  %v4673 = vunpack.c.l.b16 %v4501
  %v4674 = vunpack.c.l.b16 %v4502
  %v4675 = vunpack.c.l.b16 %v4503
  %v4676 = vunpack.c.l.b16 %v4504
  %v4677 = vunpack.c.l.b16 %v4505
  %v4678 = vunpack.c.l.b16 %v4506
  %v4679 = vunpack.c.l.b16 %v4507
  %v4680 = vunpack.c.l.b16 %v4508
  %v4681 = vunpack.c.l.b16 %v4509
  %v4682 = vunpack.c.l.b16 %v4510
  %v4683 = vunpack.c.l.b16 %v4511
  %v4684 = vunpack.c.l.b16 %v4512
  %v4685 = vunpack.c.l.b16 %v4513
  %v4686 = vunpack.c.l.b16 %v4514
  %v4687 = vunpack.c.l.b16 %v4515
  %v4688 = vunpack.c.l.b16 %v4516
  %v4689 = vunpack.c.l.b16 %v4517
  %v4690 = vunpack.c.l.b16 %v4518
  %v4691 = vunpack.c.l.b16 %v4519
  %v4692 = vunpack.c.l.b16 %v4520
  %v4693 = vunpack.c.l.b16 %v4521
  %v4694 = vunpack.c.l.b16 %v4522
  %v4695 = vunpack.c.l.b16 %v4523
  %v4696 = vunpack.c.l.b16 %v4524
  %v4697 = vunpack.c.l.b16 %v4525
  %v4698 = vunpack.c.l.b16 %v4526
  %v4699 = vunpack.c.l.b16 %v4527
  %v4700 = vunpack.c.l.b16 %v4528
  %v4701 = vunpack.c.l.b16 %v4529
  %v4702 = vunpack.c.l.b16 %v4530
  %v4703 = vunpack.c.l.b16 %v4531
  %v4704 = vunpack.c.l.b16 %v4532
  %v4705 = vunpack.c.l.b16 %v4533
  %v4706 = vunpack.c.l.b16 %v4534
  %v4707 = vunpack.c.l.b16 %v4535
  %v4708 = vunpack.c.l.b16 %v4536
  %v4709 = vunpack.c.l.b16 %v4537
  %v4710 = vunpack.c.l.b16 %v4538
  %v4711 = vunpack.c.l.b16 %v4539
  %v4712 = vpack.c.b16 %v4627, %v4626
  %v4713 = vpack.c.b16 %v4629, %v4628
  %v4714 = vpack.c.b16 %v4631, %v4630
  %v4715 = vpack.c.b16 %v4633, %v4632
  %v4716 = vpack.c.b16 %v4635, %v4634
  %v4717 = vpack.c.b16 %v4637, %v4636
  %v4718 = vpack.c.b16 %v4639, %v4638
  %v4719 = vpack.c.b16 %v4641, %v4640
  %v4720 = vpack.c.b16 %v4643, %v4642
  %v4721 = vpack.c.b16 %v4645, %v4644
  %v4722 = vpack.c.b16 %v4647, %v4646
  %v4723 = vpack.c.b16 %v4649, %v4648
  %v4724 = vpack.c.b16 %v4651, %v4650
  %v4725 = vpack.c.b16 %v4653, %v4652
  %v4726 = vpack.c.b16 %v4655, %v4654
  %v4727 = vpack.c.b16 %v4657, %v4656
  %v4728 = vpack.c.b16 %v4659, %v4658
  %v4729 = vpack.c.b16 %v4661, %v4660
  %v4730 = vpack.c.b16 %v4663, %v4662
  %v4731 = vpack.c.b16 %v4665, %v4664
  %v4732 = vpack.c.b16 %v4667, %v4666
  %v4733 = vpack.c.b16 %v4669, %v4668
  %v4734 = vpack.c.b16 %v4671, %v4670
  %v4735 = vpack.c.b16 %v4673, %v4672
  %v4736 = vpack.c.b16 %v4675, %v4674
  %v4737 = vpack.c.b16 %v4677, %v4676
  %v4738 = vpack.c.b16 %v4679, %v4678
  %v4739 = vpack.c.b16 %v4681, %v4680
  %v4740 = vpack.c.b16 %v4683, %v4682
  %v4741 = vpack.c.b16 %v4685, %v4684
  %v4742 = vpack.c.b16 %v4687, %v4686
  %v4743 = vpack.c.b16 %v4689, %v4688
  %v4744 = vpack.c.b16 %v4691, %v4690
  %v4745 = vpack.c.b16 %v4693, %v4692
  %v4746 = vpack.c.b16 %v4695, %v4694
  %v4747 = vpack.c.b16 %v4697, %v4696
  %v4748 = vpack.c.b16 %v4699, %v4698
  %v4749 = vpack.c.b16 %v4701, %v4700
  %v4750 = vpack.c.b16 %v4703, %v4702
  %v4751 = vpack.c.b16 %v4705, %v4704
  %v4752 = vpack.c.b16 %v4707, %v4706
  %v4753 = vpack.c.b16 %v4709, %v4708
  %v4754 = vpack.c.b16 %v4711, %v4710
  %v4798 = vsel %vm3371, %v2971, 0
  %v4801 = vsel %vm1939, %v4754, 0
  %4803 = vmatprep.subr.bf16.mxu0 0
  %4804 = vmatpush1.bf16.msra.mxu0 %v4719
  %4805 = vmatprep.subr.bf16.mxu0 0
  %4806 = vmatpush1.bf16.msra.mxu0 %v4718
  %4807 = vmatprep.subr.bf16.mxu0 0
  %4808 = vmatpush1.bf16.msra.mxu0 %v4717
  %4809 = vmatprep.subr.bf16.mxu0 0
  %4810 = vmatpush1.bf16.msra.mxu0 %v4716
  %4811 = vmatprep.subr.bf16.mxu0 0
  %4812 = vmatpush1.bf16.msra.mxu0 %v4715
  %4813 = vmatprep.subr.bf16.mxu0 0
  %4814 = vmatpush1.bf16.msra.mxu0 %v4714
  %4815 = vmatprep.subr.bf16.mxu0 0
  %4816 = vmatpush1.bf16.msra.mxu0 %v4713
  %4817 = vmatprep.subr.bf16.mxu0 0
  %4818 = vmatpush1.bf16.msra.mxu0 %v4712
  %4819 = vmatprep.subr.bf16.mxu0 0
  %4820 = vmatpush2.bf16.msra.mxu0 %v4727
  %4821 = vmatprep.subr.bf16.mxu0 0
  %4822 = vmatpush2.bf16.msra.mxu0 %v4726
  %4823 = vmatprep.subr.bf16.mxu0 0
  %4824 = vmatpush2.bf16.msra.mxu0 %v4725
  %4825 = vmatprep.subr.bf16.mxu0 0
  %4826 = vmatpush2.bf16.msra.mxu0 %v4724
  %4827 = vmatprep.subr.bf16.mxu0 0
  %4828 = vmatpush2.bf16.msra.mxu0 %v4723
  %4829 = vmatprep.subr.bf16.mxu0 0
  %4830 = vmatpush2.bf16.msra.mxu0 %v4722
  %4831 = vmatprep.subr.bf16.mxu0 0
  %4832 = vmatpush2.bf16.msra.mxu0 %v4721
  %4833 = vmatprep.subr.bf16.mxu0 0
  %4834 = vmatpush2.bf16.msra.mxu0 %v4720
  %4835 = vmatprep.mubr.bf16.mxu0 %v2967
  %4836 = vmatmul.mubr.bf16.gmra.mxu0 %v2966
  %v4837 = vpop.f32.mrf.mxu0
  %v4838 = vadd.f32 0.0, %v4837
  %v4839 = vpop.f32.mrf.mxu0
  %v4840 = vpop.f32.mrf.mxu0
  %v4841 = vadd.f32 0.0, %v4840
  %v4842 = vpop.f32.mrf.mxu0
  %4843 = vdwg.mxu0
  %4844 = vmatprep.subr.bf16.mxu0 0
  %4845 = vmatpush1.bf16.msra.mxu0 %v4735
  %4846 = vmatprep.subr.bf16.mxu0 0
  %4847 = vmatpush1.bf16.msra.mxu0 %v4734
  %4848 = vmatprep.subr.bf16.mxu0 0
  %4849 = vmatpush1.bf16.msra.mxu0 %v4733
  %4850 = vmatprep.subr.bf16.mxu0 0
  %4851 = vmatpush1.bf16.msra.mxu0 %v4732
  %4852 = vmatprep.subr.bf16.mxu0 0
  %4853 = vmatpush1.bf16.msra.mxu0 %v4731
  %4854 = vmatprep.subr.bf16.mxu0 0
  %4855 = vmatpush1.bf16.msra.mxu0 %v4730
  %4856 = vmatprep.subr.bf16.mxu0 0
  %4857 = vmatpush1.bf16.msra.mxu0 %v4729
  %4858 = vmatprep.subr.bf16.mxu0 0
  %4859 = vmatpush1.bf16.msra.mxu0 %v4728
  %4860 = vmatprep.subr.bf16.mxu0 0
  %4861 = vmatpush2.bf16.msra.mxu0 %v4743
  %4862 = vmatprep.subr.bf16.mxu0 0
  %4863 = vmatpush2.bf16.msra.mxu0 %v4742
  %4864 = vmatprep.subr.bf16.mxu0 0
  %4865 = vmatpush2.bf16.msra.mxu0 %v4741
  %4866 = vmatprep.subr.bf16.mxu0 0
  %4867 = vmatpush2.bf16.msra.mxu0 %v4740
  %4868 = vmatprep.subr.bf16.mxu0 0
  %4869 = vmatpush2.bf16.msra.mxu0 %v4739
  %4870 = vmatprep.subr.bf16.mxu0 0
  %4871 = vmatpush2.bf16.msra.mxu0 %v4738
  %4872 = vmatprep.subr.bf16.mxu0 0
  %4873 = vmatpush2.bf16.msra.mxu0 %v4737
  %4874 = vmatprep.subr.bf16.mxu0 0
  %4875 = vmatpush2.bf16.msra.mxu0 %v4736
  %4876 = vmatprep.mubr.bf16.mxu0 %v2969
  %4877 = vmatmul.mubr.bf16.gmra.mxu0 %v2968
  %v4878 = vpop.f32.mrf.mxu0
  %v4879 = vadd.f32 %v4838, %v4878
  %v4880 = vpop.f32.mrf.mxu0
  %v4881 = vpop.f32.mrf.mxu0
  %v4882 = vadd.f32 %v4841, %v4881
  %v4883 = vpop.f32.mrf.mxu0
  %4884 = vdwg.mxu0
  %4885 = vmatprep.subr.bf16.mxu0 0
  %4886 = vmatpush1.bf16.msra.mxu0 %v4751
  %4887 = vmatprep.subr.bf16.mxu0 0
  %4888 = vmatpush1.bf16.msra.mxu0 %v4750
  %4889 = vmatprep.subr.bf16.mxu0 0
  %4890 = vmatpush1.bf16.msra.mxu0 %v4749
  %4891 = vmatprep.subr.bf16.mxu0 0
  %4892 = vmatpush1.bf16.msra.mxu0 %v4748
  %4893 = vmatprep.subr.bf16.mxu0 0
  %4894 = vmatpush1.bf16.msra.mxu0 %v4747
  %4895 = vmatprep.subr.bf16.mxu0 0
  %4896 = vmatpush1.bf16.msra.mxu0 %v4746
  %4897 = vmatprep.subr.bf16.mxu0 0
  %4898 = vmatpush1.bf16.msra.mxu0 %v4745
  %4899 = vmatprep.subr.bf16.mxu0 0
  %4900 = vmatpush1.bf16.msra.mxu0 %v4744
  %4901 = vmatprep.subr.bf16.mxu0 0
  %4902 = vmatpush2.bf16.msra.mxu0 0
  %4903 = vmatprep.subr.bf16.mxu0 0
  %4904 = vmatpush2.bf16.msra.mxu0 0
  %4905 = vmatprep.subr.bf16.mxu0 0
  %4906 = vmatpush2.bf16.msra.mxu0 0
  %4907 = vmatprep.subr.bf16.mxu0 0
  %4908 = vmatpush2.bf16.msra.mxu0 0
  %4909 = vmatprep.subr.bf16.mxu0 0
  %4910 = vmatpush2.bf16.msra.mxu0 0
  %4911 = vmatprep.subr.bf16.mxu0 0
  %4912 = vmatpush2.bf16.msra.mxu0 %v4801
  %4913 = vmatprep.subr.bf16.mxu0 0
  %4914 = vmatpush2.bf16.msra.mxu0 %v4753
  %4915 = vmatprep.subr.bf16.mxu0 0
  %4916 = vmatpush2.bf16.msra.mxu0 %v4752
  %4917 = vmatprep.mubr.bf16.mxu0 %v4798
  %4918 = vmatmul.mubr.bf16.gmra.mxu0 %v2970
  %v4919 = vpop.f32.mrf.mxu0
  %v4920 = vadd.f32 %v4879, %v4919
  %v4921 = vpop.f32.mrf.mxu0
  %v4922 = vpop.f32.mrf.mxu0
  %v4923 = vadd.f32 %v4882, %v4922
  %v4924 = vpop.f32.mrf.mxu0
  %4925 = vdwg.mxu0
  %v4926 = vadd.f32 %v4451, %v4920
  %v4927 = vadd.f32 %v4452, %v4923
  %s4928 = scalar_lea.vmem %s3, 1376
  %v4929 = vld [vmem:[%s4928] sm:$0xf]
  %v4930 = vld [vmem:[%s4928 + $0x4] sm:$0xf]
  %v4931 = vld [vmem:[%s4928 + $0x8] sm:$0xf]
  %v4932 = vld [vmem:[%s4928 + $0xc] sm:$0xf]
  %v4933 = vld [vmem:[%s4928 + $0x10] sm:$0xf]
  %v4934 = vld [vmem:[%s4928 + $0x14] sm:$0xf]
  %v4935 = vld [vmem:[%s4928 + $0x18] sm:$0xf]
  %v4936 = vld [vmem:[%s4928 + $0x1c] sm:$0xf]
  %v4937 = vld [vmem:[%s4928 + $0x20] sm:$0xf]
  %v4938 = vld [vmem:[%s4928 + $0x24] sm:$0xf]
  %v4939 = vld [vmem:[%s4928 + $0x28] sm:$0xf]
  %v4940 = vld [vmem:[%s4928 + $0x2c] sm:$0xf]
  %v4941 = vld [vmem:[%s4928 + $0x30] sm:$0xf]
  %v4942 = vld [vmem:[%s4928 + $0x34] sm:$0xf]
  %v4943 = vld [vmem:[%s4928 + $0x38] sm:$0xf]
  %v4944 = vld [vmem:[%s4928 + $0x3c] sm:$0xf]
  %v4945 = vld [vmem:[%s4928 + $0x40] sm:$0xf]
  %v4946 = vld [vmem:[%s4928 + $0x44] sm:$0xf]
  %v4947 = vld [vmem:[%s4928 + $0x48] sm:$0xf]
  %v4948 = vld [vmem:[%s4928 + $0x4c] sm:$0xf]
  %v4949 = vld [vmem:[%s4928 + $0x50] sm:$0xf]
  %v4950 = vld [vmem:[%s4928 + $0x54] sm:$0xf]
  %v4951 = vld [vmem:[%s4928 + $0x58] sm:$0xf]
  %v4952 = vld [vmem:[%s4928 + $0x5c] sm:$0xf]
  %v4953 = vld [vmem:[%s4928 + $0x60] sm:$0xf]
  %v4954 = vld [vmem:[%s4928 + $0x64] sm:$0xf]
  %v4955 = vld [vmem:[%s4928 + $0x68] sm:$0xf]
  %v4956 = vld [vmem:[%s4928 + $0x6c] sm:$0xf]
  %v4957 = vld [vmem:[%s4928 + $0x70] sm:$0xf]
  %v4958 = vld [vmem:[%s4928 + $0x74] sm:$0xf]
  %v4959 = vld [vmem:[%s4928 + $0x78] sm:$0xf]
  %v4960 = vld [vmem:[%s4928 + $0x7c] sm:$0xf]
  %v4961 = vld [vmem:[%s4928 + $0x80] sm:$0xf]
  %v4962 = vld [vmem:[%s4928 + $0x84] sm:$0xf]
  %v4963 = vld [vmem:[%s4928 + $0x88] sm:$0xf]
  %v4964 = vld [vmem:[%s4928 + $0x8c] sm:$0xf]
  %v4965 = vld [vmem:[%s4928 + $0x90] sm:$0xf]
  %v4966 = vld [vmem:[%s4928 + $0x94] sm:$0xf]
  %v4967 = vld [vmem:[%s4928 + $0x98] sm:$0xf]
  %v4968 = vld [vmem:[%s4928 + $0x9c] sm:$0xf]
  %v4969 = vld [vmem:[%s4928 + $0xa0] sm:$0xf]
  %v4970 = vld [vmem:[%s4928 + $0xa4] sm:$0xf]
  %v4971 = vld [vmem:[%s4928 + $0xa8] sm:$0xf]
  %v4972 = vld [vmem:[%s4928 + $0xac] sm:$0xf]
  %v4973 = vld [vmem:[%s4928 + $0xb0] sm:$0xf]
  %v4974 = vld [vmem:[%s4928 + $0xb4] sm:$0xf]
  %v4975 = vld [vmem:[%s4928 + $0xb8] sm:$0xf]
  %v4976 = vld [vmem:[%s4928 + $0xbc] sm:$0xf]
  %v4977 = vld [vmem:[%s4928 + $0xc0] sm:$0xf]
  %v4978 = vld [vmem:[%s4928 + $0xc4] sm:$0xf]
  %v4979 = vld [vmem:[%s4928 + $0xc8] sm:$0xf]
  %v4980 = vld [vmem:[%s4928 + $0xcc] sm:$0xf]
  %v4981 = vld [vmem:[%s4928 + $0xd0] sm:$0xf]
  %v4982 = vld [vmem:[%s4928 + $0xd4] sm:$0xf]
  %v4983 = vld [vmem:[%s4928 + $0xd8] sm:$0xf]
  %v4984 = vld [vmem:[%s4928 + $0xdc] sm:$0xf]
  %v4985 = vld [vmem:[%s4928 + $0xe0] sm:$0xf]
  %v4986 = vld [vmem:[%s4928 + $0xe4] sm:$0xf]
  %v4987 = vld [vmem:[%s4928 + $0xe8] sm:$0xf]
  %v4988 = vld [vmem:[%s4928 + $0xec] sm:$0xf]
  %v4989 = vld [vmem:[%s4928 + $0xf0] sm:$0xf]
  %v4990 = vld [vmem:[%s4928 + $0xf4] sm:$0xf]
  %v4991 = vld [vmem:[%s4928 + $0xf8] sm:$0xf]
  %v4992 = vld [vmem:[%s4928 + $0xfc] sm:$0xf]
  %v4993 = vld [vmem:[%s4928 + $0x100] sm:$0xf]
  %v4994 = vld [vmem:[%s4928 + $0x104] sm:$0xf]
  %v4995 = vld [vmem:[%s4928 + $0x108] sm:$0xf]
  %v4996 = vld [vmem:[%s4928 + $0x10c] sm:$0xf]
  %v4997 = vld [vmem:[%s4928 + $0x110] sm:$0xf]
  %v4998 = vld [vmem:[%s4928 + $0x114] sm:$0xf]
  %v4999 = vld [vmem:[%s4928 + $0x118] sm:$0xf]
  %v5000 = vld [vmem:[%s4928 + $0x11c] sm:$0xf]
  %v5001 = vld [vmem:[%s4928 + $0x120] sm:$0xf]
  %v5002 = vld [vmem:[%s4928 + $0x124] sm:$0xf]
  %v5003 = vld [vmem:[%s4928 + $0x128] sm:$0xf]
  %v5004 = vld [vmem:[%s4928 + $0x12c] sm:$0xf]
  %v5005 = vld [vmem:[%s4928 + $0x130] sm:$0xf]
  %v5006 = vld [vmem:[%s4928 + $0x134] sm:$0xf]
  %v5007 = vld [vmem:[%s4928 + $0x138] sm:$0xf]
  %v5008 = vld [vmem:[%s4928 + $0x13c] sm:$0xf]
  %v5009 = vld [vmem:[%s4928 + $0x140] sm:$0xf]
  %v5010 = vld [vmem:[%s4928 + $0x144] sm:$0xf]
  %v5011 = vld [vmem:[%s4928 + $0x148] sm:$0xf]
  %v5012 = vld [vmem:[%s4928 + $0x14c] sm:$0xf]
  %v5013 = vld [vmem:[%s4928 + $0x150] sm:$0xf]
  %v5014 = vld [vmem:[%s4928 + $0x154] sm:$0x3]
  %v5101 = vunpack.c.l.b16 %v4929
  %v5102 = vunpack.c.l.b16 %v4930
  %v5103 = vunpack.c.l.b16 %v4931
  %v5104 = vunpack.c.l.b16 %v4932
  %v5105 = vunpack.c.l.b16 %v4933
  %v5106 = vunpack.c.l.b16 %v4934
  %v5107 = vunpack.c.l.b16 %v4935
  %v5108 = vunpack.c.l.b16 %v4936
  %v5109 = vunpack.c.l.b16 %v4937
  %v5110 = vunpack.c.l.b16 %v4938
  %v5111 = vunpack.c.l.b16 %v4939
  %v5112 = vunpack.c.l.b16 %v4940
  %v5113 = vunpack.c.l.b16 %v4941
  %v5114 = vunpack.c.l.b16 %v4942
  %v5115 = vunpack.c.l.b16 %v4943
  %v5116 = vunpack.c.l.b16 %v4944
  %v5117 = vunpack.c.l.b16 %v4945
  %v5118 = vunpack.c.l.b16 %v4946
  %v5119 = vunpack.c.l.b16 %v4947
  %v5120 = vunpack.c.l.b16 %v4948
  %v5121 = vunpack.c.l.b16 %v4949
  %v5122 = vunpack.c.l.b16 %v4950
  %v5123 = vunpack.c.l.b16 %v4951
  %v5124 = vunpack.c.l.b16 %v4952
  %v5125 = vunpack.c.l.b16 %v4953
  %v5126 = vunpack.c.l.b16 %v4954
  %v5127 = vunpack.c.l.b16 %v4955
  %v5128 = vunpack.c.l.b16 %v4956
  %v5129 = vunpack.c.l.b16 %v4957
  %v5130 = vunpack.c.l.b16 %v4958
  %v5131 = vunpack.c.l.b16 %v4959
  %v5132 = vunpack.c.l.b16 %v4960
  %v5133 = vunpack.c.l.b16 %v4961
  %v5134 = vunpack.c.l.b16 %v4962
  %v5135 = vunpack.c.l.b16 %v4963
  %v5136 = vunpack.c.l.b16 %v4964
  %v5137 = vunpack.c.l.b16 %v4965
  %v5138 = vunpack.c.l.b16 %v4966
  %v5139 = vunpack.c.l.b16 %v4967
  %v5140 = vunpack.c.l.b16 %v4968
  %v5141 = vunpack.c.l.b16 %v4969
  %v5142 = vunpack.c.l.b16 %v4970
  %v5143 = vunpack.c.l.b16 %v4971
  %v5144 = vunpack.c.l.b16 %v4972
  %v5145 = vunpack.c.l.b16 %v4973
  %v5146 = vunpack.c.l.b16 %v4974
  %v5147 = vunpack.c.l.b16 %v4975
  %v5148 = vunpack.c.l.b16 %v4976
  %v5149 = vunpack.c.l.b16 %v4977
  %v5150 = vunpack.c.l.b16 %v4978
  %v5151 = vunpack.c.l.b16 %v4979
  %v5152 = vunpack.c.l.b16 %v4980
  %v5153 = vunpack.c.l.b16 %v4981
  %v5154 = vunpack.c.l.b16 %v4982
  %v5155 = vunpack.c.l.b16 %v4983
  %v5156 = vunpack.c.l.b16 %v4984
  %v5157 = vunpack.c.l.b16 %v4985
  %v5158 = vunpack.c.l.b16 %v4986
  %v5159 = vunpack.c.l.b16 %v4987
  %v5160 = vunpack.c.l.b16 %v4988
  %v5161 = vunpack.c.l.b16 %v4989
  %v5162 = vunpack.c.l.b16 %v4990
  %v5163 = vunpack.c.l.b16 %v4991
  %v5164 = vunpack.c.l.b16 %v4992
  %v5165 = vunpack.c.l.b16 %v4993
  %v5166 = vunpack.c.l.b16 %v4994
  %v5167 = vunpack.c.l.b16 %v4995
  %v5168 = vunpack.c.l.b16 %v4996
  %v5169 = vunpack.c.l.b16 %v4997
  %v5170 = vunpack.c.l.b16 %v4998
  %v5171 = vunpack.c.l.b16 %v4999
  %v5172 = vunpack.c.l.b16 %v5000
  %v5173 = vunpack.c.l.b16 %v5001
  %v5174 = vunpack.c.l.b16 %v5002
  %v5175 = vunpack.c.l.b16 %v5003
  %v5176 = vunpack.c.l.b16 %v5004
  %v5177 = vunpack.c.l.b16 %v5005
  %v5178 = vunpack.c.l.b16 %v5006
  %v5179 = vunpack.c.l.b16 %v5007
  %v5180 = vunpack.c.l.b16 %v5008
  %v5181 = vunpack.c.l.b16 %v5009
  %v5182 = vunpack.c.l.b16 %v5010
  %v5183 = vunpack.c.l.b16 %v5011
  %v5184 = vunpack.c.l.b16 %v5012
  %v5185 = vunpack.c.l.b16 %v5013
  %v5186 = vunpack.c.l.b16 %v5014
  %v5187 = vpack.c.b16 %v5102, %v5101
  %v5188 = vpack.c.b16 %v5104, %v5103
  %v5189 = vpack.c.b16 %v5106, %v5105
  %v5190 = vpack.c.b16 %v5108, %v5107
  %v5191 = vpack.c.b16 %v5110, %v5109
  %v5192 = vpack.c.b16 %v5112, %v5111
  %v5193 = vpack.c.b16 %v5114, %v5113
  %v5194 = vpack.c.b16 %v5116, %v5115
  %v5195 = vpack.c.b16 %v5118, %v5117
  %v5196 = vpack.c.b16 %v5120, %v5119
  %v5197 = vpack.c.b16 %v5122, %v5121
  %v5198 = vpack.c.b16 %v5124, %v5123
  %v5199 = vpack.c.b16 %v5126, %v5125
  %v5200 = vpack.c.b16 %v5128, %v5127
  %v5201 = vpack.c.b16 %v5130, %v5129
  %v5202 = vpack.c.b16 %v5132, %v5131
  %v5203 = vpack.c.b16 %v5134, %v5133
  %v5204 = vpack.c.b16 %v5136, %v5135
  %v5205 = vpack.c.b16 %v5138, %v5137
  %v5206 = vpack.c.b16 %v5140, %v5139
  %v5207 = vpack.c.b16 %v5142, %v5141
  %v5208 = vpack.c.b16 %v5144, %v5143
  %v5209 = vpack.c.b16 %v5146, %v5145
  %v5210 = vpack.c.b16 %v5148, %v5147
  %v5211 = vpack.c.b16 %v5150, %v5149
  %v5212 = vpack.c.b16 %v5152, %v5151
  %v5213 = vpack.c.b16 %v5154, %v5153
  %v5214 = vpack.c.b16 %v5156, %v5155
  %v5215 = vpack.c.b16 %v5158, %v5157
  %v5216 = vpack.c.b16 %v5160, %v5159
  %v5217 = vpack.c.b16 %v5162, %v5161
  %v5218 = vpack.c.b16 %v5164, %v5163
  %v5219 = vpack.c.b16 %v5166, %v5165
  %v5220 = vpack.c.b16 %v5168, %v5167
  %v5221 = vpack.c.b16 %v5170, %v5169
  %v5222 = vpack.c.b16 %v5172, %v5171
  %v5223 = vpack.c.b16 %v5174, %v5173
  %v5224 = vpack.c.b16 %v5176, %v5175
  %v5225 = vpack.c.b16 %v5178, %v5177
  %v5226 = vpack.c.b16 %v5180, %v5179
  %v5227 = vpack.c.b16 %v5182, %v5181
  %v5228 = vpack.c.b16 %v5184, %v5183
  %v5229 = vpack.c.b16 %v5186, %v5185
  %v5273 = vsel %vm3371, %v2977, 0
  %v5276 = vsel %vm1939, %v5229, 0
  %5278 = vmatprep.subr.bf16.mxu0 0
  %5279 = vmatpush1.bf16.msra.mxu0 %v5194
  %5280 = vmatprep.subr.bf16.mxu0 0
  %5281 = vmatpush1.bf16.msra.mxu0 %v5193
  %5282 = vmatprep.subr.bf16.mxu0 0
  %5283 = vmatpush1.bf16.msra.mxu0 %v5192
  %5284 = vmatprep.subr.bf16.mxu0 0
  %5285 = vmatpush1.bf16.msra.mxu0 %v5191
  %5286 = vmatprep.subr.bf16.mxu0 0
  %5287 = vmatpush1.bf16.msra.mxu0 %v5190
  %5288 = vmatprep.subr.bf16.mxu0 0
  %5289 = vmatpush1.bf16.msra.mxu0 %v5189
  %5290 = vmatprep.subr.bf16.mxu0 0
  %5291 = vmatpush1.bf16.msra.mxu0 %v5188
  %5292 = vmatprep.subr.bf16.mxu0 0
  %5293 = vmatpush1.bf16.msra.mxu0 %v5187
  %5294 = vmatprep.subr.bf16.mxu0 0
  %5295 = vmatpush2.bf16.msra.mxu0 %v5202
  %5296 = vmatprep.subr.bf16.mxu0 0
  %5297 = vmatpush2.bf16.msra.mxu0 %v5201
  %5298 = vmatprep.subr.bf16.mxu0 0
  %5299 = vmatpush2.bf16.msra.mxu0 %v5200
  %5300 = vmatprep.subr.bf16.mxu0 0
  %5301 = vmatpush2.bf16.msra.mxu0 %v5199
  %5302 = vmatprep.subr.bf16.mxu0 0
  %5303 = vmatpush2.bf16.msra.mxu0 %v5198
  %5304 = vmatprep.subr.bf16.mxu0 0
  %5305 = vmatpush2.bf16.msra.mxu0 %v5197
  %5306 = vmatprep.subr.bf16.mxu0 0
  %5307 = vmatpush2.bf16.msra.mxu0 %v5196
  %5308 = vmatprep.subr.bf16.mxu0 0
  %5309 = vmatpush2.bf16.msra.mxu0 %v5195
  %5310 = vmatprep.mubr.bf16.mxu0 %v2973
  %5311 = vmatmul.mubr.bf16.gmra.mxu0 %v2972
  %v5312 = vpop.f32.mrf.mxu0
  %v5313 = vadd.f32 0.0, %v5312
  %v5314 = vpop.f32.mrf.mxu0
  %v5315 = vpop.f32.mrf.mxu0
  %v5316 = vadd.f32 0.0, %v5315
  %v5317 = vpop.f32.mrf.mxu0
  %5318 = vdwg.mxu0
  %5319 = vmatprep.subr.bf16.mxu0 0
  %5320 = vmatpush1.bf16.msra.mxu0 %v5210
  %5321 = vmatprep.subr.bf16.mxu0 0
  %5322 = vmatpush1.bf16.msra.mxu0 %v5209
  %5323 = vmatprep.subr.bf16.mxu0 0
  %5324 = vmatpush1.bf16.msra.mxu0 %v5208
  %5325 = vmatprep.subr.bf16.mxu0 0
  %5326 = vmatpush1.bf16.msra.mxu0 %v5207
  %5327 = vmatprep.subr.bf16.mxu0 0
  %5328 = vmatpush1.bf16.msra.mxu0 %v5206
  %5329 = vmatprep.subr.bf16.mxu0 0
  %5330 = vmatpush1.bf16.msra.mxu0 %v5205
  %5331 = vmatprep.subr.bf16.mxu0 0
  %5332 = vmatpush1.bf16.msra.mxu0 %v5204
  %5333 = vmatprep.subr.bf16.mxu0 0
  %5334 = vmatpush1.bf16.msra.mxu0 %v5203
  %5335 = vmatprep.subr.bf16.mxu0 0
  %5336 = vmatpush2.bf16.msra.mxu0 %v5218
  %5337 = vmatprep.subr.bf16.mxu0 0
  %5338 = vmatpush2.bf16.msra.mxu0 %v5217
  %5339 = vmatprep.subr.bf16.mxu0 0
  %5340 = vmatpush2.bf16.msra.mxu0 %v5216
  %5341 = vmatprep.subr.bf16.mxu0 0
  %5342 = vmatpush2.bf16.msra.mxu0 %v5215
  %5343 = vmatprep.subr.bf16.mxu0 0
  %5344 = vmatpush2.bf16.msra.mxu0 %v5214
  %5345 = vmatprep.subr.bf16.mxu0 0
  %5346 = vmatpush2.bf16.msra.mxu0 %v5213
  %5347 = vmatprep.subr.bf16.mxu0 0
  %5348 = vmatpush2.bf16.msra.mxu0 %v5212
  %5349 = vmatprep.subr.bf16.mxu0 0
  %5350 = vmatpush2.bf16.msra.mxu0 %v5211
  %5351 = vmatprep.mubr.bf16.mxu0 %v2975
  %5352 = vmatmul.mubr.bf16.gmra.mxu0 %v2974
  %v5353 = vpop.f32.mrf.mxu0
  %v5354 = vadd.f32 %v5313, %v5353
  %v5355 = vpop.f32.mrf.mxu0
  %v5356 = vpop.f32.mrf.mxu0
  %v5357 = vadd.f32 %v5316, %v5356
  %v5358 = vpop.f32.mrf.mxu0
  %5359 = vdwg.mxu0
  %5360 = vmatprep.subr.bf16.mxu0 0
  %5361 = vmatpush1.bf16.msra.mxu0 %v5226
  %5362 = vmatprep.subr.bf16.mxu0 0
  %5363 = vmatpush1.bf16.msra.mxu0 %v5225
  %5364 = vmatprep.subr.bf16.mxu0 0
  %5365 = vmatpush1.bf16.msra.mxu0 %v5224
  %5366 = vmatprep.subr.bf16.mxu0 0
  %5367 = vmatpush1.bf16.msra.mxu0 %v5223
  %5368 = vmatprep.subr.bf16.mxu0 0
  %5369 = vmatpush1.bf16.msra.mxu0 %v5222
  %5370 = vmatprep.subr.bf16.mxu0 0
  %5371 = vmatpush1.bf16.msra.mxu0 %v5221
  %5372 = vmatprep.subr.bf16.mxu0 0
  %5373 = vmatpush1.bf16.msra.mxu0 %v5220
  %5374 = vmatprep.subr.bf16.mxu0 0
  %5375 = vmatpush1.bf16.msra.mxu0 %v5219
  %5376 = vmatprep.subr.bf16.mxu0 0
  %5377 = vmatpush2.bf16.msra.mxu0 0
  %5378 = vmatprep.subr.bf16.mxu0 0
  %5379 = vmatpush2.bf16.msra.mxu0 0
  %5380 = vmatprep.subr.bf16.mxu0 0
  %5381 = vmatpush2.bf16.msra.mxu0 0
  %5382 = vmatprep.subr.bf16.mxu0 0
  %5383 = vmatpush2.bf16.msra.mxu0 0
  %5384 = vmatprep.subr.bf16.mxu0 0
  %5385 = vmatpush2.bf16.msra.mxu0 0
  %5386 = vmatprep.subr.bf16.mxu0 0
  %5387 = vmatpush2.bf16.msra.mxu0 %v5276
  %5388 = vmatprep.subr.bf16.mxu0 0
  %5389 = vmatpush2.bf16.msra.mxu0 %v5228
  %5390 = vmatprep.subr.bf16.mxu0 0
  %5391 = vmatpush2.bf16.msra.mxu0 %v5227
  %5392 = vmatprep.mubr.bf16.mxu0 %v5273
  %5393 = vmatmul.mubr.bf16.gmra.mxu0 %v2976
  %v5394 = vpop.f32.mrf.mxu0
  %v5395 = vadd.f32 %v5354, %v5394
  %v5396 = vpop.f32.mrf.mxu0
  %v5397 = vpop.f32.mrf.mxu0
  %v5398 = vadd.f32 %v5357, %v5397
  %v5399 = vpop.f32.mrf.mxu0
  %5400 = vdwg.mxu0
  %v5401 = vadd.f32 %v4926, %v5395
  %v5402 = vadd.f32 %v4927, %v5398
  %s5403 = scalar_lea.vmem %s3, 1720
  %v5404 = vld [vmem:[%s5403] sm:$0xf]
  %v5405 = vld [vmem:[%s5403 + $0x4] sm:$0xf]
  %v5406 = vld [vmem:[%s5403 + $0x8] sm:$0xf]
  %v5407 = vld [vmem:[%s5403 + $0xc] sm:$0xf]
  %v5408 = vld [vmem:[%s5403 + $0x10] sm:$0xf]
  %v5409 = vld [vmem:[%s5403 + $0x14] sm:$0xf]
  %v5410 = vld [vmem:[%s5403 + $0x18] sm:$0xf]
  %v5411 = vld [vmem:[%s5403 + $0x1c] sm:$0xf]
  %v5412 = vld [vmem:[%s5403 + $0x20] sm:$0xf]
  %v5413 = vld [vmem:[%s5403 + $0x24] sm:$0xf]
  %v5414 = vld [vmem:[%s5403 + $0x28] sm:$0xf]
  %v5415 = vld [vmem:[%s5403 + $0x2c] sm:$0xf]
  %v5416 = vld [vmem:[%s5403 + $0x30] sm:$0xf]
  %v5417 = vld [vmem:[%s5403 + $0x34] sm:$0xf]
  %v5418 = vld [vmem:[%s5403 + $0x38] sm:$0xf]
  %v5419 = vld [vmem:[%s5403 + $0x3c] sm:$0xf]
  %v5420 = vld [vmem:[%s5403 + $0x40] sm:$0xf]
  %v5421 = vld [vmem:[%s5403 + $0x44] sm:$0xf]
  %v5422 = vld [vmem:[%s5403 + $0x48] sm:$0xf]
  %v5423 = vld [vmem:[%s5403 + $0x4c] sm:$0xf]
  %v5424 = vld [vmem:[%s5403 + $0x50] sm:$0xf]
  %v5425 = vld [vmem:[%s5403 + $0x54] sm:$0xf]
  %v5426 = vld [vmem:[%s5403 + $0x58] sm:$0xf]
  %v5427 = vld [vmem:[%s5403 + $0x5c] sm:$0xf]
  %v5428 = vld [vmem:[%s5403 + $0x60] sm:$0xf]
  %v5429 = vld [vmem:[%s5403 + $0x64] sm:$0xf]
  %v5430 = vld [vmem:[%s5403 + $0x68] sm:$0xf]
  %v5431 = vld [vmem:[%s5403 + $0x6c] sm:$0xf]
  %v5432 = vld [vmem:[%s5403 + $0x70] sm:$0xf]
  %v5433 = vld [vmem:[%s5403 + $0x74] sm:$0xf]
  %v5434 = vld [vmem:[%s5403 + $0x78] sm:$0xf]
  %v5435 = vld [vmem:[%s5403 + $0x7c] sm:$0xf]
  %v5436 = vld [vmem:[%s5403 + $0x80] sm:$0xf]
  %v5437 = vld [vmem:[%s5403 + $0x84] sm:$0xf]
  %v5438 = vld [vmem:[%s5403 + $0x88] sm:$0xf]
  %v5439 = vld [vmem:[%s5403 + $0x8c] sm:$0xf]
  %v5440 = vld [vmem:[%s5403 + $0x90] sm:$0xf]
  %v5441 = vld [vmem:[%s5403 + $0x94] sm:$0xf]
  %v5442 = vld [vmem:[%s5403 + $0x98] sm:$0xf]
  %v5443 = vld [vmem:[%s5403 + $0x9c] sm:$0xf]
  %v5444 = vld [vmem:[%s5403 + $0xa0] sm:$0xf]
  %v5445 = vld [vmem:[%s5403 + $0xa4] sm:$0xf]
  %v5446 = vld [vmem:[%s5403 + $0xa8] sm:$0xf]
  %v5447 = vld [vmem:[%s5403 + $0xac] sm:$0xf]
  %v5448 = vld [vmem:[%s5403 + $0xb0] sm:$0xf]
  %v5449 = vld [vmem:[%s5403 + $0xb4] sm:$0xf]
  %v5450 = vld [vmem:[%s5403 + $0xb8] sm:$0xf]
  %v5451 = vld [vmem:[%s5403 + $0xbc] sm:$0xf]
  %v5452 = vld [vmem:[%s5403 + $0xc0] sm:$0xf]
  %v5453 = vld [vmem:[%s5403 + $0xc4] sm:$0xf]
  %v5454 = vld [vmem:[%s5403 + $0xc8] sm:$0xf]
  %v5455 = vld [vmem:[%s5403 + $0xcc] sm:$0xf]
  %v5456 = vld [vmem:[%s5403 + $0xd0] sm:$0xf]
  %v5457 = vld [vmem:[%s5403 + $0xd4] sm:$0xf]
  %v5458 = vld [vmem:[%s5403 + $0xd8] sm:$0xf]
  %v5459 = vld [vmem:[%s5403 + $0xdc] sm:$0xf]
  %v5460 = vld [vmem:[%s5403 + $0xe0] sm:$0xf]
  %v5461 = vld [vmem:[%s5403 + $0xe4] sm:$0xf]
  %v5462 = vld [vmem:[%s5403 + $0xe8] sm:$0xf]
  %v5463 = vld [vmem:[%s5403 + $0xec] sm:$0xf]
  %v5464 = vld [vmem:[%s5403 + $0xf0] sm:$0xf]
  %v5465 = vld [vmem:[%s5403 + $0xf4] sm:$0xf]
  %v5466 = vld [vmem:[%s5403 + $0xf8] sm:$0xf]
  %v5467 = vld [vmem:[%s5403 + $0xfc] sm:$0xf]
  %v5468 = vld [vmem:[%s5403 + $0x100] sm:$0xf]
  %v5469 = vld [vmem:[%s5403 + $0x104] sm:$0xf]
  %v5470 = vld [vmem:[%s5403 + $0x108] sm:$0xf]
  %v5471 = vld [vmem:[%s5403 + $0x10c] sm:$0xf]
  %v5472 = vld [vmem:[%s5403 + $0x110] sm:$0xf]
  %v5473 = vld [vmem:[%s5403 + $0x114] sm:$0xf]
  %v5474 = vld [vmem:[%s5403 + $0x118] sm:$0xf]
  %v5475 = vld [vmem:[%s5403 + $0x11c] sm:$0xf]
  %v5476 = vld [vmem:[%s5403 + $0x120] sm:$0xf]
  %v5477 = vld [vmem:[%s5403 + $0x124] sm:$0xf]
  %v5478 = vld [vmem:[%s5403 + $0x128] sm:$0xf]
  %v5479 = vld [vmem:[%s5403 + $0x12c] sm:$0xf]
  %v5480 = vld [vmem:[%s5403 + $0x130] sm:$0xf]
  %v5481 = vld [vmem:[%s5403 + $0x134] sm:$0xf]
  %v5482 = vld [vmem:[%s5403 + $0x138] sm:$0xf]
  %v5483 = vld [vmem:[%s5403 + $0x13c] sm:$0xf]
  %v5484 = vld [vmem:[%s5403 + $0x140] sm:$0xf]
  %v5485 = vld [vmem:[%s5403 + $0x144] sm:$0xf]
  %v5486 = vld [vmem:[%s5403 + $0x148] sm:$0xf]
  %v5487 = vld [vmem:[%s5403 + $0x14c] sm:$0xf]
  %v5488 = vld [vmem:[%s5403 + $0x150] sm:$0xf]
  %v5489 = vld [vmem:[%s5403 + $0x154] sm:$0x3]
  %v5576 = vunpack.c.l.b16 %v5404
  %v5577 = vunpack.c.l.b16 %v5405
  %v5578 = vunpack.c.l.b16 %v5406
  %v5579 = vunpack.c.l.b16 %v5407
  %v5580 = vunpack.c.l.b16 %v5408
  %v5581 = vunpack.c.l.b16 %v5409
  %v5582 = vunpack.c.l.b16 %v5410
  %v5583 = vunpack.c.l.b16 %v5411
  %v5584 = vunpack.c.l.b16 %v5412
  %v5585 = vunpack.c.l.b16 %v5413
  %v5586 = vunpack.c.l.b16 %v5414
  %v5587 = vunpack.c.l.b16 %v5415
  %v5588 = vunpack.c.l.b16 %v5416
  %v5589 = vunpack.c.l.b16 %v5417
  %v5590 = vunpack.c.l.b16 %v5418
  %v5591 = vunpack.c.l.b16 %v5419
  %v5592 = vunpack.c.l.b16 %v5420
  %v5593 = vunpack.c.l.b16 %v5421
  %v5594 = vunpack.c.l.b16 %v5422
  %v5595 = vunpack.c.l.b16 %v5423
  %v5596 = vunpack.c.l.b16 %v5424
  %v5597 = vunpack.c.l.b16 %v5425
  %v5598 = vunpack.c.l.b16 %v5426
  %v5599 = vunpack.c.l.b16 %v5427
  %v5600 = vunpack.c.l.b16 %v5428
  %v5601 = vunpack.c.l.b16 %v5429
  %v5602 = vunpack.c.l.b16 %v5430
  %v5603 = vunpack.c.l.b16 %v5431
  %v5604 = vunpack.c.l.b16 %v5432
  %v5605 = vunpack.c.l.b16 %v5433
  %v5606 = vunpack.c.l.b16 %v5434
  %v5607 = vunpack.c.l.b16 %v5435
  %v5608 = vunpack.c.l.b16 %v5436
  %v5609 = vunpack.c.l.b16 %v5437
  %v5610 = vunpack.c.l.b16 %v5438
  %v5611 = vunpack.c.l.b16 %v5439
  %v5612 = vunpack.c.l.b16 %v5440
  %v5613 = vunpack.c.l.b16 %v5441
  %v5614 = vunpack.c.l.b16 %v5442
  %v5615 = vunpack.c.l.b16 %v5443
  %v5616 = vunpack.c.l.b16 %v5444
  %v5617 = vunpack.c.l.b16 %v5445
  %v5618 = vunpack.c.l.b16 %v5446
  %v5619 = vunpack.c.l.b16 %v5447
  %v5620 = vunpack.c.l.b16 %v5448
  %v5621 = vunpack.c.l.b16 %v5449
  %v5622 = vunpack.c.l.b16 %v5450
  %v5623 = vunpack.c.l.b16 %v5451
  %v5624 = vunpack.c.l.b16 %v5452
  %v5625 = vunpack.c.l.b16 %v5453
  %v5626 = vunpack.c.l.b16 %v5454
  %v5627 = vunpack.c.l.b16 %v5455
  %v5628 = vunpack.c.l.b16 %v5456
  %v5629 = vunpack.c.l.b16 %v5457
  %v5630 = vunpack.c.l.b16 %v5458
  %v5631 = vunpack.c.l.b16 %v5459
  %v5632 = vunpack.c.l.b16 %v5460
  %v5633 = vunpack.c.l.b16 %v5461
  %v5634 = vunpack.c.l.b16 %v5462
  %v5635 = vunpack.c.l.b16 %v5463
  %v5636 = vunpack.c.l.b16 %v5464
  %v5637 = vunpack.c.l.b16 %v5465
  %v5638 = vunpack.c.l.b16 %v5466
  %v5639 = vunpack.c.l.b16 %v5467
  %v5640 = vunpack.c.l.b16 %v5468
  %v5641 = vunpack.c.l.b16 %v5469
  %v5642 = vunpack.c.l.b16 %v5470
  %v5643 = vunpack.c.l.b16 %v5471
  %v5644 = vunpack.c.l.b16 %v5472
  %v5645 = vunpack.c.l.b16 %v5473
  %v5646 = vunpack.c.l.b16 %v5474
  %v5647 = vunpack.c.l.b16 %v5475
  %v5648 = vunpack.c.l.b16 %v5476
  %v5649 = vunpack.c.l.b16 %v5477
  %v5650 = vunpack.c.l.b16 %v5478
  %v5651 = vunpack.c.l.b16 %v5479
  %v5652 = vunpack.c.l.b16 %v5480
  %v5653 = vunpack.c.l.b16 %v5481
  %v5654 = vunpack.c.l.b16 %v5482
  %v5655 = vunpack.c.l.b16 %v5483
  %v5656 = vunpack.c.l.b16 %v5484
  %v5657 = vunpack.c.l.b16 %v5485
  %v5658 = vunpack.c.l.b16 %v5486
  %v5659 = vunpack.c.l.b16 %v5487
  %v5660 = vunpack.c.l.b16 %v5488
  %v5661 = vunpack.c.l.b16 %v5489
  %v5662 = vpack.c.b16 %v5577, %v5576
  %v5663 = vpack.c.b16 %v5579, %v5578
  %v5664 = vpack.c.b16 %v5581, %v5580
  %v5665 = vpack.c.b16 %v5583, %v5582
  %v5666 = vpack.c.b16 %v5585, %v5584
  %v5667 = vpack.c.b16 %v5587, %v5586
  %v5668 = vpack.c.b16 %v5589, %v5588
  %v5669 = vpack.c.b16 %v5591, %v5590
  %v5670 = vpack.c.b16 %v5593, %v5592
  %v5671 = vpack.c.b16 %v5595, %v5594
  %v5672 = vpack.c.b16 %v5597, %v5596
  %v5673 = vpack.c.b16 %v5599, %v5598
  %v5674 = vpack.c.b16 %v5601, %v5600
  %v5675 = vpack.c.b16 %v5603, %v5602
  %v5676 = vpack.c.b16 %v5605, %v5604
  %v5677 = vpack.c.b16 %v5607, %v5606
  %v5678 = vpack.c.b16 %v5609, %v5608
  %v5679 = vpack.c.b16 %v5611, %v5610
  %v5680 = vpack.c.b16 %v5613, %v5612
  %v5681 = vpack.c.b16 %v5615, %v5614
  %v5682 = vpack.c.b16 %v5617, %v5616
  %v5683 = vpack.c.b16 %v5619, %v5618
  %v5684 = vpack.c.b16 %v5621, %v5620
  %v5685 = vpack.c.b16 %v5623, %v5622
  %v5686 = vpack.c.b16 %v5625, %v5624
  %v5687 = vpack.c.b16 %v5627, %v5626
  %v5688 = vpack.c.b16 %v5629, %v5628
  %v5689 = vpack.c.b16 %v5631, %v5630
  %v5690 = vpack.c.b16 %v5633, %v5632
  %v5691 = vpack.c.b16 %v5635, %v5634
  %v5692 = vpack.c.b16 %v5637, %v5636
  %v5693 = vpack.c.b16 %v5639, %v5638
  %v5694 = vpack.c.b16 %v5641, %v5640
  %v5695 = vpack.c.b16 %v5643, %v5642
  %v5696 = vpack.c.b16 %v5645, %v5644
  %v5697 = vpack.c.b16 %v5647, %v5646
  %v5698 = vpack.c.b16 %v5649, %v5648
  %v5699 = vpack.c.b16 %v5651, %v5650
  %v5700 = vpack.c.b16 %v5653, %v5652
  %v5701 = vpack.c.b16 %v5655, %v5654
  %v5702 = vpack.c.b16 %v5657, %v5656
  %v5703 = vpack.c.b16 %v5659, %v5658
  %v5704 = vpack.c.b16 %v5661, %v5660
  %v5748 = vsel %vm3371, %v2983, 0
  %v5751 = vsel %vm1939, %v5704, 0
  %5753 = vmatprep.subr.bf16.mxu0 0
  %5754 = vmatpush1.bf16.msra.mxu0 %v5669
  %5755 = vmatprep.subr.bf16.mxu0 0
  %5756 = vmatpush1.bf16.msra.mxu0 %v5668
  %5757 = vmatprep.subr.bf16.mxu0 0
  %5758 = vmatpush1.bf16.msra.mxu0 %v5667
  %5759 = vmatprep.subr.bf16.mxu0 0
  %5760 = vmatpush1.bf16.msra.mxu0 %v5666
  %5761 = vmatprep.subr.bf16.mxu0 0
  %5762 = vmatpush1.bf16.msra.mxu0 %v5665
  %5763 = vmatprep.subr.bf16.mxu0 0
  %5764 = vmatpush1.bf16.msra.mxu0 %v5664
  %5765 = vmatprep.subr.bf16.mxu0 0
  %5766 = vmatpush1.bf16.msra.mxu0 %v5663
  %5767 = vmatprep.subr.bf16.mxu0 0
  %5768 = vmatpush1.bf16.msra.mxu0 %v5662
  %5769 = vmatprep.subr.bf16.mxu0 0
  %5770 = vmatpush2.bf16.msra.mxu0 %v5677
  %5771 = vmatprep.subr.bf16.mxu0 0
  %5772 = vmatpush2.bf16.msra.mxu0 %v5676
  %5773 = vmatprep.subr.bf16.mxu0 0
  %5774 = vmatpush2.bf16.msra.mxu0 %v5675
  %5775 = vmatprep.subr.bf16.mxu0 0
  %5776 = vmatpush2.bf16.msra.mxu0 %v5674
  %5777 = vmatprep.subr.bf16.mxu0 0
  %5778 = vmatpush2.bf16.msra.mxu0 %v5673
  %5779 = vmatprep.subr.bf16.mxu0 0
  %5780 = vmatpush2.bf16.msra.mxu0 %v5672
  %5781 = vmatprep.subr.bf16.mxu0 0
  %5782 = vmatpush2.bf16.msra.mxu0 %v5671
  %5783 = vmatprep.subr.bf16.mxu0 0
  %5784 = vmatpush2.bf16.msra.mxu0 %v5670
  %5785 = vmatprep.mubr.bf16.mxu0 %v2979
  %5786 = vmatmul.mubr.bf16.gmra.mxu0 %v2978
  %v5787 = vpop.f32.mrf.mxu0
  %v5788 = vadd.f32 0.0, %v5787
  %v5789 = vpop.f32.mrf.mxu0
  %v5790 = vpop.f32.mrf.mxu0
  %v5791 = vadd.f32 0.0, %v5790
  %v5792 = vpop.f32.mrf.mxu0
  %5793 = vdwg.mxu0
  %5794 = vmatprep.subr.bf16.mxu0 0
  %5795 = vmatpush1.bf16.msra.mxu0 %v5685
  %5796 = vmatprep.subr.bf16.mxu0 0
  %5797 = vmatpush1.bf16.msra.mxu0 %v5684
  %5798 = vmatprep.subr.bf16.mxu0 0
  %5799 = vmatpush1.bf16.msra.mxu0 %v5683
  %5800 = vmatprep.subr.bf16.mxu0 0
  %5801 = vmatpush1.bf16.msra.mxu0 %v5682
  %5802 = vmatprep.subr.bf16.mxu0 0
  %5803 = vmatpush1.bf16.msra.mxu0 %v5681
  %5804 = vmatprep.subr.bf16.mxu0 0
  %5805 = vmatpush1.bf16.msra.mxu0 %v5680
  %5806 = vmatprep.subr.bf16.mxu0 0
  %5807 = vmatpush1.bf16.msra.mxu0 %v5679
  %5808 = vmatprep.subr.bf16.mxu0 0
  %5809 = vmatpush1.bf16.msra.mxu0 %v5678
  %5810 = vmatprep.subr.bf16.mxu0 0
  %5811 = vmatpush2.bf16.msra.mxu0 %v5693
  %5812 = vmatprep.subr.bf16.mxu0 0
  %5813 = vmatpush2.bf16.msra.mxu0 %v5692
  %5814 = vmatprep.subr.bf16.mxu0 0
  %5815 = vmatpush2.bf16.msra.mxu0 %v5691
  %5816 = vmatprep.subr.bf16.mxu0 0
  %5817 = vmatpush2.bf16.msra.mxu0 %v5690
  %5818 = vmatprep.subr.bf16.mxu0 0
  %5819 = vmatpush2.bf16.msra.mxu0 %v5689
  %5820 = vmatprep.subr.bf16.mxu0 0
  %5821 = vmatpush2.bf16.msra.mxu0 %v5688
  %5822 = vmatprep.subr.bf16.mxu0 0
  %5823 = vmatpush2.bf16.msra.mxu0 %v5687
  %5824 = vmatprep.subr.bf16.mxu0 0
  %5825 = vmatpush2.bf16.msra.mxu0 %v5686
  %5826 = vmatprep.mubr.bf16.mxu0 %v2981
  %5827 = vmatmul.mubr.bf16.gmra.mxu0 %v2980
  %v5828 = vpop.f32.mrf.mxu0
  %v5829 = vadd.f32 %v5788, %v5828
  %v5830 = vpop.f32.mrf.mxu0
  %v5831 = vpop.f32.mrf.mxu0
  %v5832 = vadd.f32 %v5791, %v5831
  %v5833 = vpop.f32.mrf.mxu0
  %5834 = vdwg.mxu0
  %5835 = vmatprep.subr.bf16.mxu0 0
  %5836 = vmatpush1.bf16.msra.mxu0 %v5701
  %5837 = vmatprep.subr.bf16.mxu0 0
  %5838 = vmatpush1.bf16.msra.mxu0 %v5700
  %5839 = vmatprep.subr.bf16.mxu0 0
  %5840 = vmatpush1.bf16.msra.mxu0 %v5699
  %5841 = vmatprep.subr.bf16.mxu0 0
  %5842 = vmatpush1.bf16.msra.mxu0 %v5698
  %5843 = vmatprep.subr.bf16.mxu0 0
  %5844 = vmatpush1.bf16.msra.mxu0 %v5697
  %5845 = vmatprep.subr.bf16.mxu0 0
  %5846 = vmatpush1.bf16.msra.mxu0 %v5696
  %5847 = vmatprep.subr.bf16.mxu0 0
  %5848 = vmatpush1.bf16.msra.mxu0 %v5695
  %5849 = vmatprep.subr.bf16.mxu0 0
  %5850 = vmatpush1.bf16.msra.mxu0 %v5694
  %5851 = vmatprep.subr.bf16.mxu0 0
  %5852 = vmatpush2.bf16.msra.mxu0 0
  %5853 = vmatprep.subr.bf16.mxu0 0
  %5854 = vmatpush2.bf16.msra.mxu0 0
  %5855 = vmatprep.subr.bf16.mxu0 0
  %5856 = vmatpush2.bf16.msra.mxu0 0
  %5857 = vmatprep.subr.bf16.mxu0 0
  %5858 = vmatpush2.bf16.msra.mxu0 0
  %5859 = vmatprep.subr.bf16.mxu0 0
  %5860 = vmatpush2.bf16.msra.mxu0 0
  %5861 = vmatprep.subr.bf16.mxu0 0
  %5862 = vmatpush2.bf16.msra.mxu0 %v5751
  %5863 = vmatprep.subr.bf16.mxu0 0
  %5864 = vmatpush2.bf16.msra.mxu0 %v5703
  %5865 = vmatprep.subr.bf16.mxu0 0
  %5866 = vmatpush2.bf16.msra.mxu0 %v5702
  %5867 = vmatprep.mubr.bf16.mxu0 %v5748
  %5868 = vmatmul.mubr.bf16.gmra.mxu0 %v2982
  %v5869 = vpop.f32.mrf.mxu0
  %v5870 = vadd.f32 %v5829, %v5869
  %v5871 = vpop.f32.mrf.mxu0
  %v5872 = vpop.f32.mrf.mxu0
  %v5873 = vadd.f32 %v5832, %v5872
  %v5874 = vpop.f32.mrf.mxu0
  %5875 = vdwg.mxu0
  %v5876 = vadd.f32 %v5401, %v5870
  %v5877 = vadd.f32 %v5402, %v5873
  %s5878 = scalar_lea.vmem %s3, 2064
  %v5879 = vld [vmem:[%s5878] sm:$0xf]
  %v5880 = vld [vmem:[%s5878 + $0x4] sm:$0xf]
  %v5881 = vld [vmem:[%s5878 + $0x8] sm:$0xf]
  %v5882 = vld [vmem:[%s5878 + $0xc] sm:$0xf]
  %v5883 = vld [vmem:[%s5878 + $0x10] sm:$0xf]
  %v5884 = vld [vmem:[%s5878 + $0x14] sm:$0xf]
  %v5885 = vld [vmem:[%s5878 + $0x18] sm:$0xf]
  %v5886 = vld [vmem:[%s5878 + $0x1c] sm:$0xf]
  %v5887 = vld [vmem:[%s5878 + $0x20] sm:$0xf]
  %v5888 = vld [vmem:[%s5878 + $0x24] sm:$0xf]
  %v5889 = vld [vmem:[%s5878 + $0x28] sm:$0xf]
  %v5890 = vld [vmem:[%s5878 + $0x2c] sm:$0xf]
  %v5891 = vld [vmem:[%s5878 + $0x30] sm:$0xf]
  %v5892 = vld [vmem:[%s5878 + $0x34] sm:$0xf]
  %v5893 = vld [vmem:[%s5878 + $0x38] sm:$0xf]
  %v5894 = vld [vmem:[%s5878 + $0x3c] sm:$0xf]
  %v5895 = vld [vmem:[%s5878 + $0x40] sm:$0xf]
  %v5896 = vld [vmem:[%s5878 + $0x44] sm:$0xf]
  %v5897 = vld [vmem:[%s5878 + $0x48] sm:$0xf]
  %v5898 = vld [vmem:[%s5878 + $0x4c] sm:$0xf]
  %v5899 = vld [vmem:[%s5878 + $0x50] sm:$0xf]
  %v5900 = vld [vmem:[%s5878 + $0x54] sm:$0xf]
  %v5901 = vld [vmem:[%s5878 + $0x58] sm:$0xf]
  %v5902 = vld [vmem:[%s5878 + $0x5c] sm:$0xf]
  %v5903 = vld [vmem:[%s5878 + $0x60] sm:$0xf]
  %v5904 = vld [vmem:[%s5878 + $0x64] sm:$0xf]
  %v5905 = vld [vmem:[%s5878 + $0x68] sm:$0xf]
  %v5906 = vld [vmem:[%s5878 + $0x6c] sm:$0xf]
  %v5907 = vld [vmem:[%s5878 + $0x70] sm:$0xf]
  %v5908 = vld [vmem:[%s5878 + $0x74] sm:$0xf]
  %v5909 = vld [vmem:[%s5878 + $0x78] sm:$0xf]
  %v5910 = vld [vmem:[%s5878 + $0x7c] sm:$0xf]
  %v5911 = vld [vmem:[%s5878 + $0x80] sm:$0xf]
  %v5912 = vld [vmem:[%s5878 + $0x84] sm:$0xf]
  %v5913 = vld [vmem:[%s5878 + $0x88] sm:$0xf]
  %v5914 = vld [vmem:[%s5878 + $0x8c] sm:$0xf]
  %v5915 = vld [vmem:[%s5878 + $0x90] sm:$0xf]
  %v5916 = vld [vmem:[%s5878 + $0x94] sm:$0xf]
  %v5917 = vld [vmem:[%s5878 + $0x98] sm:$0xf]
  %v5918 = vld [vmem:[%s5878 + $0x9c] sm:$0xf]
  %v5919 = vld [vmem:[%s5878 + $0xa0] sm:$0xf]
  %v5920 = vld [vmem:[%s5878 + $0xa4] sm:$0xf]
  %v5921 = vld [vmem:[%s5878 + $0xa8] sm:$0xf]
  %v5922 = vld [vmem:[%s5878 + $0xac] sm:$0xf]
  %v5923 = vld [vmem:[%s5878 + $0xb0] sm:$0xf]
  %v5924 = vld [vmem:[%s5878 + $0xb4] sm:$0xf]
  %v5925 = vld [vmem:[%s5878 + $0xb8] sm:$0xf]
  %v5926 = vld [vmem:[%s5878 + $0xbc] sm:$0xf]
  %v5927 = vld [vmem:[%s5878 + $0xc0] sm:$0xf]
  %v5928 = vld [vmem:[%s5878 + $0xc4] sm:$0xf]
  %v5929 = vld [vmem:[%s5878 + $0xc8] sm:$0xf]
  %v5930 = vld [vmem:[%s5878 + $0xcc] sm:$0xf]
  %v5931 = vld [vmem:[%s5878 + $0xd0] sm:$0xf]
  %v5932 = vld [vmem:[%s5878 + $0xd4] sm:$0xf]
  %v5933 = vld [vmem:[%s5878 + $0xd8] sm:$0xf]
  %v5934 = vld [vmem:[%s5878 + $0xdc] sm:$0xf]
  %v5935 = vld [vmem:[%s5878 + $0xe0] sm:$0xf]
  %v5936 = vld [vmem:[%s5878 + $0xe4] sm:$0xf]
  %v5937 = vld [vmem:[%s5878 + $0xe8] sm:$0xf]
  %v5938 = vld [vmem:[%s5878 + $0xec] sm:$0xf]
  %v5939 = vld [vmem:[%s5878 + $0xf0] sm:$0xf]
  %v5940 = vld [vmem:[%s5878 + $0xf4] sm:$0xf]
  %v5941 = vld [vmem:[%s5878 + $0xf8] sm:$0xf]
  %v5942 = vld [vmem:[%s5878 + $0xfc] sm:$0xf]
  %v5943 = vld [vmem:[%s5878 + $0x100] sm:$0xf]
  %v5944 = vld [vmem:[%s5878 + $0x104] sm:$0xf]
  %v5945 = vld [vmem:[%s5878 + $0x108] sm:$0xf]
  %v5946 = vld [vmem:[%s5878 + $0x10c] sm:$0xf]
  %v5947 = vld [vmem:[%s5878 + $0x110] sm:$0xf]
  %v5948 = vld [vmem:[%s5878 + $0x114] sm:$0xf]
  %v5949 = vld [vmem:[%s5878 + $0x118] sm:$0xf]
  %v5950 = vld [vmem:[%s5878 + $0x11c] sm:$0xf]
  %v5951 = vld [vmem:[%s5878 + $0x120] sm:$0xf]
  %v5952 = vld [vmem:[%s5878 + $0x124] sm:$0xf]
  %v5953 = vld [vmem:[%s5878 + $0x128] sm:$0xf]
  %v5954 = vld [vmem:[%s5878 + $0x12c] sm:$0xf]
  %v5955 = vld [vmem:[%s5878 + $0x130] sm:$0xf]
  %v5956 = vld [vmem:[%s5878 + $0x134] sm:$0xf]
  %v5957 = vld [vmem:[%s5878 + $0x138] sm:$0xf]
  %v5958 = vld [vmem:[%s5878 + $0x13c] sm:$0xf]
  %v5959 = vld [vmem:[%s5878 + $0x140] sm:$0xf]
  %v5960 = vld [vmem:[%s5878 + $0x144] sm:$0xf]
  %v5961 = vld [vmem:[%s5878 + $0x148] sm:$0xf]
  %v5962 = vld [vmem:[%s5878 + $0x14c] sm:$0xf]
  %v5963 = vld [vmem:[%s5878 + $0x150] sm:$0xf]
  %v5964 = vld [vmem:[%s5878 + $0x154] sm:$0x3]
  %v6051 = vunpack.c.l.b16 %v5879
  %v6052 = vunpack.c.l.b16 %v5880
  %v6053 = vunpack.c.l.b16 %v5881
  %v6054 = vunpack.c.l.b16 %v5882
  %v6055 = vunpack.c.l.b16 %v5883
  %v6056 = vunpack.c.l.b16 %v5884
  %v6057 = vunpack.c.l.b16 %v5885
  %v6058 = vunpack.c.l.b16 %v5886
  %v6059 = vunpack.c.l.b16 %v5887
  %v6060 = vunpack.c.l.b16 %v5888
  %v6061 = vunpack.c.l.b16 %v5889
  %v6062 = vunpack.c.l.b16 %v5890
  %v6063 = vunpack.c.l.b16 %v5891
  %v6064 = vunpack.c.l.b16 %v5892
  %v6065 = vunpack.c.l.b16 %v5893
  %v6066 = vunpack.c.l.b16 %v5894
  %v6067 = vunpack.c.l.b16 %v5895
  %v6068 = vunpack.c.l.b16 %v5896
  %v6069 = vunpack.c.l.b16 %v5897
  %v6070 = vunpack.c.l.b16 %v5898
  %v6071 = vunpack.c.l.b16 %v5899
  %v6072 = vunpack.c.l.b16 %v5900
  %v6073 = vunpack.c.l.b16 %v5901
  %v6074 = vunpack.c.l.b16 %v5902
  %v6075 = vunpack.c.l.b16 %v5903
  %v6076 = vunpack.c.l.b16 %v5904
  %v6077 = vunpack.c.l.b16 %v5905
  %v6078 = vunpack.c.l.b16 %v5906
  %v6079 = vunpack.c.l.b16 %v5907
  %v6080 = vunpack.c.l.b16 %v5908
  %v6081 = vunpack.c.l.b16 %v5909
  %v6082 = vunpack.c.l.b16 %v5910
  %v6083 = vunpack.c.l.b16 %v5911
  %v6084 = vunpack.c.l.b16 %v5912
  %v6085 = vunpack.c.l.b16 %v5913
  %v6086 = vunpack.c.l.b16 %v5914
  %v6087 = vunpack.c.l.b16 %v5915
  %v6088 = vunpack.c.l.b16 %v5916
  %v6089 = vunpack.c.l.b16 %v5917
  %v6090 = vunpack.c.l.b16 %v5918
  %v6091 = vunpack.c.l.b16 %v5919
  %v6092 = vunpack.c.l.b16 %v5920
  %v6093 = vunpack.c.l.b16 %v5921
  %v6094 = vunpack.c.l.b16 %v5922
  %v6095 = vunpack.c.l.b16 %v5923
  %v6096 = vunpack.c.l.b16 %v5924
  %v6097 = vunpack.c.l.b16 %v5925
  %v6098 = vunpack.c.l.b16 %v5926
  %v6099 = vunpack.c.l.b16 %v5927
  %v6100 = vunpack.c.l.b16 %v5928
  %v6101 = vunpack.c.l.b16 %v5929
  %v6102 = vunpack.c.l.b16 %v5930
  %v6103 = vunpack.c.l.b16 %v5931
  %v6104 = vunpack.c.l.b16 %v5932
  %v6105 = vunpack.c.l.b16 %v5933
  %v6106 = vunpack.c.l.b16 %v5934
  %v6107 = vunpack.c.l.b16 %v5935
  %v6108 = vunpack.c.l.b16 %v5936
  %v6109 = vunpack.c.l.b16 %v5937
  %v6110 = vunpack.c.l.b16 %v5938
  %v6111 = vunpack.c.l.b16 %v5939
  %v6112 = vunpack.c.l.b16 %v5940
  %v6113 = vunpack.c.l.b16 %v5941
  %v6114 = vunpack.c.l.b16 %v5942
  %v6115 = vunpack.c.l.b16 %v5943
  %v6116 = vunpack.c.l.b16 %v5944
  %v6117 = vunpack.c.l.b16 %v5945
  %v6118 = vunpack.c.l.b16 %v5946
  %v6119 = vunpack.c.l.b16 %v5947
  %v6120 = vunpack.c.l.b16 %v5948
  %v6121 = vunpack.c.l.b16 %v5949
  %v6122 = vunpack.c.l.b16 %v5950
  %v6123 = vunpack.c.l.b16 %v5951
  %v6124 = vunpack.c.l.b16 %v5952
  %v6125 = vunpack.c.l.b16 %v5953
  %v6126 = vunpack.c.l.b16 %v5954
  %v6127 = vunpack.c.l.b16 %v5955
  %v6128 = vunpack.c.l.b16 %v5956
  %v6129 = vunpack.c.l.b16 %v5957
  %v6130 = vunpack.c.l.b16 %v5958
  %v6131 = vunpack.c.l.b16 %v5959
  %v6132 = vunpack.c.l.b16 %v5960
  %v6133 = vunpack.c.l.b16 %v5961
  %v6134 = vunpack.c.l.b16 %v5962
  %v6135 = vunpack.c.l.b16 %v5963
  %v6136 = vunpack.c.l.b16 %v5964
  %v6137 = vpack.c.b16 %v6052, %v6051
  %v6138 = vpack.c.b16 %v6054, %v6053
  %v6139 = vpack.c.b16 %v6056, %v6055
  %v6140 = vpack.c.b16 %v6058, %v6057
  %v6141 = vpack.c.b16 %v6060, %v6059
  %v6142 = vpack.c.b16 %v6062, %v6061
  %v6143 = vpack.c.b16 %v6064, %v6063
  %v6144 = vpack.c.b16 %v6066, %v6065
  %v6145 = vpack.c.b16 %v6068, %v6067
  %v6146 = vpack.c.b16 %v6070, %v6069
  %v6147 = vpack.c.b16 %v6072, %v6071
  %v6148 = vpack.c.b16 %v6074, %v6073
  %v6149 = vpack.c.b16 %v6076, %v6075
  %v6150 = vpack.c.b16 %v6078, %v6077
  %v6151 = vpack.c.b16 %v6080, %v6079
  %v6152 = vpack.c.b16 %v6082, %v6081
  %v6153 = vpack.c.b16 %v6084, %v6083
  %v6154 = vpack.c.b16 %v6086, %v6085
  %v6155 = vpack.c.b16 %v6088, %v6087
  %v6156 = vpack.c.b16 %v6090, %v6089
  %v6157 = vpack.c.b16 %v6092, %v6091
  %v6158 = vpack.c.b16 %v6094, %v6093
  %v6159 = vpack.c.b16 %v6096, %v6095
  %v6160 = vpack.c.b16 %v6098, %v6097
  %v6161 = vpack.c.b16 %v6100, %v6099
  %v6162 = vpack.c.b16 %v6102, %v6101
  %v6163 = vpack.c.b16 %v6104, %v6103
  %v6164 = vpack.c.b16 %v6106, %v6105
  %v6165 = vpack.c.b16 %v6108, %v6107
  %v6166 = vpack.c.b16 %v6110, %v6109
  %v6167 = vpack.c.b16 %v6112, %v6111
  %v6168 = vpack.c.b16 %v6114, %v6113
  %v6169 = vpack.c.b16 %v6116, %v6115
  %v6170 = vpack.c.b16 %v6118, %v6117
  %v6171 = vpack.c.b16 %v6120, %v6119
  %v6172 = vpack.c.b16 %v6122, %v6121
  %v6173 = vpack.c.b16 %v6124, %v6123
  %v6174 = vpack.c.b16 %v6126, %v6125
  %v6175 = vpack.c.b16 %v6128, %v6127
  %v6176 = vpack.c.b16 %v6130, %v6129
  %v6177 = vpack.c.b16 %v6132, %v6131
  %v6178 = vpack.c.b16 %v6134, %v6133
  %v6179 = vpack.c.b16 %v6136, %v6135
  %v6223 = vsel %vm3371, %v2989, 0
  %v6226 = vsel %vm1939, %v6179, 0
  %6228 = vmatprep.subr.bf16.mxu0 0
  %6229 = vmatpush1.bf16.msra.mxu0 %v6144
  %6230 = vmatprep.subr.bf16.mxu0 0
  %6231 = vmatpush1.bf16.msra.mxu0 %v6143
  %6232 = vmatprep.subr.bf16.mxu0 0
  %6233 = vmatpush1.bf16.msra.mxu0 %v6142
  %6234 = vmatprep.subr.bf16.mxu0 0
  %6235 = vmatpush1.bf16.msra.mxu0 %v6141
  %6236 = vmatprep.subr.bf16.mxu0 0
  %6237 = vmatpush1.bf16.msra.mxu0 %v6140
  %6238 = vmatprep.subr.bf16.mxu0 0
  %6239 = vmatpush1.bf16.msra.mxu0 %v6139
  %6240 = vmatprep.subr.bf16.mxu0 0
  %6241 = vmatpush1.bf16.msra.mxu0 %v6138
  %6242 = vmatprep.subr.bf16.mxu0 0
  %6243 = vmatpush1.bf16.msra.mxu0 %v6137
  %6244 = vmatprep.subr.bf16.mxu0 0
  %6245 = vmatpush2.bf16.msra.mxu0 %v6152
  %6246 = vmatprep.subr.bf16.mxu0 0
  %6247 = vmatpush2.bf16.msra.mxu0 %v6151
  %6248 = vmatprep.subr.bf16.mxu0 0
  %6249 = vmatpush2.bf16.msra.mxu0 %v6150
  %6250 = vmatprep.subr.bf16.mxu0 0
  %6251 = vmatpush2.bf16.msra.mxu0 %v6149
  %6252 = vmatprep.subr.bf16.mxu0 0
  %6253 = vmatpush2.bf16.msra.mxu0 %v6148
  %6254 = vmatprep.subr.bf16.mxu0 0
  %6255 = vmatpush2.bf16.msra.mxu0 %v6147
  %6256 = vmatprep.subr.bf16.mxu0 0
  %6257 = vmatpush2.bf16.msra.mxu0 %v6146
  %6258 = vmatprep.subr.bf16.mxu0 0
  %6259 = vmatpush2.bf16.msra.mxu0 %v6145
  %6260 = vmatprep.mubr.bf16.mxu0 %v2985
  %6261 = vmatmul.mubr.bf16.gmra.mxu0 %v2984
  %v6262 = vpop.f32.mrf.mxu0
  %v6263 = vadd.f32 0.0, %v6262
  %v6264 = vpop.f32.mrf.mxu0
  %v6265 = vpop.f32.mrf.mxu0
  %v6266 = vadd.f32 0.0, %v6265
  %v6267 = vpop.f32.mrf.mxu0
  %6268 = vdwg.mxu0
  %6269 = vmatprep.subr.bf16.mxu0 0
  %6270 = vmatpush1.bf16.msra.mxu0 %v6160
  %6271 = vmatprep.subr.bf16.mxu0 0
  %6272 = vmatpush1.bf16.msra.mxu0 %v6159
  %6273 = vmatprep.subr.bf16.mxu0 0
  %6274 = vmatpush1.bf16.msra.mxu0 %v6158
  %6275 = vmatprep.subr.bf16.mxu0 0
  %6276 = vmatpush1.bf16.msra.mxu0 %v6157
  %6277 = vmatprep.subr.bf16.mxu0 0
  %6278 = vmatpush1.bf16.msra.mxu0 %v6156
  %6279 = vmatprep.subr.bf16.mxu0 0
  %6280 = vmatpush1.bf16.msra.mxu0 %v6155
  %6281 = vmatprep.subr.bf16.mxu0 0
  %6282 = vmatpush1.bf16.msra.mxu0 %v6154
  %6283 = vmatprep.subr.bf16.mxu0 0
  %6284 = vmatpush1.bf16.msra.mxu0 %v6153
  %6285 = vmatprep.subr.bf16.mxu0 0
  %6286 = vmatpush2.bf16.msra.mxu0 %v6168
  %6287 = vmatprep.subr.bf16.mxu0 0
  %6288 = vmatpush2.bf16.msra.mxu0 %v6167
  %6289 = vmatprep.subr.bf16.mxu0 0
  %6290 = vmatpush2.bf16.msra.mxu0 %v6166
  %6291 = vmatprep.subr.bf16.mxu0 0
  %6292 = vmatpush2.bf16.msra.mxu0 %v6165
  %6293 = vmatprep.subr.bf16.mxu0 0
  %6294 = vmatpush2.bf16.msra.mxu0 %v6164
  %6295 = vmatprep.subr.bf16.mxu0 0
  %6296 = vmatpush2.bf16.msra.mxu0 %v6163
  %6297 = vmatprep.subr.bf16.mxu0 0
  %6298 = vmatpush2.bf16.msra.mxu0 %v6162
  %6299 = vmatprep.subr.bf16.mxu0 0
  %6300 = vmatpush2.bf16.msra.mxu0 %v6161
  %6301 = vmatprep.mubr.bf16.mxu0 %v2987
  %6302 = vmatmul.mubr.bf16.gmra.mxu0 %v2986
  %v6303 = vpop.f32.mrf.mxu0
  %v6304 = vadd.f32 %v6263, %v6303
  %v6305 = vpop.f32.mrf.mxu0
  %v6306 = vpop.f32.mrf.mxu0
  %v6307 = vadd.f32 %v6266, %v6306
  %v6308 = vpop.f32.mrf.mxu0
  %6309 = vdwg.mxu0
  %6310 = vmatprep.subr.bf16.mxu0 0
  %6311 = vmatpush1.bf16.msra.mxu0 %v6176
  %6312 = vmatprep.subr.bf16.mxu0 0
  %6313 = vmatpush1.bf16.msra.mxu0 %v6175
  %6314 = vmatprep.subr.bf16.mxu0 0
  %6315 = vmatpush1.bf16.msra.mxu0 %v6174
  %6316 = vmatprep.subr.bf16.mxu0 0
  %6317 = vmatpush1.bf16.msra.mxu0 %v6173
  %6318 = vmatprep.subr.bf16.mxu0 0
  %6319 = vmatpush1.bf16.msra.mxu0 %v6172
  %6320 = vmatprep.subr.bf16.mxu0 0
  %6321 = vmatpush1.bf16.msra.mxu0 %v6171
  %6322 = vmatprep.subr.bf16.mxu0 0
  %6323 = vmatpush1.bf16.msra.mxu0 %v6170
  %6324 = vmatprep.subr.bf16.mxu0 0
  %6325 = vmatpush1.bf16.msra.mxu0 %v6169
  %6326 = vmatprep.subr.bf16.mxu0 0
  %6327 = vmatpush2.bf16.msra.mxu0 0
  %6328 = vmatprep.subr.bf16.mxu0 0
  %6329 = vmatpush2.bf16.msra.mxu0 0
  %6330 = vmatprep.subr.bf16.mxu0 0
  %6331 = vmatpush2.bf16.msra.mxu0 0
  %6332 = vmatprep.subr.bf16.mxu0 0
  %6333 = vmatpush2.bf16.msra.mxu0 0
  %6334 = vmatprep.subr.bf16.mxu0 0
  %6335 = vmatpush2.bf16.msra.mxu0 0
  %6336 = vmatprep.subr.bf16.mxu0 0
  %6337 = vmatpush2.bf16.msra.mxu0 %v6226
  %6338 = vmatprep.subr.bf16.mxu0 0
  %6339 = vmatpush2.bf16.msra.mxu0 %v6178
  %6340 = vmatprep.subr.bf16.mxu0 0
  %6341 = vmatpush2.bf16.msra.mxu0 %v6177
  %6342 = vmatprep.mubr.bf16.mxu0 %v6223
  %6343 = vmatmul.mubr.bf16.gmra.mxu0 %v2988
  %v6344 = vpop.f32.mrf.mxu0
  %v6345 = vadd.f32 %v6304, %v6344
  %v6346 = vpop.f32.mrf.mxu0
  %v6347 = vpop.f32.mrf.mxu0
  %v6348 = vadd.f32 %v6307, %v6347
  %v6349 = vpop.f32.mrf.mxu0
  %6350 = vdwg.mxu0
  %v6351 = vadd.f32 %v5876, %v6345
  %v6352 = vadd.f32 %v5877, %v6348
  %s6353 = scalar_lea.vmem %s3, 2408
  %v6354 = vld [vmem:[%s6353] sm:$0xf]
  %v6355 = vld [vmem:[%s6353 + $0x4] sm:$0xf]
  %v6356 = vld [vmem:[%s6353 + $0x8] sm:$0xf]
  %v6357 = vld [vmem:[%s6353 + $0xc] sm:$0xf]
  %v6358 = vld [vmem:[%s6353 + $0x10] sm:$0xf]
  %v6359 = vld [vmem:[%s6353 + $0x14] sm:$0xf]
  %v6360 = vld [vmem:[%s6353 + $0x18] sm:$0xf]
  %v6361 = vld [vmem:[%s6353 + $0x1c] sm:$0xf]
  %v6362 = vld [vmem:[%s6353 + $0x20] sm:$0xf]
  %v6363 = vld [vmem:[%s6353 + $0x24] sm:$0xf]
  %v6364 = vld [vmem:[%s6353 + $0x28] sm:$0xf]
  %v6365 = vld [vmem:[%s6353 + $0x2c] sm:$0xf]
  %v6366 = vld [vmem:[%s6353 + $0x30] sm:$0xf]
  %v6367 = vld [vmem:[%s6353 + $0x34] sm:$0xf]
  %v6368 = vld [vmem:[%s6353 + $0x38] sm:$0xf]
  %v6369 = vld [vmem:[%s6353 + $0x3c] sm:$0xf]
  %v6370 = vld [vmem:[%s6353 + $0x40] sm:$0xf]
  %v6371 = vld [vmem:[%s6353 + $0x44] sm:$0xf]
  %v6372 = vld [vmem:[%s6353 + $0x48] sm:$0xf]
  %v6373 = vld [vmem:[%s6353 + $0x4c] sm:$0xf]
  %v6374 = vld [vmem:[%s6353 + $0x50] sm:$0xf]
  %v6375 = vld [vmem:[%s6353 + $0x54] sm:$0xf]
  %v6376 = vld [vmem:[%s6353 + $0x58] sm:$0xf]
  %v6377 = vld [vmem:[%s6353 + $0x5c] sm:$0xf]
  %v6378 = vld [vmem:[%s6353 + $0x60] sm:$0xf]
  %v6379 = vld [vmem:[%s6353 + $0x64] sm:$0xf]
  %v6380 = vld [vmem:[%s6353 + $0x68] sm:$0xf]
  %v6381 = vld [vmem:[%s6353 + $0x6c] sm:$0xf]
  %v6382 = vld [vmem:[%s6353 + $0x70] sm:$0xf]
  %v6383 = vld [vmem:[%s6353 + $0x74] sm:$0xf]
  %v6384 = vld [vmem:[%s6353 + $0x78] sm:$0xf]
  %v6385 = vld [vmem:[%s6353 + $0x7c] sm:$0xf]
  %v6386 = vld [vmem:[%s6353 + $0x80] sm:$0xf]
  %v6387 = vld [vmem:[%s6353 + $0x84] sm:$0xf]
  %v6388 = vld [vmem:[%s6353 + $0x88] sm:$0xf]
  %v6389 = vld [vmem:[%s6353 + $0x8c] sm:$0xf]
  %v6390 = vld [vmem:[%s6353 + $0x90] sm:$0xf]
  %v6391 = vld [vmem:[%s6353 + $0x94] sm:$0xf]
  %v6392 = vld [vmem:[%s6353 + $0x98] sm:$0xf]
  %v6393 = vld [vmem:[%s6353 + $0x9c] sm:$0xf]
  %v6394 = vld [vmem:[%s6353 + $0xa0] sm:$0xf]
  %v6395 = vld [vmem:[%s6353 + $0xa4] sm:$0xf]
  %v6396 = vld [vmem:[%s6353 + $0xa8] sm:$0xf]
  %v6397 = vld [vmem:[%s6353 + $0xac] sm:$0xf]
  %v6398 = vld [vmem:[%s6353 + $0xb0] sm:$0xf]
  %v6399 = vld [vmem:[%s6353 + $0xb4] sm:$0xf]
  %v6400 = vld [vmem:[%s6353 + $0xb8] sm:$0xf]
  %v6401 = vld [vmem:[%s6353 + $0xbc] sm:$0xf]
  %v6402 = vld [vmem:[%s6353 + $0xc0] sm:$0xf]
  %v6403 = vld [vmem:[%s6353 + $0xc4] sm:$0xf]
  %v6404 = vld [vmem:[%s6353 + $0xc8] sm:$0xf]
  %v6405 = vld [vmem:[%s6353 + $0xcc] sm:$0xf]
  %v6406 = vld [vmem:[%s6353 + $0xd0] sm:$0xf]
  %v6407 = vld [vmem:[%s6353 + $0xd4] sm:$0xf]
  %v6408 = vld [vmem:[%s6353 + $0xd8] sm:$0xf]
  %v6409 = vld [vmem:[%s6353 + $0xdc] sm:$0xf]
  %v6410 = vld [vmem:[%s6353 + $0xe0] sm:$0xf]
  %v6411 = vld [vmem:[%s6353 + $0xe4] sm:$0xf]
  %v6412 = vld [vmem:[%s6353 + $0xe8] sm:$0xf]
  %v6413 = vld [vmem:[%s6353 + $0xec] sm:$0xf]
  %v6414 = vld [vmem:[%s6353 + $0xf0] sm:$0xf]
  %v6415 = vld [vmem:[%s6353 + $0xf4] sm:$0xf]
  %v6416 = vld [vmem:[%s6353 + $0xf8] sm:$0xf]
  %v6417 = vld [vmem:[%s6353 + $0xfc] sm:$0xf]
  %v6418 = vld [vmem:[%s6353 + $0x100] sm:$0xf]
  %v6419 = vld [vmem:[%s6353 + $0x104] sm:$0xf]
  %v6420 = vld [vmem:[%s6353 + $0x108] sm:$0xf]
  %v6421 = vld [vmem:[%s6353 + $0x10c] sm:$0xf]
  %v6422 = vld [vmem:[%s6353 + $0x110] sm:$0xf]
  %v6423 = vld [vmem:[%s6353 + $0x114] sm:$0xf]
  %v6424 = vld [vmem:[%s6353 + $0x118] sm:$0xf]
  %v6425 = vld [vmem:[%s6353 + $0x11c] sm:$0xf]
  %v6426 = vld [vmem:[%s6353 + $0x120] sm:$0xf]
  %v6427 = vld [vmem:[%s6353 + $0x124] sm:$0xf]
  %v6428 = vld [vmem:[%s6353 + $0x128] sm:$0xf]
  %v6429 = vld [vmem:[%s6353 + $0x12c] sm:$0xf]
  %v6430 = vld [vmem:[%s6353 + $0x130] sm:$0xf]
  %v6431 = vld [vmem:[%s6353 + $0x134] sm:$0xf]
  %v6432 = vld [vmem:[%s6353 + $0x138] sm:$0xf]
  %v6433 = vld [vmem:[%s6353 + $0x13c] sm:$0xf]
  %v6434 = vld [vmem:[%s6353 + $0x140] sm:$0xf]
  %v6435 = vld [vmem:[%s6353 + $0x144] sm:$0xf]
  %v6436 = vld [vmem:[%s6353 + $0x148] sm:$0xf]
  %v6437 = vld [vmem:[%s6353 + $0x14c] sm:$0xf]
  %v6438 = vld [vmem:[%s6353 + $0x150] sm:$0xf]
  %v6439 = vld [vmem:[%s6353 + $0x154] sm:$0x3]
  %v6526 = vunpack.c.l.b16 %v6354
  %v6527 = vunpack.c.l.b16 %v6355
  %v6528 = vunpack.c.l.b16 %v6356
  %v6529 = vunpack.c.l.b16 %v6357
  %v6530 = vunpack.c.l.b16 %v6358
  %v6531 = vunpack.c.l.b16 %v6359
  %v6532 = vunpack.c.l.b16 %v6360
  %v6533 = vunpack.c.l.b16 %v6361
  %v6534 = vunpack.c.l.b16 %v6362
  %v6535 = vunpack.c.l.b16 %v6363
  %v6536 = vunpack.c.l.b16 %v6364
  %v6537 = vunpack.c.l.b16 %v6365
  %v6538 = vunpack.c.l.b16 %v6366
  %v6539 = vunpack.c.l.b16 %v6367
  %v6540 = vunpack.c.l.b16 %v6368
  %v6541 = vunpack.c.l.b16 %v6369
  %v6542 = vunpack.c.l.b16 %v6370
  %v6543 = vunpack.c.l.b16 %v6371
  %v6544 = vunpack.c.l.b16 %v6372
  %v6545 = vunpack.c.l.b16 %v6373
  %v6546 = vunpack.c.l.b16 %v6374
  %v6547 = vunpack.c.l.b16 %v6375
  %v6548 = vunpack.c.l.b16 %v6376
  %v6549 = vunpack.c.l.b16 %v6377
  %v6550 = vunpack.c.l.b16 %v6378
  %v6551 = vunpack.c.l.b16 %v6379
  %v6552 = vunpack.c.l.b16 %v6380
  %v6553 = vunpack.c.l.b16 %v6381
  %v6554 = vunpack.c.l.b16 %v6382
  %v6555 = vunpack.c.l.b16 %v6383
  %v6556 = vunpack.c.l.b16 %v6384
  %v6557 = vunpack.c.l.b16 %v6385
  %v6558 = vunpack.c.l.b16 %v6386
  %v6559 = vunpack.c.l.b16 %v6387
  %v6560 = vunpack.c.l.b16 %v6388
  %v6561 = vunpack.c.l.b16 %v6389
  %v6562 = vunpack.c.l.b16 %v6390
  %v6563 = vunpack.c.l.b16 %v6391
  %v6564 = vunpack.c.l.b16 %v6392
  %v6565 = vunpack.c.l.b16 %v6393
  %v6566 = vunpack.c.l.b16 %v6394
  %v6567 = vunpack.c.l.b16 %v6395
  %v6568 = vunpack.c.l.b16 %v6396
  %v6569 = vunpack.c.l.b16 %v6397
  %v6570 = vunpack.c.l.b16 %v6398
  %v6571 = vunpack.c.l.b16 %v6399
  %v6572 = vunpack.c.l.b16 %v6400
  %v6573 = vunpack.c.l.b16 %v6401
  %v6574 = vunpack.c.l.b16 %v6402
  %v6575 = vunpack.c.l.b16 %v6403
  %v6576 = vunpack.c.l.b16 %v6404
  %v6577 = vunpack.c.l.b16 %v6405
  %v6578 = vunpack.c.l.b16 %v6406
  %v6579 = vunpack.c.l.b16 %v6407
  %v6580 = vunpack.c.l.b16 %v6408
  %v6581 = vunpack.c.l.b16 %v6409
  %v6582 = vunpack.c.l.b16 %v6410
  %v6583 = vunpack.c.l.b16 %v6411
  %v6584 = vunpack.c.l.b16 %v6412
  %v6585 = vunpack.c.l.b16 %v6413
  %v6586 = vunpack.c.l.b16 %v6414
  %v6587 = vunpack.c.l.b16 %v6415
  %v6588 = vunpack.c.l.b16 %v6416
  %v6589 = vunpack.c.l.b16 %v6417
  %v6590 = vunpack.c.l.b16 %v6418
  %v6591 = vunpack.c.l.b16 %v6419
  %v6592 = vunpack.c.l.b16 %v6420
  %v6593 = vunpack.c.l.b16 %v6421
  %v6594 = vunpack.c.l.b16 %v6422
  %v6595 = vunpack.c.l.b16 %v6423
  %v6596 = vunpack.c.l.b16 %v6424
  %v6597 = vunpack.c.l.b16 %v6425
  %v6598 = vunpack.c.l.b16 %v6426
  %v6599 = vunpack.c.l.b16 %v6427
  %v6600 = vunpack.c.l.b16 %v6428
  %v6601 = vunpack.c.l.b16 %v6429
  %v6602 = vunpack.c.l.b16 %v6430
  %v6603 = vunpack.c.l.b16 %v6431
  %v6604 = vunpack.c.l.b16 %v6432
  %v6605 = vunpack.c.l.b16 %v6433
  %v6606 = vunpack.c.l.b16 %v6434
  %v6607 = vunpack.c.l.b16 %v6435
  %v6608 = vunpack.c.l.b16 %v6436
  %v6609 = vunpack.c.l.b16 %v6437
  %v6610 = vunpack.c.l.b16 %v6438
  %v6611 = vunpack.c.l.b16 %v6439
  %v6612 = vpack.c.b16 %v6527, %v6526
  %v6613 = vpack.c.b16 %v6529, %v6528
  %v6614 = vpack.c.b16 %v6531, %v6530
  %v6615 = vpack.c.b16 %v6533, %v6532
  %v6616 = vpack.c.b16 %v6535, %v6534
  %v6617 = vpack.c.b16 %v6537, %v6536
  %v6618 = vpack.c.b16 %v6539, %v6538
  %v6619 = vpack.c.b16 %v6541, %v6540
  %v6620 = vpack.c.b16 %v6543, %v6542
  %v6621 = vpack.c.b16 %v6545, %v6544
  %v6622 = vpack.c.b16 %v6547, %v6546
  %v6623 = vpack.c.b16 %v6549, %v6548
  %v6624 = vpack.c.b16 %v6551, %v6550
  %v6625 = vpack.c.b16 %v6553, %v6552
  %v6626 = vpack.c.b16 %v6555, %v6554
  %v6627 = vpack.c.b16 %v6557, %v6556
  %v6628 = vpack.c.b16 %v6559, %v6558
  %v6629 = vpack.c.b16 %v6561, %v6560
  %v6630 = vpack.c.b16 %v6563, %v6562
  %v6631 = vpack.c.b16 %v6565, %v6564
  %v6632 = vpack.c.b16 %v6567, %v6566
  %v6633 = vpack.c.b16 %v6569, %v6568
  %v6634 = vpack.c.b16 %v6571, %v6570
  %v6635 = vpack.c.b16 %v6573, %v6572
  %v6636 = vpack.c.b16 %v6575, %v6574
  %v6637 = vpack.c.b16 %v6577, %v6576
  %v6638 = vpack.c.b16 %v6579, %v6578
  %v6639 = vpack.c.b16 %v6581, %v6580
  %v6640 = vpack.c.b16 %v6583, %v6582
  %v6641 = vpack.c.b16 %v6585, %v6584
  %v6642 = vpack.c.b16 %v6587, %v6586
  %v6643 = vpack.c.b16 %v6589, %v6588
  %v6644 = vpack.c.b16 %v6591, %v6590
  %v6645 = vpack.c.b16 %v6593, %v6592
  %v6646 = vpack.c.b16 %v6595, %v6594
  %v6647 = vpack.c.b16 %v6597, %v6596
  %v6648 = vpack.c.b16 %v6599, %v6598
  %v6649 = vpack.c.b16 %v6601, %v6600
  %v6650 = vpack.c.b16 %v6603, %v6602
  %v6651 = vpack.c.b16 %v6605, %v6604
  %v6652 = vpack.c.b16 %v6607, %v6606
  %v6653 = vpack.c.b16 %v6609, %v6608
  %v6654 = vpack.c.b16 %v6611, %v6610
  %v6698 = vsel %vm3371, %v2995, 0
  %v6701 = vsel %vm1939, %v6654, 0
  %6703 = vmatprep.subr.bf16.mxu0 0
  %6704 = vmatpush1.bf16.msra.mxu0 %v6619
  %6705 = vmatprep.subr.bf16.mxu0 0
  %6706 = vmatpush1.bf16.msra.mxu0 %v6618
  %6707 = vmatprep.subr.bf16.mxu0 0
  %6708 = vmatpush1.bf16.msra.mxu0 %v6617
  %6709 = vmatprep.subr.bf16.mxu0 0
  %6710 = vmatpush1.bf16.msra.mxu0 %v6616
  %6711 = vmatprep.subr.bf16.mxu0 0
  %6712 = vmatpush1.bf16.msra.mxu0 %v6615
  %6713 = vmatprep.subr.bf16.mxu0 0
  %6714 = vmatpush1.bf16.msra.mxu0 %v6614
  %6715 = vmatprep.subr.bf16.mxu0 0
  %6716 = vmatpush1.bf16.msra.mxu0 %v6613
  %6717 = vmatprep.subr.bf16.mxu0 0
  %6718 = vmatpush1.bf16.msra.mxu0 %v6612
  %6719 = vmatprep.subr.bf16.mxu0 0
  %6720 = vmatpush2.bf16.msra.mxu0 %v6627
  %6721 = vmatprep.subr.bf16.mxu0 0
  %6722 = vmatpush2.bf16.msra.mxu0 %v6626
  %6723 = vmatprep.subr.bf16.mxu0 0
  %6724 = vmatpush2.bf16.msra.mxu0 %v6625
  %6725 = vmatprep.subr.bf16.mxu0 0
  %6726 = vmatpush2.bf16.msra.mxu0 %v6624
  %6727 = vmatprep.subr.bf16.mxu0 0
  %6728 = vmatpush2.bf16.msra.mxu0 %v6623
  %6729 = vmatprep.subr.bf16.mxu0 0
  %6730 = vmatpush2.bf16.msra.mxu0 %v6622
  %6731 = vmatprep.subr.bf16.mxu0 0
  %6732 = vmatpush2.bf16.msra.mxu0 %v6621
  %6733 = vmatprep.subr.bf16.mxu0 0
  %6734 = vmatpush2.bf16.msra.mxu0 %v6620
  %6735 = vmatprep.mubr.bf16.mxu0 %v2991
  %6736 = vmatmul.mubr.bf16.gmra.mxu0 %v2990
  %v6737 = vpop.f32.mrf.mxu0
  %v6738 = vadd.f32 0.0, %v6737
  %v6739 = vpop.f32.mrf.mxu0
  %v6740 = vpop.f32.mrf.mxu0
  %v6741 = vadd.f32 0.0, %v6740
  %v6742 = vpop.f32.mrf.mxu0
  %6743 = vdwg.mxu0
  %6744 = vmatprep.subr.bf16.mxu0 0
  %6745 = vmatpush1.bf16.msra.mxu0 %v6635
  %6746 = vmatprep.subr.bf16.mxu0 0
  %6747 = vmatpush1.bf16.msra.mxu0 %v6634
  %6748 = vmatprep.subr.bf16.mxu0 0
  %6749 = vmatpush1.bf16.msra.mxu0 %v6633
  %6750 = vmatprep.subr.bf16.mxu0 0
  %6751 = vmatpush1.bf16.msra.mxu0 %v6632
  %6752 = vmatprep.subr.bf16.mxu0 0
  %6753 = vmatpush1.bf16.msra.mxu0 %v6631
  %6754 = vmatprep.subr.bf16.mxu0 0
  %6755 = vmatpush1.bf16.msra.mxu0 %v6630
  %6756 = vmatprep.subr.bf16.mxu0 0
  %6757 = vmatpush1.bf16.msra.mxu0 %v6629
  %6758 = vmatprep.subr.bf16.mxu0 0
  %6759 = vmatpush1.bf16.msra.mxu0 %v6628
  %6760 = vmatprep.subr.bf16.mxu0 0
  %6761 = vmatpush2.bf16.msra.mxu0 %v6643
  %6762 = vmatprep.subr.bf16.mxu0 0
  %6763 = vmatpush2.bf16.msra.mxu0 %v6642
  %6764 = vmatprep.subr.bf16.mxu0 0
  %6765 = vmatpush2.bf16.msra.mxu0 %v6641
  %6766 = vmatprep.subr.bf16.mxu0 0
  %6767 = vmatpush2.bf16.msra.mxu0 %v6640
  %6768 = vmatprep.subr.bf16.mxu0 0
  %6769 = vmatpush2.bf16.msra.mxu0 %v6639
  %6770 = vmatprep.subr.bf16.mxu0 0
  %6771 = vmatpush2.bf16.msra.mxu0 %v6638
  %6772 = vmatprep.subr.bf16.mxu0 0
  %6773 = vmatpush2.bf16.msra.mxu0 %v6637
  %6774 = vmatprep.subr.bf16.mxu0 0
  %6775 = vmatpush2.bf16.msra.mxu0 %v6636
  %6776 = vmatprep.mubr.bf16.mxu0 %v2993
  %6777 = vmatmul.mubr.bf16.gmra.mxu0 %v2992
  %v6778 = vpop.f32.mrf.mxu0
  %v6779 = vadd.f32 %v6738, %v6778
  %v6780 = vpop.f32.mrf.mxu0
  %v6781 = vpop.f32.mrf.mxu0
  %v6782 = vadd.f32 %v6741, %v6781
  %v6783 = vpop.f32.mrf.mxu0
  %6784 = vdwg.mxu0
  %6785 = vmatprep.subr.bf16.mxu0 0
  %6786 = vmatpush1.bf16.msra.mxu0 %v6651
  %6787 = vmatprep.subr.bf16.mxu0 0
  %6788 = vmatpush1.bf16.msra.mxu0 %v6650
  %6789 = vmatprep.subr.bf16.mxu0 0
  %6790 = vmatpush1.bf16.msra.mxu0 %v6649
  %6791 = vmatprep.subr.bf16.mxu0 0
  %6792 = vmatpush1.bf16.msra.mxu0 %v6648
  %6793 = vmatprep.subr.bf16.mxu0 0
  %6794 = vmatpush1.bf16.msra.mxu0 %v6647
  %6795 = vmatprep.subr.bf16.mxu0 0
  %6796 = vmatpush1.bf16.msra.mxu0 %v6646
  %6797 = vmatprep.subr.bf16.mxu0 0
  %6798 = vmatpush1.bf16.msra.mxu0 %v6645
  %6799 = vmatprep.subr.bf16.mxu0 0
  %6800 = vmatpush1.bf16.msra.mxu0 %v6644
  %6801 = vmatprep.subr.bf16.mxu0 0
  %6802 = vmatpush2.bf16.msra.mxu0 0
  %6803 = vmatprep.subr.bf16.mxu0 0
  %6804 = vmatpush2.bf16.msra.mxu0 0
  %6805 = vmatprep.subr.bf16.mxu0 0
  %6806 = vmatpush2.bf16.msra.mxu0 0
  %6807 = vmatprep.subr.bf16.mxu0 0
  %6808 = vmatpush2.bf16.msra.mxu0 0
  %6809 = vmatprep.subr.bf16.mxu0 0
  %6810 = vmatpush2.bf16.msra.mxu0 0
  %6811 = vmatprep.subr.bf16.mxu0 0
  %6812 = vmatpush2.bf16.msra.mxu0 %v6701
  %6813 = vmatprep.subr.bf16.mxu0 0
  %6814 = vmatpush2.bf16.msra.mxu0 %v6653
  %6815 = vmatprep.subr.bf16.mxu0 0
  %6816 = vmatpush2.bf16.msra.mxu0 %v6652
  %6817 = vmatprep.mubr.bf16.mxu0 %v6698
  %6818 = vmatmul.mubr.bf16.gmra.mxu0 %v2994
  %v6819 = vpop.f32.mrf.mxu0
  %v6820 = vadd.f32 %v6779, %v6819
  %v6821 = vpop.f32.mrf.mxu0
  %v6822 = vpop.f32.mrf.mxu0
  %v6823 = vadd.f32 %v6782, %v6822
  %v6824 = vpop.f32.mrf.mxu0
  %6825 = vdwg.mxu0
  %v6826 = vadd.f32 %v6351, %v6820
  %v6827 = vadd.f32 %v6352, %v6823
  %s6828 = scalar_lea.vmem %s3, 2752
  %v6829 = vld [vmem:[%s6828] sm:$0xf]
  %v6830 = vld [vmem:[%s6828 + $0x4] sm:$0xf]
  %v6831 = vld [vmem:[%s6828 + $0x8] sm:$0xf]
  %v6832 = vld [vmem:[%s6828 + $0xc] sm:$0xf]
  %v6833 = vld [vmem:[%s6828 + $0x10] sm:$0xf]
  %v6834 = vld [vmem:[%s6828 + $0x14] sm:$0xf]
  %v6835 = vld [vmem:[%s6828 + $0x18] sm:$0xf]
  %v6836 = vld [vmem:[%s6828 + $0x1c] sm:$0xf]
  %v6837 = vld [vmem:[%s6828 + $0x20] sm:$0xf]
  %v6838 = vld [vmem:[%s6828 + $0x24] sm:$0xf]
  %v6839 = vld [vmem:[%s6828 + $0x28] sm:$0xf]
  %v6840 = vld [vmem:[%s6828 + $0x2c] sm:$0xf]
  %v6841 = vld [vmem:[%s6828 + $0x30] sm:$0xf]
  %v6842 = vld [vmem:[%s6828 + $0x34] sm:$0xf]
  %v6843 = vld [vmem:[%s6828 + $0x38] sm:$0xf]
  %v6844 = vld [vmem:[%s6828 + $0x3c] sm:$0xf]
  %v6845 = vld [vmem:[%s6828 + $0x40] sm:$0xf]
  %v6846 = vld [vmem:[%s6828 + $0x44] sm:$0xf]
  %v6847 = vld [vmem:[%s6828 + $0x48] sm:$0xf]
  %v6848 = vld [vmem:[%s6828 + $0x4c] sm:$0xf]
  %v6849 = vld [vmem:[%s6828 + $0x50] sm:$0xf]
  %v6850 = vld [vmem:[%s6828 + $0x54] sm:$0xf]
  %v6851 = vld [vmem:[%s6828 + $0x58] sm:$0xf]
  %v6852 = vld [vmem:[%s6828 + $0x5c] sm:$0xf]
  %v6853 = vld [vmem:[%s6828 + $0x60] sm:$0xf]
  %v6854 = vld [vmem:[%s6828 + $0x64] sm:$0xf]
  %v6855 = vld [vmem:[%s6828 + $0x68] sm:$0xf]
  %v6856 = vld [vmem:[%s6828 + $0x6c] sm:$0xf]
  %v6857 = vld [vmem:[%s6828 + $0x70] sm:$0xf]
  %v6858 = vld [vmem:[%s6828 + $0x74] sm:$0xf]
  %v6859 = vld [vmem:[%s6828 + $0x78] sm:$0xf]
  %v6860 = vld [vmem:[%s6828 + $0x7c] sm:$0xf]
  %v6861 = vld [vmem:[%s6828 + $0x80] sm:$0xf]
  %v6862 = vld [vmem:[%s6828 + $0x84] sm:$0xf]
  %v6863 = vld [vmem:[%s6828 + $0x88] sm:$0xf]
  %v6864 = vld [vmem:[%s6828 + $0x8c] sm:$0xf]
  %v6865 = vld [vmem:[%s6828 + $0x90] sm:$0xf]
  %v6866 = vld [vmem:[%s6828 + $0x94] sm:$0xf]
  %v6867 = vld [vmem:[%s6828 + $0x98] sm:$0xf]
  %v6868 = vld [vmem:[%s6828 + $0x9c] sm:$0xf]
  %v6869 = vld [vmem:[%s6828 + $0xa0] sm:$0xf]
  %v6870 = vld [vmem:[%s6828 + $0xa4] sm:$0xf]
  %v6871 = vld [vmem:[%s6828 + $0xa8] sm:$0xf]
  %v6872 = vld [vmem:[%s6828 + $0xac] sm:$0xf]
  %v6873 = vld [vmem:[%s6828 + $0xb0] sm:$0xf]
  %v6874 = vld [vmem:[%s6828 + $0xb4] sm:$0xf]
  %v6875 = vld [vmem:[%s6828 + $0xb8] sm:$0xf]
  %v6876 = vld [vmem:[%s6828 + $0xbc] sm:$0xf]
  %v6877 = vld [vmem:[%s6828 + $0xc0] sm:$0xf]
  %v6878 = vld [vmem:[%s6828 + $0xc4] sm:$0xf]
  %v6879 = vld [vmem:[%s6828 + $0xc8] sm:$0xf]
  %v6880 = vld [vmem:[%s6828 + $0xcc] sm:$0xf]
  %v6881 = vld [vmem:[%s6828 + $0xd0] sm:$0xf]
  %v6882 = vld [vmem:[%s6828 + $0xd4] sm:$0xf]
  %v6883 = vld [vmem:[%s6828 + $0xd8] sm:$0xf]
  %v6884 = vld [vmem:[%s6828 + $0xdc] sm:$0xf]
  %v6885 = vld [vmem:[%s6828 + $0xe0] sm:$0xf]
  %v6886 = vld [vmem:[%s6828 + $0xe4] sm:$0xf]
  %v6887 = vld [vmem:[%s6828 + $0xe8] sm:$0xf]
  %v6888 = vld [vmem:[%s6828 + $0xec] sm:$0xf]
  %v6889 = vld [vmem:[%s6828 + $0xf0] sm:$0xf]
  %v6890 = vld [vmem:[%s6828 + $0xf4] sm:$0xf]
  %v6891 = vld [vmem:[%s6828 + $0xf8] sm:$0xf]
  %v6892 = vld [vmem:[%s6828 + $0xfc] sm:$0xf]
  %v6893 = vld [vmem:[%s6828 + $0x100] sm:$0xf]
  %v6894 = vld [vmem:[%s6828 + $0x104] sm:$0xf]
  %v6895 = vld [vmem:[%s6828 + $0x108] sm:$0xf]
  %v6896 = vld [vmem:[%s6828 + $0x10c] sm:$0xf]
  %v6897 = vld [vmem:[%s6828 + $0x110] sm:$0xf]
  %v6898 = vld [vmem:[%s6828 + $0x114] sm:$0xf]
  %v6899 = vld [vmem:[%s6828 + $0x118] sm:$0xf]
  %v6900 = vld [vmem:[%s6828 + $0x11c] sm:$0xf]
  %v6901 = vld [vmem:[%s6828 + $0x120] sm:$0xf]
  %v6902 = vld [vmem:[%s6828 + $0x124] sm:$0xf]
  %v6903 = vld [vmem:[%s6828 + $0x128] sm:$0xf]
  %v6904 = vld [vmem:[%s6828 + $0x12c] sm:$0xf]
  %v6905 = vld [vmem:[%s6828 + $0x130] sm:$0xf]
  %v6906 = vld [vmem:[%s6828 + $0x134] sm:$0xf]
  %v6907 = vld [vmem:[%s6828 + $0x138] sm:$0xf]
  %v6908 = vld [vmem:[%s6828 + $0x13c] sm:$0xf]
  %v6909 = vld [vmem:[%s6828 + $0x140] sm:$0xf]
  %v6910 = vld [vmem:[%s6828 + $0x144] sm:$0xf]
  %v6911 = vld [vmem:[%s6828 + $0x148] sm:$0xf]
  %v6912 = vld [vmem:[%s6828 + $0x14c] sm:$0xf]
  %v6913 = vld [vmem:[%s6828 + $0x150] sm:$0xf]
  %v6914 = vld [vmem:[%s6828 + $0x154] sm:$0x3]
  %v7001 = vunpack.c.l.b16 %v6829
  %v7002 = vunpack.c.l.b16 %v6830
  %v7003 = vunpack.c.l.b16 %v6831
  %v7004 = vunpack.c.l.b16 %v6832
  %v7005 = vunpack.c.l.b16 %v6833
  %v7006 = vunpack.c.l.b16 %v6834
  %v7007 = vunpack.c.l.b16 %v6835
  %v7008 = vunpack.c.l.b16 %v6836
  %v7009 = vunpack.c.l.b16 %v6837
  %v7010 = vunpack.c.l.b16 %v6838
  %v7011 = vunpack.c.l.b16 %v6839
  %v7012 = vunpack.c.l.b16 %v6840
  %v7013 = vunpack.c.l.b16 %v6841
  %v7014 = vunpack.c.l.b16 %v6842
  %v7015 = vunpack.c.l.b16 %v6843
  %v7016 = vunpack.c.l.b16 %v6844
  %v7017 = vunpack.c.l.b16 %v6845
  %v7018 = vunpack.c.l.b16 %v6846
  %v7019 = vunpack.c.l.b16 %v6847
  %v7020 = vunpack.c.l.b16 %v6848
  %v7021 = vunpack.c.l.b16 %v6849
  %v7022 = vunpack.c.l.b16 %v6850
  %v7023 = vunpack.c.l.b16 %v6851
  %v7024 = vunpack.c.l.b16 %v6852
  %v7025 = vunpack.c.l.b16 %v6853
  %v7026 = vunpack.c.l.b16 %v6854
  %v7027 = vunpack.c.l.b16 %v6855
  %v7028 = vunpack.c.l.b16 %v6856
  %v7029 = vunpack.c.l.b16 %v6857
  %v7030 = vunpack.c.l.b16 %v6858
  %v7031 = vunpack.c.l.b16 %v6859
  %v7032 = vunpack.c.l.b16 %v6860
  %v7033 = vunpack.c.l.b16 %v6861
  %v7034 = vunpack.c.l.b16 %v6862
  %v7035 = vunpack.c.l.b16 %v6863
  %v7036 = vunpack.c.l.b16 %v6864
  %v7037 = vunpack.c.l.b16 %v6865
  %v7038 = vunpack.c.l.b16 %v6866
  %v7039 = vunpack.c.l.b16 %v6867
  %v7040 = vunpack.c.l.b16 %v6868
  %v7041 = vunpack.c.l.b16 %v6869
  %v7042 = vunpack.c.l.b16 %v6870
  %v7043 = vunpack.c.l.b16 %v6871
  %v7044 = vunpack.c.l.b16 %v6872
  %v7045 = vunpack.c.l.b16 %v6873
  %v7046 = vunpack.c.l.b16 %v6874
  %v7047 = vunpack.c.l.b16 %v6875
  %v7048 = vunpack.c.l.b16 %v6876
  %v7049 = vunpack.c.l.b16 %v6877
  %v7050 = vunpack.c.l.b16 %v6878
  %v7051 = vunpack.c.l.b16 %v6879
  %v7052 = vunpack.c.l.b16 %v6880
  %v7053 = vunpack.c.l.b16 %v6881
  %v7054 = vunpack.c.l.b16 %v6882
  %v7055 = vunpack.c.l.b16 %v6883
  %v7056 = vunpack.c.l.b16 %v6884
  %v7057 = vunpack.c.l.b16 %v6885
  %v7058 = vunpack.c.l.b16 %v6886
  %v7059 = vunpack.c.l.b16 %v6887
  %v7060 = vunpack.c.l.b16 %v6888
  %v7061 = vunpack.c.l.b16 %v6889
  %v7062 = vunpack.c.l.b16 %v6890
  %v7063 = vunpack.c.l.b16 %v6891
  %v7064 = vunpack.c.l.b16 %v6892
  %v7065 = vunpack.c.l.b16 %v6893
  %v7066 = vunpack.c.l.b16 %v6894
  %v7067 = vunpack.c.l.b16 %v6895
  %v7068 = vunpack.c.l.b16 %v6896
  %v7069 = vunpack.c.l.b16 %v6897
  %v7070 = vunpack.c.l.b16 %v6898
  %v7071 = vunpack.c.l.b16 %v6899
  %v7072 = vunpack.c.l.b16 %v6900
  %v7073 = vunpack.c.l.b16 %v6901
  %v7074 = vunpack.c.l.b16 %v6902
  %v7075 = vunpack.c.l.b16 %v6903
  %v7076 = vunpack.c.l.b16 %v6904
  %v7077 = vunpack.c.l.b16 %v6905
  %v7078 = vunpack.c.l.b16 %v6906
  %v7079 = vunpack.c.l.b16 %v6907
  %v7080 = vunpack.c.l.b16 %v6908
  %v7081 = vunpack.c.l.b16 %v6909
  %v7082 = vunpack.c.l.b16 %v6910
  %v7083 = vunpack.c.l.b16 %v6911
  %v7084 = vunpack.c.l.b16 %v6912
  %v7085 = vunpack.c.l.b16 %v6913
  %v7086 = vunpack.c.l.b16 %v6914
  %v7087 = vpack.c.b16 %v7002, %v7001
  %v7088 = vpack.c.b16 %v7004, %v7003
  %v7089 = vpack.c.b16 %v7006, %v7005
  %v7090 = vpack.c.b16 %v7008, %v7007
  %v7091 = vpack.c.b16 %v7010, %v7009
  %v7092 = vpack.c.b16 %v7012, %v7011
  %v7093 = vpack.c.b16 %v7014, %v7013
  %v7094 = vpack.c.b16 %v7016, %v7015
  %v7095 = vpack.c.b16 %v7018, %v7017
  %v7096 = vpack.c.b16 %v7020, %v7019
  %v7097 = vpack.c.b16 %v7022, %v7021
  %v7098 = vpack.c.b16 %v7024, %v7023
  %v7099 = vpack.c.b16 %v7026, %v7025
  %v7100 = vpack.c.b16 %v7028, %v7027
  %v7101 = vpack.c.b16 %v7030, %v7029
  %v7102 = vpack.c.b16 %v7032, %v7031
  %v7103 = vpack.c.b16 %v7034, %v7033
  %v7104 = vpack.c.b16 %v7036, %v7035
  %v7105 = vpack.c.b16 %v7038, %v7037
  %v7106 = vpack.c.b16 %v7040, %v7039
  %v7107 = vpack.c.b16 %v7042, %v7041
  %v7108 = vpack.c.b16 %v7044, %v7043
  %v7109 = vpack.c.b16 %v7046, %v7045
  %v7110 = vpack.c.b16 %v7048, %v7047
  %v7111 = vpack.c.b16 %v7050, %v7049
  %v7112 = vpack.c.b16 %v7052, %v7051
  %v7113 = vpack.c.b16 %v7054, %v7053
  %v7114 = vpack.c.b16 %v7056, %v7055
  %v7115 = vpack.c.b16 %v7058, %v7057
  %v7116 = vpack.c.b16 %v7060, %v7059
  %v7117 = vpack.c.b16 %v7062, %v7061
  %v7118 = vpack.c.b16 %v7064, %v7063
  %v7119 = vpack.c.b16 %v7066, %v7065
  %v7120 = vpack.c.b16 %v7068, %v7067
  %v7121 = vpack.c.b16 %v7070, %v7069
  %v7122 = vpack.c.b16 %v7072, %v7071
  %v7123 = vpack.c.b16 %v7074, %v7073
  %v7124 = vpack.c.b16 %v7076, %v7075
  %v7125 = vpack.c.b16 %v7078, %v7077
  %v7126 = vpack.c.b16 %v7080, %v7079
  %v7127 = vpack.c.b16 %v7082, %v7081
  %v7128 = vpack.c.b16 %v7084, %v7083
  %v7129 = vpack.c.b16 %v7086, %v7085
  %v7173 = vsel %vm3371, %v3001, 0
  %v7176 = vsel %vm1939, %v7129, 0
  %7178 = vmatprep.subr.bf16.mxu0 0
  %7179 = vmatpush1.bf16.msra.mxu0 %v7094
  %7180 = vmatprep.subr.bf16.mxu0 0
  %7181 = vmatpush1.bf16.msra.mxu0 %v7093
  %7182 = vmatprep.subr.bf16.mxu0 0
  %7183 = vmatpush1.bf16.msra.mxu0 %v7092
  %7184 = vmatprep.subr.bf16.mxu0 0
  %7185 = vmatpush1.bf16.msra.mxu0 %v7091
  %7186 = vmatprep.subr.bf16.mxu0 0
  %7187 = vmatpush1.bf16.msra.mxu0 %v7090
  %7188 = vmatprep.subr.bf16.mxu0 0
  %7189 = vmatpush1.bf16.msra.mxu0 %v7089
  %7190 = vmatprep.subr.bf16.mxu0 0
  %7191 = vmatpush1.bf16.msra.mxu0 %v7088
  %7192 = vmatprep.subr.bf16.mxu0 0
  %7193 = vmatpush1.bf16.msra.mxu0 %v7087
  %7194 = vmatprep.subr.bf16.mxu0 0
  %7195 = vmatpush2.bf16.msra.mxu0 %v7102
  %7196 = vmatprep.subr.bf16.mxu0 0
  %7197 = vmatpush2.bf16.msra.mxu0 %v7101
  %7198 = vmatprep.subr.bf16.mxu0 0
  %7199 = vmatpush2.bf16.msra.mxu0 %v7100
  %7200 = vmatprep.subr.bf16.mxu0 0
  %7201 = vmatpush2.bf16.msra.mxu0 %v7099
  %7202 = vmatprep.subr.bf16.mxu0 0
  %7203 = vmatpush2.bf16.msra.mxu0 %v7098
  %7204 = vmatprep.subr.bf16.mxu0 0
  %7205 = vmatpush2.bf16.msra.mxu0 %v7097
  %7206 = vmatprep.subr.bf16.mxu0 0
  %7207 = vmatpush2.bf16.msra.mxu0 %v7096
  %7208 = vmatprep.subr.bf16.mxu0 0
  %7209 = vmatpush2.bf16.msra.mxu0 %v7095
  %7210 = vmatprep.mubr.bf16.mxu0 %v2997
  %7211 = vmatmul.mubr.bf16.gmra.mxu0 %v2996
  %v7212 = vpop.f32.mrf.mxu0
  %v7213 = vadd.f32 0.0, %v7212
  %v7214 = vpop.f32.mrf.mxu0
  %v7215 = vpop.f32.mrf.mxu0
  %v7216 = vadd.f32 0.0, %v7215
  %v7217 = vpop.f32.mrf.mxu0
  %7218 = vdwg.mxu0
  %7219 = vmatprep.subr.bf16.mxu0 0
  %7220 = vmatpush1.bf16.msra.mxu0 %v7110
  %7221 = vmatprep.subr.bf16.mxu0 0
  %7222 = vmatpush1.bf16.msra.mxu0 %v7109
  %7223 = vmatprep.subr.bf16.mxu0 0
  %7224 = vmatpush1.bf16.msra.mxu0 %v7108
  %7225 = vmatprep.subr.bf16.mxu0 0
  %7226 = vmatpush1.bf16.msra.mxu0 %v7107
  %7227 = vmatprep.subr.bf16.mxu0 0
  %7228 = vmatpush1.bf16.msra.mxu0 %v7106
  %7229 = vmatprep.subr.bf16.mxu0 0
  %7230 = vmatpush1.bf16.msra.mxu0 %v7105
  %7231 = vmatprep.subr.bf16.mxu0 0
  %7232 = vmatpush1.bf16.msra.mxu0 %v7104
  %7233 = vmatprep.subr.bf16.mxu0 0
  %7234 = vmatpush1.bf16.msra.mxu0 %v7103
  %7235 = vmatprep.subr.bf16.mxu0 0
  %7236 = vmatpush2.bf16.msra.mxu0 %v7118
  %7237 = vmatprep.subr.bf16.mxu0 0
  %7238 = vmatpush2.bf16.msra.mxu0 %v7117
  %7239 = vmatprep.subr.bf16.mxu0 0
  %7240 = vmatpush2.bf16.msra.mxu0 %v7116
  %7241 = vmatprep.subr.bf16.mxu0 0
  %7242 = vmatpush2.bf16.msra.mxu0 %v7115
  %7243 = vmatprep.subr.bf16.mxu0 0
  %7244 = vmatpush2.bf16.msra.mxu0 %v7114
  %7245 = vmatprep.subr.bf16.mxu0 0
  %7246 = vmatpush2.bf16.msra.mxu0 %v7113
  %7247 = vmatprep.subr.bf16.mxu0 0
  %7248 = vmatpush2.bf16.msra.mxu0 %v7112
  %7249 = vmatprep.subr.bf16.mxu0 0
  %7250 = vmatpush2.bf16.msra.mxu0 %v7111
  %7251 = vmatprep.mubr.bf16.mxu0 %v2999
  %7252 = vmatmul.mubr.bf16.gmra.mxu0 %v2998
  %v7253 = vpop.f32.mrf.mxu0
  %v7254 = vadd.f32 %v7213, %v7253
  %v7255 = vpop.f32.mrf.mxu0
  %v7256 = vpop.f32.mrf.mxu0
  %v7257 = vadd.f32 %v7216, %v7256
  %v7258 = vpop.f32.mrf.mxu0
  %7259 = vdwg.mxu0
  %7260 = vmatprep.subr.bf16.mxu0 0
  %7261 = vmatpush1.bf16.msra.mxu0 %v7126
  %7262 = vmatprep.subr.bf16.mxu0 0
  %7263 = vmatpush1.bf16.msra.mxu0 %v7125
  %7264 = vmatprep.subr.bf16.mxu0 0
  %7265 = vmatpush1.bf16.msra.mxu0 %v7124
  %7266 = vmatprep.subr.bf16.mxu0 0
  %7267 = vmatpush1.bf16.msra.mxu0 %v7123
  %7268 = vmatprep.subr.bf16.mxu0 0
  %7269 = vmatpush1.bf16.msra.mxu0 %v7122
  %7270 = vmatprep.subr.bf16.mxu0 0
  %7271 = vmatpush1.bf16.msra.mxu0 %v7121
  %7272 = vmatprep.subr.bf16.mxu0 0
  %7273 = vmatpush1.bf16.msra.mxu0 %v7120
  %7274 = vmatprep.subr.bf16.mxu0 0
  %7275 = vmatpush1.bf16.msra.mxu0 %v7119
  %7276 = vmatprep.subr.bf16.mxu0 0
  %7277 = vmatpush2.bf16.msra.mxu0 0
  %7278 = vmatprep.subr.bf16.mxu0 0
  %7279 = vmatpush2.bf16.msra.mxu0 0
  %7280 = vmatprep.subr.bf16.mxu0 0
  %7281 = vmatpush2.bf16.msra.mxu0 0
  %7282 = vmatprep.subr.bf16.mxu0 0
  %7283 = vmatpush2.bf16.msra.mxu0 0
  %7284 = vmatprep.subr.bf16.mxu0 0
  %7285 = vmatpush2.bf16.msra.mxu0 0
  %7286 = vmatprep.subr.bf16.mxu0 0
  %7287 = vmatpush2.bf16.msra.mxu0 %v7176
  %7288 = vmatprep.subr.bf16.mxu0 0
  %7289 = vmatpush2.bf16.msra.mxu0 %v7128
  %7290 = vmatprep.subr.bf16.mxu0 0
  %7291 = vmatpush2.bf16.msra.mxu0 %v7127
  %7292 = vmatprep.mubr.bf16.mxu0 %v7173
  %7293 = vmatmul.mubr.bf16.gmra.mxu0 %v3000
  %v7294 = vpop.f32.mrf.mxu0
  %v7295 = vadd.f32 %v7254, %v7294
  %v7296 = vpop.f32.mrf.mxu0
  %v7297 = vpop.f32.mrf.mxu0
  %v7298 = vadd.f32 %v7257, %v7297
  %v7299 = vpop.f32.mrf.mxu0
  %7300 = vdwg.mxu0
  %v7301 = vadd.f32 %v6826, %v7295
  %v7302 = vadd.f32 %v6827, %v7298
  %s7303 = scalar_lea.vmem %s3, 3096
  %v7304 = vld [vmem:[%s7303] sm:$0xf]
  %v7305 = vld [vmem:[%s7303 + $0x4] sm:$0xf]
  %v7306 = vld [vmem:[%s7303 + $0x8] sm:$0xf]
  %v7307 = vld [vmem:[%s7303 + $0xc] sm:$0xf]
  %v7308 = vld [vmem:[%s7303 + $0x10] sm:$0xf]
  %v7309 = vld [vmem:[%s7303 + $0x14] sm:$0xf]
  %v7310 = vld [vmem:[%s7303 + $0x18] sm:$0xf]
  %v7311 = vld [vmem:[%s7303 + $0x1c] sm:$0xf]
  %v7312 = vld [vmem:[%s7303 + $0x20] sm:$0xf]
  %v7313 = vld [vmem:[%s7303 + $0x24] sm:$0xf]
  %v7314 = vld [vmem:[%s7303 + $0x28] sm:$0xf]
  %v7315 = vld [vmem:[%s7303 + $0x2c] sm:$0xf]
  %v7316 = vld [vmem:[%s7303 + $0x30] sm:$0xf]
  %v7317 = vld [vmem:[%s7303 + $0x34] sm:$0xf]
  %v7318 = vld [vmem:[%s7303 + $0x38] sm:$0xf]
  %v7319 = vld [vmem:[%s7303 + $0x3c] sm:$0xf]
  %v7320 = vld [vmem:[%s7303 + $0x40] sm:$0xf]
  %v7321 = vld [vmem:[%s7303 + $0x44] sm:$0xf]
  %v7322 = vld [vmem:[%s7303 + $0x48] sm:$0xf]
  %v7323 = vld [vmem:[%s7303 + $0x4c] sm:$0xf]
  %v7324 = vld [vmem:[%s7303 + $0x50] sm:$0xf]
  %v7325 = vld [vmem:[%s7303 + $0x54] sm:$0xf]
  %v7326 = vld [vmem:[%s7303 + $0x58] sm:$0xf]
  %v7327 = vld [vmem:[%s7303 + $0x5c] sm:$0xf]
  %v7328 = vld [vmem:[%s7303 + $0x60] sm:$0xf]
  %v7329 = vld [vmem:[%s7303 + $0x64] sm:$0xf]
  %v7330 = vld [vmem:[%s7303 + $0x68] sm:$0xf]
  %v7331 = vld [vmem:[%s7303 + $0x6c] sm:$0xf]
  %v7332 = vld [vmem:[%s7303 + $0x70] sm:$0xf]
  %v7333 = vld [vmem:[%s7303 + $0x74] sm:$0xf]
  %v7334 = vld [vmem:[%s7303 + $0x78] sm:$0xf]
  %v7335 = vld [vmem:[%s7303 + $0x7c] sm:$0xf]
  %v7336 = vld [vmem:[%s7303 + $0x80] sm:$0xf]
  %v7337 = vld [vmem:[%s7303 + $0x84] sm:$0xf]
  %v7338 = vld [vmem:[%s7303 + $0x88] sm:$0xf]
  %v7339 = vld [vmem:[%s7303 + $0x8c] sm:$0xf]
  %v7340 = vld [vmem:[%s7303 + $0x90] sm:$0xf]
  %v7341 = vld [vmem:[%s7303 + $0x94] sm:$0xf]
  %v7342 = vld [vmem:[%s7303 + $0x98] sm:$0xf]
  %v7343 = vld [vmem:[%s7303 + $0x9c] sm:$0xf]
  %v7344 = vld [vmem:[%s7303 + $0xa0] sm:$0xf]
  %v7345 = vld [vmem:[%s7303 + $0xa4] sm:$0xf]
  %v7346 = vld [vmem:[%s7303 + $0xa8] sm:$0xf]
  %v7347 = vld [vmem:[%s7303 + $0xac] sm:$0xf]
  %v7348 = vld [vmem:[%s7303 + $0xb0] sm:$0xf]
  %v7349 = vld [vmem:[%s7303 + $0xb4] sm:$0xf]
  %v7350 = vld [vmem:[%s7303 + $0xb8] sm:$0xf]
  %v7351 = vld [vmem:[%s7303 + $0xbc] sm:$0xf]
  %v7352 = vld [vmem:[%s7303 + $0xc0] sm:$0xf]
  %v7353 = vld [vmem:[%s7303 + $0xc4] sm:$0xf]
  %v7354 = vld [vmem:[%s7303 + $0xc8] sm:$0xf]
  %v7355 = vld [vmem:[%s7303 + $0xcc] sm:$0xf]
  %v7356 = vld [vmem:[%s7303 + $0xd0] sm:$0xf]
  %v7357 = vld [vmem:[%s7303 + $0xd4] sm:$0xf]
  %v7358 = vld [vmem:[%s7303 + $0xd8] sm:$0xf]
  %v7359 = vld [vmem:[%s7303 + $0xdc] sm:$0xf]
  %v7360 = vld [vmem:[%s7303 + $0xe0] sm:$0xf]
  %v7361 = vld [vmem:[%s7303 + $0xe4] sm:$0xf]
  %v7362 = vld [vmem:[%s7303 + $0xe8] sm:$0xf]
  %v7363 = vld [vmem:[%s7303 + $0xec] sm:$0xf]
  %v7364 = vld [vmem:[%s7303 + $0xf0] sm:$0xf]
  %v7365 = vld [vmem:[%s7303 + $0xf4] sm:$0xf]
  %v7366 = vld [vmem:[%s7303 + $0xf8] sm:$0xf]
  %v7367 = vld [vmem:[%s7303 + $0xfc] sm:$0xf]
  %v7368 = vld [vmem:[%s7303 + $0x100] sm:$0xf]
  %v7369 = vld [vmem:[%s7303 + $0x104] sm:$0xf]
  %v7370 = vld [vmem:[%s7303 + $0x108] sm:$0xf]
  %v7371 = vld [vmem:[%s7303 + $0x10c] sm:$0xf]
  %v7372 = vld [vmem:[%s7303 + $0x110] sm:$0xf]
  %v7373 = vld [vmem:[%s7303 + $0x114] sm:$0xf]
  %v7374 = vld [vmem:[%s7303 + $0x118] sm:$0xf]
  %v7375 = vld [vmem:[%s7303 + $0x11c] sm:$0xf]
  %v7376 = vld [vmem:[%s7303 + $0x120] sm:$0xf]
  %v7377 = vld [vmem:[%s7303 + $0x124] sm:$0xf]
  %v7378 = vld [vmem:[%s7303 + $0x128] sm:$0xf]
  %v7379 = vld [vmem:[%s7303 + $0x12c] sm:$0xf]
  %v7380 = vld [vmem:[%s7303 + $0x130] sm:$0xf]
  %v7381 = vld [vmem:[%s7303 + $0x134] sm:$0xf]
  %v7382 = vld [vmem:[%s7303 + $0x138] sm:$0xf]
  %v7383 = vld [vmem:[%s7303 + $0x13c] sm:$0xf]
  %v7384 = vld [vmem:[%s7303 + $0x140] sm:$0xf]
  %v7385 = vld [vmem:[%s7303 + $0x144] sm:$0xf]
  %v7386 = vld [vmem:[%s7303 + $0x148] sm:$0xf]
  %v7387 = vld [vmem:[%s7303 + $0x14c] sm:$0xf]
  %v7388 = vld [vmem:[%s7303 + $0x150] sm:$0xf]
  %v7389 = vld [vmem:[%s7303 + $0x154] sm:$0x3]
  %v7476 = vunpack.c.l.b16 %v7304
  %v7477 = vunpack.c.l.b16 %v7305
  %v7478 = vunpack.c.l.b16 %v7306
  %v7479 = vunpack.c.l.b16 %v7307
  %v7480 = vunpack.c.l.b16 %v7308
  %v7481 = vunpack.c.l.b16 %v7309
  %v7482 = vunpack.c.l.b16 %v7310
  %v7483 = vunpack.c.l.b16 %v7311
  %v7484 = vunpack.c.l.b16 %v7312
  %v7485 = vunpack.c.l.b16 %v7313
  %v7486 = vunpack.c.l.b16 %v7314
  %v7487 = vunpack.c.l.b16 %v7315
  %v7488 = vunpack.c.l.b16 %v7316
  %v7489 = vunpack.c.l.b16 %v7317
  %v7490 = vunpack.c.l.b16 %v7318
  %v7491 = vunpack.c.l.b16 %v7319
  %v7492 = vunpack.c.l.b16 %v7320
  %v7493 = vunpack.c.l.b16 %v7321
  %v7494 = vunpack.c.l.b16 %v7322
  %v7495 = vunpack.c.l.b16 %v7323
  %v7496 = vunpack.c.l.b16 %v7324
  %v7497 = vunpack.c.l.b16 %v7325
  %v7498 = vunpack.c.l.b16 %v7326
  %v7499 = vunpack.c.l.b16 %v7327
  %v7500 = vunpack.c.l.b16 %v7328
  %v7501 = vunpack.c.l.b16 %v7329
  %v7502 = vunpack.c.l.b16 %v7330
  %v7503 = vunpack.c.l.b16 %v7331
  %v7504 = vunpack.c.l.b16 %v7332
  %v7505 = vunpack.c.l.b16 %v7333
  %v7506 = vunpack.c.l.b16 %v7334
  %v7507 = vunpack.c.l.b16 %v7335
  %v7508 = vunpack.c.l.b16 %v7336
  %v7509 = vunpack.c.l.b16 %v7337
  %v7510 = vunpack.c.l.b16 %v7338
  %v7511 = vunpack.c.l.b16 %v7339
  %v7512 = vunpack.c.l.b16 %v7340
  %v7513 = vunpack.c.l.b16 %v7341
  %v7514 = vunpack.c.l.b16 %v7342
  %v7515 = vunpack.c.l.b16 %v7343
  %v7516 = vunpack.c.l.b16 %v7344
  %v7517 = vunpack.c.l.b16 %v7345
  %v7518 = vunpack.c.l.b16 %v7346
  %v7519 = vunpack.c.l.b16 %v7347
  %v7520 = vunpack.c.l.b16 %v7348
  %v7521 = vunpack.c.l.b16 %v7349
  %v7522 = vunpack.c.l.b16 %v7350
  %v7523 = vunpack.c.l.b16 %v7351
  %v7524 = vunpack.c.l.b16 %v7352
  %v7525 = vunpack.c.l.b16 %v7353
  %v7526 = vunpack.c.l.b16 %v7354
  %v7527 = vunpack.c.l.b16 %v7355
  %v7528 = vunpack.c.l.b16 %v7356
  %v7529 = vunpack.c.l.b16 %v7357
  %v7530 = vunpack.c.l.b16 %v7358
  %v7531 = vunpack.c.l.b16 %v7359
  %v7532 = vunpack.c.l.b16 %v7360
  %v7533 = vunpack.c.l.b16 %v7361
  %v7534 = vunpack.c.l.b16 %v7362
  %v7535 = vunpack.c.l.b16 %v7363
  %v7536 = vunpack.c.l.b16 %v7364
  %v7537 = vunpack.c.l.b16 %v7365
  %v7538 = vunpack.c.l.b16 %v7366
  %v7539 = vunpack.c.l.b16 %v7367
  %v7540 = vunpack.c.l.b16 %v7368
  %v7541 = vunpack.c.l.b16 %v7369
  %v7542 = vunpack.c.l.b16 %v7370
  %v7543 = vunpack.c.l.b16 %v7371
  %v7544 = vunpack.c.l.b16 %v7372
  %v7545 = vunpack.c.l.b16 %v7373
  %v7546 = vunpack.c.l.b16 %v7374
  %v7547 = vunpack.c.l.b16 %v7375
  %v7548 = vunpack.c.l.b16 %v7376
  %v7549 = vunpack.c.l.b16 %v7377
  %v7550 = vunpack.c.l.b16 %v7378
  %v7551 = vunpack.c.l.b16 %v7379
  %v7552 = vunpack.c.l.b16 %v7380
  %v7553 = vunpack.c.l.b16 %v7381
  %v7554 = vunpack.c.l.b16 %v7382
  %v7555 = vunpack.c.l.b16 %v7383
  %v7556 = vunpack.c.l.b16 %v7384
  %v7557 = vunpack.c.l.b16 %v7385
  %v7558 = vunpack.c.l.b16 %v7386
  %v7559 = vunpack.c.l.b16 %v7387
  %v7560 = vunpack.c.l.b16 %v7388
  %v7561 = vunpack.c.l.b16 %v7389
  %v7562 = vpack.c.b16 %v7477, %v7476
  %v7563 = vpack.c.b16 %v7479, %v7478
  %v7564 = vpack.c.b16 %v7481, %v7480
  %v7565 = vpack.c.b16 %v7483, %v7482
  %v7566 = vpack.c.b16 %v7485, %v7484
  %v7567 = vpack.c.b16 %v7487, %v7486
  %v7568 = vpack.c.b16 %v7489, %v7488
  %v7569 = vpack.c.b16 %v7491, %v7490
  %v7570 = vpack.c.b16 %v7493, %v7492
  %v7571 = vpack.c.b16 %v7495, %v7494
  %v7572 = vpack.c.b16 %v7497, %v7496
  %v7573 = vpack.c.b16 %v7499, %v7498
  %v7574 = vpack.c.b16 %v7501, %v7500
  %v7575 = vpack.c.b16 %v7503, %v7502
  %v7576 = vpack.c.b16 %v7505, %v7504
  %v7577 = vpack.c.b16 %v7507, %v7506
  %v7578 = vpack.c.b16 %v7509, %v7508
  %v7579 = vpack.c.b16 %v7511, %v7510
  %v7580 = vpack.c.b16 %v7513, %v7512
  %v7581 = vpack.c.b16 %v7515, %v7514
  %v7582 = vpack.c.b16 %v7517, %v7516
  %v7583 = vpack.c.b16 %v7519, %v7518
  %v7584 = vpack.c.b16 %v7521, %v7520
  %v7585 = vpack.c.b16 %v7523, %v7522
  %v7586 = vpack.c.b16 %v7525, %v7524
  %v7587 = vpack.c.b16 %v7527, %v7526
  %v7588 = vpack.c.b16 %v7529, %v7528
  %v7589 = vpack.c.b16 %v7531, %v7530
  %v7590 = vpack.c.b16 %v7533, %v7532
  %v7591 = vpack.c.b16 %v7535, %v7534
  %v7592 = vpack.c.b16 %v7537, %v7536
  %v7593 = vpack.c.b16 %v7539, %v7538
  %v7594 = vpack.c.b16 %v7541, %v7540
  %v7595 = vpack.c.b16 %v7543, %v7542
  %v7596 = vpack.c.b16 %v7545, %v7544
  %v7597 = vpack.c.b16 %v7547, %v7546
  %v7598 = vpack.c.b16 %v7549, %v7548
  %v7599 = vpack.c.b16 %v7551, %v7550
  %v7600 = vpack.c.b16 %v7553, %v7552
  %v7601 = vpack.c.b16 %v7555, %v7554
  %v7602 = vpack.c.b16 %v7557, %v7556
  %v7603 = vpack.c.b16 %v7559, %v7558
  %v7604 = vpack.c.b16 %v7561, %v7560
  %v7648 = vsel %vm3371, %v3007, 0
  %v7651 = vsel %vm1939, %v7604, 0
  %7653 = vmatprep.subr.bf16.mxu0 0
  %7654 = vmatpush1.bf16.msra.mxu0 %v7569
  %7655 = vmatprep.subr.bf16.mxu0 0
  %7656 = vmatpush1.bf16.msra.mxu0 %v7568
  %7657 = vmatprep.subr.bf16.mxu0 0
  %7658 = vmatpush1.bf16.msra.mxu0 %v7567
  %7659 = vmatprep.subr.bf16.mxu0 0
  %7660 = vmatpush1.bf16.msra.mxu0 %v7566
  %7661 = vmatprep.subr.bf16.mxu0 0
  %7662 = vmatpush1.bf16.msra.mxu0 %v7565
  %7663 = vmatprep.subr.bf16.mxu0 0
  %7664 = vmatpush1.bf16.msra.mxu0 %v7564
  %7665 = vmatprep.subr.bf16.mxu0 0
  %7666 = vmatpush1.bf16.msra.mxu0 %v7563
  %7667 = vmatprep.subr.bf16.mxu0 0
  %7668 = vmatpush1.bf16.msra.mxu0 %v7562
  %7669 = vmatprep.subr.bf16.mxu0 0
  %7670 = vmatpush2.bf16.msra.mxu0 %v7577
  %7671 = vmatprep.subr.bf16.mxu0 0
  %7672 = vmatpush2.bf16.msra.mxu0 %v7576
  %7673 = vmatprep.subr.bf16.mxu0 0
  %7674 = vmatpush2.bf16.msra.mxu0 %v7575
  %7675 = vmatprep.subr.bf16.mxu0 0
  %7676 = vmatpush2.bf16.msra.mxu0 %v7574
  %7677 = vmatprep.subr.bf16.mxu0 0
  %7678 = vmatpush2.bf16.msra.mxu0 %v7573
  %7679 = vmatprep.subr.bf16.mxu0 0
  %7680 = vmatpush2.bf16.msra.mxu0 %v7572
  %7681 = vmatprep.subr.bf16.mxu0 0
  %7682 = vmatpush2.bf16.msra.mxu0 %v7571
  %7683 = vmatprep.subr.bf16.mxu0 0
  %7684 = vmatpush2.bf16.msra.mxu0 %v7570
  %7685 = vmatprep.mubr.bf16.mxu0 %v3003
  %7686 = vmatmul.mubr.bf16.gmra.mxu0 %v3002
  %v7687 = vpop.f32.mrf.mxu0
  %v7688 = vadd.f32 0.0, %v7687
  %v7689 = vpop.f32.mrf.mxu0
  %v7690 = vpop.f32.mrf.mxu0
  %v7691 = vadd.f32 0.0, %v7690
  %v7692 = vpop.f32.mrf.mxu0
  %7693 = vdwg.mxu0
  %7694 = vmatprep.subr.bf16.mxu0 0
  %7695 = vmatpush1.bf16.msra.mxu0 %v7585
  %7696 = vmatprep.subr.bf16.mxu0 0
  %7697 = vmatpush1.bf16.msra.mxu0 %v7584
  %7698 = vmatprep.subr.bf16.mxu0 0
  %7699 = vmatpush1.bf16.msra.mxu0 %v7583
  %7700 = vmatprep.subr.bf16.mxu0 0
  %7701 = vmatpush1.bf16.msra.mxu0 %v7582
  %7702 = vmatprep.subr.bf16.mxu0 0
  %7703 = vmatpush1.bf16.msra.mxu0 %v7581
  %7704 = vmatprep.subr.bf16.mxu0 0
  %7705 = vmatpush1.bf16.msra.mxu0 %v7580
  %7706 = vmatprep.subr.bf16.mxu0 0
  %7707 = vmatpush1.bf16.msra.mxu0 %v7579
  %7708 = vmatprep.subr.bf16.mxu0 0
  %7709 = vmatpush1.bf16.msra.mxu0 %v7578
  %7710 = vmatprep.subr.bf16.mxu0 0
  %7711 = vmatpush2.bf16.msra.mxu0 %v7593
  %7712 = vmatprep.subr.bf16.mxu0 0
  %7713 = vmatpush2.bf16.msra.mxu0 %v7592
  %7714 = vmatprep.subr.bf16.mxu0 0
  %7715 = vmatpush2.bf16.msra.mxu0 %v7591
  %7716 = vmatprep.subr.bf16.mxu0 0
  %7717 = vmatpush2.bf16.msra.mxu0 %v7590
  %7718 = vmatprep.subr.bf16.mxu0 0
  %7719 = vmatpush2.bf16.msra.mxu0 %v7589
  %7720 = vmatprep.subr.bf16.mxu0 0
  %7721 = vmatpush2.bf16.msra.mxu0 %v7588
  %7722 = vmatprep.subr.bf16.mxu0 0
  %7723 = vmatpush2.bf16.msra.mxu0 %v7587
  %7724 = vmatprep.subr.bf16.mxu0 0
  %7725 = vmatpush2.bf16.msra.mxu0 %v7586
  %7726 = vmatprep.mubr.bf16.mxu0 %v3005
  %7727 = vmatmul.mubr.bf16.gmra.mxu0 %v3004
  %v7728 = vpop.f32.mrf.mxu0
  %v7729 = vadd.f32 %v7688, %v7728
  %v7730 = vpop.f32.mrf.mxu0
  %v7731 = vpop.f32.mrf.mxu0
  %v7732 = vadd.f32 %v7691, %v7731
  %v7733 = vpop.f32.mrf.mxu0
  %7734 = vdwg.mxu0
  %7735 = vmatprep.subr.bf16.mxu0 0
  %7736 = vmatpush1.bf16.msra.mxu0 %v7601
  %7737 = vmatprep.subr.bf16.mxu0 0
  %7738 = vmatpush1.bf16.msra.mxu0 %v7600
  %7739 = vmatprep.subr.bf16.mxu0 0
  %7740 = vmatpush1.bf16.msra.mxu0 %v7599
  %7741 = vmatprep.subr.bf16.mxu0 0
  %7742 = vmatpush1.bf16.msra.mxu0 %v7598
  %7743 = vmatprep.subr.bf16.mxu0 0
  %7744 = vmatpush1.bf16.msra.mxu0 %v7597
  %7745 = vmatprep.subr.bf16.mxu0 0
  %7746 = vmatpush1.bf16.msra.mxu0 %v7596
  %7747 = vmatprep.subr.bf16.mxu0 0
  %7748 = vmatpush1.bf16.msra.mxu0 %v7595
  %7749 = vmatprep.subr.bf16.mxu0 0
  %7750 = vmatpush1.bf16.msra.mxu0 %v7594
  %7751 = vmatprep.subr.bf16.mxu0 0
  %7752 = vmatpush2.bf16.msra.mxu0 0
  %7753 = vmatprep.subr.bf16.mxu0 0
  %7754 = vmatpush2.bf16.msra.mxu0 0
  %7755 = vmatprep.subr.bf16.mxu0 0
  %7756 = vmatpush2.bf16.msra.mxu0 0
  %7757 = vmatprep.subr.bf16.mxu0 0
  %7758 = vmatpush2.bf16.msra.mxu0 0
  %7759 = vmatprep.subr.bf16.mxu0 0
  %7760 = vmatpush2.bf16.msra.mxu0 0
  %7761 = vmatprep.subr.bf16.mxu0 0
  %7762 = vmatpush2.bf16.msra.mxu0 %v7651
  %7763 = vmatprep.subr.bf16.mxu0 0
  %7764 = vmatpush2.bf16.msra.mxu0 %v7603
  %7765 = vmatprep.subr.bf16.mxu0 0
  %7766 = vmatpush2.bf16.msra.mxu0 %v7602
  %7767 = vmatprep.mubr.bf16.mxu0 %v7648
  %7768 = vmatmul.mubr.bf16.gmra.mxu0 %v3006
  %v7769 = vpop.f32.mrf.mxu0
  %v7770 = vadd.f32 %v7729, %v7769
  %v7771 = vpop.f32.mrf.mxu0
  %v7772 = vpop.f32.mrf.mxu0
  %v7773 = vadd.f32 %v7732, %v7772
  %v7774 = vpop.f32.mrf.mxu0
  %7775 = vdwg.mxu0
  %v7776 = vadd.f32 %v7301, %v7770
  %v7777 = vadd.f32 %v7302, %v7773
  %s7778 = scalar_lea.vmem %s3, 3440
  %v7779 = vld [vmem:[%s7778] sm:$0xf]
  %v7780 = vld [vmem:[%s7778 + $0x4] sm:$0xf]
  %v7781 = vld [vmem:[%s7778 + $0x8] sm:$0xf]
  %v7782 = vld [vmem:[%s7778 + $0xc] sm:$0xf]
  %v7783 = vld [vmem:[%s7778 + $0x10] sm:$0xf]
  %v7784 = vld [vmem:[%s7778 + $0x14] sm:$0xf]
  %v7785 = vld [vmem:[%s7778 + $0x18] sm:$0xf]
  %v7786 = vld [vmem:[%s7778 + $0x1c] sm:$0xf]
  %v7787 = vld [vmem:[%s7778 + $0x20] sm:$0xf]
  %v7788 = vld [vmem:[%s7778 + $0x24] sm:$0xf]
  %v7789 = vld [vmem:[%s7778 + $0x28] sm:$0xf]
  %v7790 = vld [vmem:[%s7778 + $0x2c] sm:$0xf]
  %v7791 = vld [vmem:[%s7778 + $0x30] sm:$0xf]
  %v7792 = vld [vmem:[%s7778 + $0x34] sm:$0xf]
  %v7793 = vld [vmem:[%s7778 + $0x38] sm:$0xf]
  %v7794 = vld [vmem:[%s7778 + $0x3c] sm:$0xf]
  %v7795 = vld [vmem:[%s7778 + $0x40] sm:$0xf]
  %v7796 = vld [vmem:[%s7778 + $0x44] sm:$0xf]
  %v7797 = vld [vmem:[%s7778 + $0x48] sm:$0xf]
  %v7798 = vld [vmem:[%s7778 + $0x4c] sm:$0xf]
  %v7799 = vld [vmem:[%s7778 + $0x50] sm:$0xf]
  %v7800 = vld [vmem:[%s7778 + $0x54] sm:$0xf]
  %v7801 = vld [vmem:[%s7778 + $0x58] sm:$0xf]
  %v7802 = vld [vmem:[%s7778 + $0x5c] sm:$0xf]
  %v7803 = vld [vmem:[%s7778 + $0x60] sm:$0xf]
  %v7804 = vld [vmem:[%s7778 + $0x64] sm:$0xf]
  %v7805 = vld [vmem:[%s7778 + $0x68] sm:$0xf]
  %v7806 = vld [vmem:[%s7778 + $0x6c] sm:$0xf]
  %v7807 = vld [vmem:[%s7778 + $0x70] sm:$0xf]
  %v7808 = vld [vmem:[%s7778 + $0x74] sm:$0xf]
  %v7809 = vld [vmem:[%s7778 + $0x78] sm:$0xf]
  %v7810 = vld [vmem:[%s7778 + $0x7c] sm:$0xf]
  %v7811 = vld [vmem:[%s7778 + $0x80] sm:$0xf]
  %v7812 = vld [vmem:[%s7778 + $0x84] sm:$0xf]
  %v7813 = vld [vmem:[%s7778 + $0x88] sm:$0xf]
  %v7814 = vld [vmem:[%s7778 + $0x8c] sm:$0xf]
  %v7815 = vld [vmem:[%s7778 + $0x90] sm:$0xf]
  %v7816 = vld [vmem:[%s7778 + $0x94] sm:$0xf]
  %v7817 = vld [vmem:[%s7778 + $0x98] sm:$0xf]
  %v7818 = vld [vmem:[%s7778 + $0x9c] sm:$0xf]
  %v7819 = vld [vmem:[%s7778 + $0xa0] sm:$0xf]
  %v7820 = vld [vmem:[%s7778 + $0xa4] sm:$0xf]
  %v7821 = vld [vmem:[%s7778 + $0xa8] sm:$0xf]
  %v7822 = vld [vmem:[%s7778 + $0xac] sm:$0xf]
  %v7823 = vld [vmem:[%s7778 + $0xb0] sm:$0xf]
  %v7824 = vld [vmem:[%s7778 + $0xb4] sm:$0xf]
  %v7825 = vld [vmem:[%s7778 + $0xb8] sm:$0xf]
  %v7826 = vld [vmem:[%s7778 + $0xbc] sm:$0xf]
  %v7827 = vld [vmem:[%s7778 + $0xc0] sm:$0xf]
  %v7828 = vld [vmem:[%s7778 + $0xc4] sm:$0xf]
  %v7829 = vld [vmem:[%s7778 + $0xc8] sm:$0xf]
  %v7830 = vld [vmem:[%s7778 + $0xcc] sm:$0xf]
  %v7831 = vld [vmem:[%s7778 + $0xd0] sm:$0xf]
  %v7832 = vld [vmem:[%s7778 + $0xd4] sm:$0xf]
  %v7833 = vld [vmem:[%s7778 + $0xd8] sm:$0xf]
  %v7834 = vld [vmem:[%s7778 + $0xdc] sm:$0xf]
  %v7835 = vld [vmem:[%s7778 + $0xe0] sm:$0xf]
  %v7836 = vld [vmem:[%s7778 + $0xe4] sm:$0xf]
  %v7837 = vld [vmem:[%s7778 + $0xe8] sm:$0xf]
  %v7838 = vld [vmem:[%s7778 + $0xec] sm:$0xf]
  %v7839 = vld [vmem:[%s7778 + $0xf0] sm:$0xf]
  %v7840 = vld [vmem:[%s7778 + $0xf4] sm:$0xf]
  %v7841 = vld [vmem:[%s7778 + $0xf8] sm:$0xf]
  %v7842 = vld [vmem:[%s7778 + $0xfc] sm:$0xf]
  %v7843 = vld [vmem:[%s7778 + $0x100] sm:$0xf]
  %v7844 = vld [vmem:[%s7778 + $0x104] sm:$0xf]
  %v7845 = vld [vmem:[%s7778 + $0x108] sm:$0xf]
  %v7846 = vld [vmem:[%s7778 + $0x10c] sm:$0xf]
  %v7847 = vld [vmem:[%s7778 + $0x110] sm:$0xf]
  %v7848 = vld [vmem:[%s7778 + $0x114] sm:$0xf]
  %v7849 = vld [vmem:[%s7778 + $0x118] sm:$0xf]
  %v7850 = vld [vmem:[%s7778 + $0x11c] sm:$0xf]
  %v7851 = vld [vmem:[%s7778 + $0x120] sm:$0xf]
  %v7852 = vld [vmem:[%s7778 + $0x124] sm:$0xf]
  %v7853 = vld [vmem:[%s7778 + $0x128] sm:$0xf]
  %v7854 = vld [vmem:[%s7778 + $0x12c] sm:$0xf]
  %v7855 = vld [vmem:[%s7778 + $0x130] sm:$0xf]
  %v7856 = vld [vmem:[%s7778 + $0x134] sm:$0xf]
  %v7857 = vld [vmem:[%s7778 + $0x138] sm:$0xf]
  %v7858 = vld [vmem:[%s7778 + $0x13c] sm:$0xf]
  %v7859 = vld [vmem:[%s7778 + $0x140] sm:$0xf]
  %v7860 = vld [vmem:[%s7778 + $0x144] sm:$0xf]
  %v7861 = vld [vmem:[%s7778 + $0x148] sm:$0xf]
  %v7862 = vld [vmem:[%s7778 + $0x14c] sm:$0xf]
  %v7863 = vld [vmem:[%s7778 + $0x150] sm:$0xf]
  %v7864 = vld [vmem:[%s7778 + $0x154] sm:$0x3]
  %v7951 = vunpack.c.l.b16 %v7779
  %v7952 = vunpack.c.l.b16 %v7780
  %v7953 = vunpack.c.l.b16 %v7781
  %v7954 = vunpack.c.l.b16 %v7782
  %v7955 = vunpack.c.l.b16 %v7783
  %v7956 = vunpack.c.l.b16 %v7784
  %v7957 = vunpack.c.l.b16 %v7785
  %v7958 = vunpack.c.l.b16 %v7786
  %v7959 = vunpack.c.l.b16 %v7787
  %v7960 = vunpack.c.l.b16 %v7788
  %v7961 = vunpack.c.l.b16 %v7789
  %v7962 = vunpack.c.l.b16 %v7790
  %v7963 = vunpack.c.l.b16 %v7791
  %v7964 = vunpack.c.l.b16 %v7792
  %v7965 = vunpack.c.l.b16 %v7793
  %v7966 = vunpack.c.l.b16 %v7794
  %v7967 = vunpack.c.l.b16 %v7795
  %v7968 = vunpack.c.l.b16 %v7796
  %v7969 = vunpack.c.l.b16 %v7797
  %v7970 = vunpack.c.l.b16 %v7798
  %v7971 = vunpack.c.l.b16 %v7799
  %v7972 = vunpack.c.l.b16 %v7800
  %v7973 = vunpack.c.l.b16 %v7801
  %v7974 = vunpack.c.l.b16 %v7802
  %v7975 = vunpack.c.l.b16 %v7803
  %v7976 = vunpack.c.l.b16 %v7804
  %v7977 = vunpack.c.l.b16 %v7805
  %v7978 = vunpack.c.l.b16 %v7806
  %v7979 = vunpack.c.l.b16 %v7807
  %v7980 = vunpack.c.l.b16 %v7808
  %v7981 = vunpack.c.l.b16 %v7809
  %v7982 = vunpack.c.l.b16 %v7810
  %v7983 = vunpack.c.l.b16 %v7811
  %v7984 = vunpack.c.l.b16 %v7812
  %v7985 = vunpack.c.l.b16 %v7813
  %v7986 = vunpack.c.l.b16 %v7814
  %v7987 = vunpack.c.l.b16 %v7815
  %v7988 = vunpack.c.l.b16 %v7816
  %v7989 = vunpack.c.l.b16 %v7817
  %v7990 = vunpack.c.l.b16 %v7818
  %v7991 = vunpack.c.l.b16 %v7819
  %v7992 = vunpack.c.l.b16 %v7820
  %v7993 = vunpack.c.l.b16 %v7821
  %v7994 = vunpack.c.l.b16 %v7822
  %v7995 = vunpack.c.l.b16 %v7823
  %v7996 = vunpack.c.l.b16 %v7824
  %v7997 = vunpack.c.l.b16 %v7825
  %v7998 = vunpack.c.l.b16 %v7826
  %v7999 = vunpack.c.l.b16 %v7827
  %v8000 = vunpack.c.l.b16 %v7828
  %v8001 = vunpack.c.l.b16 %v7829
  %v8002 = vunpack.c.l.b16 %v7830
  %v8003 = vunpack.c.l.b16 %v7831
  %v8004 = vunpack.c.l.b16 %v7832
  %v8005 = vunpack.c.l.b16 %v7833
  %v8006 = vunpack.c.l.b16 %v7834
  %v8007 = vunpack.c.l.b16 %v7835
  %v8008 = vunpack.c.l.b16 %v7836
  %v8009 = vunpack.c.l.b16 %v7837
  %v8010 = vunpack.c.l.b16 %v7838
  %v8011 = vunpack.c.l.b16 %v7839
  %v8012 = vunpack.c.l.b16 %v7840
  %v8013 = vunpack.c.l.b16 %v7841
  %v8014 = vunpack.c.l.b16 %v7842
  %v8015 = vunpack.c.l.b16 %v7843
  %v8016 = vunpack.c.l.b16 %v7844
  %v8017 = vunpack.c.l.b16 %v7845
  %v8018 = vunpack.c.l.b16 %v7846
  %v8019 = vunpack.c.l.b16 %v7847
  %v8020 = vunpack.c.l.b16 %v7848
  %v8021 = vunpack.c.l.b16 %v7849
  %v8022 = vunpack.c.l.b16 %v7850
  %v8023 = vunpack.c.l.b16 %v7851
  %v8024 = vunpack.c.l.b16 %v7852
  %v8025 = vunpack.c.l.b16 %v7853
  %v8026 = vunpack.c.l.b16 %v7854
  %v8027 = vunpack.c.l.b16 %v7855
  %v8028 = vunpack.c.l.b16 %v7856
  %v8029 = vunpack.c.l.b16 %v7857
  %v8030 = vunpack.c.l.b16 %v7858
  %v8031 = vunpack.c.l.b16 %v7859
  %v8032 = vunpack.c.l.b16 %v7860
  %v8033 = vunpack.c.l.b16 %v7861
  %v8034 = vunpack.c.l.b16 %v7862
  %v8035 = vunpack.c.l.b16 %v7863
  %v8036 = vunpack.c.l.b16 %v7864
  %v8037 = vpack.c.b16 %v7952, %v7951
  %v8038 = vpack.c.b16 %v7954, %v7953
  %v8039 = vpack.c.b16 %v7956, %v7955
  %v8040 = vpack.c.b16 %v7958, %v7957
  %v8041 = vpack.c.b16 %v7960, %v7959
  %v8042 = vpack.c.b16 %v7962, %v7961
  %v8043 = vpack.c.b16 %v7964, %v7963
  %v8044 = vpack.c.b16 %v7966, %v7965
  %v8045 = vpack.c.b16 %v7968, %v7967
  %v8046 = vpack.c.b16 %v7970, %v7969
  %v8047 = vpack.c.b16 %v7972, %v7971
  %v8048 = vpack.c.b16 %v7974, %v7973
  %v8049 = vpack.c.b16 %v7976, %v7975
  %v8050 = vpack.c.b16 %v7978, %v7977
  %v8051 = vpack.c.b16 %v7980, %v7979
  %v8052 = vpack.c.b16 %v7982, %v7981
  %v8053 = vpack.c.b16 %v7984, %v7983
  %v8054 = vpack.c.b16 %v7986, %v7985
  %v8055 = vpack.c.b16 %v7988, %v7987
  %v8056 = vpack.c.b16 %v7990, %v7989
  %v8057 = vpack.c.b16 %v7992, %v7991
  %v8058 = vpack.c.b16 %v7994, %v7993
  %v8059 = vpack.c.b16 %v7996, %v7995
  %v8060 = vpack.c.b16 %v7998, %v7997
  %v8061 = vpack.c.b16 %v8000, %v7999
  %v8062 = vpack.c.b16 %v8002, %v8001
  %v8063 = vpack.c.b16 %v8004, %v8003
  %v8064 = vpack.c.b16 %v8006, %v8005
  %v8065 = vpack.c.b16 %v8008, %v8007
  %v8066 = vpack.c.b16 %v8010, %v8009
  %v8067 = vpack.c.b16 %v8012, %v8011
  %v8068 = vpack.c.b16 %v8014, %v8013
  %v8069 = vpack.c.b16 %v8016, %v8015
  %v8070 = vpack.c.b16 %v8018, %v8017
  %v8071 = vpack.c.b16 %v8020, %v8019
  %v8072 = vpack.c.b16 %v8022, %v8021
  %v8073 = vpack.c.b16 %v8024, %v8023
  %v8074 = vpack.c.b16 %v8026, %v8025
  %v8075 = vpack.c.b16 %v8028, %v8027
  %v8076 = vpack.c.b16 %v8030, %v8029
  %v8077 = vpack.c.b16 %v8032, %v8031
  %v8078 = vpack.c.b16 %v8034, %v8033
  %v8079 = vpack.c.b16 %v8036, %v8035
  %v8123 = vsel %vm3371, %v3013, 0
  %v8126 = vsel %vm1939, %v8079, 0
  %8128 = vmatprep.subr.bf16.mxu0 0
  %8129 = vmatpush1.bf16.msra.mxu0 %v8044
  %8130 = vmatprep.subr.bf16.mxu0 0
  %8131 = vmatpush1.bf16.msra.mxu0 %v8043
  %8132 = vmatprep.subr.bf16.mxu0 0
  %8133 = vmatpush1.bf16.msra.mxu0 %v8042
  %8134 = vmatprep.subr.bf16.mxu0 0
  %8135 = vmatpush1.bf16.msra.mxu0 %v8041
  %8136 = vmatprep.subr.bf16.mxu0 0
  %8137 = vmatpush1.bf16.msra.mxu0 %v8040
  %8138 = vmatprep.subr.bf16.mxu0 0
  %8139 = vmatpush1.bf16.msra.mxu0 %v8039
  %8140 = vmatprep.subr.bf16.mxu0 0
  %8141 = vmatpush1.bf16.msra.mxu0 %v8038
  %8142 = vmatprep.subr.bf16.mxu0 0
  %8143 = vmatpush1.bf16.msra.mxu0 %v8037
  %8144 = vmatprep.subr.bf16.mxu0 0
  %8145 = vmatpush2.bf16.msra.mxu0 %v8052
  %8146 = vmatprep.subr.bf16.mxu0 0
  %8147 = vmatpush2.bf16.msra.mxu0 %v8051
  %8148 = vmatprep.subr.bf16.mxu0 0
  %8149 = vmatpush2.bf16.msra.mxu0 %v8050
  %8150 = vmatprep.subr.bf16.mxu0 0
  %8151 = vmatpush2.bf16.msra.mxu0 %v8049
  %8152 = vmatprep.subr.bf16.mxu0 0
  %8153 = vmatpush2.bf16.msra.mxu0 %v8048
  %8154 = vmatprep.subr.bf16.mxu0 0
  %8155 = vmatpush2.bf16.msra.mxu0 %v8047
  %8156 = vmatprep.subr.bf16.mxu0 0
  %8157 = vmatpush2.bf16.msra.mxu0 %v8046
  %8158 = vmatprep.subr.bf16.mxu0 0
  %8159 = vmatpush2.bf16.msra.mxu0 %v8045
  %8160 = vmatprep.mubr.bf16.mxu0 %v3009
  %8161 = vmatmul.mubr.bf16.gmra.mxu0 %v3008
  %v8162 = vpop.f32.mrf.mxu0
  %v8163 = vadd.f32 0.0, %v8162
  %v8164 = vpop.f32.mrf.mxu0
  %v8165 = vpop.f32.mrf.mxu0
  %v8166 = vadd.f32 0.0, %v8165
  %v8167 = vpop.f32.mrf.mxu0
  %8168 = vdwg.mxu0
  %8169 = vmatprep.subr.bf16.mxu0 0
  %8170 = vmatpush1.bf16.msra.mxu0 %v8060
  %8171 = vmatprep.subr.bf16.mxu0 0
  %8172 = vmatpush1.bf16.msra.mxu0 %v8059
  %8173 = vmatprep.subr.bf16.mxu0 0
  %8174 = vmatpush1.bf16.msra.mxu0 %v8058
  %8175 = vmatprep.subr.bf16.mxu0 0
  %8176 = vmatpush1.bf16.msra.mxu0 %v8057
  %8177 = vmatprep.subr.bf16.mxu0 0
  %8178 = vmatpush1.bf16.msra.mxu0 %v8056
  %8179 = vmatprep.subr.bf16.mxu0 0
  %8180 = vmatpush1.bf16.msra.mxu0 %v8055
  %8181 = vmatprep.subr.bf16.mxu0 0
  %8182 = vmatpush1.bf16.msra.mxu0 %v8054
  %8183 = vmatprep.subr.bf16.mxu0 0
  %8184 = vmatpush1.bf16.msra.mxu0 %v8053
  %8185 = vmatprep.subr.bf16.mxu0 0
  %8186 = vmatpush2.bf16.msra.mxu0 %v8068
  %8187 = vmatprep.subr.bf16.mxu0 0
  %8188 = vmatpush2.bf16.msra.mxu0 %v8067
  %8189 = vmatprep.subr.bf16.mxu0 0
  %8190 = vmatpush2.bf16.msra.mxu0 %v8066
  %8191 = vmatprep.subr.bf16.mxu0 0
  %8192 = vmatpush2.bf16.msra.mxu0 %v8065
  %8193 = vmatprep.subr.bf16.mxu0 0
  %8194 = vmatpush2.bf16.msra.mxu0 %v8064
  %8195 = vmatprep.subr.bf16.mxu0 0
  %8196 = vmatpush2.bf16.msra.mxu0 %v8063
  %8197 = vmatprep.subr.bf16.mxu0 0
  %8198 = vmatpush2.bf16.msra.mxu0 %v8062
  %8199 = vmatprep.subr.bf16.mxu0 0
  %8200 = vmatpush2.bf16.msra.mxu0 %v8061
  %8201 = vmatprep.mubr.bf16.mxu0 %v3011
  %8202 = vmatmul.mubr.bf16.gmra.mxu0 %v3010
  %v8203 = vpop.f32.mrf.mxu0
  %v8204 = vadd.f32 %v8163, %v8203
  %v8205 = vpop.f32.mrf.mxu0
  %v8206 = vpop.f32.mrf.mxu0
  %v8207 = vadd.f32 %v8166, %v8206
  %v8208 = vpop.f32.mrf.mxu0
  %8209 = vdwg.mxu0
  %8210 = vmatprep.subr.bf16.mxu0 0
  %8211 = vmatpush1.bf16.msra.mxu0 %v8076
  %8212 = vmatprep.subr.bf16.mxu0 0
  %8213 = vmatpush1.bf16.msra.mxu0 %v8075
  %8214 = vmatprep.subr.bf16.mxu0 0
  %8215 = vmatpush1.bf16.msra.mxu0 %v8074
  %8216 = vmatprep.subr.bf16.mxu0 0
  %8217 = vmatpush1.bf16.msra.mxu0 %v8073
  %8218 = vmatprep.subr.bf16.mxu0 0
  %8219 = vmatpush1.bf16.msra.mxu0 %v8072
  %8220 = vmatprep.subr.bf16.mxu0 0
  %8221 = vmatpush1.bf16.msra.mxu0 %v8071
  %8222 = vmatprep.subr.bf16.mxu0 0
  %8223 = vmatpush1.bf16.msra.mxu0 %v8070
  %8224 = vmatprep.subr.bf16.mxu0 0
  %8225 = vmatpush1.bf16.msra.mxu0 %v8069
  %8226 = vmatprep.subr.bf16.mxu0 0
  %8227 = vmatpush2.bf16.msra.mxu0 0
  %8228 = vmatprep.subr.bf16.mxu0 0
  %8229 = vmatpush2.bf16.msra.mxu0 0
  %8230 = vmatprep.subr.bf16.mxu0 0
  %8231 = vmatpush2.bf16.msra.mxu0 0
  %8232 = vmatprep.subr.bf16.mxu0 0
  %8233 = vmatpush2.bf16.msra.mxu0 0
  %8234 = vmatprep.subr.bf16.mxu0 0
  %8235 = vmatpush2.bf16.msra.mxu0 0
  %8236 = vmatprep.subr.bf16.mxu0 0
  %8237 = vmatpush2.bf16.msra.mxu0 %v8126
  %8238 = vmatprep.subr.bf16.mxu0 0
  %8239 = vmatpush2.bf16.msra.mxu0 %v8078
  %8240 = vmatprep.subr.bf16.mxu0 0
  %8241 = vmatpush2.bf16.msra.mxu0 %v8077
  %8242 = vmatprep.mubr.bf16.mxu0 %v8123
  %8243 = vmatmul.mubr.bf16.gmra.mxu0 %v3012
  %v8244 = vpop.f32.mrf.mxu0
  %v8245 = vadd.f32 %v8204, %v8244
  %v8246 = vpop.f32.mrf.mxu0
  %v8247 = vpop.f32.mrf.mxu0
  %v8248 = vadd.f32 %v8207, %v8247
  %v8249 = vpop.f32.mrf.mxu0
  %8250 = vdwg.mxu0
  %v8251 = vadd.f32 %v7776, %v8245
  %v8252 = vadd.f32 %v7777, %v8248
  %s8253 = scalar_lea.vmem %s3, 3784
  %v8254 = vld [vmem:[%s8253] sm:$0xf]
  %v8255 = vld [vmem:[%s8253 + $0x4] sm:$0xf]
  %v8256 = vld [vmem:[%s8253 + $0x8] sm:$0xf]
  %v8257 = vld [vmem:[%s8253 + $0xc] sm:$0xf]
  %v8258 = vld [vmem:[%s8253 + $0x10] sm:$0xf]
  %v8259 = vld [vmem:[%s8253 + $0x14] sm:$0xf]
  %v8260 = vld [vmem:[%s8253 + $0x18] sm:$0xf]
  %v8261 = vld [vmem:[%s8253 + $0x1c] sm:$0xf]
  %v8262 = vld [vmem:[%s8253 + $0x20] sm:$0xf]
  %v8263 = vld [vmem:[%s8253 + $0x24] sm:$0xf]
  %v8264 = vld [vmem:[%s8253 + $0x28] sm:$0xf]
  %v8265 = vld [vmem:[%s8253 + $0x2c] sm:$0xf]
  %v8266 = vld [vmem:[%s8253 + $0x30] sm:$0xf]
  %v8267 = vld [vmem:[%s8253 + $0x34] sm:$0xf]
  %v8268 = vld [vmem:[%s8253 + $0x38] sm:$0xf]
  %v8269 = vld [vmem:[%s8253 + $0x3c] sm:$0xf]
  %v8270 = vld [vmem:[%s8253 + $0x40] sm:$0xf]
  %v8271 = vld [vmem:[%s8253 + $0x44] sm:$0xf]
  %v8272 = vld [vmem:[%s8253 + $0x48] sm:$0xf]
  %v8273 = vld [vmem:[%s8253 + $0x4c] sm:$0xf]
  %v8274 = vld [vmem:[%s8253 + $0x50] sm:$0xf]
  %v8275 = vld [vmem:[%s8253 + $0x54] sm:$0xf]
  %v8276 = vld [vmem:[%s8253 + $0x58] sm:$0xf]
  %v8277 = vld [vmem:[%s8253 + $0x5c] sm:$0xf]
  %v8278 = vld [vmem:[%s8253 + $0x60] sm:$0xf]
  %v8279 = vld [vmem:[%s8253 + $0x64] sm:$0xf]
  %v8280 = vld [vmem:[%s8253 + $0x68] sm:$0xf]
  %v8281 = vld [vmem:[%s8253 + $0x6c] sm:$0xf]
  %v8282 = vld [vmem:[%s8253 + $0x70] sm:$0xf]
  %v8283 = vld [vmem:[%s8253 + $0x74] sm:$0xf]
  %v8284 = vld [vmem:[%s8253 + $0x78] sm:$0xf]
  %v8285 = vld [vmem:[%s8253 + $0x7c] sm:$0xf]
  %v8286 = vld [vmem:[%s8253 + $0x80] sm:$0xf]
  %v8287 = vld [vmem:[%s8253 + $0x84] sm:$0xf]
  %v8288 = vld [vmem:[%s8253 + $0x88] sm:$0xf]
  %v8289 = vld [vmem:[%s8253 + $0x8c] sm:$0xf]
  %v8290 = vld [vmem:[%s8253 + $0x90] sm:$0xf]
  %v8291 = vld [vmem:[%s8253 + $0x94] sm:$0xf]
  %v8292 = vld [vmem:[%s8253 + $0x98] sm:$0xf]
  %v8293 = vld [vmem:[%s8253 + $0x9c] sm:$0xf]
  %v8294 = vld [vmem:[%s8253 + $0xa0] sm:$0xf]
  %v8295 = vld [vmem:[%s8253 + $0xa4] sm:$0xf]
  %v8296 = vld [vmem:[%s8253 + $0xa8] sm:$0xf]
  %v8297 = vld [vmem:[%s8253 + $0xac] sm:$0xf]
  %v8298 = vld [vmem:[%s8253 + $0xb0] sm:$0xf]
  %v8299 = vld [vmem:[%s8253 + $0xb4] sm:$0xf]
  %v8300 = vld [vmem:[%s8253 + $0xb8] sm:$0xf]
  %v8301 = vld [vmem:[%s8253 + $0xbc] sm:$0xf]
  %v8302 = vld [vmem:[%s8253 + $0xc0] sm:$0xf]
  %v8303 = vld [vmem:[%s8253 + $0xc4] sm:$0xf]
  %v8304 = vld [vmem:[%s8253 + $0xc8] sm:$0xf]
  %v8305 = vld [vmem:[%s8253 + $0xcc] sm:$0xf]
  %v8306 = vld [vmem:[%s8253 + $0xd0] sm:$0xf]
  %v8307 = vld [vmem:[%s8253 + $0xd4] sm:$0xf]
  %v8308 = vld [vmem:[%s8253 + $0xd8] sm:$0xf]
  %v8309 = vld [vmem:[%s8253 + $0xdc] sm:$0xf]
  %v8310 = vld [vmem:[%s8253 + $0xe0] sm:$0xf]
  %v8311 = vld [vmem:[%s8253 + $0xe4] sm:$0xf]
  %v8312 = vld [vmem:[%s8253 + $0xe8] sm:$0xf]
  %v8313 = vld [vmem:[%s8253 + $0xec] sm:$0xf]
  %v8314 = vld [vmem:[%s8253 + $0xf0] sm:$0xf]
  %v8315 = vld [vmem:[%s8253 + $0xf4] sm:$0xf]
  %v8316 = vld [vmem:[%s8253 + $0xf8] sm:$0xf]
  %v8317 = vld [vmem:[%s8253 + $0xfc] sm:$0xf]
  %v8318 = vld [vmem:[%s8253 + $0x100] sm:$0xf]
  %v8319 = vld [vmem:[%s8253 + $0x104] sm:$0xf]
  %v8320 = vld [vmem:[%s8253 + $0x108] sm:$0xf]
  %v8321 = vld [vmem:[%s8253 + $0x10c] sm:$0xf]
  %v8322 = vld [vmem:[%s8253 + $0x110] sm:$0xf]
  %v8323 = vld [vmem:[%s8253 + $0x114] sm:$0xf]
  %v8324 = vld [vmem:[%s8253 + $0x118] sm:$0xf]
  %v8325 = vld [vmem:[%s8253 + $0x11c] sm:$0xf]
  %v8326 = vld [vmem:[%s8253 + $0x120] sm:$0xf]
  %v8327 = vld [vmem:[%s8253 + $0x124] sm:$0xf]
  %v8328 = vld [vmem:[%s8253 + $0x128] sm:$0xf]
  %v8329 = vld [vmem:[%s8253 + $0x12c] sm:$0xf]
  %v8330 = vld [vmem:[%s8253 + $0x130] sm:$0xf]
  %v8331 = vld [vmem:[%s8253 + $0x134] sm:$0xf]
  %v8332 = vld [vmem:[%s8253 + $0x138] sm:$0xf]
  %v8333 = vld [vmem:[%s8253 + $0x13c] sm:$0xf]
  %v8334 = vld [vmem:[%s8253 + $0x140] sm:$0xf]
  %v8335 = vld [vmem:[%s8253 + $0x144] sm:$0xf]
  %v8336 = vld [vmem:[%s8253 + $0x148] sm:$0xf]
  %v8337 = vld [vmem:[%s8253 + $0x14c] sm:$0xf]
  %v8338 = vld [vmem:[%s8253 + $0x150] sm:$0xf]
  %v8339 = vld [vmem:[%s8253 + $0x154] sm:$0x3]
  %v8426 = vunpack.c.l.b16 %v8254
  %v8427 = vunpack.c.l.b16 %v8255
  %v8428 = vunpack.c.l.b16 %v8256
  %v8429 = vunpack.c.l.b16 %v8257
  %v8430 = vunpack.c.l.b16 %v8258
  %v8431 = vunpack.c.l.b16 %v8259
  %v8432 = vunpack.c.l.b16 %v8260
  %v8433 = vunpack.c.l.b16 %v8261
  %v8434 = vunpack.c.l.b16 %v8262
  %v8435 = vunpack.c.l.b16 %v8263
  %v8436 = vunpack.c.l.b16 %v8264
  %v8437 = vunpack.c.l.b16 %v8265
  %v8438 = vunpack.c.l.b16 %v8266
  %v8439 = vunpack.c.l.b16 %v8267
  %v8440 = vunpack.c.l.b16 %v8268
  %v8441 = vunpack.c.l.b16 %v8269
  %v8442 = vunpack.c.l.b16 %v8270
  %v8443 = vunpack.c.l.b16 %v8271
  %v8444 = vunpack.c.l.b16 %v8272
  %v8445 = vunpack.c.l.b16 %v8273
  %v8446 = vunpack.c.l.b16 %v8274
  %v8447 = vunpack.c.l.b16 %v8275
  %v8448 = vunpack.c.l.b16 %v8276
  %v8449 = vunpack.c.l.b16 %v8277
  %v8450 = vunpack.c.l.b16 %v8278
  %v8451 = vunpack.c.l.b16 %v8279
  %v8452 = vunpack.c.l.b16 %v8280
  %v8453 = vunpack.c.l.b16 %v8281
  %v8454 = vunpack.c.l.b16 %v8282
  %v8455 = vunpack.c.l.b16 %v8283
  %v8456 = vunpack.c.l.b16 %v8284
  %v8457 = vunpack.c.l.b16 %v8285
  %v8458 = vunpack.c.l.b16 %v8286
  %v8459 = vunpack.c.l.b16 %v8287
  %v8460 = vunpack.c.l.b16 %v8288
  %v8461 = vunpack.c.l.b16 %v8289
  %v8462 = vunpack.c.l.b16 %v8290
  %v8463 = vunpack.c.l.b16 %v8291
  %v8464 = vunpack.c.l.b16 %v8292
  %v8465 = vunpack.c.l.b16 %v8293
  %v8466 = vunpack.c.l.b16 %v8294
  %v8467 = vunpack.c.l.b16 %v8295
  %v8468 = vunpack.c.l.b16 %v8296
  %v8469 = vunpack.c.l.b16 %v8297
  %v8470 = vunpack.c.l.b16 %v8298
  %v8471 = vunpack.c.l.b16 %v8299
  %v8472 = vunpack.c.l.b16 %v8300
  %v8473 = vunpack.c.l.b16 %v8301
  %v8474 = vunpack.c.l.b16 %v8302
  %v8475 = vunpack.c.l.b16 %v8303
  %v8476 = vunpack.c.l.b16 %v8304
  %v8477 = vunpack.c.l.b16 %v8305
  %v8478 = vunpack.c.l.b16 %v8306
  %v8479 = vunpack.c.l.b16 %v8307
  %v8480 = vunpack.c.l.b16 %v8308
  %v8481 = vunpack.c.l.b16 %v8309
  %v8482 = vunpack.c.l.b16 %v8310
  %v8483 = vunpack.c.l.b16 %v8311
  %v8484 = vunpack.c.l.b16 %v8312
  %v8485 = vunpack.c.l.b16 %v8313
  %v8486 = vunpack.c.l.b16 %v8314
  %v8487 = vunpack.c.l.b16 %v8315
  %v8488 = vunpack.c.l.b16 %v8316
  %v8489 = vunpack.c.l.b16 %v8317
  %v8490 = vunpack.c.l.b16 %v8318
  %v8491 = vunpack.c.l.b16 %v8319
  %v8492 = vunpack.c.l.b16 %v8320
  %v8493 = vunpack.c.l.b16 %v8321
  %v8494 = vunpack.c.l.b16 %v8322
  %v8495 = vunpack.c.l.b16 %v8323
  %v8496 = vunpack.c.l.b16 %v8324
  %v8497 = vunpack.c.l.b16 %v8325
  %v8498 = vunpack.c.l.b16 %v8326
  %v8499 = vunpack.c.l.b16 %v8327
  %v8500 = vunpack.c.l.b16 %v8328
  %v8501 = vunpack.c.l.b16 %v8329
  %v8502 = vunpack.c.l.b16 %v8330
  %v8503 = vunpack.c.l.b16 %v8331
  %v8504 = vunpack.c.l.b16 %v8332
  %v8505 = vunpack.c.l.b16 %v8333
  %v8506 = vunpack.c.l.b16 %v8334
  %v8507 = vunpack.c.l.b16 %v8335
  %v8508 = vunpack.c.l.b16 %v8336
  %v8509 = vunpack.c.l.b16 %v8337
  %v8510 = vunpack.c.l.b16 %v8338
  %v8511 = vunpack.c.l.b16 %v8339
  %v8512 = vpack.c.b16 %v8427, %v8426
  %v8513 = vpack.c.b16 %v8429, %v8428
  %v8514 = vpack.c.b16 %v8431, %v8430
  %v8515 = vpack.c.b16 %v8433, %v8432
  %v8516 = vpack.c.b16 %v8435, %v8434
  %v8517 = vpack.c.b16 %v8437, %v8436
  %v8518 = vpack.c.b16 %v8439, %v8438
  %v8519 = vpack.c.b16 %v8441, %v8440
  %v8520 = vpack.c.b16 %v8443, %v8442
  %v8521 = vpack.c.b16 %v8445, %v8444
  %v8522 = vpack.c.b16 %v8447, %v8446
  %v8523 = vpack.c.b16 %v8449, %v8448
  %v8524 = vpack.c.b16 %v8451, %v8450
  %v8525 = vpack.c.b16 %v8453, %v8452
  %v8526 = vpack.c.b16 %v8455, %v8454
  %v8527 = vpack.c.b16 %v8457, %v8456
  %v8528 = vpack.c.b16 %v8459, %v8458
  %v8529 = vpack.c.b16 %v8461, %v8460
  %v8530 = vpack.c.b16 %v8463, %v8462
  %v8531 = vpack.c.b16 %v8465, %v8464
  %v8532 = vpack.c.b16 %v8467, %v8466
  %v8533 = vpack.c.b16 %v8469, %v8468
  %v8534 = vpack.c.b16 %v8471, %v8470
  %v8535 = vpack.c.b16 %v8473, %v8472
  %v8536 = vpack.c.b16 %v8475, %v8474
  %v8537 = vpack.c.b16 %v8477, %v8476
  %v8538 = vpack.c.b16 %v8479, %v8478
  %v8539 = vpack.c.b16 %v8481, %v8480
  %v8540 = vpack.c.b16 %v8483, %v8482
  %v8541 = vpack.c.b16 %v8485, %v8484
  %v8542 = vpack.c.b16 %v8487, %v8486
  %v8543 = vpack.c.b16 %v8489, %v8488
  %v8544 = vpack.c.b16 %v8491, %v8490
  %v8545 = vpack.c.b16 %v8493, %v8492
  %v8546 = vpack.c.b16 %v8495, %v8494
  %v8547 = vpack.c.b16 %v8497, %v8496
  %v8548 = vpack.c.b16 %v8499, %v8498
  %v8549 = vpack.c.b16 %v8501, %v8500
  %v8550 = vpack.c.b16 %v8503, %v8502
  %v8551 = vpack.c.b16 %v8505, %v8504
  %v8552 = vpack.c.b16 %v8507, %v8506
  %v8553 = vpack.c.b16 %v8509, %v8508
  %v8554 = vpack.c.b16 %v8511, %v8510
  %v8598 = vsel %vm3371, %v3019, 0
  %v8601 = vsel %vm1939, %v8554, 0
  %8603 = vmatprep.subr.bf16.mxu0 0
  %8604 = vmatpush1.bf16.msra.mxu0 %v8519
  %8605 = vmatprep.subr.bf16.mxu0 0
  %8606 = vmatpush1.bf16.msra.mxu0 %v8518
  %8607 = vmatprep.subr.bf16.mxu0 0
  %8608 = vmatpush1.bf16.msra.mxu0 %v8517
  %8609 = vmatprep.subr.bf16.mxu0 0
  %8610 = vmatpush1.bf16.msra.mxu0 %v8516
  %8611 = vmatprep.subr.bf16.mxu0 0
  %8612 = vmatpush1.bf16.msra.mxu0 %v8515
  %8613 = vmatprep.subr.bf16.mxu0 0
  %8614 = vmatpush1.bf16.msra.mxu0 %v8514
  %8615 = vmatprep.subr.bf16.mxu0 0
  %8616 = vmatpush1.bf16.msra.mxu0 %v8513
  %8617 = vmatprep.subr.bf16.mxu0 0
  %8618 = vmatpush1.bf16.msra.mxu0 %v8512
  %8619 = vmatprep.subr.bf16.mxu0 0
  %8620 = vmatpush2.bf16.msra.mxu0 %v8527
  %8621 = vmatprep.subr.bf16.mxu0 0
  %8622 = vmatpush2.bf16.msra.mxu0 %v8526
  %8623 = vmatprep.subr.bf16.mxu0 0
  %8624 = vmatpush2.bf16.msra.mxu0 %v8525
  %8625 = vmatprep.subr.bf16.mxu0 0
  %8626 = vmatpush2.bf16.msra.mxu0 %v8524
  %8627 = vmatprep.subr.bf16.mxu0 0
  %8628 = vmatpush2.bf16.msra.mxu0 %v8523
  %8629 = vmatprep.subr.bf16.mxu0 0
  %8630 = vmatpush2.bf16.msra.mxu0 %v8522
  %8631 = vmatprep.subr.bf16.mxu0 0
  %8632 = vmatpush2.bf16.msra.mxu0 %v8521
  %8633 = vmatprep.subr.bf16.mxu0 0
  %8634 = vmatpush2.bf16.msra.mxu0 %v8520
  %8635 = vmatprep.mubr.bf16.mxu0 %v3015
  %8636 = vmatmul.mubr.bf16.gmra.mxu0 %v3014
  %v8637 = vpop.f32.mrf.mxu0
  %v8638 = vadd.f32 0.0, %v8637
  %v8639 = vpop.f32.mrf.mxu0
  %v8640 = vpop.f32.mrf.mxu0
  %v8641 = vadd.f32 0.0, %v8640
  %v8642 = vpop.f32.mrf.mxu0
  %8643 = vdwg.mxu0
  %8644 = vmatprep.subr.bf16.mxu0 0
  %8645 = vmatpush1.bf16.msra.mxu0 %v8535
  %8646 = vmatprep.subr.bf16.mxu0 0
  %8647 = vmatpush1.bf16.msra.mxu0 %v8534
  %8648 = vmatprep.subr.bf16.mxu0 0
  %8649 = vmatpush1.bf16.msra.mxu0 %v8533
  %8650 = vmatprep.subr.bf16.mxu0 0
  %8651 = vmatpush1.bf16.msra.mxu0 %v8532
  %8652 = vmatprep.subr.bf16.mxu0 0
  %8653 = vmatpush1.bf16.msra.mxu0 %v8531
  %8654 = vmatprep.subr.bf16.mxu0 0
  %8655 = vmatpush1.bf16.msra.mxu0 %v8530
  %8656 = vmatprep.subr.bf16.mxu0 0
  %8657 = vmatpush1.bf16.msra.mxu0 %v8529
  %8658 = vmatprep.subr.bf16.mxu0 0
  %8659 = vmatpush1.bf16.msra.mxu0 %v8528
  %8660 = vmatprep.subr.bf16.mxu0 0
  %8661 = vmatpush2.bf16.msra.mxu0 %v8543
  %8662 = vmatprep.subr.bf16.mxu0 0
  %8663 = vmatpush2.bf16.msra.mxu0 %v8542
  %8664 = vmatprep.subr.bf16.mxu0 0
  %8665 = vmatpush2.bf16.msra.mxu0 %v8541
  %8666 = vmatprep.subr.bf16.mxu0 0
  %8667 = vmatpush2.bf16.msra.mxu0 %v8540
  %8668 = vmatprep.subr.bf16.mxu0 0
  %8669 = vmatpush2.bf16.msra.mxu0 %v8539
  %8670 = vmatprep.subr.bf16.mxu0 0
  %8671 = vmatpush2.bf16.msra.mxu0 %v8538
  %8672 = vmatprep.subr.bf16.mxu0 0
  %8673 = vmatpush2.bf16.msra.mxu0 %v8537
  %8674 = vmatprep.subr.bf16.mxu0 0
  %8675 = vmatpush2.bf16.msra.mxu0 %v8536
  %8676 = vmatprep.mubr.bf16.mxu0 %v3017
  %8677 = vmatmul.mubr.bf16.gmra.mxu0 %v3016
  %v8678 = vpop.f32.mrf.mxu0
  %v8679 = vadd.f32 %v8638, %v8678
  %v8680 = vpop.f32.mrf.mxu0
  %v8681 = vpop.f32.mrf.mxu0
  %v8682 = vadd.f32 %v8641, %v8681
  %v8683 = vpop.f32.mrf.mxu0
  %8684 = vdwg.mxu0
  %8685 = vmatprep.subr.bf16.mxu0 0
  %8686 = vmatpush1.bf16.msra.mxu0 %v8551
  %8687 = vmatprep.subr.bf16.mxu0 0
  %8688 = vmatpush1.bf16.msra.mxu0 %v8550
  %8689 = vmatprep.subr.bf16.mxu0 0
  %8690 = vmatpush1.bf16.msra.mxu0 %v8549
  %8691 = vmatprep.subr.bf16.mxu0 0
  %8692 = vmatpush1.bf16.msra.mxu0 %v8548
  %8693 = vmatprep.subr.bf16.mxu0 0
  %8694 = vmatpush1.bf16.msra.mxu0 %v8547
  %8695 = vmatprep.subr.bf16.mxu0 0
  %8696 = vmatpush1.bf16.msra.mxu0 %v8546
  %8697 = vmatprep.subr.bf16.mxu0 0
  %8698 = vmatpush1.bf16.msra.mxu0 %v8545
  %8699 = vmatprep.subr.bf16.mxu0 0
  %8700 = vmatpush1.bf16.msra.mxu0 %v8544
  %8701 = vmatprep.subr.bf16.mxu0 0
  %8702 = vmatpush2.bf16.msra.mxu0 0
  %8703 = vmatprep.subr.bf16.mxu0 0
  %8704 = vmatpush2.bf16.msra.mxu0 0
  %8705 = vmatprep.subr.bf16.mxu0 0
  %8706 = vmatpush2.bf16.msra.mxu0 0
  %8707 = vmatprep.subr.bf16.mxu0 0
  %8708 = vmatpush2.bf16.msra.mxu0 0
  %8709 = vmatprep.subr.bf16.mxu0 0
  %8710 = vmatpush2.bf16.msra.mxu0 0
  %8711 = vmatprep.subr.bf16.mxu0 0
  %8712 = vmatpush2.bf16.msra.mxu0 %v8601
  %8713 = vmatprep.subr.bf16.mxu0 0
  %8714 = vmatpush2.bf16.msra.mxu0 %v8553
  %8715 = vmatprep.subr.bf16.mxu0 0
  %8716 = vmatpush2.bf16.msra.mxu0 %v8552
  %8717 = vmatprep.mubr.bf16.mxu0 %v8598
  %8718 = vmatmul.mubr.bf16.gmra.mxu0 %v3018
  %v8719 = vpop.f32.mrf.mxu0
  %v8720 = vadd.f32 %v8679, %v8719
  %v8721 = vpop.f32.mrf.mxu0
  %v8722 = vpop.f32.mrf.mxu0
  %v8723 = vadd.f32 %v8682, %v8722
  %v8724 = vpop.f32.mrf.mxu0
  %8725 = vdwg.mxu0
  %v8726 = vadd.f32 %v8251, %v8720
  %v8727 = vadd.f32 %v8252, %v8723
  %v8728 = vld [vmem:[%s5] sm:$0xff]
  %v8729 = vld [vmem:[%s5 + $0x8] sm:$0xff]
  %v8730 = vld [vmem:[%s5 + $0x10] sm:$0xff]
  %v8731 = vld [vmem:[%s5 + $0x18] sm:$0xff]
  %v8732 = vld [vmem:[%s5 + $0x20] sm:$0xff]
  %v8733 = vld [vmem:[%s5 + $0x28] sm:$0xff]
  %v8734 = vld [vmem:[%s5 + $0x30] sm:$0xff]
  %v8735 = vld [vmem:[%s5 + $0x38] sm:$0xff]
  %v8736 = vld [vmem:[%s5 + $0x40] sm:$0xff]
  %v8737 = vld [vmem:[%s5 + $0x48] sm:$0xff]
  %v8738 = vld [vmem:[%s5 + $0x50] sm:$0xff]
  %v8739 = vld [vmem:[%s5 + $0x58] sm:$0xff]
  %v8740 = vld [vmem:[%s5 + $0x60] sm:$0xff]
  %v8741 = vld [vmem:[%s5 + $0x68] sm:$0xff]
  %v8742 = vld [vmem:[%s5 + $0x70] sm:$0xff]
  %v8743 = vld [vmem:[%s5 + $0x78] sm:$0xff]
  %v8744 = vld [vmem:[%s6] sm:$0x1]
  %v8746 = vlaneseq
  %v8747 = vshrl.u32 %v8746, 7
  %v8748 = vsub.s32 0, %v8747
  %v8749 = vrot.slane %v8744, %v8748
  %8751 = vmatprep.subr.mxu0 0.0
  %8752 = vmatpush1.msra.mxu0 %v8743
  %8753 = vmatprep.subr.mxu0 0.0
  %8754 = vmatpush1.msra.mxu0 %v8742
  %8755 = vmatprep.subr.mxu0 0.0
  %8756 = vmatpush1.msra.mxu0 %v8741
  %8757 = vmatprep.subr.mxu0 0.0
  %8758 = vmatpush1.msra.mxu0 %v8740
  %8759 = vmatprep.subr.mxu0 0.0
  %8760 = vmatpush1.msra.mxu0 %v8739
  %8761 = vmatprep.subr.mxu0 0.0
  %8762 = vmatpush1.msra.mxu0 %v8738
  %8763 = vmatprep.subr.mxu0 0.0
  %8764 = vmatpush1.msra.mxu0 %v8737
  %8765 = vmatprep.subr.mxu0 0.0
  %8766 = vmatpush1.msra.mxu0 %v8736
  %8767 = vmatprep.subr.mxu0 0.0
  %8768 = vmatpush1.msra.mxu0 %v8735
  %8769 = vmatprep.subr.mxu0 0.0
  %8770 = vmatpush1.msra.mxu0 %v8734
  %8771 = vmatprep.subr.mxu0 0.0
  %8772 = vmatpush1.msra.mxu0 %v8733
  %8773 = vmatprep.subr.mxu0 0.0
  %8774 = vmatpush1.msra.mxu0 %v8732
  %8775 = vmatprep.subr.mxu0 0.0
  %8776 = vmatpush1.msra.mxu0 %v8731
  %8777 = vmatprep.subr.mxu0 0.0
  %8778 = vmatpush1.msra.mxu0 %v8730
  %8779 = vmatprep.subr.mxu0 0.0
  %8780 = vmatpush1.msra.mxu0 %v8729
  %8781 = vmatprep.subr.mxu0 0.0
  %8782 = vmatpush1.msra.mxu0 %v8728
  %8783 = vmatprep.subr.mxu0 0.0
  %8784 = vmatpush2.msra.mxu0 0.0
  %8785 = vmatprep.subr.mxu0 0.0
  %8786 = vmatpush2.msra.mxu0 0.0
  %8787 = vmatprep.subr.mxu0 0.0
  %8788 = vmatpush2.msra.mxu0 0.0
  %8789 = vmatprep.subr.mxu0 0.0
  %8790 = vmatpush2.msra.mxu0 0.0
  %8791 = vmatprep.subr.mxu0 0.0
  %8792 = vmatpush2.msra.mxu0 0.0
  %8793 = vmatprep.subr.mxu0 0.0
  %8794 = vmatpush2.msra.mxu0 0.0
  %8795 = vmatprep.subr.mxu0 0.0
  %8796 = vmatpush2.msra.mxu0 0.0
  %8797 = vmatprep.subr.mxu0 0.0
  %8798 = vmatpush2.msra.mxu0 0.0
  %8799 = vmatprep.subr.mxu0 0.0
  %8800 = vmatpush2.msra.mxu0 0.0
  %8801 = vmatprep.subr.mxu0 0.0
  %8802 = vmatpush2.msra.mxu0 0.0
  %8803 = vmatprep.subr.mxu0 0.0
  %8804 = vmatpush2.msra.mxu0 0.0
  %8805 = vmatprep.subr.mxu0 0.0
  %8806 = vmatpush2.msra.mxu0 0.0
  %8807 = vmatprep.subr.mxu0 0.0
  %8808 = vmatpush2.msra.mxu0 0.0
  %8809 = vmatprep.subr.mxu0 0.0
  %8810 = vmatpush2.msra.mxu0 0.0
  %8811 = vmatprep.subr.mxu0 0.0
  %8812 = vmatpush2.msra.mxu0 0.0
  %8813 = vmatprep.subr.mxu0 0.0
  %8814 = vmatpush2.msra.mxu0 0.0
  %8815 = vmatprep.mubr.f32.mxu0 0.0
  %8816 = vmatmul.mubr.f32.gmra.mxu0 %v8726
  %v8817 = vpop.f32.mrf.mxu0
  %v8818 = vadd.f32 %v8749, %v8817
  %v8819 = vpop.f32.mrf.mxu0
  %8820 = vmatprep.mubr.f32.mxu0 0.0
  %8821 = vmatmul.mubr.f32.gmra.mxu0 %v8727
  %v8822 = vpop.f32.mrf.mxu0
  %v8823 = vadd.f32 %v8749, %v8822
  %v8824 = vpop.f32.mrf.mxu0
  %8825 = vdwg.mxu0
  %vm8826 = vcmask 80896
  %v8827 = vsel %vm8826, %v8818, -inf
  %8828 = vmax.xlane.f32.xlu0 %v8827
  %v8829 = vpop.xlane.xlu0 %8828
  %v8830 = vsel %vm8826, %v8823, -inf
  %8831 = vmax.xlane.f32.xlu0 %v8830
  %v8832 = vpop.xlane.xlu0 %8831
  %v8833 = vsub.f32 %v8818, %v8829
  %v8834 = vsub.f32 %v8823, %v8832
  %v8835 = vmul.f32 %v8833, 1.442695
  %v8836 = vpow.pop %v8835
  %v8837 = vmul.f32 %v8834, 1.442695
  %v8838 = vpow.pop %v8837
  %v8839 = vsel %vm8826, %v8836, 0.0
  %8840 = vadd.xlane.f32.xlu0 %v8839
  %v8841 = vpop.xlane.xlu0 %8840
  %v8842 = vsel %vm8826, %v8838, 0.0
  %8843 = vadd.xlane.f32.xlu0 %v8842
  %v8844 = vpop.xlane.xlu0 %8843
  %v8845 = vlog2.pop %v8841
  %v8846 = vmul.f32 %v8845, 0.6931472
  %v8847 = vlog2.pop %v8844
  %v8848 = vmul.f32 %v8847, 0.6931472
  %v8849 = vsub.f32 %v8833, %v8846
  %v8850 = vsub.f32 %v8834, %v8848
  %8851 = vst.msk [vmem:[%s7] sm:$0xff] %vm8826, %v8849
  %8852 = vst.msk [vmem:[%s7 + $0x8] sm:$0xff] %vm8826, %v8850
  // Predicated region
  $region30: #{conv2d_then_linear_48.1} parent=0 // pred_check
    _
  $region31: #{conv2d_then_linear_48.1} parent=0 // pred_check_branch
    %8854 = sbr.rel (0) target = $region33
  $region32: #{conv2d_then_linear_48.1} parent=0 // pred_region
    _
  $region33: #{conv2d_then_linear_48.1} parent=0 // pred_fallthru
    _
  // Predicated region
  $region34: #{conv2d_then_linear_48.1} parent=0 // pred_check
    _
  $region35: #{conv2d_then_linear_48.1} parent=0 // pred_check_branch
    %8856 = sbr.rel (0) target = $region37
  $region36: #{conv2d_then_linear_48.1} parent=0 // pred_region
    _
  $region37: #{conv2d_then_linear_48.1} parent=0 // pred_fallthru
    _

</llo_original>
